<compile_context>
chip_gen: v7x
topology: tpu7x:2x2x1
jax: 0.10.0
libtpu: 0.0.40
codegen_flags: <defaults>
</compile_context>

<pallas_src>
import functools

import jax
import jax.numpy as jnp
from jax.experimental import pallas as pl
from jax.experimental.pallas import tpu as pltpu

LANE = 128
BN_EPS = 1e-5
MATMUL_DTYPE = jnp.bfloat16     # MXU input dtype (f32 accumulation)
_M_TILE_TARGET = 512            # rows per M tile (HBM-roofline sweet spot)


def _round_up(x, m):
    return (x + m - 1) // m * m


def _choose_m_tile(m, target=_M_TILE_TARGET):
    """Pick an M tile (multiple of 8, <= target).  Prefer an exact divisor of m;
    otherwise pad m up (padded rows are zero / masked out of the statistics)."""
    t = max(8, (min(target, m) // 8) * 8)
    for tm in range(t, 7, -8):
        if m % tm == 0:
            return tm, m
    return t, _round_up(m, t)


def _pick_strip(h, target=8):
    for t in range(min(h, target), 0, -1):
        if h % t == 0:
            return t
    return 1


def _pad_rows(a, mp):
    return a if a.shape[0] == mp else jnp.pad(a, ((0, mp - a.shape[0]), (0, 0)))


def _hswish(x):
    # Hardswish: x * relu6(x + 3) / 6 == x * clip(x/6 + 0.5, 0, 1)
    return x * jnp.clip(x * (1.0 / 6.0) + 0.5, 0.0, 1.0)


def _affine_from_stats(stats, gamma_row, beta_row, count):
    """Training-mode BN folded to per-channel (scale, shift) rows, shape (2, Cp)."""
    mean = stats[0] / count
    # TODO(synk): E[y^2]-E[y]^2 in f32 can cancel for very large M; fine here.
    var = jnp.maximum(stats[1] / count - mean * mean, 0.0)
    scale = gamma_row * jax.lax.rsqrt(var + BN_EPS)
    shift = beta_row - mean * scale
    return jnp.stack([scale, shift], axis=0)


# ----------------------------------------------------------------------------
# Kernel 1: tiled 1x1-conv matmul (in-kernel bf16 cast) + per-tile stats
# ----------------------------------------------------------------------------
def _mm_stats_kernel(x_ref, w_ref, y_ref, st_ref):
    y = jnp.dot(x_ref[...].astype(MATMUL_DTYPE), w_ref[...],
                preferred_element_type=jnp.float32)
    y_ref[...] = y
    st_ref[0:1, :] = jnp.sum(y, axis=0, keepdims=True)
    st_ref[1:2, :] = jnp.sum(y * y, axis=0, keepdims=True)


def _matmul_stats(x, w_bf16, tm):
    Mp, Kp = x.shape
    Np = w_bf16.shape[1]
    gm = Mp // tm
    flops = 2 * Mp * Kp * Np
    bytes_accessed = Mp * Kp * 4 + Kp * Np * 2 + Mp * Np * 4 + gm * 2 * Np * 4
    return pl.pallas_call(
        _mm_stats_kernel,
        out_shape=(jax.ShapeDtypeStruct((Mp, Np), jnp.float32),
                   jax.ShapeDtypeStruct((gm, 2, Np), jnp.float32)),
        grid_spec=pltpu.PrefetchScalarGridSpec(
            num_scalar_prefetch=0,
            grid=(gm,),
            in_specs=[pl.BlockSpec((tm, Kp), lambda i: (i, 0)),
                      pl.BlockSpec((Kp, Np), lambda i: (0, 0))],
            out_specs=(pl.BlockSpec((tm, Np), lambda i: (i, 0)),
                       pl.BlockSpec((None, 2, Np), lambda i: (i, 0, 0))),
        ),
        compiler_params=pltpu.CompilerParams(dimension_semantics=("parallel",)),
        cost_estimate=pl.CostEstimate(flops=int(flops), transcendentals=0,
                                      bytes_accessed=int(bytes_accessed)),
    )(x, w_bf16)


# ----------------------------------------------------------------------------
# Kernel 2: depthwise 5x5 'same' conv with fused input BN+Hardswish + stats
# ----------------------------------------------------------------------------
def _dw5_kernel(y_ref, aff_ref, w_ref, yd_ref, st_ref, xpad_ref, xsh_ref,
                *, H, W, Cp, hs):
    K, P = 5, 2
    scale = aff_ref[0:1, :].reshape(1, 1, Cp)
    shift = aff_ref[1:2, :].reshape(1, 1, Cp)
    act = _hswish(y_ref[...] * scale + shift)             # BN+Hardswish fused here

    # In-kernel 'same' padding: zero the scratch, store the activated interior.
    xpad_ref[...] = jnp.zeros_like(xpad_ref)
    xpad_ref[P:P + H, P:P + W, :] = act

    # Hoist the 5 dx (sublane) shifts once; all tap loads below are aligned.
    for dx in range(K):
        xsh_ref[dx, :, :, :] = xpad_ref[:, dx:dx + W, :]

    w = w_ref[...]                                         # (25, Cp)
    w_rows = [w[i].reshape(1, 1, Cp) for i in range(K * K)]   # hoisted broadcasts

    s = jnp.zeros((1, Cp), jnp.float32)
    ss = jnp.zeros((1, Cp), jnp.float32)
    for h0 in range(0, H, hs):          # row strips bound the accumulator live range
        acc = jnp.zeros((hs, W, Cp), jnp.float32)
        for dy in range(K):
            for dx in range(K):
                acc = acc + xsh_ref[dx, h0 + dy:h0 + dy + hs, :, :] * w_rows[dy * K + dx]
        acc2 = acc.reshape(hs * W, Cp)
        yd_ref[h0 * W:(h0 + hs) * W, :] = acc2
        s = s + jnp.sum(acc2, axis=0, keepdims=True)
        ss = ss + jnp.sum(acc2 * acc2, axis=0, keepdims=True)
    st_ref[0:1, :] = s
    st_ref[1:2, :] = ss


def _dw5_bn_stats(y_img, aff, taps):
    N, H, W, Cp = y_img.shape
    Hp, Wp = H + 4, W + 4
    hs = _pick_strip(H)
    kernel = functools.partial(_dw5_kernel, H=H, W=W, Cp=Cp, hs=hs)
    # TODO(synk): for large spatial sizes, tile H into haloed strips (manual DMA)
    # instead of whole-image blocks to stay within VMEM.
    return pl.pallas_call(
        kernel,
        out_shape=(jax.ShapeDtypeStruct((N * H * W, Cp), jnp.float32),
                   jax.ShapeDtypeStruct((N, 2, Cp), jnp.float32)),
        grid_spec=pltpu.PrefetchScalarGridSpec(
            num_scalar_prefetch=0,
            grid=(N,),
            in_specs=[pl.BlockSpec((None, H, W, Cp), lambda n: (n, 0, 0, 0)),
                      pl.BlockSpec((2, Cp), lambda n: (0, 0)),
                      pl.BlockSpec((25, Cp), lambda n: (0, 0))],
            out_specs=(pl.BlockSpec((H * W, Cp), lambda n: (n, 0)),
                       pl.BlockSpec((None, 2, Cp), lambda n: (n, 0, 0))),
            scratch_shapes=[pltpu.VMEM((Hp, Wp, Cp), jnp.float32),
                            pltpu.VMEM((5, Hp, W, Cp), jnp.float32)]),
        compiler_params=pltpu.CompilerParams(dimension_semantics=("parallel",)),
    )(y_img, aff, taps)


# ----------------------------------------------------------------------------
# Kernel 3: 3x3/s1/p1 max pool with fused input BN+Hardswish (bf16 output)
# ----------------------------------------------------------------------------
def _maxpool_kernel(y_ref, aff_ref, o_ref, xpad_ref, *, H, W, Cp):
    K, P = 3, 1
    scale = aff_ref[0:1, :].reshape(1, 1, Cp)
    shift = aff_ref[1:2, :].reshape(1, 1, Cp)
    act = _hswish(y_ref[...] * scale + shift)
    # In-kernel padding with a large negative (never wins the max, stays finite).
    xpad_ref[...] = jnp.full(xpad_ref.shape, -1e30, dtype=xpad_ref.dtype)
    xpad_ref[P:P + H, P:P + W, :] = act
    acc = xpad_ref[0:H, 0:W, :]
    for dy in range(K):
        for dx in range(K):
            if dy == 0 and dx == 0:
                continue
            acc = jnp.maximum(acc, xpad_ref[dy:dy + H, dx:dx + W, :])
    o_ref[...] = acc.reshape(H * W, Cp).astype(o_ref.dtype)


def _maxpool_bn(y_img, aff):
    N, H, W, Cp = y_img.shape
    Hp, Wp = H + 2, W + 2
    kernel = functools.partial(_maxpool_kernel, H=H, W=W, Cp=Cp)
    return pl.pallas_call(
        kernel,
        out_shape=jax.ShapeDtypeStruct((N * H * W, Cp), MATMUL_DTYPE),
        grid_spec=pltpu.PrefetchScalarGridSpec(
            num_scalar_prefetch=0,
            grid=(N,),
            in_specs=[pl.BlockSpec((None, H, W, Cp), lambda n: (n, 0, 0, 0)),
                      pl.BlockSpec((2, Cp), lambda n: (0, 0))],
            out_specs=pl.BlockSpec((H * W, Cp), lambda n: (n, 0)),
            scratch_shapes=[pltpu.VMEM((Hp, Wp, Cp), jnp.float32)]),
        compiler_params=pltpu.CompilerParams(dimension_semantics=("parallel",)),
    )(y_img, aff)


# ----------------------------------------------------------------------------
# Kernel 4: fused branch merge (BN+hswish per source, lane select, bf16 cast)
#           + block-diagonal 1x1 matmul + per-tile stats
# ----------------------------------------------------------------------------
def _merge_mm_kernel(y0_ref, yd1_ref, yd2_ref, amp_ref,
                     aff0_ref, aff1_ref, aff2_ref, grp_ref, w_ref,
                     y_ref, st_ref, *, tm, m_valid):
    def bn_act(v_ref, aff_ref):
        return _hswish(v_ref[...] * aff_ref[0:1, :] + aff_ref[1:2, :])

    a0 = bn_act(y0_ref, aff0_ref)             # branch0 activation (group 0)
    a1 = bn_act(yd1_ref, aff1_ref)            # branch2 dw activation (group 1)
    a2 = bn_act(yd2_ref, aff2_ref)            # branch3 dw2 activation (group 2)
    a3 = amp_ref[...].astype(jnp.float32)     # branch4 max pool (group 3), no BN
    grp = grp_ref[...]
    z = jnp.where(grp == 0.0, a0,
        jnp.where(grp == 1.0, a1,
        jnp.where(grp == 2.0, a2, a3)))
    y = jnp.dot(z.astype(MATMUL_DTYPE), w_ref[...],
                preferred_element_type=jnp.float32)
    y_ref[...] = y
    if m_valid is None:
        ys = y
    else:
        row = jax.lax.broadcasted_iota(jnp.int32, (tm, 1), 0) + pl.program_id(0) * tm
        ys = jnp.where(row < m_valid, y, 0.0)
    st_ref[0:1, :] = jnp.sum(ys, axis=0, keepdims=True)
    st_ref[1:2, :] = jnp.sum(ys * ys, axis=0, keepdims=True)


def _merge_matmul_stats(y0, yd1, yd2, amp, aff0, aff1, aff2, grp_row, w_bf16, tm,
                        m_valid=None):
    Mp, Cp = y0.shape
    gm = Mp // tm
    kernel = functools.partial(_merge_mm_kernel, tm=tm, m_valid=m_valid)
    act_spec = pl.BlockSpec((tm, Cp), lambda i: (i, 0))
    row_spec = pl.BlockSpec((2, Cp), lambda i: (0, 0))
    flops = 2 * Mp * Cp * Cp
    bytes_accessed = 3 * Mp * Cp * 4 + Mp * Cp * 2 + Cp * Cp * 2 + Mp * Cp * 4
    return pl.pallas_call(
        kernel,
        out_shape=(jax.ShapeDtypeStruct((Mp, Cp), jnp.float32),
                   jax.ShapeDtypeStruct((gm, 2, Cp), jnp.float32)),
        grid_spec=pltpu.PrefetchScalarGridSpec(
            num_scalar_prefetch=0,
            grid=(gm,),
            in_specs=[act_spec, act_spec, act_spec, act_spec,
                      row_spec, row_spec, row_spec,
                      pl.BlockSpec((1, Cp), lambda i: (0, 0)),
                      pl.BlockSpec((Cp, Cp), lambda i: (0, 0))],
            out_specs=(pl.BlockSpec((tm, Cp), lambda i: (i, 0)),
                       pl.BlockSpec((None, 2, Cp), lambda i: (i, 0, 0))),
        ),
        compiler_params=pltpu.CompilerParams(dimension_semantics=("parallel",)),
        cost_estimate=pl.CostEstimate(flops=int(flops), transcendentals=0,
                                      bytes_accessed=int(bytes_accessed)),
    )(y0, yd1, yd2, amp, aff0, aff1, aff2, grp_row, w_bf16)


# ----------------------------------------------------------------------------
# Kernel 5: final affine (BN) + Hardswish
# ----------------------------------------------------------------------------
def _affine_act_kernel(y_ref, aff_ref, o_ref):
    o_ref[...] = _hswish(y_ref[...] * aff_ref[0:1, :]
                         + aff_ref[1:2, :]).astype(o_ref.dtype)


def _affine_act(y, aff, tm):
    Mp, Cp = y.shape
    gm = Mp // tm
    return pl.pallas_call(
        _affine_act_kernel,
        out_shape=jax.ShapeDtypeStruct((Mp, Cp), jnp.float32),
        grid_spec=pltpu.PrefetchScalarGridSpec(
            num_scalar_prefetch=0,
            grid=(gm,),
            in_specs=[pl.BlockSpec((tm, Cp), lambda i: (i, 0)),
                      pl.BlockSpec((2, Cp), lambda i: (0, 0))],
            out_specs=pl.BlockSpec((tm, Cp), lambda i: (i, 0)),
        ),
        compiler_params=pltpu.CompilerParams(dimension_semantics=("parallel",)),
    )(y, aff)


# ----------------------------------------------------------------------------
# Module forward
# ----------------------------------------------------------------------------
def inception_v3_module_2_forward(x_nchw, params):
    N, C, H, W = x_nchw.shape
    assert C % 4 == 0
    C4 = C // 4
    Cp = _round_up(C, LANE)
    M = N * H * W
    assert (H * W) % 8 == 0, "depthwise/pool output tiling needs H*W % 8 == 0"
    # TODO(synk): feature maps with H*W % 8 != 0 (e.g. 17x17) need a row-padded
    # flat layout for the depthwise/pool outputs; not needed at these sizes.

    tm, Mp = _choose_m_tile(M)
    grp_row = (jnp.arange(Cp) // C4).astype(jnp.float32).reshape(1, Cp)

    def lane_row(segments, default):
        r = jnp.full((Cp,), default, jnp.float32)
        for start, vals in segments:
            r = r.at[start:start + vals.shape[0]].set(vals)
        return r

    # --- weight packing (lane-dense, block-diagonal for grouped / fused 1x1) ---
    W0 = jnp.zeros((Cp, Cp), jnp.float32)                  # branch0 grouped 1x1
    for g in range(4):
        blk = params["b0_w"][g * C4:(g + 1) * C4, :, 0, 0]        # (out, in)
        W0 = W0.at[g * C4:(g + 1) * C4, g * C4:(g + 1) * C4].set(blk.T)
    pw = [params["b1_w"], params["b2_pw_w"], params["b3_pw_w"], params["b4_pw_w"]]
    WF = jnp.zeros((Cp, Cp), jnp.float32)                  # fused branch-ending 1x1
    for g in range(4):
        WF = WF.at[g * C4:(g + 1) * C4, g * C4:(g + 1) * C4].set(pw[g][:, :, 0, 0].T)
    dw1 = jnp.zeros((25, Cp), jnp.float32)                 # branch2.dw + branch3.dw1
    dw1 = dw1.at[:, C4:2 * C4].set(params["b2_dw_w"][:, 0].reshape(C4, 25).T)
    dw1 = dw1.at[:, 2 * C4:3 * C4].set(params["b3_dw1_w"][:, 0].reshape(C4, 25).T)
    dw2 = jnp.zeros((25, Cp), jnp.float32)                 # branch3.dw2
    dw2 = dw2.at[:, 2 * C4:3 * C4].set(params["b3_dw2_w"][:, 0].reshape(C4, 25).T)
    # TODO(synk): when C4 >= 128 (real Inception widths) switch to per-group
    # (tm,C4)x(C4,C4) matmuls and lane-sliced depthwise/pool passes instead of
    # the block-diagonal Cp x Cp form (recovers the wasted MXU MACs / lanes).

    # --- input: NCHW -> lane-dense (Mp, Cp) f32 (bf16 cast happens in-kernel) ---
    x2d = jnp.transpose(x_nchw, (0, 2, 3, 1)).astype(jnp.float32).reshape(M, C)
    x2d = jnp.pad(x2d, ((0, Mp - M), (0, Cp - C)))

    # --- branch0: grouped 1x1 conv + batch stats -------------------------------
    y0, st0p = _matmul_stats(x2d, W0.astype(MATMUL_DTYPE), tm)
    aff0 = _affine_from_stats(st0p.sum(0),
                              lane_row([(0, params["b0_g"])], 1.0),
                              lane_row([(0, params["b0_b"])], 0.0), M)
    y0_img = y0[:M].reshape(N, H, W, Cp)

    # --- depthwise pass 1 (branch2.dw + branch3.dw1); BN0+hswish fused on input
    yd1, st1p = _dw5_bn_stats(y0_img, aff0, dw1)
    aff1 = _affine_from_stats(
        st1p.sum(0),
        lane_row([(C4, params["b2_dw_g"]), (2 * C4, params["b3_dw1_g"])], 1.0),
        lane_row([(C4, params["b2_dw_b"]), (2 * C4, params["b3_dw1_b"])], 0.0), M)

    # --- depthwise pass 2 (branch3.dw2); BN1+hswish fused on input -------------
    yd2, st2p = _dw5_bn_stats(yd1.reshape(N, H, W, Cp), aff1, dw2)
    aff2 = _affine_from_stats(st2p.sum(0),
                              lane_row([(2 * C4, params["b3_dw2_g"])], 1.0),
                              lane_row([(2 * C4, params["b3_dw2_b"])], 0.0), M)

    # --- branch4: 3x3/s1/p1 max pool of branch0 activation (BN0 fused) ---------
    amp = _maxpool_bn(y0_img, aff0)

    # --- fused merge + branch-ending 1x1 convs + stats --------------------------
    yf, stfp = _merge_matmul_stats(
        y0, _pad_rows(yd1, Mp), _pad_rows(yd2, Mp), _pad_rows(amp, Mp),
        aff0, aff1, aff2, grp_row, WF.astype(MATMUL_DTYPE), tm,
        m_valid=None if Mp == M else M)
    afff = _affine_from_stats(
        stfp.sum(0),
        lane_row([(0, params["b1_g"]), (C4, params["b2_pw_g"]),
                  (2 * C4, params["b3_pw_g"]), (3 * C4, params["b4_pw_g"])], 1.0),
        lane_row([(0, params["b1_b"]), (C4, params["b2_pw_b"]),
                  (2 * C4, params["b3_pw_b"]), (3 * C4, params["b4_pw_b"])], 0.0), M)

    out = _affine_act(yf, afff, tm)
    out = out[:M, :C].reshape(N, H, W, C)      # channel order = cat(out1..out4)
    return jnp.transpose(out, (0, 3, 1, 2))    # NHWC -> NCHW


# ----------------------------------------------------------------------------
# Parameters (deterministic, mirroring the PyTorch module's layers)
# ----------------------------------------------------------------------------
def init_params(key, in_channels):
    C = in_channels
    C4 = C // 4
    keys = iter(jax.random.split(key, 32))

    def conv_w(cout, cin, kh, kw):
        return 0.1 * jax.random.normal(next(keys), (cout, cin, kh, kw), jnp.float32)

    def bn(c):
        return (1.0 + 0.05 * jax.random.normal(next(keys), (c,), jnp.float32),
                0.05 * jax.random.normal(next(keys), (c,), jnp.float32))

    p = {}
    p["b0_w"] = conv_w(C, C4, 1, 1)                    # grouped 1x1, groups=4
    p["b0_g"], p["b0_b"] = bn(C)
    p["b1_w"] = conv_w(C4, C4, 1, 1)                   # branch1 1x1
    p["b1_g"], p["b1_b"] = bn(C4)
    p["b2_dw_w"] = conv_w(C4, 1, 5, 5)                 # branch2 depthwise 5x5
    p["b2_dw_g"], p["b2_dw_b"] = bn(C4)
    p["b2_pw_w"] = conv_w(C4, C4, 1, 1)                # branch2 1x1
    p["b2_pw_g"], p["b2_pw_b"] = bn(C4)
    p["b3_dw1_w"] = conv_w(C4, 1, 5, 5)                # branch3 depthwise 5x5 (x2)
    p["b3_dw1_g"], p["b3_dw1_b"] = bn(C4)
    p["b3_dw2_w"] = conv_w(C4, 1, 5, 5)
    p["b3_dw2_g"], p["b3_dw2_b"] = bn(C4)
    p["b3_pw_w"] = conv_w(C4, C4, 1, 1)                # branch3 1x1
    p["b3_pw_g"], p["b3_pw_b"] = bn(C4)
    p["b4_pw_w"] = conv_w(C4, C4, 1, 1)                # branch4 1x1 (after maxpool)
    p["b4_pw_g"], p["b4_pw_b"] = bn(C4)
    return p


if __name__ == "__main__":
    key = jax.random.PRNGKey(0)
    kx, kp = jax.random.split(key)
    N, C, H, W = 2, 32, 16, 16                          # small, C divisible by 4
    x = jax.random.normal(kx, (N, C, H, W), jnp.float32)
    params = init_params(kp, in_channels=C)

    fwd = jax.jit(inception_v3_module_2_forward)
    y = jax.block_until_ready(fwd(x, params))

    assert y.shape == (N, C, H, W), y.shape
    assert y.dtype == jnp.float32
    assert bool(jnp.all(jnp.isfinite(y)))
    print("KERNEL_OK")
</pallas_src>

<mosaic_0001>
module attributes {stable_mosaic.version = 11 : i64} {
  func.func @_mm_stats_kernel(%arg0: i32, %arg1: memref<512x128xf32, #tpu.memory_space<vmem>>, %arg2: memref<128x128xbf16, #tpu.memory_space<vmem>>, %arg3: memref<512x128xf32, #tpu.memory_space<vmem>>, %arg4: memref<1x2x128xf32, #tpu.memory_space<vmem>>) attributes {dimension_semantics = [#tpu.dimension_semantics<parallel>], iteration_bounds = array<i64: 1>, scalar_prefetch = 0 : i64, scratch_operands = 0 : i64, tpu.core_type = #tpu.core_type<tc>, window_params = [{transform_indices = @transform_0, window_bounds = array<i64: 512, 128>}, {pipeline_mode = #tpu.pipeline_mode<synchronous>, transform_indices = @transform_1, window_bounds = array<i64: 128, 128>}, {transform_indices = @transform_2, window_bounds = array<i64: 512, 128>}, {transform_indices = @transform_3, window_bounds = array<i64: 1, 2, 128>}]} {
    %c0 = arith.constant 0 : index
    %c0_0 = arith.constant 0 : index
    %0 = vector.load %arg1[%c0, %c0_0] : memref<512x128xf32, #tpu.memory_space<vmem>>, vector<512x128xf32>
    %1 = arith.truncf %0 : vector<512x128xf32> to vector<512x128xbf16>
    %c0_1 = arith.constant 0 : index
    %c0_2 = arith.constant 0 : index
    %2 = vector.load %arg2[%c0_1, %c0_2] : memref<128x128xbf16, #tpu.memory_space<vmem>>, vector<128x128xbf16>
    %cst = arith.constant dense<0.000000e+00> : vector<512x128xf32>
    %3 = tpu.matmul %1, %2, %cst {dimension_numbers = #tpu.dot_dimension_numbers<[1], [0], [0], [1], [0, 0, 1, 1], [], []>} : vector<512x128xbf16>, vector<128x128xbf16>, vector<512x128xf32> -> vector<512x128xf32>
    %c0_3 = arith.constant 0 : index
    %c0_4 = arith.constant 0 : index
    %4 = vector.load %arg3[%c0_3, %c0_4] : memref<512x128xf32, #tpu.memory_space<vmem>>, vector<512x128xf32>
    tpu.vector_store %arg3[%c0_3, %c0_4], %3 {strides = array<i32>} : memref<512x128xf32, #tpu.memory_space<vmem>>, vector<512x128xf32>,
    %cst_5 = arith.constant dense<0.000000e+00> : vector<128xf32>
    %5 = vector.multi_reduction <add>, %3, %cst_5 [0] : vector<512x128xf32> to vector<128xf32>
    %6 = vector.shape_cast %5 : vector<128xf32> to vector<1x128xf32>
    %c0_6 = arith.constant 0 : index
    %c0_7 = arith.constant 0 : index
    %c0_8 = arith.constant 0 : index
    %7 = vector.load %arg4[%c0_6, %c0_7, %c0_8] : memref<1x2x128xf32, #tpu.memory_space<vmem>>, vector<1x1x128xf32>
    %8 = vector.shape_cast %7 : vector<1x1x128xf32> to vector<1x128xf32>
    %9 = vector.shape_cast %6 : vector<1x128xf32> to vector<1x1x128xf32>
    tpu.vector_store %arg4[%c0_6, %c0_7, %c0_8], %9 {strides = array<i32>} : memref<1x2x128xf32, #tpu.memory_space<vmem>>, vector<1x1x128xf32>,
    %10 = arith.mulf %3, %3 : vector<512x128xf32>
    %cst_9 = arith.constant dense<0.000000e+00> : vector<128xf32>
    %11 = vector.multi_reduction <add>, %10, %cst_9 [0] : vector<512x128xf32> to vector<128xf32>
    %12 = vector.shape_cast %11 : vector<128xf32> to vector<1x128xf32>
    %c0_10 = arith.constant 0 : index
    %c1 = arith.constant 1 : index
    %c0_11 = arith.constant 0 : index
    %13 = vector.load %arg4[%c0_10, %c1, %c0_11] : memref<1x2x128xf32, #tpu.memory_space<vmem>>, vector<1x1x128xf32>
    %14 = vector.shape_cast %13 : vector<1x1x128xf32> to vector<1x128xf32>
    %15 = vector.shape_cast %12 : vector<1x128xf32> to vector<1x1x128xf32>
    tpu.vector_store %arg4[%c0_10, %c1, %c0_11], %15 {strides = array<i32>} : memref<1x2x128xf32, #tpu.memory_space<vmem>>, vector<1x1x128xf32>,
    return
  }
  func.func @transform_0(%arg0: i32) -> (i32, i32) {
    %c0_i32 = arith.constant 0 : i32
    %c0_i32_0 = arith.constant 0 : i32
    return %arg0, %c0_i32 : i32, i32
  }
  func.func @transform_1(%arg0: i32) -> (i32, i32) {
    %c0_i32 = arith.constant 0 : i32
    %c0_i32_0 = arith.constant 0 : i32
    %c0_i32_1 = arith.constant 0 : i32
    return %c0_i32, %c0_i32_0 : i32, i32
  }
  func.func @transform_2(%arg0: i32) -> (i32, i32) {
    %c0_i32 = arith.constant 0 : i32
    %c0_i32_0 = arith.constant 0 : i32
    return %arg0, %c0_i32 : i32, i32
  }
  func.func @transform_3(%arg0: i32) -> (i32, i32, i32) {
    %c0_i32 = arith.constant 0 : i32
    %c0_i32_0 = arith.constant 0 : i32
    %c0_i32_1 = arith.constant 0 : i32
    return %arg0, %c0_i32, %c0_i32_0 : i32, i32, i32
  }
}

module attributes {stable_mosaic.version = 11 : i64} {
  func.func @_dw5_kernel(%arg0: i32, %arg1: memref<1x16x16x128xf32, #tpu.memory_space<vmem>>, %arg2: memref<2x128xf32, #tpu.memory_space<vmem>>, %arg3: memref<25x128xf32, #tpu.memory_space<vmem>>, %arg4: memref<256x128xf32, #tpu.memory_space<vmem>>, %arg5: memref<1x2x128xf32, #tpu.memory_space<vmem>>, %arg6: memref<20x20x128xf32, #tpu.memory_space<vmem>>, %arg7: memref<5x20x16x128xf32, #tpu.memory_space<vmem>>) attributes {dimension_semantics = [#tpu.dimension_semantics<parallel>], iteration_bounds = array<i64: 2>, scalar_prefetch = 0 : i64, scratch_operands = 2 : i64, tpu.core_type = #tpu.core_type<tc>, window_params = [{transform_indices = @transform_0, window_bounds = array<i64: 1, 16, 16, 128>}, {pipeline_mode = #tpu.pipeline_mode<synchronous>, transform_indices = @transform_1, window_bounds = array<i64: 2, 128>}, {pipeline_mode = #tpu.pipeline_mode<synchronous>, transform_indices = @transform_2, window_bounds = array<i64: 25, 128>}, {transform_indices = @transform_3, window_bounds = array<i64: 256, 128>}, {transform_indices = @transform_4, window_bounds = array<i64: 1, 2, 128>}]} {
    %c0 = arith.constant 0 : index
    %c0_0 = arith.constant 0 : index
    %0 = vector.load %arg2[%c0, %c0_0] : memref<2x128xf32, #tpu.memory_space<vmem>>, vector<1x128xf32>
    %1 = vector.shape_cast %0 : vector<1x128xf32> to vector<1x1x128xf32>
    %c1 = arith.constant 1 : index
    %c0_1 = arith.constant 0 : index
    %2 = vector.load %arg2[%c1, %c0_1] : memref<2x128xf32, #tpu.memory_space<vmem>>, vector<1x128xf32>
    %3 = vector.shape_cast %2 : vector<1x128xf32> to vector<1x1x128xf32>
    %c0_2 = arith.constant 0 : index
    %c0_3 = arith.constant 0 : index
    %c0_4 = arith.constant 0 : index
    %c0_5 = arith.constant 0 : index
    %4 = vector.load %arg1[%c0_2, %c0_3, %c0_4, %c0_5] : memref<1x16x16x128xf32, #tpu.memory_space<vmem>>, vector<1x16x16x128xf32>
    %5 = vector.shape_cast %4 : vector<1x16x16x128xf32> to vector<16x16x128xf32>
    %6 = vector.broadcast %1 : vector<1x1x128xf32> to vector<16x16x128xf32>
    %7 = arith.mulf %5, %6 : vector<16x16x128xf32>
    %8 = vector.broadcast %3 : vector<1x1x128xf32> to vector<16x16x128xf32>
    %9 = arith.addf %7, %8 : vector<16x16x128xf32>
    %cst = arith.constant 0.166666672 : f32
    %10 = vector.broadcast %cst : f32 to vector<16x16x128xf32>
    %11 = arith.mulf %9, %10 : vector<16x16x128xf32>
    %cst_6 = arith.constant 5.000000e-01 : f32
    %12 = vector.broadcast %cst_6 : f32 to vector<16x16x128xf32>
    %13 = arith.addf %11, %12 : vector<16x16x128xf32>
    %cst_7 = arith.constant 0.000000e+00 : f32
    %cst_8 = arith.constant 1.000000e+00 : f32
    %14 = vector.broadcast %cst_7 : f32 to vector<16x16x128xf32>
    %15 = arith.maximumf %14, %13 : vector<16x16x128xf32>
    %16 = vector.broadcast %cst_8 : f32 to vector<16x16x128xf32>
    %17 = arith.minimumf %16, %15 : vector<16x16x128xf32>
    %18 = arith.mulf %9, %17 : vector<16x16x128xf32>
    %cst_9 = arith.constant 0.000000e+00 : f32
    %19 = vector.broadcast %cst_9 : f32 to vector<20x20x128xf32>
    %c0_10 = arith.constant 0 : index
    %c0_11 = arith.constant 0 : index
    %c0_12 = arith.constant 0 : index
    %20 = vector.load %arg6[%c0_10, %c0_11, %c0_12] : memref<20x20x128xf32, #tpu.memory_space<vmem>>, vector<20x20x128xf32>
    tpu.vector_store %arg6[%c0_10, %c0_11, %c0_12], %19 {strides = array<i32>} : memref<20x20x128xf32, #tpu.memory_space<vmem>>, vector<20x20x128xf32>,
    %c2 = arith.constant 2 : index
    %c2_13 = arith.constant 2 : index
    %c0_14 = arith.constant 0 : index
    %21 = vector.load %arg6[%c2, %c2_13, %c0_14] : memref<20x20x128xf32, #tpu.memory_space<vmem>>, vector<16x16x128xf32>
    tpu.vector_store %arg6[%c2, %c2_13, %c0_14], %18 {strides = array<i32>} : memref<20x20x128xf32, #tpu.memory_space<vmem>>, vector<16x16x128xf32>,
    %c0_15 = arith.constant 0 : index
    %c0_16 = arith.constant 0 : index
    %c0_17 = arith.constant 0 : index
    %22 = vector.load %arg6[%c0_15, %c0_16, %c0_17] : memref<20x20x128xf32, #tpu.memory_space<vmem>>, vector<20x16x128xf32>
    %c0_18 = arith.constant 0 : index
    %c0_19 = arith.constant 0 : index
    %c0_20 = arith.constant 0 : index
    %c0_21 = arith.constant 0 : index
    %23 = vector.load %arg7[%c0_18, %c0_19, %c0_20, %c0_21] : memref<5x20x16x128xf32, #tpu.memory_space<vmem>>, vector<1x20x16x128xf32>
    %24 = vector.shape_cast %23 : vector<1x20x16x128xf32> to vector<20x16x128xf32>
    %25 = vector.shape_cast %22 : vector<20x16x128xf32> to vector<1x20x16x128xf32>
    tpu.vector_store %arg7[%c0_18, %c0_19, %c0_20, %c0_21], %25 {strides = array<i32>} : memref<5x20x16x128xf32, #tpu.memory_space<vmem>>, vector<1x20x16x128xf32>,
    %c0_22 = arith.constant 0 : index
    %c1_23 = arith.constant 1 : index
    %c0_24 = arith.constant 0 : index
    %26 = vector.load %arg6[%c0_22, %c1_23, %c0_24] : memref<20x20x128xf32, #tpu.memory_space<vmem>>, vector<20x16x128xf32>
    %c1_25 = arith.constant 1 : index
    %c0_26 = arith.constant 0 : index
    %c0_27 = arith.constant 0 : index
    %c0_28 = arith.constant 0 : index
    %27 = vector.load %arg7[%c1_25, %c0_26, %c0_27, %c0_28] : memref<5x20x16x128xf32, #tpu.memory_space<vmem>>, vector<1x20x16x128xf32>
    %28 = vector.shape_cast %27 : vector<1x20x16x128xf32> to vector<20x16x128xf32>
    %29 = vector.shape_cast %26 : vector<20x16x128xf32> to vector<1x20x16x128xf32>
    tpu.vector_store %arg7[%c1_25, %c0_26, %c0_27, %c0_28], %29 {strides = array<i32>} : memref<5x20x16x128xf32, #tpu.memory_space<vmem>>, vector<1x20x16x128xf32>,
    %c0_29 = arith.constant 0 : index
    %c2_30 = arith.constant 2 : index
    %c0_31 = arith.constant 0 : index
    %30 = vector.load %arg6[%c0_29, %c2_30, %c0_31] : memref<20x20x128xf32, #tpu.memory_space<vmem>>, vector<20x16x128xf32>
    %c2_32 = arith.constant 2 : index
    %c0_33 = arith.constant 0 : index
    %c0_34 = arith.constant 0 : index
    %c0_35 = arith.constant 0 : index
    %31 = vector.load %arg7[%c2_32, %c0_33, %c0_34, %c0_35] : memref<5x20x16x128xf32, #tpu.memory_space<vmem>>, vector<1x20x16x128xf32>
    %32 = vector.shape_cast %31 : vector<1x20x16x128xf32> to vector<20x16x128xf32>
    %33 = vector.shape_cast %30 : vector<20x16x128xf32> to vector<1x20x16x128xf32>
    tpu.vector_store %arg7[%c2_32, %c0_33, %c0_34, %c0_35], %33 {strides = array<i32>} : memref<5x20x16x128xf32, #tpu.memory_space<vmem>>, vector<1x20x16x128xf32>,
    %c0_36 = arith.constant 0 : index
    %c3 = arith.constant 3 : index
    %c0_37 = arith.constant 0 : index
    %34 = vector.load %arg6[%c0_36, %c3, %c0_37] : memref<20x20x128xf32, #tpu.memory_space<vmem>>, vector<20x16x128xf32>
    %c3_38 = arith.constant 3 : index
    %c0_39 = arith.constant 0 : index
    %c0_40 = arith.constant 0 : index
    %c0_41 = arith.constant 0 : index
    %35 = vector.load %arg7[%c3_38, %c0_39, %c0_40, %c0_41] : memref<5x20x16x128xf32, #tpu.memory_space<vmem>>, vector<1x20x16x128xf32>
    %36 = vector.shape_cast %35 : vector<1x20x16x128xf32> to vector<20x16x128xf32>
    %37 = vector.shape_cast %34 : vector<20x16x128xf32> to vector<1x20x16x128xf32>
    tpu.vector_store %arg7[%c3_38, %c0_39, %c0_40, %c0_41], %37 {strides = array<i32>} : memref<5x20x16x128xf32, #tpu.memory_space<vmem>>, vector<1x20x16x128xf32>,
    %c0_42 = arith.constant 0 : index
    %c4 = arith.constant 4 : index
    %c0_43 = arith.constant 0 : index
    %38 = vector.load %arg6[%c0_42, %c4, %c0_43] : memref<20x20x128xf32, #tpu.memory_space<vmem>>, vector<20x16x128xf32>
    %c4_44 = arith.constant 4 : index
    %c0_45 = arith.constant 0 : index
    %c0_46 = arith.constant 0 : index
    %c0_47 = arith.constant 0 : index
    %39 = vector.load %arg7[%c4_44, %c0_45, %c0_46, %c0_47] : memref<5x20x16x128xf32, #tpu.memory_space<vmem>>, vector<1x20x16x128xf32>
    %40 = vector.shape_cast %39 : vector<1x20x16x128xf32> to vector<20x16x128xf32>
    %41 = vector.shape_cast %38 : vector<20x16x128xf32> to vector<1x20x16x128xf32>
    tpu.vector_store %arg7[%c4_44, %c0_45, %c0_46, %c0_47], %41 {strides = array<i32>} : memref<5x20x16x128xf32, #tpu.memory_space<vmem>>, vector<1x20x16x128xf32>,
    %c0_48 = arith.constant 0 : index
    %c0_49 = arith.constant 0 : index
    %42 = vector.load %arg3[%c0_48, %c0_49] : memref<25x128xf32, #tpu.memory_space<vmem>>, vector<25x128xf32>
    %43 = vector.extract_strided_slice %42 {offsets = [0, 0], sizes = [1, 128], strides = [1, 1]} : vector<25x128xf32> to vector<1x128xf32>
    %44 = vector.shape_cast %43 : vector<1x128xf32> to vector<128xf32>
    %45 = vector.shape_cast %44 : vector<128xf32> to vector<1x1x128xf32>
    %46 = vector.extract_strided_slice %42 {offsets = [1, 0], sizes = [1, 128], strides = [1, 1]} : vector<25x128xf32> to vector<1x128xf32>
    %47 = vector.shape_cast %46 : vector<1x128xf32> to vector<128xf32>
    %48 = vector.shape_cast %47 : vector<128xf32> to vector<1x1x128xf32>
    %49 = vector.extract_strided_slice %42 {offsets = [2, 0], sizes = [1, 128], strides = [1, 1]} : vector<25x128xf32> to vector<1x128xf32>
    %50 = vector.shape_cast %49 : vector<1x128xf32> to vector<128xf32>
    %51 = vector.shape_cast %50 : vector<128xf32> to vector<1x1x128xf32>
    %52 = vector.extract_strided_slice %42 {offsets = [3, 0], sizes = [1, 128], strides = [1, 1]} : vector<25x128xf32> to vector<1x128xf32>
    %53 = vector.shape_cast %52 : vector<1x128xf32> to vector<128xf32>
    %54 = vector.shape_cast %53 : vector<128xf32> to vector<1x1x128xf32>
    %55 = vector.extract_strided_slice %42 {offsets = [4, 0], sizes = [1, 128], strides = [1, 1]} : vector<25x128xf32> to vector<1x128xf32>
    %56 = vector.shape_cast %55 : vector<1x128xf32> to vector<128xf32>
    %57 = vector.shape_cast %56 : vector<128xf32> to vector<1x1x128xf32>
    %58 = vector.extract_strided_slice %42 {offsets = [5, 0], sizes = [1, 128], strides = [1, 1]} : vector<25x128xf32> to vector<1x128xf32>
    %59 = vector.shape_cast %58 : vector<1x128xf32> to vector<128xf32>
    %60 = vector.shape_cast %59 : vector<128xf32> to vector<1x1x128xf32>
    %61 = vector.extract_strided_slice %42 {offsets = [6, 0], sizes = [1, 128], strides = [1, 1]} : vector<25x128xf32> to vector<1x128xf32>
    %62 = vector.shape_cast %61 : vector<1x128xf32> to vector<128xf32>
    %63 = vector.shape_cast %62 : vector<128xf32> to vector<1x1x128xf32>
    %64 = vector.extract_strided_slice %42 {offsets = [7, 0], sizes = [1, 128], strides = [1, 1]} : vector<25x128xf32> to vector<1x128xf32>
    %65 = vector.shape_cast %64 : vector<1x128xf32> to vector<128xf32>
    %66 = vector.shape_cast %65 : vector<128xf32> to vector<1x1x128xf32>
    %67 = vector.extract_strided_slice %42 {offsets = [8, 0], sizes = [1, 128], strides = [1, 1]} : vector<25x128xf32> to vector<1x128xf32>
    %68 = vector.shape_cast %67 : vector<1x128xf32> to vector<128xf32>
    %69 = vector.shape_cast %68 : vector<128xf32> to vector<1x1x128xf32>
    %70 = vector.extract_strided_slice %42 {offsets = [9, 0], sizes = [1, 128], strides = [1, 1]} : vector<25x128xf32> to vector<1x128xf32>
    %71 = vector.shape_cast %70 : vector<1x128xf32> to vector<128xf32>
    %72 = vector.shape_cast %71 : vector<128xf32> to vector<1x1x128xf32>
    %73 = vector.extract_strided_slice %42 {offsets = [10, 0], sizes = [1, 128], strides = [1, 1]} : vector<25x128xf32> to vector<1x128xf32>
    %74 = vector.shape_cast %73 : vector<1x128xf32> to vector<128xf32>
    %75 = vector.shape_cast %74 : vector<128xf32> to vector<1x1x128xf32>
    %76 = vector.extract_strided_slice %42 {offsets = [11, 0], sizes = [1, 128], strides = [1, 1]} : vector<25x128xf32> to vector<1x128xf32>
    %77 = vector.shape_cast %76 : vector<1x128xf32> to vector<128xf32>
    %78 = vector.shape_cast %77 : vector<128xf32> to vector<1x1x128xf32>
    %79 = vector.extract_strided_slice %42 {offsets = [12, 0], sizes = [1, 128], strides = [1, 1]} : vector<25x128xf32> to vector<1x128xf32>
    %80 = vector.shape_cast %79 : vector<1x128xf32> to vector<128xf32>
    %81 = vector.shape_cast %80 : vector<128xf32> to vector<1x1x128xf32>
    %82 = vector.extract_strided_slice %42 {offsets = [13, 0], sizes = [1, 128], strides = [1, 1]} : vector<25x128xf32> to vector<1x128xf32>
    %83 = vector.shape_cast %82 : vector<1x128xf32> to vector<128xf32>
    %84 = vector.shape_cast %83 : vector<128xf32> to vector<1x1x128xf32>
    %85 = vector.extract_strided_slice %42 {offsets = [14, 0], sizes = [1, 128], strides = [1, 1]} : vector<25x128xf32> to vector<1x128xf32>
    %86 = vector.shape_cast %85 : vector<1x128xf32> to vector<128xf32>
    %87 = vector.shape_cast %86 : vector<128xf32> to vector<1x1x128xf32>
    %88 = vector.extract_strided_slice %42 {offsets = [15, 0], sizes = [1, 128], strides = [1, 1]} : vector<25x128xf32> to vector<1x128xf32>
    %89 = vector.shape_cast %88 : vector<1x128xf32> to vector<128xf32>
    %90 = vector.shape_cast %89 : vector<128xf32> to vector<1x1x128xf32>
    %91 = vector.extract_strided_slice %42 {offsets = [16, 0], sizes = [1, 128], strides = [1, 1]} : vector<25x128xf32> to vector<1x128xf32>
    %92 = vector.shape_cast %91 : vector<1x128xf32> to vector<128xf32>
    %93 = vector.shape_cast %92 : vector<128xf32> to vector<1x1x128xf32>
    %94 = vector.extract_strided_slice %42 {offsets = [17, 0], sizes = [1, 128], strides = [1, 1]} : vector<25x128xf32> to vector<1x128xf32>
    %95 = vector.shape_cast %94 : vector<1x128xf32> to vector<128xf32>
    %96 = vector.shape_cast %95 : vector<128xf32> to vector<1x1x128xf32>
    %97 = vector.extract_strided_slice %42 {offsets = [18, 0], sizes = [1, 128], strides = [1, 1]} : vector<25x128xf32> to vector<1x128xf32>
    %98 = vector.shape_cast %97 : vector<1x128xf32> to vector<128xf32>
    %99 = vector.shape_cast %98 : vector<128xf32> to vector<1x1x128xf32>
    %100 = vector.extract_strided_slice %42 {offsets = [19, 0], sizes = [1, 128], strides = [1, 1]} : vector<25x128xf32> to vector<1x128xf32>
    %101 = vector.shape_cast %100 : vector<1x128xf32> to vector<128xf32>
    %102 = vector.shape_cast %101 : vector<128xf32> to vector<1x1x128xf32>
    %103 = vector.extract_strided_slice %42 {offsets = [20, 0], sizes = [1, 128], strides = [1, 1]} : vector<25x128xf32> to vector<1x128xf32>
    %104 = vector.shape_cast %103 : vector<1x128xf32> to vector<128xf32>
    %105 = vector.shape_cast %104 : vector<128xf32> to vector<1x1x128xf32>
    %106 = vector.extract_strided_slice %42 {offsets = [21, 0], sizes = [1, 128], strides = [1, 1]} : vector<25x128xf32> to vector<1x128xf32>
    %107 = vector.shape_cast %106 : vector<1x128xf32> to vector<128xf32>
    %108 = vector.shape_cast %107 : vector<128xf32> to vector<1x1x128xf32>
    %109 = vector.extract_strided_slice %42 {offsets = [22, 0], sizes = [1, 128], strides = [1, 1]} : vector<25x128xf32> to vector<1x128xf32>
    %110 = vector.shape_cast %109 : vector<1x128xf32> to vector<128xf32>
    %111 = vector.shape_cast %110 : vector<128xf32> to vector<1x1x128xf32>
    %112 = vector.extract_strided_slice %42 {offsets = [23, 0], sizes = [1, 128], strides = [1, 1]} : vector<25x128xf32> to vector<1x128xf32>
    %113 = vector.shape_cast %112 : vector<1x128xf32> to vector<128xf32>
    %114 = vector.shape_cast %113 : vector<128xf32> to vector<1x1x128xf32>
    %115 = vector.extract_strided_slice %42 {offsets = [24, 0], sizes = [1, 128], strides = [1, 1]} : vector<25x128xf32> to vector<1x128xf32>
    %116 = vector.shape_cast %115 : vector<1x128xf32> to vector<128xf32>
    %117 = vector.shape_cast %116 : vector<128xf32> to vector<1x1x128xf32>
    %cst_50 = arith.constant 0.000000e+00 : f32
    %118 = vector.broadcast %cst_50 : f32 to vector<1x128xf32>
    %cst_51 = arith.constant 0.000000e+00 : f32
    %119 = vector.broadcast %cst_51 : f32 to vector<1x128xf32>
    %cst_52 = arith.constant 0.000000e+00 : f32
    %120 = vector.broadcast %cst_52 : f32 to vector<8x16x128xf32>
    %c0_53 = arith.constant 0 : index
    %c0_54 = arith.constant 0 : index
    %c0_55 = arith.constant 0 : index
    %c0_56 = arith.constant 0 : index
    %121 = vector.load %arg7[%c0_53, %c0_54, %c0_55, %c0_56] : memref<5x20x16x128xf32, #tpu.memory_space<vmem>>, vector<1x8x16x128xf32>
    %122 = vector.shape_cast %121 : vector<1x8x16x128xf32> to vector<8x16x128xf32>
    %123 = vector.broadcast %45 : vector<1x1x128xf32> to vector<8x16x128xf32>
    %124 = arith.mulf %122, %123 : vector<8x16x128xf32>
    %125 = arith.addf %120, %124 : vector<8x16x128xf32>
    %c1_57 = arith.constant 1 : index
    %c0_58 = arith.constant 0 : index
    %c0_59 = arith.constant 0 : index
    %c0_60 = arith.constant 0 : index
    %126 = vector.load %arg7[%c1_57, %c0_58, %c0_59, %c0_60] : memref<5x20x16x128xf32, #tpu.memory_space<vmem>>, vector<1x8x16x128xf32>
    %127 = vector.shape_cast %126 : vector<1x8x16x128xf32> to vector<8x16x128xf32>
    %128 = vector.broadcast %48 : vector<1x1x128xf32> to vector<8x16x128xf32>
    %129 = arith.mulf %127, %128 : vector<8x16x128xf32>
    %130 = arith.addf %125, %129 : vector<8x16x128xf32>
    %c2_61 = arith.constant 2 : index
    %c0_62 = arith.constant 0 : index
    %c0_63 = arith.constant 0 : index
    %c0_64 = arith.constant 0 : index
    %131 = vector.load %arg7[%c2_61, %c0_62, %c0_63, %c0_64] : memref<5x20x16x128xf32, #tpu.memory_space<vmem>>, vector<1x8x16x128xf32>
    %132 = vector.shape_cast %131 : vector<1x8x16x128xf32> to vector<8x16x128xf32>
    %133 = vector.broadcast %51 : vector<1x1x128xf32> to vector<8x16x128xf32>
    %134 = arith.mulf %132, %133 : vector<8x16x128xf32>
    %135 = arith.addf %130, %134 : vector<8x16x128xf32>
    %c3_65 = arith.constant 3 : index
    %c0_66 = arith.constant 0 : index
    %c0_67 = arith.constant 0 : index
    %c0_68 = arith.constant 0 : index
    %136 = vector.load %arg7[%c3_65, %c0_66, %c0_67, %c0_68] : memref<5x20x16x128xf32, #tpu.memory_space<vmem>>, vector<1x8x16x128xf32>
    %137 = vector.shape_cast %136 : vector<1x8x16x128xf32> to vector<8x16x128xf32>
    %138 = vector.broadcast %54 : vector<1x1x128xf32> to vector<8x16x128xf32>
    %139 = arith.mulf %137, %138 : vector<8x16x128xf32>
    %140 = arith.addf %135, %139 : vector<8x16x128xf32>
    %c4_69 = arith.constant 4 : index
    %c0_70 = arith.constant 0 : index
    %c0_71 = arith.constant 0 : index
    %c0_72 = arith.constant 0 : index
    %141 = vector.load %arg7[%c4_69, %c0_70, %c0_71, %c0_72] : memref<5x20x16x128xf32, #tpu.memory_space<vmem>>, vector<1x8x16x128xf32>
    %142 = vector.shape_cast %141 : vector<1x8x16x128xf32> to vector<8x16x128xf32>
    %143 = vector.broadcast %57 : vector<1x1x128xf32> to vector<8x16x128xf32>
    %144 = arith.mulf %142, %143 : vector<8x16x128xf32>
    %145 = arith.addf %140, %144 : vector<8x16x128xf32>
    %c0_73 = arith.constant 0 : index
    %c1_74 = arith.constant 1 : index
    %c0_75 = arith.constant 0 : index
    %c0_76 = arith.constant 0 : index
    %146 = vector.load %arg7[%c0_73, %c1_74, %c0_75, %c0_76] : memref<5x20x16x128xf32, #tpu.memory_space<vmem>>, vector<1x8x16x128xf32>
    %147 = vector.shape_cast %146 : vector<1x8x16x128xf32> to vector<8x16x128xf32>
    %148 = vector.broadcast %60 : vector<1x1x128xf32> to vector<8x16x128xf32>
    %149 = arith.mulf %147, %148 : vector<8x16x128xf32>
    %150 = arith.addf %145, %149 : vector<8x16x128xf32>
    %c1_77 = arith.constant 1 : index
    %c1_78 = arith.constant 1 : index
    %c0_79 = arith.constant 0 : index
    %c0_80 = arith.constant 0 : index
    %151 = vector.load %arg7[%c1_77, %c1_78, %c0_79, %c0_80] : memref<5x20x16x128xf32, #tpu.memory_space<vmem>>, vector<1x8x16x128xf32>
    %152 = vector.shape_cast %151 : vector<1x8x16x128xf32> to vector<8x16x128xf32>
    %153 = vector.broadcast %63 : vector<1x1x128xf32> to vector<8x16x128xf32>
    %154 = arith.mulf %152, %153 : vector<8x16x128xf32>
    %155 = arith.addf %150, %154 : vector<8x16x128xf32>
    %c2_81 = arith.constant 2 : index
    %c1_82 = arith.constant 1 : index
    %c0_83 = arith.constant 0 : index
    %c0_84 = arith.constant 0 : index
    %156 = vector.load %arg7[%c2_81, %c1_82, %c0_83, %c0_84] : memref<5x20x16x128xf32, #tpu.memory_space<vmem>>, vector<1x8x16x128xf32>
    %157 = vector.shape_cast %156 : vector<1x8x16x128xf32> to vector<8x16x128xf32>
    %158 = vector.broadcast %66 : vector<1x1x128xf32> to vector<8x16x128xf32>
    %159 = arith.mulf %157, %158 : vector<8x16x128xf32>
    %160 = arith.addf %155, %159 : vector<8x16x128xf32>
    %c3_85 = arith.constant 3 : index
    %c1_86 = arith.constant 1 : index
    %c0_87 = arith.constant 0 : index
    %c0_88 = arith.constant 0 : index
    %161 = vector.load %arg7[%c3_85, %c1_86, %c0_87, %c0_88] : memref<5x20x16x128xf32, #tpu.memory_space<vmem>>, vector<1x8x16x128xf32>
    %162 = vector.shape_cast %161 : vector<1x8x16x128xf32> to vector<8x16x128xf32>
    %163 = vector.broadcast %69 : vector<1x1x128xf32> to vector<8x16x128xf32>
    %164 = arith.mulf %162, %163 : vector<8x16x128xf32>
    %165 = arith.addf %160, %164 : vector<8x16x128xf32>
    %c4_89 = arith.constant 4 : index
    %c1_90 = arith.constant 1 : index
    %c0_91 = arith.constant 0 : index
    %c0_92 = arith.constant 0 : index
    %166 = vector.load %arg7[%c4_89, %c1_90, %c0_91, %c0_92] : memref<5x20x16x128xf32, #tpu.memory_space<vmem>>, vector<1x8x16x128xf32>
    %167 = vector.shape_cast %166 : vector<1x8x16x128xf32> to vector<8x16x128xf32>
    %168 = vector.broadcast %72 : vector<1x1x128xf32> to vector<8x16x128xf32>
    %169 = arith.mulf %167, %168 : vector<8x16x128xf32>
    %170 = arith.addf %165, %169 : vector<8x16x128xf32>
    %c0_93 = arith.constant 0 : index
    %c2_94 = arith.constant 2 : index
    %c0_95 = arith.constant 0 : index
    %c0_96 = arith.constant 0 : index
    %171 = vector.load %arg7[%c0_93, %c2_94, %c0_95, %c0_96] : memref<5x20x16x128xf32, #tpu.memory_space<vmem>>, vector<1x8x16x128xf32>
    %172 = vector.shape_cast %171 : vector<1x8x16x128xf32> to vector<8x16x128xf32>
    %173 = vector.broadcast %75 : vector<1x1x128xf32> to vector<8x16x128xf32>
    %174 = arith.mulf %172, %173 : vector<8x16x128xf32>
    %175 = arith.addf %170, %174 : vector<8x16x128xf32>
    %c1_97 = arith.constant 1 : index
    %c2_98 = arith.constant 2 : index
    %c0_99 = arith.constant 0 : index
    %c0_100 = arith.constant 0 : index
    %176 = vector.load %arg7[%c1_97, %c2_98, %c0_99, %c0_100] : memref<5x20x16x128xf32, #tpu.memory_space<vmem>>, vector<1x8x16x128xf32>
    %177 = vector.shape_cast %176 : vector<1x8x16x128xf32> to vector<8x16x128xf32>
    %178 = vector.broadcast %78 : vector<1x1x128xf32> to vector<8x16x128xf32>
    %179 = arith.mulf %177, %178 : vector<8x16x128xf32>
    %180 = arith.addf %175, %179 : vector<8x16x128xf32>
    %c2_101 = arith.constant 2 : index
    %c2_102 = arith.constant 2 : index
    %c0_103 = arith.constant 0 : index
    %c0_104 = arith.constant 0 : index
    %181 = vector.load %arg7[%c2_101, %c2_102, %c0_103, %c0_104] : memref<5x20x16x128xf32, #tpu.memory_space<vmem>>, vector<1x8x16x128xf32>
    %182 = vector.shape_cast %181 : vector<1x8x16x128xf32> to vector<8x16x128xf32>
    %183 = vector.broadcast %81 : vector<1x1x128xf32> to vector<8x16x128xf32>
    %184 = arith.mulf %182, %183 : vector<8x16x128xf32>
    %185 = arith.addf %180, %184 : vector<8x16x128xf32>
    %c3_105 = arith.constant 3 : index
    %c2_106 = arith.constant 2 : index
    %c0_107 = arith.constant 0 : index
    %c0_108 = arith.constant 0 : index
    %186 = vector.load %arg7[%c3_105, %c2_106, %c0_107, %c0_108] : memref<5x20x16x128xf32, #tpu.memory_space<vmem>>, vector<1x8x16x128xf32>
    %187 = vector.shape_cast %186 : vector<1x8x16x128xf32> to vector<8x16x128xf32>
    %188 = vector.broadcast %84 : vector<1x1x128xf32> to vector<8x16x128xf32>
    %189 = arith.mulf %187, %188 : vector<8x16x128xf32>
    %190 = arith.addf %185, %189 : vector<8x16x128xf32>
    %c4_109 = arith.constant 4 : index
    %c2_110 = arith.constant 2 : index
    %c0_111 = arith.constant 0 : index
    %c0_112 = arith.constant 0 : index
    %191 = vector.load %arg7[%c4_109, %c2_110, %c0_111, %c0_112] : memref<5x20x16x128xf32, #tpu.memory_space<vmem>>, vector<1x8x16x128xf32>
    %192 = vector.shape_cast %191 : vector<1x8x16x128xf32> to vector<8x16x128xf32>
    %193 = vector.broadcast %87 : vector<1x1x128xf32> to vector<8x16x128xf32>
    %194 = arith.mulf %192, %193 : vector<8x16x128xf32>
    %195 = arith.addf %190, %194 : vector<8x16x128xf32>
    %c0_113 = arith.constant 0 : index
    %c3_114 = arith.constant 3 : index
    %c0_115 = arith.constant 0 : index
    %c0_116 = arith.constant 0 : index
    %196 = vector.load %arg7[%c0_113, %c3_114, %c0_115, %c0_116] : memref<5x20x16x128xf32, #tpu.memory_space<vmem>>, vector<1x8x16x128xf32>
    %197 = vector.shape_cast %196 : vector<1x8x16x128xf32> to vector<8x16x128xf32>
    %198 = vector.broadcast %90 : vector<1x1x128xf32> to vector<8x16x128xf32>
    %199 = arith.mulf %197, %198 : vector<8x16x128xf32>
    %200 = arith.addf %195, %199 : vector<8x16x128xf32>
    %c1_117 = arith.constant 1 : index
    %c3_118 = arith.constant 3 : index
    %c0_119 = arith.constant 0 : index
    %c0_120 = arith.constant 0 : index
    %201 = vector.load %arg7[%c1_117, %c3_118, %c0_119, %c0_120] : memref<5x20x16x128xf32, #tpu.memory_space<vmem>>, vector<1x8x16x128xf32>
    %202 = vector.shape_cast %201 : vector<1x8x16x128xf32> to vector<8x16x128xf32>
    %203 = vector.broadcast %93 : vector<1x1x128xf32> to vector<8x16x128xf32>
    %204 = arith.mulf %202, %203 : vector<8x16x128xf32>
    %205 = arith.addf %200, %204 : vector<8x16x128xf32>
    %c2_121 = arith.constant 2 : index
    %c3_122 = arith.constant 3 : index
    %c0_123 = arith.constant 0 : index
    %c0_124 = arith.constant 0 : index
    %206 = vector.load %arg7[%c2_121, %c3_122, %c0_123, %c0_124] : memref<5x20x16x128xf32, #tpu.memory_space<vmem>>, vector<1x8x16x128xf32>
    %207 = vector.shape_cast %206 : vector<1x8x16x128xf32> to vector<8x16x128xf32>
    %208 = vector.broadcast %96 : vector<1x1x128xf32> to vector<8x16x128xf32>
    %209 = arith.mulf %207, %208 : vector<8x16x128xf32>
    %210 = arith.addf %205, %209 : vector<8x16x128xf32>
    %c3_125 = arith.constant 3 : index
    %c3_126 = arith.constant 3 : index
    %c0_127 = arith.constant 0 : index
    %c0_128 = arith.constant 0 : index
    %211 = vector.load %arg7[%c3_125, %c3_126, %c0_127, %c0_128] : memref<5x20x16x128xf32, #tpu.memory_space<vmem>>, vector<1x8x16x128xf32>
    %212 = vector.shape_cast %211 : vector<1x8x16x128xf32> to vector<8x16x128xf32>
    %213 = vector.broadcast %99 : vector<1x1x128xf32> to vector<8x16x128xf32>
    %214 = arith.mulf %212, %213 : vector<8x16x128xf32>
    %215 = arith.addf %210, %214 : vector<8x16x128xf32>
    %c4_129 = arith.constant 4 : index
    %c3_130 = arith.constant 3 : index
    %c0_131 = arith.constant 0 : index
    %c0_132 = arith.constant 0 : index
    %216 = vector.load %arg7[%c4_129, %c3_130, %c0_131, %c0_132] : memref<5x20x16x128xf32, #tpu.memory_space<vmem>>, vector<1x8x16x128xf32>
    %217 = vector.shape_cast %216 : vector<1x8x16x128xf32> to vector<8x16x128xf32>
    %218 = vector.broadcast %102 : vector<1x1x128xf32> to vector<8x16x128xf32>
    %219 = arith.mulf %217, %218 : vector<8x16x128xf32>
    %220 = arith.addf %215, %219 : vector<8x16x128xf32>
    %c0_133 = arith.constant 0 : index
    %c4_134 = arith.constant 4 : index
    %c0_135 = arith.constant 0 : index
    %c0_136 = arith.constant 0 : index
    %221 = vector.load %arg7[%c0_133, %c4_134, %c0_135, %c0_136] : memref<5x20x16x128xf32, #tpu.memory_space<vmem>>, vector<1x8x16x128xf32>
    %222 = vector.shape_cast %221 : vector<1x8x16x128xf32> to vector<8x16x128xf32>
    %223 = vector.broadcast %105 : vector<1x1x128xf32> to vector<8x16x128xf32>
    %224 = arith.mulf %222, %223 : vector<8x16x128xf32>
    %225 = arith.addf %220, %224 : vector<8x16x128xf32>
    %c1_137 = arith.constant 1 : index
    %c4_138 = arith.constant 4 : index
    %c0_139 = arith.constant 0 : index
    %c0_140 = arith.constant 0 : index
    %226 = vector.load %arg7[%c1_137, %c4_138, %c0_139, %c0_140] : memref<5x20x16x128xf32, #tpu.memory_space<vmem>>, vector<1x8x16x128xf32>
    %227 = vector.shape_cast %226 : vector<1x8x16x128xf32> to vector<8x16x128xf32>
    %228 = vector.broadcast %108 : vector<1x1x128xf32> to vector<8x16x128xf32>
    %229 = arith.mulf %227, %228 : vector<8x16x128xf32>
    %230 = arith.addf %225, %229 : vector<8x16x128xf32>
    %c2_141 = arith.constant 2 : index
    %c4_142 = arith.constant 4 : index
    %c0_143 = arith.constant 0 : index
    %c0_144 = arith.constant 0 : index
    %231 = vector.load %arg7[%c2_141, %c4_142, %c0_143, %c0_144] : memref<5x20x16x128xf32, #tpu.memory_space<vmem>>, vector<1x8x16x128xf32>
    %232 = vector.shape_cast %231 : vector<1x8x16x128xf32> to vector<8x16x128xf32>
    %233 = vector.broadcast %111 : vector<1x1x128xf32> to vector<8x16x128xf32>
    %234 = arith.mulf %232, %233 : vector<8x16x128xf32>
    %235 = arith.addf %230, %234 : vector<8x16x128xf32>
    %c3_145 = arith.constant 3 : index
    %c4_146 = arith.constant 4 : index
    %c0_147 = arith.constant 0 : index
    %c0_148 = arith.constant 0 : index
    %236 = vector.load %arg7[%c3_145, %c4_146, %c0_147, %c0_148] : memref<5x20x16x128xf32, #tpu.memory_space<vmem>>, vector<1x8x16x128xf32>
    %237 = vector.shape_cast %236 : vector<1x8x16x128xf32> to vector<8x16x128xf32>
    %238 = vector.broadcast %114 : vector<1x1x128xf32> to vector<8x16x128xf32>
    %239 = arith.mulf %237, %238 : vector<8x16x128xf32>
    %240 = arith.addf %235, %239 : vector<8x16x128xf32>
    %c4_149 = arith.constant 4 : index
    %c4_150 = arith.constant 4 : index
    %c0_151 = arith.constant 0 : index
    %c0_152 = arith.constant 0 : index
    %241 = vector.load %arg7[%c4_149, %c4_150, %c0_151, %c0_152] : memref<5x20x16x128xf32, #tpu.memory_space<vmem>>, vector<1x8x16x128xf32>
    %242 = vector.shape_cast %241 : vector<1x8x16x128xf32> to vector<8x16x128xf32>
    %243 = vector.broadcast %117 : vector<1x1x128xf32> to vector<8x16x128xf32>
    %244 = arith.mulf %242, %243 : vector<8x16x128xf32>
    %245 = arith.addf %240, %244 : vector<8x16x128xf32>
    %246 = vector.shape_cast %245 : vector<8x16x128xf32> to vector<128x128xf32>
    %c0_153 = arith.constant 0 : index
    %c0_154 = arith.constant 0 : index
    %247 = vector.load %arg4[%c0_153, %c0_154] : memref<256x128xf32, #tpu.memory_space<vmem>>, vector<128x128xf32>
    tpu.vector_store %arg4[%c0_153, %c0_154], %246 {strides = array<i32>} : memref<256x128xf32, #tpu.memory_space<vmem>>, vector<128x128xf32>,
    %cst_155 = arith.constant dense<0.000000e+00> : vector<128xf32>
    %248 = vector.multi_reduction <add>, %246, %cst_155 [0] : vector<128x128xf32> to vector<128xf32>
    %249 = vector.shape_cast %248 : vector<128xf32> to vector<1x128xf32>
    %250 = arith.addf %118, %249 : vector<1x128xf32>
    %251 = arith.mulf %246, %246 : vector<128x128xf32>
    %cst_156 = arith.constant dense<0.000000e+00> : vector<128xf32>
    %252 = vector.multi_reduction <add>, %251, %cst_156 [0] : vector<128x128xf32> to vector<128xf32>
    %253 = vector.shape_cast %252 : vector<128xf32> to vector<1x128xf32>
    %254 = arith.addf %119, %253 : vector<1x128xf32>
    %cst_157 = arith.constant 0.000000e+00 : f32
    %255 = vector.broadcast %cst_157 : f32 to vector<8x16x128xf32>
    %c0_158 = arith.constant 0 : index
    %c8 = arith.constant 8 : index
    %c0_159 = arith.constant 0 : index
    %c0_160 = arith.constant 0 : index
    %256 = vector.load %arg7[%c0_158, %c8, %c0_159, %c0_160] : memref<5x20x16x128xf32, #tpu.memory_space<vmem>>, vector<1x8x16x128xf32>
    %257 = vector.shape_cast %256 : vector<1x8x16x128xf32> to vector<8x16x128xf32>
    %258 = vector.broadcast %45 : vector<1x1x128xf32> to vector<8x16x128xf32>
    %259 = arith.mulf %257, %258 : vector<8x16x128xf32>
    %260 = arith.addf %255, %259 : vector<8x16x128xf32>
    %c1_161 = arith.constant 1 : index
    %c8_162 = arith.constant 8 : index
    %c0_163 = arith.constant 0 : index
    %c0_164 = arith.constant 0 : index
    %261 = vector.load %arg7[%c1_161, %c8_162, %c0_163, %c0_164] : memref<5x20x16x128xf32, #tpu.memory_space<vmem>>, vector<1x8x16x128xf32>
    %262 = vector.shape_cast %261 : vector<1x8x16x128xf32> to vector<8x16x128xf32>
    %263 = vector.broadcast %48 : vector<1x1x128xf32> to vector<8x16x128xf32>
    %264 = arith.mulf %262, %263 : vector<8x16x128xf32>
    %265 = arith.addf %260, %264 : vector<8x16x128xf32>
    %c2_165 = arith.constant 2 : index
    %c8_166 = arith.constant 8 : index
    %c0_167 = arith.constant 0 : index
    %c0_168 = arith.constant 0 : index
    %266 = vector.load %arg7[%c2_165, %c8_166, %c0_167, %c0_168] : memref<5x20x16x128xf32, #tpu.memory_space<vmem>>, vector<1x8x16x128xf32>
    %267 = vector.shape_cast %266 : vector<1x8x16x128xf32> to vector<8x16x128xf32>
    %268 = vector.broadcast %51 : vector<1x1x128xf32> to vector<8x16x128xf32>
    %269 = arith.mulf %267, %268 : vector<8x16x128xf32>
    %270 = arith.addf %265, %269 : vector<8x16x128xf32>
    %c3_169 = arith.constant 3 : index
    %c8_170 = arith.constant 8 : index
    %c0_171 = arith.constant 0 : index
    %c0_172 = arith.constant 0 : index
    %271 = vector.load %arg7[%c3_169, %c8_170, %c0_171, %c0_172] : memref<5x20x16x128xf32, #tpu.memory_space<vmem>>, vector<1x8x16x128xf32>
    %272 = vector.shape_cast %271 : vector<1x8x16x128xf32> to vector<8x16x128xf32>
    %273 = vector.broadcast %54 : vector<1x1x128xf32> to vector<8x16x128xf32>
    %274 = arith.mulf %272, %273 : vector<8x16x128xf32>
    %275 = arith.addf %270, %274 : vector<8x16x128xf32>
    %c4_173 = arith.constant 4 : index
    %c8_174 = arith.constant 8 : index
    %c0_175 = arith.constant 0 : index
    %c0_176 = arith.constant 0 : index
    %276 = vector.load %arg7[%c4_173, %c8_174, %c0_175, %c0_176] : memref<5x20x16x128xf32, #tpu.memory_space<vmem>>, vector<1x8x16x128xf32>
    %277 = vector.shape_cast %276 : vector<1x8x16x128xf32> to vector<8x16x128xf32>
    %278 = vector.broadcast %57 : vector<1x1x128xf32> to vector<8x16x128xf32>
    %279 = arith.mulf %277, %278 : vector<8x16x128xf32>
    %280 = arith.addf %275, %279 : vector<8x16x128xf32>
    %c0_177 = arith.constant 0 : index
    %c9 = arith.constant 9 : index
    %c0_178 = arith.constant 0 : index
    %c0_179 = arith.constant 0 : index
    %281 = vector.load %arg7[%c0_177, %c9, %c0_178, %c0_179] : memref<5x20x16x128xf32, #tpu.memory_space<vmem>>, vector<1x8x16x128xf32>
    %282 = vector.shape_cast %281 : vector<1x8x16x128xf32> to vector<8x16x128xf32>
    %283 = vector.broadcast %60 : vector<1x1x128xf32> to vector<8x16x128xf32>
    %284 = arith.mulf %282, %283 : vector<8x16x128xf32>
    %285 = arith.addf %280, %284 : vector<8x16x128xf32>
    %c1_180 = arith.constant 1 : index
    %c9_181 = arith.constant 9 : index
    %c0_182 = arith.constant 0 : index
    %c0_183 = arith.constant 0 : index
    %286 = vector.load %arg7[%c1_180, %c9_181, %c0_182, %c0_183] : memref<5x20x16x128xf32, #tpu.memory_space<vmem>>, vector<1x8x16x128xf32>
    %287 = vector.shape_cast %286 : vector<1x8x16x128xf32> to vector<8x16x128xf32>
    %288 = vector.broadcast %63 : vector<1x1x128xf32> to vector<8x16x128xf32>
    %289 = arith.mulf %287, %288 : vector<8x16x128xf32>
    %290 = arith.addf %285, %289 : vector<8x16x128xf32>
    %c2_184 = arith.constant 2 : index
    %c9_185 = arith.constant 9 : index
    %c0_186 = arith.constant 0 : index
    %c0_187 = arith.constant 0 : index
    %291 = vector.load %arg7[%c2_184, %c9_185, %c0_186, %c0_187] : memref<5x20x16x128xf32, #tpu.memory_space<vmem>>, vector<1x8x16x128xf32>
    %292 = vector.shape_cast %291 : vector<1x8x16x128xf32> to vector<8x16x128xf32>
    %293 = vector.broadcast %66 : vector<1x1x128xf32> to vector<8x16x128xf32>
    %294 = arith.mulf %292, %293 : vector<8x16x128xf32>
    %295 = arith.addf %290, %294 : vector<8x16x128xf32>
    %c3_188 = arith.constant 3 : index
    %c9_189 = arith.constant 9 : index
    %c0_190 = arith.constant 0 : index
    %c0_191 = arith.constant 0 : index
    %296 = vector.load %arg7[%c3_188, %c9_189, %c0_190, %c0_191] : memref<5x20x16x128xf32, #tpu.memory_space<vmem>>, vector<1x8x16x128xf32>
    %297 = vector.shape_cast %296 : vector<1x8x16x128xf32> to vector<8x16x128xf32>
    %298 = vector.broadcast %69 : vector<1x1x128xf32> to vector<8x16x128xf32>
    %299 = arith.mulf %297, %298 : vector<8x16x128xf32>
    %300 = arith.addf %295, %299 : vector<8x16x128xf32>
    %c4_192 = arith.constant 4 : index
    %c9_193 = arith.constant 9 : index
    %c0_194 = arith.constant 0 : index
    %c0_195 = arith.constant 0 : index
    %301 = vector.load %arg7[%c4_192, %c9_193, %c0_194, %c0_195] : memref<5x20x16x128xf32, #tpu.memory_space<vmem>>, vector<1x8x16x128xf32>
    %302 = vector.shape_cast %301 : vector<1x8x16x128xf32> to vector<8x16x128xf32>
    %303 = vector.broadcast %72 : vector<1x1x128xf32> to vector<8x16x128xf32>
    %304 = arith.mulf %302, %303 : vector<8x16x128xf32>
    %305 = arith.addf %300, %304 : vector<8x16x128xf32>
    %c0_196 = arith.constant 0 : index
    %c10 = arith.constant 10 : index
    %c0_197 = arith.constant 0 : index
    %c0_198 = arith.constant 0 : index
    %306 = vector.load %arg7[%c0_196, %c10, %c0_197, %c0_198] : memref<5x20x16x128xf32, #tpu.memory_space<vmem>>, vector<1x8x16x128xf32>
    %307 = vector.shape_cast %306 : vector<1x8x16x128xf32> to vector<8x16x128xf32>
    %308 = vector.broadcast %75 : vector<1x1x128xf32> to vector<8x16x128xf32>
    %309 = arith.mulf %307, %308 : vector<8x16x128xf32>
    %310 = arith.addf %305, %309 : vector<8x16x128xf32>
    %c1_199 = arith.constant 1 : index
    %c10_200 = arith.constant 10 : index
    %c0_201 = arith.constant 0 : index
    %c0_202 = arith.constant 0 : index
    %311 = vector.load %arg7[%c1_199, %c10_200, %c0_201, %c0_202] : memref<5x20x16x128xf32, #tpu.memory_space<vmem>>, vector<1x8x16x128xf32>
    %312 = vector.shape_cast %311 : vector<1x8x16x128xf32> to vector<8x16x128xf32>
    %313 = vector.broadcast %78 : vector<1x1x128xf32> to vector<8x16x128xf32>
    %314 = arith.mulf %312, %313 : vector<8x16x128xf32>
    %315 = arith.addf %310, %314 : vector<8x16x128xf32>
    %c2_203 = arith.constant 2 : index
    %c10_204 = arith.constant 10 : index
    %c0_205 = arith.constant 0 : index
    %c0_206 = arith.constant 0 : index
    %316 = vector.load %arg7[%c2_203, %c10_204, %c0_205, %c0_206] : memref<5x20x16x128xf32, #tpu.memory_space<vmem>>, vector<1x8x16x128xf32>
    %317 = vector.shape_cast %316 : vector<1x8x16x128xf32> to vector<8x16x128xf32>
    %318 = vector.broadcast %81 : vector<1x1x128xf32> to vector<8x16x128xf32>
    %319 = arith.mulf %317, %318 : vector<8x16x128xf32>
    %320 = arith.addf %315, %319 : vector<8x16x128xf32>
    %c3_207 = arith.constant 3 : index
    %c10_208 = arith.constant 10 : index
    %c0_209 = arith.constant 0 : index
    %c0_210 = arith.constant 0 : index
    %321 = vector.load %arg7[%c3_207, %c10_208, %c0_209, %c0_210] : memref<5x20x16x128xf32, #tpu.memory_space<vmem>>, vector<1x8x16x128xf32>
    %322 = vector.shape_cast %321 : vector<1x8x16x128xf32> to vector<8x16x128xf32>
    %323 = vector.broadcast %84 : vector<1x1x128xf32> to vector<8x16x128xf32>
    %324 = arith.mulf %322, %323 : vector<8x16x128xf32>
    %325 = arith.addf %320, %324 : vector<8x16x128xf32>
    %c4_211 = arith.constant 4 : index
    %c10_212 = arith.constant 10 : index
    %c0_213 = arith.constant 0 : index
    %c0_214 = arith.constant 0 : index
    %326 = vector.load %arg7[%c4_211, %c10_212, %c0_213, %c0_214] : memref<5x20x16x128xf32, #tpu.memory_space<vmem>>, vector<1x8x16x128xf32>
    %327 = vector.shape_cast %326 : vector<1x8x16x128xf32> to vector<8x16x128xf32>
    %328 = vector.broadcast %87 : vector<1x1x128xf32> to vector<8x16x128xf32>
    %329 = arith.mulf %327, %328 : vector<8x16x128xf32>
    %330 = arith.addf %325, %329 : vector<8x16x128xf32>
    %c0_215 = arith.constant 0 : index
    %c11 = arith.constant 11 : index
    %c0_216 = arith.constant 0 : index
    %c0_217 = arith.constant 0 : index
    %331 = vector.load %arg7[%c0_215, %c11, %c0_216, %c0_217] : memref<5x20x16x128xf32, #tpu.memory_space<vmem>>, vector<1x8x16x128xf32>
    %332 = vector.shape_cast %331 : vector<1x8x16x128xf32> to vector<8x16x128xf32>
    %333 = vector.broadcast %90 : vector<1x1x128xf32> to vector<8x16x128xf32>
    %334 = arith.mulf %332, %333 : vector<8x16x128xf32>
    %335 = arith.addf %330, %334 : vector<8x16x128xf32>
    %c1_218 = arith.constant 1 : index
    %c11_219 = arith.constant 11 : index
    %c0_220 = arith.constant 0 : index
    %c0_221 = arith.constant 0 : index
    %336 = vector.load %arg7[%c1_218, %c11_219, %c0_220, %c0_221] : memref<5x20x16x128xf32, #tpu.memory_space<vmem>>, vector<1x8x16x128xf32>
    %337 = vector.shape_cast %336 : vector<1x8x16x128xf32> to vector<8x16x128xf32>
    %338 = vector.broadcast %93 : vector<1x1x128xf32> to vector<8x16x128xf32>
    %339 = arith.mulf %337, %338 : vector<8x16x128xf32>
    %340 = arith.addf %335, %339 : vector<8x16x128xf32>
    %c2_222 = arith.constant 2 : index
    %c11_223 = arith.constant 11 : index
    %c0_224 = arith.constant 0 : index
    %c0_225 = arith.constant 0 : index
    %341 = vector.load %arg7[%c2_222, %c11_223, %c0_224, %c0_225] : memref<5x20x16x128xf32, #tpu.memory_space<vmem>>, vector<1x8x16x128xf32>
    %342 = vector.shape_cast %341 : vector<1x8x16x128xf32> to vector<8x16x128xf32>
    %343 = vector.broadcast %96 : vector<1x1x128xf32> to vector<8x16x128xf32>
    %344 = arith.mulf %342, %343 : vector<8x16x128xf32>
    %345 = arith.addf %340, %344 : vector<8x16x128xf32>
    %c3_226 = arith.constant 3 : index
    %c11_227 = arith.constant 11 : index
    %c0_228 = arith.constant 0 : index
    %c0_229 = arith.constant 0 : index
    %346 = vector.load %arg7[%c3_226, %c11_227, %c0_228, %c0_229] : memref<5x20x16x128xf32, #tpu.memory_space<vmem>>, vector<1x8x16x128xf32>
    %347 = vector.shape_cast %346 : vector<1x8x16x128xf32> to vector<8x16x128xf32>
    %348 = vector.broadcast %99 : vector<1x1x128xf32> to vector<8x16x128xf32>
    %349 = arith.mulf %347, %348 : vector<8x16x128xf32>
    %350 = arith.addf %345, %349 : vector<8x16x128xf32>
    %c4_230 = arith.constant 4 : index
    %c11_231 = arith.constant 11 : index
    %c0_232 = arith.constant 0 : index
    %c0_233 = arith.constant 0 : index
    %351 = vector.load %arg7[%c4_230, %c11_231, %c0_232, %c0_233] : memref<5x20x16x128xf32, #tpu.memory_space<vmem>>, vector<1x8x16x128xf32>
    %352 = vector.shape_cast %351 : vector<1x8x16x128xf32> to vector<8x16x128xf32>
    %353 = vector.broadcast %102 : vector<1x1x128xf32> to vector<8x16x128xf32>
    %354 = arith.mulf %352, %353 : vector<8x16x128xf32>
    %355 = arith.addf %350, %354 : vector<8x16x128xf32>
    %c0_234 = arith.constant 0 : index
    %c12 = arith.constant 12 : index
    %c0_235 = arith.constant 0 : index
    %c0_236 = arith.constant 0 : index
    %356 = vector.load %arg7[%c0_234, %c12, %c0_235, %c0_236] : memref<5x20x16x128xf32, #tpu.memory_space<vmem>>, vector<1x8x16x128xf32>
    %357 = vector.shape_cast %356 : vector<1x8x16x128xf32> to vector<8x16x128xf32>
    %358 = vector.broadcast %105 : vector<1x1x128xf32> to vector<8x16x128xf32>
    %359 = arith.mulf %357, %358 : vector<8x16x128xf32>
    %360 = arith.addf %355, %359 : vector<8x16x128xf32>
    %c1_237 = arith.constant 1 : index
    %c12_238 = arith.constant 12 : index
    %c0_239 = arith.constant 0 : index
    %c0_240 = arith.constant 0 : index
    %361 = vector.load %arg7[%c1_237, %c12_238, %c0_239, %c0_240] : memref<5x20x16x128xf32, #tpu.memory_space<vmem>>, vector<1x8x16x128xf32>
    %362 = vector.shape_cast %361 : vector<1x8x16x128xf32> to vector<8x16x128xf32>
    %363 = vector.broadcast %108 : vector<1x1x128xf32> to vector<8x16x128xf32>
    %364 = arith.mulf %362, %363 : vector<8x16x128xf32>
    %365 = arith.addf %360, %364 : vector<8x16x128xf32>
    %c2_241 = arith.constant 2 : index
    %c12_242 = arith.constant 12 : index
    %c0_243 = arith.constant 0 : index
    %c0_244 = arith.constant 0 : index
    %366 = vector.load %arg7[%c2_241, %c12_242, %c0_243, %c0_244] : memref<5x20x16x128xf32, #tpu.memory_space<vmem>>, vector<1x8x16x128xf32>
    %367 = vector.shape_cast %366 : vector<1x8x16x128xf32> to vector<8x16x128xf32>
    %368 = vector.broadcast %111 : vector<1x1x128xf32> to vector<8x16x128xf32>
    %369 = arith.mulf %367, %368 : vector<8x16x128xf32>
    %370 = arith.addf %365, %369 : vector<8x16x128xf32>
    %c3_245 = arith.constant 3 : index
    %c12_246 = arith.constant 12 : index
    %c0_247 = arith.constant 0 : index
    %c0_248 = arith.constant 0 : index
    %371 = vector.load %arg7[%c3_245, %c12_246, %c0_247, %c0_248] : memref<5x20x16x128xf32, #tpu.memory_space<vmem>>, vector<1x8x16x128xf32>
    %372 = vector.shape_cast %371 : vector<1x8x16x128xf32> to vector<8x16x128xf32>
    %373 = vector.broadcast %114 : vector<1x1x128xf32> to vector<8x16x128xf32>
    %374 = arith.mulf %372, %373 : vector<8x16x128xf32>
    %375 = arith.addf %370, %374 : vector<8x16x128xf32>
    %c4_249 = arith.constant 4 : index
    %c12_250 = arith.constant 12 : index
    %c0_251 = arith.constant 0 : index
    %c0_252 = arith.constant 0 : index
    %376 = vector.load %arg7[%c4_249, %c12_250, %c0_251, %c0_252] : memref<5x20x16x128xf32, #tpu.memory_space<vmem>>, vector<1x8x16x128xf32>
    %377 = vector.shape_cast %376 : vector<1x8x16x128xf32> to vector<8x16x128xf32>
    %378 = vector.broadcast %117 : vector<1x1x128xf32> to vector<8x16x128xf32>
    %379 = arith.mulf %377, %378 : vector<8x16x128xf32>
    %380 = arith.addf %375, %379 : vector<8x16x128xf32>
    %381 = vector.shape_cast %380 : vector<8x16x128xf32> to vector<128x128xf32>
    %c128 = arith.constant 128 : index
    %c0_253 = arith.constant 0 : index
    %382 = vector.load %arg4[%c128, %c0_253] : memref<256x128xf32, #tpu.memory_space<vmem>>, vector<128x128xf32>
    tpu.vector_store %arg4[%c128, %c0_253], %381 {strides = array<i32>} : memref<256x128xf32, #tpu.memory_space<vmem>>, vector<128x128xf32>,
    %cst_254 = arith.constant dense<0.000000e+00> : vector<128xf32>
    %383 = vector.multi_reduction <add>, %381, %cst_254 [0] : vector<128x128xf32> to vector<128xf32>
    %384 = vector.shape_cast %383 : vector<128xf32> to vector<1x128xf32>
    %385 = arith.addf %250, %384 : vector<1x128xf32>
    %386 = arith.mulf %381, %381 : vector<128x128xf32>
    %cst_255 = arith.constant dense<0.000000e+00> : vector<128xf32>
    %387 = vector.multi_reduction <add>, %386, %cst_255 [0] : vector<128x128xf32> to vector<128xf32>
    %388 = vector.shape_cast %387 : vector<128xf32> to vector<1x128xf32>
    %389 = arith.addf %254, %388 : vector<1x128xf32>
    %c0_256 = arith.constant 0 : index
    %c0_257 = arith.constant 0 : index
    %c0_258 = arith.constant 0 : index
    %390 = vector.load %arg5[%c0_256, %c0_257, %c0_258] : memref<1x2x128xf32, #tpu.memory_space<vmem>>, vector<1x1x128xf32>
    %391 = vector.shape_cast %390 : vector<1x1x128xf32> to vector<1x128xf32>
    %392 = vector.shape_cast %385 : vector<1x128xf32> to vector<1x1x128xf32>
    tpu.vector_store %arg5[%c0_256, %c0_257, %c0_258], %392 {strides = array<i32>} : memref<1x2x128xf32, #tpu.memory_space<vmem>>, vector<1x1x128xf32>,
    %c0_259 = arith.constant 0 : index
    %c1_260 = arith.constant 1 : index
    %c0_261 = arith.constant 0 : index
    %393 = vector.load %arg5[%c0_259, %c1_260, %c0_261] : memref<1x2x128xf32, #tpu.memory_space<vmem>>, vector<1x1x128xf32>
    %394 = vector.shape_cast %393 : vector<1x1x128xf32> to vector<1x128xf32>
    %395 = vector.shape_cast %389 : vector<1x128xf32> to vector<1x1x128xf32>
    tpu.vector_store %arg5[%c0_259, %c1_260, %c0_261], %395 {strides = array<i32>} : memref<1x2x128xf32, #tpu.memory_space<vmem>>, vector<1x1x128xf32>,
    return
  }
  func.func @transform_0(%arg0: i32) -> (i32, i32, i32, i32) {
    %c0_i32 = arith.constant 0 : i32
    %c0_i32_0 = arith.constant 0 : i32
    %c0_i32_1 = arith.constant 0 : i32
    %c0_i32_2 = arith.constant 0 : i32
    return %arg0, %c0_i32, %c0_i32_0, %c0_i32_1 : i32, i32, i32, i32
  }
  func.func @transform_1(%arg0: i32) -> (i32, i32) {
    %c0_i32 = arith.constant 0 : i32
    %c0_i32_0 = arith.constant 0 : i32
    %c0_i32_1 = arith.constant 0 : i32
    return %c0_i32, %c0_i32_0 : i32, i32
  }
  func.func @transform_2(%arg0: i32) -> (i32, i32) {
    %c0_i32 = arith.constant 0 : i32
    %c0_i32_0 = arith.constant 0 : i32
    %c0_i32_1 = arith.constant 0 : i32
    return %c0_i32, %c0_i32_0 : i32, i32
  }
  func.func @transform_3(%arg0: i32) -> (i32, i32) {
    %c0_i32 = arith.constant 0 : i32
    %c0_i32_0 = arith.constant 0 : i32
    return %arg0, %c0_i32 : i32, i32
  }
  func.func @transform_4(%arg0: i32) -> (i32, i32, i32) {
    %c0_i32 = arith.constant 0 : i32
    %c0_i32_0 = arith.constant 0 : i32
    %c0_i32_1 = arith.constant 0 : i32
    return %arg0, %c0_i32, %c0_i32_0 : i32, i32, i32
  }
}

module attributes {stable_mosaic.version = 11 : i64} {
  func.func @_maxpool_kernel(%arg0: i32, %arg1: memref<1x16x16x128xf32, #tpu.memory_space<vmem>>, %arg2: memref<2x128xf32, #tpu.memory_space<vmem>>, %arg3: memref<256x128xbf16, #tpu.memory_space<vmem>>, %arg4: memref<18x18x128xf32, #tpu.memory_space<vmem>>) attributes {dimension_semantics = [#tpu.dimension_semantics<parallel>], iteration_bounds = array<i64: 2>, scalar_prefetch = 0 : i64, scratch_operands = 1 : i64, tpu.core_type = #tpu.core_type<tc>, window_params = [{transform_indices = @transform_0, window_bounds = array<i64: 1, 16, 16, 128>}, {pipeline_mode = #tpu.pipeline_mode<synchronous>, transform_indices = @transform_1, window_bounds = array<i64: 2, 128>}, {transform_indices = @transform_2, window_bounds = array<i64: 256, 128>}]} {
    %c0 = arith.constant 0 : index
    %c0_0 = arith.constant 0 : index
    %0 = vector.load %arg2[%c0, %c0_0] : memref<2x128xf32, #tpu.memory_space<vmem>>, vector<1x128xf32>
    %1 = vector.shape_cast %0 : vector<1x128xf32> to vector<1x1x128xf32>
    %c1 = arith.constant 1 : index
    %c0_1 = arith.constant 0 : index
    %2 = vector.load %arg2[%c1, %c0_1] : memref<2x128xf32, #tpu.memory_space<vmem>>, vector<1x128xf32>
    %3 = vector.shape_cast %2 : vector<1x128xf32> to vector<1x1x128xf32>
    %c0_2 = arith.constant 0 : index
    %c0_3 = arith.constant 0 : index
    %c0_4 = arith.constant 0 : index
    %c0_5 = arith.constant 0 : index
    %4 = vector.load %arg1[%c0_2, %c0_3, %c0_4, %c0_5] : memref<1x16x16x128xf32, #tpu.memory_space<vmem>>, vector<1x16x16x128xf32>
    %5 = vector.shape_cast %4 : vector<1x16x16x128xf32> to vector<16x16x128xf32>
    %6 = vector.broadcast %1 : vector<1x1x128xf32> to vector<16x16x128xf32>
    %7 = arith.mulf %5, %6 : vector<16x16x128xf32>
    %8 = vector.broadcast %3 : vector<1x1x128xf32> to vector<16x16x128xf32>
    %9 = arith.addf %7, %8 : vector<16x16x128xf32>
    %cst = arith.constant 0.166666672 : f32
    %10 = vector.broadcast %cst : f32 to vector<16x16x128xf32>
    %11 = arith.mulf %9, %10 : vector<16x16x128xf32>
    %cst_6 = arith.constant 5.000000e-01 : f32
    %12 = vector.broadcast %cst_6 : f32 to vector<16x16x128xf32>
    %13 = arith.addf %11, %12 : vector<16x16x128xf32>
    %cst_7 = arith.constant 0.000000e+00 : f32
    %cst_8 = arith.constant 1.000000e+00 : f32
    %14 = vector.broadcast %cst_7 : f32 to vector<16x16x128xf32>
    %15 = arith.maximumf %14, %13 : vector<16x16x128xf32>
    %16 = vector.broadcast %cst_8 : f32 to vector<16x16x128xf32>
    %17 = arith.minimumf %16, %15 : vector<16x16x128xf32>
    %18 = arith.mulf %9, %17 : vector<16x16x128xf32>
    %cst_9 = arith.constant -1.000000e+30 : f32
    %19 = vector.broadcast %cst_9 : f32 to vector<18x18x128xf32>
    %c0_10 = arith.constant 0 : index
    %c0_11 = arith.constant 0 : index
    %c0_12 = arith.constant 0 : index
    %20 = vector.load %arg4[%c0_10, %c0_11, %c0_12] : memref<18x18x128xf32, #tpu.memory_space<vmem>>, vector<18x18x128xf32>
    tpu.vector_store %arg4[%c0_10, %c0_11, %c0_12], %19 {strides = array<i32>} : memref<18x18x128xf32, #tpu.memory_space<vmem>>, vector<18x18x128xf32>,
    %c1_13 = arith.constant 1 : index
    %c1_14 = arith.constant 1 : index
    %c0_15 = arith.constant 0 : index
    %21 = vector.load %arg4[%c1_13, %c1_14, %c0_15] : memref<18x18x128xf32, #tpu.memory_space<vmem>>, vector<16x16x128xf32>
    tpu.vector_store %arg4[%c1_13, %c1_14, %c0_15], %18 {strides = array<i32>} : memref<18x18x128xf32, #tpu.memory_space<vmem>>, vector<16x16x128xf32>,
    %c0_16 = arith.constant 0 : index
    %c0_17 = arith.constant 0 : index
    %c0_18 = arith.constant 0 : index
    %22 = vector.load %arg4[%c0_16, %c0_17, %c0_18] : memref<18x18x128xf32, #tpu.memory_space<vmem>>, vector<16x16x128xf32>
    %c0_19 = arith.constant 0 : index
    %c1_20 = arith.constant 1 : index
    %c0_21 = arith.constant 0 : index
    %23 = vector.load %arg4[%c0_19, %c1_20, %c0_21] : memref<18x18x128xf32, #tpu.memory_space<vmem>>, vector<16x16x128xf32>
    %24 = arith.maximumf %22, %23 : vector<16x16x128xf32>
    %c0_22 = arith.constant 0 : index
    %c2 = arith.constant 2 : index
    %c0_23 = arith.constant 0 : index
    %25 = vector.load %arg4[%c0_22, %c2, %c0_23] : memref<18x18x128xf32, #tpu.memory_space<vmem>>, vector<16x16x128xf32>
    %26 = arith.maximumf %24, %25 : vector<16x16x128xf32>
    %c1_24 = arith.constant 1 : index
    %c0_25 = arith.constant 0 : index
    %c0_26 = arith.constant 0 : index
    %27 = vector.load %arg4[%c1_24, %c0_25, %c0_26] : memref<18x18x128xf32, #tpu.memory_space<vmem>>, vector<16x16x128xf32>
    %28 = arith.maximumf %26, %27 : vector<16x16x128xf32>
    %c1_27 = arith.constant 1 : index
    %c1_28 = arith.constant 1 : index
    %c0_29 = arith.constant 0 : index
    %29 = vector.load %arg4[%c1_27, %c1_28, %c0_29] : memref<18x18x128xf32, #tpu.memory_space<vmem>>, vector<16x16x128xf32>
    %30 = arith.maximumf %28, %29 : vector<16x16x128xf32>
    %c1_30 = arith.constant 1 : index
    %c2_31 = arith.constant 2 : index
    %c0_32 = arith.constant 0 : index
    %31 = vector.load %arg4[%c1_30, %c2_31, %c0_32] : memref<18x18x128xf32, #tpu.memory_space<vmem>>, vector<16x16x128xf32>
    %32 = arith.maximumf %30, %31 : vector<16x16x128xf32>
    %c2_33 = arith.constant 2 : index
    %c0_34 = arith.constant 0 : index
    %c0_35 = arith.constant 0 : index
    %33 = vector.load %arg4[%c2_33, %c0_34, %c0_35] : memref<18x18x128xf32, #tpu.memory_space<vmem>>, vector<16x16x128xf32>
    %34 = arith.maximumf %32, %33 : vector<16x16x128xf32>
    %c2_36 = arith.constant 2 : index
    %c1_37 = arith.constant 1 : index
    %c0_38 = arith.constant 0 : index
    %35 = vector.load %arg4[%c2_36, %c1_37, %c0_38] : memref<18x18x128xf32, #tpu.memory_space<vmem>>, vector<16x16x128xf32>
    %36 = arith.maximumf %34, %35 : vector<16x16x128xf32>
    %c2_39 = arith.constant 2 : index
    %c2_40 = arith.constant 2 : index
    %c0_41 = arith.constant 0 : index
    %37 = vector.load %arg4[%c2_39, %c2_40, %c0_41] : memref<18x18x128xf32, #tpu.memory_space<vmem>>, vector<16x16x128xf32>
    %38 = arith.maximumf %36, %37 : vector<16x16x128xf32>
    %39 = vector.shape_cast %38 : vector<16x16x128xf32> to vector<256x128xf32>
    %40 = arith.truncf %39 : vector<256x128xf32> to vector<256x128xbf16>
    %c0_42 = arith.constant 0 : index
    %c0_43 = arith.constant 0 : index
    %41 = vector.load %arg3[%c0_42, %c0_43] : memref<256x128xbf16, #tpu.memory_space<vmem>>, vector<256x128xbf16>
    tpu.vector_store %arg3[%c0_42, %c0_43], %40 {strides = array<i32>} : memref<256x128xbf16, #tpu.memory_space<vmem>>, vector<256x128xbf16>,
    return
  }
  func.func @transform_0(%arg0: i32) -> (i32, i32, i32, i32) {
    %c0_i32 = arith.constant 0 : i32
    %c0_i32_0 = arith.constant 0 : i32
    %c0_i32_1 = arith.constant 0 : i32
    %c0_i32_2 = arith.constant 0 : i32
    return %arg0, %c0_i32, %c0_i32_0, %c0_i32_1 : i32, i32, i32, i32
  }
  func.func @transform_1(%arg0: i32) -> (i32, i32) {
    %c0_i32 = arith.constant 0 : i32
    %c0_i32_0 = arith.constant 0 : i32
    %c0_i32_1 = arith.constant 0 : i32
    return %c0_i32, %c0_i32_0 : i32, i32
  }
  func.func @transform_2(%arg0: i32) -> (i32, i32) {
    %c0_i32 = arith.constant 0 : i32
    %c0_i32_0 = arith.constant 0 : i32
    return %arg0, %c0_i32 : i32, i32
  }
}

module attributes {stable_mosaic.version = 11 : i64} {
  func.func @_merge_mm_kernel(%arg0: i32, %arg1: memref<512x128xf32, #tpu.memory_space<vmem>>, %arg2: memref<512x128xf32, #tpu.memory_space<vmem>>, %arg3: memref<512x128xf32, #tpu.memory_space<vmem>>, %arg4: memref<512x128xbf16, #tpu.memory_space<vmem>>, %arg5: memref<2x128xf32, #tpu.memory_space<vmem>>, %arg6: memref<2x128xf32, #tpu.memory_space<vmem>>, %arg7: memref<2x128xf32, #tpu.memory_space<vmem>>, %arg8: memref<1x128xf32, #tpu.memory_space<vmem>>, %arg9: memref<128x128xbf16, #tpu.memory_space<vmem>>, %arg10: memref<512x128xf32, #tpu.memory_space<vmem>>, %arg11: memref<1x2x128xf32, #tpu.memory_space<vmem>>) attributes {dimension_semantics = [#tpu.dimension_semantics<parallel>], iteration_bounds = array<i64: 1>, scalar_prefetch = 0 : i64, scratch_operands = 0 : i64, tpu.core_type = #tpu.core_type<tc>, window_params = [{transform_indices = @transform_0, window_bounds = array<i64: 512, 128>}, {transform_indices = @transform_1, window_bounds = array<i64: 512, 128>}, {transform_indices = @transform_2, window_bounds = array<i64: 512, 128>}, {transform_indices = @transform_3, window_bounds = array<i64: 512, 128>}, {pipeline_mode = #tpu.pipeline_mode<synchronous>, transform_indices = @transform_4, window_bounds = array<i64: 2, 128>}, {pipeline_mode = #tpu.pipeline_mode<synchronous>, transform_indices = @transform_5, window_bounds = array<i64: 2, 128>}, {pipeline_mode = #tpu.pipeline_mode<synchronous>, transform_indices = @transform_6, window_bounds = array<i64: 2, 128>}, {pipeline_mode = #tpu.pipeline_mode<synchronous>, transform_indices = @transform_7, window_bounds = array<i64: 1, 128>}, {pipeline_mode = #tpu.pipeline_mode<synchronous>, transform_indices = @transform_8, window_bounds = array<i64: 128, 128>}, {transform_indices = @transform_9, window_bounds = array<i64: 512, 128>}, {transform_indices = @transform_10, window_bounds = array<i64: 1, 2, 128>}]} {
    %c0 = arith.constant 0 : index
    %c0_0 = arith.constant 0 : index
    %0 = vector.load %arg1[%c0, %c0_0] : memref<512x128xf32, #tpu.memory_space<vmem>>, vector<512x128xf32>
    %c0_1 = arith.constant 0 : index
    %c0_2 = arith.constant 0 : index
    %1 = vector.load %arg5[%c0_1, %c0_2] : memref<2x128xf32, #tpu.memory_space<vmem>>, vector<1x128xf32>
    %2 = vector.broadcast %1 : vector<1x128xf32> to vector<512x128xf32>
    %3 = arith.mulf %0, %2 : vector<512x128xf32>
    %c1 = arith.constant 1 : index
    %c0_3 = arith.constant 0 : index
    %4 = vector.load %arg5[%c1, %c0_3] : memref<2x128xf32, #tpu.memory_space<vmem>>, vector<1x128xf32>
    %5 = vector.broadcast %4 : vector<1x128xf32> to vector<512x128xf32>
    %6 = arith.addf %3, %5 : vector<512x128xf32>
    %cst = arith.constant 0.166666672 : f32
    %7 = vector.broadcast %cst : f32 to vector<512x128xf32>
    %8 = arith.mulf %6, %7 : vector<512x128xf32>
    %cst_4 = arith.constant 5.000000e-01 : f32
    %9 = vector.broadcast %cst_4 : f32 to vector<512x128xf32>
    %10 = arith.addf %8, %9 : vector<512x128xf32>
    %cst_5 = arith.constant 0.000000e+00 : f32
    %cst_6 = arith.constant 1.000000e+00 : f32
    %11 = vector.broadcast %cst_5 : f32 to vector<512x128xf32>
    %12 = arith.maximumf %11, %10 : vector<512x128xf32>
    %13 = vector.broadcast %cst_6 : f32 to vector<512x128xf32>
    %14 = arith.minimumf %13, %12 : vector<512x128xf32>
    %15 = arith.mulf %6, %14 : vector<512x128xf32>
    %c0_7 = arith.constant 0 : index
    %c0_8 = arith.constant 0 : index
    %16 = vector.load %arg2[%c0_7, %c0_8] : memref<512x128xf32, #tpu.memory_space<vmem>>, vector<512x128xf32>
    %c0_9 = arith.constant 0 : index
    %c0_10 = arith.constant 0 : index
    %17 = vector.load %arg6[%c0_9, %c0_10] : memref<2x128xf32, #tpu.memory_space<vmem>>, vector<1x128xf32>
    %18 = vector.broadcast %17 : vector<1x128xf32> to vector<512x128xf32>
    %19 = arith.mulf %16, %18 : vector<512x128xf32>
    %c1_11 = arith.constant 1 : index
    %c0_12 = arith.constant 0 : index
    %20 = vector.load %arg6[%c1_11, %c0_12] : memref<2x128xf32, #tpu.memory_space<vmem>>, vector<1x128xf32>
    %21 = vector.broadcast %20 : vector<1x128xf32> to vector<512x128xf32>
    %22 = arith.addf %19, %21 : vector<512x128xf32>
    %cst_13 = arith.constant 0.166666672 : f32
    %23 = vector.broadcast %cst_13 : f32 to vector<512x128xf32>
    %24 = arith.mulf %22, %23 : vector<512x128xf32>
    %cst_14 = arith.constant 5.000000e-01 : f32
    %25 = vector.broadcast %cst_14 : f32 to vector<512x128xf32>
    %26 = arith.addf %24, %25 : vector<512x128xf32>
    %cst_15 = arith.constant 0.000000e+00 : f32
    %cst_16 = arith.constant 1.000000e+00 : f32
    %27 = vector.broadcast %cst_15 : f32 to vector<512x128xf32>
    %28 = arith.maximumf %27, %26 : vector<512x128xf32>
    %29 = vector.broadcast %cst_16 : f32 to vector<512x128xf32>
    %30 = arith.minimumf %29, %28 : vector<512x128xf32>
    %31 = arith.mulf %22, %30 : vector<512x128xf32>
    %c0_17 = arith.constant 0 : index
    %c0_18 = arith.constant 0 : index
    %32 = vector.load %arg3[%c0_17, %c0_18] : memref<512x128xf32, #tpu.memory_space<vmem>>, vector<512x128xf32>
    %c0_19 = arith.constant 0 : index
    %c0_20 = arith.constant 0 : index
    %33 = vector.load %arg7[%c0_19, %c0_20] : memref<2x128xf32, #tpu.memory_space<vmem>>, vector<1x128xf32>
    %34 = vector.broadcast %33 : vector<1x128xf32> to vector<512x128xf32>
    %35 = arith.mulf %32, %34 : vector<512x128xf32>
    %c1_21 = arith.constant 1 : index
    %c0_22 = arith.constant 0 : index
    %36 = vector.load %arg7[%c1_21, %c0_22] : memref<2x128xf32, #tpu.memory_space<vmem>>, vector<1x128xf32>
    %37 = vector.broadcast %36 : vector<1x128xf32> to vector<512x128xf32>
    %38 = arith.addf %35, %37 : vector<512x128xf32>
    %cst_23 = arith.constant 0.166666672 : f32
    %39 = vector.broadcast %cst_23 : f32 to vector<512x128xf32>
    %40 = arith.mulf %38, %39 : vector<512x128xf32>
    %cst_24 = arith.constant 5.000000e-01 : f32
    %41 = vector.broadcast %cst_24 : f32 to vector<512x128xf32>
    %42 = arith.addf %40, %41 : vector<512x128xf32>
    %cst_25 = arith.constant 0.000000e+00 : f32
    %cst_26 = arith.constant 1.000000e+00 : f32
    %43 = vector.broadcast %cst_25 : f32 to vector<512x128xf32>
    %44 = arith.maximumf %43, %42 : vector<512x128xf32>
    %45 = vector.broadcast %cst_26 : f32 to vector<512x128xf32>
    %46 = arith.minimumf %45, %44 : vector<512x128xf32>
    %47 = arith.mulf %38, %46 : vector<512x128xf32>
    %c0_27 = arith.constant 0 : index
    %c0_28 = arith.constant 0 : index
    %48 = vector.load %arg4[%c0_27, %c0_28] : memref<512x128xbf16, #tpu.memory_space<vmem>>, vector<512x128xbf16>
    %49 = arith.extf %48 : vector<512x128xbf16> to vector<512x128xf32>
    %c0_29 = arith.constant 0 : index
    %c0_30 = arith.constant 0 : index
    %50 = vector.load %arg8[%c0_29, %c0_30] : memref<1x128xf32, #tpu.memory_space<vmem>>, vector<1x128xf32>
    %cst_31 = arith.constant 0.000000e+00 : f32
    %51 = vector.broadcast %cst_31 : f32 to vector<1x128xf32>
    %52 = arith.cmpf oeq, %50, %51 : vector<1x128xf32>
    %cst_32 = arith.constant 1.000000e+00 : f32
    %53 = vector.broadcast %cst_32 : f32 to vector<1x128xf32>
    %54 = arith.cmpf oeq, %50, %53 : vector<1x128xf32>
    %cst_33 = arith.constant 2.000000e+00 : f32
    %55 = vector.broadcast %cst_33 : f32 to vector<1x128xf32>
    %56 = arith.cmpf oeq, %50, %55 : vector<1x128xf32>
    %57 = vector.shape_cast %56 : vector<1x128xi1> to vector<1x128xi1>
    %58 = vector.broadcast %57 : vector<1x128xi1> to vector<512x128xi1>
    %59 = arith.select %58, %47, %49 : vector<512x128xi1>, vector<512x128xf32>
    %60 = vector.shape_cast %54 : vector<1x128xi1> to vector<1x128xi1>
    %61 = vector.broadcast %60 : vector<1x128xi1> to vector<512x128xi1>
    %62 = arith.select %61, %31, %59 : vector<512x128xi1>, vector<512x128xf32>
    %63 = vector.shape_cast %52 : vector<1x128xi1> to vector<1x128xi1>
    %64 = vector.broadcast %63 : vector<1x128xi1> to vector<512x128xi1>
    %65 = arith.select %64, %15, %62 : vector<512x128xi1>, vector<512x128xf32>
    %66 = arith.truncf %65 : vector<512x128xf32> to vector<512x128xbf16>
    %c0_34 = arith.constant 0 : index
    %c0_35 = arith.constant 0 : index
    %67 = vector.load %arg9[%c0_34, %c0_35] : memref<128x128xbf16, #tpu.memory_space<vmem>>, vector<128x128xbf16>
    %cst_36 = arith.constant dense<0.000000e+00> : vector<512x128xf32>
    %68 = tpu.matmul %66, %67, %cst_36 {dimension_numbers = #tpu.dot_dimension_numbers<[1], [0], [0], [1], [0, 0, 1, 1], [], []>} : vector<512x128xbf16>, vector<128x128xbf16>, vector<512x128xf32> -> vector<512x128xf32>
    %c0_37 = arith.constant 0 : index
    %c0_38 = arith.constant 0 : index
    %69 = vector.load %arg10[%c0_37, %c0_38] : memref<512x128xf32, #tpu.memory_space<vmem>>, vector<512x128xf32>
    tpu.vector_store %arg10[%c0_37, %c0_38], %68 {strides = array<i32>} : memref<512x128xf32, #tpu.memory_space<vmem>>, vector<512x128xf32>,
    %cst_39 = arith.constant dense<0.000000e+00> : vector<128xf32>
    %70 = vector.multi_reduction <add>, %68, %cst_39 [0] : vector<512x128xf32> to vector<128xf32>
    %71 = vector.shape_cast %70 : vector<128xf32> to vector<1x128xf32>
    %c0_40 = arith.constant 0 : index
    %c0_41 = arith.constant 0 : index
    %c0_42 = arith.constant 0 : index
    %72 = vector.load %arg11[%c0_40, %c0_41, %c0_42] : memref<1x2x128xf32, #tpu.memory_space<vmem>>, vector<1x1x128xf32>
    %73 = vector.shape_cast %72 : vector<1x1x128xf32> to vector<1x128xf32>
    %74 = vector.shape_cast %71 : vector<1x128xf32> to vector<1x1x128xf32>
    tpu.vector_store %arg11[%c0_40, %c0_41, %c0_42], %74 {strides = array<i32>} : memref<1x2x128xf32, #tpu.memory_space<vmem>>, vector<1x1x128xf32>,
    %75 = arith.mulf %68, %68 : vector<512x128xf32>
    %cst_43 = arith.constant dense<0.000000e+00> : vector<128xf32>
    %76 = vector.multi_reduction <add>, %75, %cst_43 [0] : vector<512x128xf32> to vector<128xf32>
    %77 = vector.shape_cast %76 : vector<128xf32> to vector<1x128xf32>
    %c0_44 = arith.constant 0 : index
    %c1_45 = arith.constant 1 : index
    %c0_46 = arith.constant 0 : index
    %78 = vector.load %arg11[%c0_44, %c1_45, %c0_46] : memref<1x2x128xf32, #tpu.memory_space<vmem>>, vector<1x1x128xf32>
    %79 = vector.shape_cast %78 : vector<1x1x128xf32> to vector<1x128xf32>
    %80 = vector.shape_cast %77 : vector<1x128xf32> to vector<1x1x128xf32>
    tpu.vector_store %arg11[%c0_44, %c1_45, %c0_46], %80 {strides = array<i32>} : memref<1x2x128xf32, #tpu.memory_space<vmem>>, vector<1x1x128xf32>,
    return
  }
  func.func @transform_0(%arg0: i32) -> (i32, i32) {
    %c0_i32 = arith.constant 0 : i32
    %c0_i32_0 = arith.constant 0 : i32
    return %arg0, %c0_i32 : i32, i32
  }
  func.func @transform_1(%arg0: i32) -> (i32, i32) {
    %c0_i32 = arith.constant 0 : i32
    %c0_i32_0 = arith.constant 0 : i32
    return %arg0, %c0_i32 : i32, i32
  }
  func.func @transform_2(%arg0: i32) -> (i32, i32) {
    %c0_i32 = arith.constant 0 : i32
    %c0_i32_0 = arith.constant 0 : i32
    return %arg0, %c0_i32 : i32, i32
  }
  func.func @transform_3(%arg0: i32) -> (i32, i32) {
    %c0_i32 = arith.constant 0 : i32
    %c0_i32_0 = arith.constant 0 : i32
    return %arg0, %c0_i32 : i32, i32
  }
  func.func @transform_4(%arg0: i32) -> (i32, i32) {
    %c0_i32 = arith.constant 0 : i32
    %c0_i32_0 = arith.constant 0 : i32
    %c0_i32_1 = arith.constant 0 : i32
    return %c0_i32, %c0_i32_0 : i32, i32
  }
  func.func @transform_5(%arg0: i32) -> (i32, i32) {
    %c0_i32 = arith.constant 0 : i32
    %c0_i32_0 = arith.constant 0 : i32
    %c0_i32_1 = arith.constant 0 : i32
    return %c0_i32, %c0_i32_0 : i32, i32
  }
  func.func @transform_6(%arg0: i32) -> (i32, i32) {
    %c0_i32 = arith.constant 0 : i32
    %c0_i32_0 = arith.constant 0 : i32
    %c0_i32_1 = arith.constant 0 : i32
    return %c0_i32, %c0_i32_0 : i32, i32
  }
  func.func @transform_7(%arg0: i32) -> (i32, i32) {
    %c0_i32 = arith.constant 0 : i32
    %c0_i32_0 = arith.constant 0 : i32
    %c0_i32_1 = arith.constant 0 : i32
    return %c0_i32, %c0_i32_0 : i32, i32
  }
  func.func @transform_8(%arg0: i32) -> (i32, i32) {
    %c0_i32 = arith.constant 0 : i32
    %c0_i32_0 = arith.constant 0 : i32
    %c0_i32_1 = arith.constant 0 : i32
    return %c0_i32, %c0_i32_0 : i32, i32
  }
  func.func @transform_9(%arg0: i32) -> (i32, i32) {
    %c0_i32 = arith.constant 0 : i32
    %c0_i32_0 = arith.constant 0 : i32
    return %arg0, %c0_i32 : i32, i32
  }
  func.func @transform_10(%arg0: i32) -> (i32, i32, i32) {
    %c0_i32 = arith.constant 0 : i32
    %c0_i32_0 = arith.constant 0 : i32
    %c0_i32_1 = arith.constant 0 : i32
    return %arg0, %c0_i32, %c0_i32_0 : i32, i32, i32
  }
}

module attributes {stable_mosaic.version = 11 : i64} {
  func.func @_affine_act_kernel(%arg0: i32, %arg1: memref<512x128xf32, #tpu.memory_space<vmem>>, %arg2: memref<2x128xf32, #tpu.memory_space<vmem>>, %arg3: memref<512x128xf32, #tpu.memory_space<vmem>>) attributes {dimension_semantics = [#tpu.dimension_semantics<parallel>], iteration_bounds = array<i64: 1>, scalar_prefetch = 0 : i64, scratch_operands = 0 : i64, tpu.core_type = #tpu.core_type<tc>, window_params = [{transform_indices = @transform_0, window_bounds = array<i64: 512, 128>}, {pipeline_mode = #tpu.pipeline_mode<synchronous>, transform_indices = @transform_1, window_bounds = array<i64: 2, 128>}, {transform_indices = @transform_2, window_bounds = array<i64: 512, 128>}]} {
    %c0 = arith.constant 0 : index
    %c0_0 = arith.constant 0 : index
    %0 = vector.load %arg1[%c0, %c0_0] : memref<512x128xf32, #tpu.memory_space<vmem>>, vector<512x128xf32>
    %c0_1 = arith.constant 0 : index
    %c0_2 = arith.constant 0 : index
    %1 = vector.load %arg2[%c0_1, %c0_2] : memref<2x128xf32, #tpu.memory_space<vmem>>, vector<1x128xf32>
    %2 = vector.broadcast %1 : vector<1x128xf32> to vector<512x128xf32>
    %3 = arith.mulf %0, %2 : vector<512x128xf32>
    %c1 = arith.constant 1 : index
    %c0_3 = arith.constant 0 : index
    %4 = vector.load %arg2[%c1, %c0_3] : memref<2x128xf32, #tpu.memory_space<vmem>>, vector<1x128xf32>
    %5 = vector.broadcast %4 : vector<1x128xf32> to vector<512x128xf32>
    %6 = arith.addf %3, %5 : vector<512x128xf32>
    %cst = arith.constant 0.166666672 : f32
    %7 = vector.broadcast %cst : f32 to vector<512x128xf32>
    %8 = arith.mulf %6, %7 : vector<512x128xf32>
    %cst_4 = arith.constant 5.000000e-01 : f32
    %9 = vector.broadcast %cst_4 : f32 to vector<512x128xf32>
    %10 = arith.addf %8, %9 : vector<512x128xf32>
    %cst_5 = arith.constant 0.000000e+00 : f32
    %cst_6 = arith.constant 1.000000e+00 : f32
    %11 = vector.broadcast %cst_5 : f32 to vector<512x128xf32>
    %12 = arith.maximumf %11, %10 : vector<512x128xf32>
    %13 = vector.broadcast %cst_6 : f32 to vector<512x128xf32>
    %14 = arith.minimumf %13, %12 : vector<512x128xf32>
    %15 = arith.mulf %6, %14 : vector<512x128xf32>
    %c0_7 = arith.constant 0 : index
    %c0_8 = arith.constant 0 : index
    %16 = vector.load %arg3[%c0_7, %c0_8] : memref<512x128xf32, #tpu.memory_space<vmem>>, vector<512x128xf32>
    tpu.vector_store %arg3[%c0_7, %c0_8], %15 {strides = array<i32>} : memref<512x128xf32, #tpu.memory_space<vmem>>, vector<512x128xf32>,
    return
  }
  func.func @transform_0(%arg0: i32) -> (i32, i32) {
    %c0_i32 = arith.constant 0 : i32
    %c0_i32_0 = arith.constant 0 : i32
    return %arg0, %c0_i32 : i32, i32
  }
  func.func @transform_1(%arg0: i32) -> (i32, i32) {
    %c0_i32 = arith.constant 0 : i32
    %c0_i32_0 = arith.constant 0 : i32
    %c0_i32_1 = arith.constant 0 : i32
    return %c0_i32, %c0_i32_0 : i32, i32
  }
  func.func @transform_2(%arg0: i32) -> (i32, i32) {
    %c0_i32 = arith.constant 0 : i32
    %c0_i32_0 = arith.constant 0 : i32
    return %arg0, %c0_i32 : i32, i32
  }
}

</mosaic_0001>

<llo_original>
// kernel: inception_v3_module_2_forward.6
$region0: #{inception_v3_module_2_forward.6}
  #allocation0 [shape = 'u32[]', space=smem, size = 0x4, offset = 0x4, fixed_abs, tag = 'smem constant byte address 0x4 - core index']
  #allocation1 [shape = 'u32[144,128]{1,0:T(1,128)}', space=vmem, size = 0x12000, scoped, tag = 'internal scratch']
  %s0 = inlined_call_operand.vmem [shape: f32[512,128], index: 0, kind: input, shape index: {}]
  %s1 = inlined_call_operand.vmem [shape: bf16[128,128], index: 1, kind: input, shape index: {}]
  %s2 = inlined_call_operand.vmem [shape: f32[512,128], index: 2, kind: output, shape index: {0}]
  %s3 = inlined_call_operand.vmem [shape: f32[1,2,128], index: 3, kind: output, shape index: {1}]
  %4 = xla_tuple %s2, %s3
  %s5 = sld [smem:[#allocation0]]
  $region26: #{inception_v3_module_2_forward.6} parent=0
    _
  %s7 = ssub.s32 1, %s5
  %s8 = scalar_select 0, %s7, %s5
  // Predicated region
  $region2: #{inception_v3_module_2_forward.6} parent=0 // pred_check
    _
  $region3: #{inception_v3_module_2_forward.6} parent=0 // pred_check_branch
    %10 = sbr.rel (0) target = $region5
  $region4: #{inception_v3_module_2_forward.6} parent=0 // pred_region
    _
  $region5: #{inception_v3_module_2_forward.6} parent=0 // pred_fallthru
    _
  // Predicated region
  $region6: #{inception_v3_module_2_forward.6} parent=0 // pred_check
    _
  $region7: #{inception_v3_module_2_forward.6} parent=0 // pred_check_branch
    %12 = sbr.rel (0) target = $region9
  $region8: #{inception_v3_module_2_forward.6} parent=0 // pred_region
    _
  $region9: #{inception_v3_module_2_forward.6} parent=0 // pred_fallthru
    _
  %v14 = vld [vmem:[%s0] sm:$0xff]
  %v15 = vld [vmem:[%s0 + $0x8] sm:$0xff]
  %v16 = vld [vmem:[%s0 + $0x10] sm:$0xff]
  %v17 = vld [vmem:[%s0 + $0x18] sm:$0xff]
  %v18 = vld [vmem:[%s0 + $0x20] sm:$0xff]
  %v19 = vld [vmem:[%s0 + $0x28] sm:$0xff]
  %v20 = vld [vmem:[%s0 + $0x30] sm:$0xff]
  %v21 = vld [vmem:[%s0 + $0x38] sm:$0xff]
  %v22 = vld [vmem:[%s0 + $0x40] sm:$0xff]
  %v23 = vld [vmem:[%s0 + $0x48] sm:$0xff]
  %v24 = vld [vmem:[%s0 + $0x50] sm:$0xff]
  %v25 = vld [vmem:[%s0 + $0x58] sm:$0xff]
  %v26 = vld [vmem:[%s0 + $0x60] sm:$0xff]
  %v27 = vld [vmem:[%s0 + $0x68] sm:$0xff]
  %v28 = vld [vmem:[%s0 + $0x70] sm:$0xff]
  %v29 = vld [vmem:[%s0 + $0x78] sm:$0xff]
  %v30 = vld [vmem:[%s0 + $0x80] sm:$0xff]
  %v31 = vld [vmem:[%s0 + $0x88] sm:$0xff]
  %v32 = vld [vmem:[%s0 + $0x90] sm:$0xff]
  %v33 = vld [vmem:[%s0 + $0x98] sm:$0xff]
  %v34 = vld [vmem:[%s0 + $0xa0] sm:$0xff]
  %v35 = vld [vmem:[%s0 + $0xa8] sm:$0xff]
  %v36 = vld [vmem:[%s0 + $0xb0] sm:$0xff]
  %v37 = vld [vmem:[%s0 + $0xb8] sm:$0xff]
  %v38 = vld [vmem:[%s0 + $0xc0] sm:$0xff]
  %v39 = vld [vmem:[%s0 + $0xc8] sm:$0xff]
  %v40 = vld [vmem:[%s0 + $0xd0] sm:$0xff]
  %v41 = vld [vmem:[%s0 + $0xd8] sm:$0xff]
  %v42 = vld [vmem:[%s0 + $0xe0] sm:$0xff]
  %v43 = vld [vmem:[%s0 + $0xe8] sm:$0xff]
  %v44 = vld [vmem:[%s0 + $0xf0] sm:$0xff]
  %v45 = vld [vmem:[%s0 + $0xf8] sm:$0xff]
  %v46 = vld [vmem:[%s0 + $0x100] sm:$0xff]
  %v47 = vld [vmem:[%s0 + $0x108] sm:$0xff]
  %v48 = vld [vmem:[%s0 + $0x110] sm:$0xff]
  %v49 = vld [vmem:[%s0 + $0x118] sm:$0xff]
  %v50 = vld [vmem:[%s0 + $0x120] sm:$0xff]
  %v51 = vld [vmem:[%s0 + $0x128] sm:$0xff]
  %v52 = vld [vmem:[%s0 + $0x130] sm:$0xff]
  %v53 = vld [vmem:[%s0 + $0x138] sm:$0xff]
  %v54 = vld [vmem:[%s0 + $0x140] sm:$0xff]
  %v55 = vld [vmem:[%s0 + $0x148] sm:$0xff]
  %v56 = vld [vmem:[%s0 + $0x150] sm:$0xff]
  %v57 = vld [vmem:[%s0 + $0x158] sm:$0xff]
  %v58 = vld [vmem:[%s0 + $0x160] sm:$0xff]
  %v59 = vld [vmem:[%s0 + $0x168] sm:$0xff]
  %v60 = vld [vmem:[%s0 + $0x170] sm:$0xff]
  %v61 = vld [vmem:[%s0 + $0x178] sm:$0xff]
  %v62 = vld [vmem:[%s0 + $0x180] sm:$0xff]
  %v63 = vld [vmem:[%s0 + $0x188] sm:$0xff]
  %v64 = vld [vmem:[%s0 + $0x190] sm:$0xff]
  %v65 = vld [vmem:[%s0 + $0x198] sm:$0xff]
  %v66 = vld [vmem:[%s0 + $0x1a0] sm:$0xff]
  %v67 = vld [vmem:[%s0 + $0x1a8] sm:$0xff]
  %v68 = vld [vmem:[%s0 + $0x1b0] sm:$0xff]
  %v69 = vld [vmem:[%s0 + $0x1b8] sm:$0xff]
  %v70 = vld [vmem:[%s0 + $0x1c0] sm:$0xff]
  %v71 = vld [vmem:[%s0 + $0x1c8] sm:$0xff]
  %v72 = vld [vmem:[%s0 + $0x1d0] sm:$0xff]
  %v73 = vld [vmem:[%s0 + $0x1d8] sm:$0xff]
  %v74 = vld [vmem:[%s0 + $0x1e0] sm:$0xff]
  %v75 = vld [vmem:[%s0 + $0x1e8] sm:$0xff]
  %v76 = vld [vmem:[%s0 + $0x1f0] sm:$0xff]
  %v77 = vld [vmem:[%s0 + $0x1f8] sm:$0xff]
  %v78 = vpack.c.bf16 %v15, %v14
  %v79 = vpack.c.bf16 %v17, %v16
  %v80 = vpack.c.bf16 %v19, %v18
  %v81 = vpack.c.bf16 %v21, %v20
  %v82 = vpack.c.bf16 %v23, %v22
  %v83 = vpack.c.bf16 %v25, %v24
  %v84 = vpack.c.bf16 %v27, %v26
  %v85 = vpack.c.bf16 %v29, %v28
  %v86 = vpack.c.bf16 %v31, %v30
  %v87 = vpack.c.bf16 %v33, %v32
  %v88 = vpack.c.bf16 %v35, %v34
  %v89 = vpack.c.bf16 %v37, %v36
  %v90 = vpack.c.bf16 %v39, %v38
  %v91 = vpack.c.bf16 %v41, %v40
  %v92 = vpack.c.bf16 %v43, %v42
  %v93 = vpack.c.bf16 %v45, %v44
  %v94 = vpack.c.bf16 %v47, %v46
  %v95 = vpack.c.bf16 %v49, %v48
  %v96 = vpack.c.bf16 %v51, %v50
  %v97 = vpack.c.bf16 %v53, %v52
  %v98 = vpack.c.bf16 %v55, %v54
  %v99 = vpack.c.bf16 %v57, %v56
  %v100 = vpack.c.bf16 %v59, %v58
  %v101 = vpack.c.bf16 %v61, %v60
  %v102 = vpack.c.bf16 %v63, %v62
  %v103 = vpack.c.bf16 %v65, %v64
  %v104 = vpack.c.bf16 %v67, %v66
  %v105 = vpack.c.bf16 %v69, %v68
  %v106 = vpack.c.bf16 %v71, %v70
  %v107 = vpack.c.bf16 %v73, %v72
  %v108 = vpack.c.bf16 %v75, %v74
  %v109 = vpack.c.bf16 %v77, %v76
  %v110 = vld [vmem:[%s1] sm:$0xf]
  %v111 = vld [vmem:[%s1 + $0x4] sm:$0xf]
  %v112 = vld [vmem:[%s1 + $0x8] sm:$0xf]
  %v113 = vld [vmem:[%s1 + $0xc] sm:$0xf]
  %v114 = vld [vmem:[%s1 + $0x10] sm:$0xf]
  %v115 = vld [vmem:[%s1 + $0x14] sm:$0xf]
  %v116 = vld [vmem:[%s1 + $0x18] sm:$0xf]
  %v117 = vld [vmem:[%s1 + $0x1c] sm:$0xf]
  %v118 = vld [vmem:[%s1 + $0x20] sm:$0xf]
  %v119 = vld [vmem:[%s1 + $0x24] sm:$0xf]
  %v120 = vld [vmem:[%s1 + $0x28] sm:$0xf]
  %v121 = vld [vmem:[%s1 + $0x2c] sm:$0xf]
  %v122 = vld [vmem:[%s1 + $0x30] sm:$0xf]
  %v123 = vld [vmem:[%s1 + $0x34] sm:$0xf]
  %v124 = vld [vmem:[%s1 + $0x38] sm:$0xf]
  %v125 = vld [vmem:[%s1 + $0x3c] sm:$0xf]
  %v142 = vunpack.c.l.b16 %v110
  %v143 = vunpack.c.l.b16 %v111
  %v144 = vunpack.c.l.b16 %v112
  %v145 = vunpack.c.l.b16 %v113
  %v146 = vunpack.c.l.b16 %v114
  %v147 = vunpack.c.l.b16 %v115
  %v148 = vunpack.c.l.b16 %v116
  %v149 = vunpack.c.l.b16 %v117
  %v150 = vunpack.c.l.b16 %v118
  %v151 = vunpack.c.l.b16 %v119
  %v152 = vunpack.c.l.b16 %v120
  %v153 = vunpack.c.l.b16 %v121
  %v154 = vunpack.c.l.b16 %v122
  %v155 = vunpack.c.l.b16 %v123
  %v156 = vunpack.c.l.b16 %v124
  %v157 = vunpack.c.l.b16 %v125
  %v158 = vpack.c.b16 %v143, %v142
  %v159 = vpack.c.b16 %v145, %v144
  %v160 = vpack.c.b16 %v147, %v146
  %v161 = vpack.c.b16 %v149, %v148
  %v162 = vpack.c.b16 %v151, %v150
  %v163 = vpack.c.b16 %v153, %v152
  %v164 = vpack.c.b16 %v155, %v154
  %v165 = vpack.c.b16 %v157, %v156
  %174 = vmatprep.subr.bf16.mxu0 0
  %175 = vmatpush1.bf16.msra.mxu0 %v158
  %176 = vmatprep.subr.bf16.mxu0 0
  %177 = vmatpush1.bf16.msra.mxu0 %v159
  %178 = vmatprep.subr.bf16.mxu0 0
  %179 = vmatpush1.bf16.msra.mxu0 %v160
  %180 = vmatprep.subr.bf16.mxu0 0
  %181 = vmatpush1.bf16.msra.mxu0 %v161
  %182 = vmatprep.subr.bf16.mxu0 0
  %183 = vmatpush1.bf16.msra.mxu0 %v162
  %184 = vmatprep.subr.bf16.mxu0 0
  %185 = vmatpush1.bf16.msra.mxu0 %v163
  %186 = vmatprep.subr.bf16.mxu0 0
  %187 = vmatpush1.bf16.msra.mxu0 %v164
  %188 = vmatprep.subr.bf16.mxu0 0
  %189 = vmatpush1.bf16.msra.mxu0 %v165
  %190 = vmatprep.subr.bf16.mxu0 0
  %191 = vmatpush1.bf16.msra.mxu0 0
  %192 = vmatprep.subr.bf16.mxu0 0
  %193 = vmatpush1.bf16.msra.mxu0 0
  %194 = vmatprep.subr.bf16.mxu0 0
  %195 = vmatpush1.bf16.msra.mxu0 0
  %196 = vmatprep.subr.bf16.mxu0 0
  %197 = vmatpush1.bf16.msra.mxu0 0
  %198 = vmatprep.subr.bf16.mxu0 0
  %199 = vmatpush1.bf16.msra.mxu0 0
  %200 = vmatprep.subr.bf16.mxu0 0
  %201 = vmatpush1.bf16.msra.mxu0 0
  %202 = vmatprep.subr.bf16.mxu0 0
  %203 = vmatpush1.bf16.msra.mxu0 0
  %204 = vmatprep.subr.bf16.mxu0 0
  %205 = vmatpush1.bf16.msra.mxu0 0
  %206 = vmatprep.mubr.bf16.mxu0 0
  %207 = vmatmul.mubr.bf16.gmra.mrb[0].mxu0 %v78
  %v208 = vpop.f32.mrb[0].mxu0
  %v209 = vadd.f32 0.0, %v208
  %v210 = vpop.f32.mrb[0].mxu0
  %v211 = vpop.f32.mrb[0].mxu0
  %v212 = vadd.f32 0.0, %v211
  %v213 = vpop.f32.mrb[0].mxu0
  %214 = vmatprep.mubr.bf16.mxu0 0
  %215 = vmatmul.mubr.bf16.gmra.mrb[0].mxu0 %v79
  %v216 = vpop.f32.mrb[0].mxu0
  %v217 = vadd.f32 0.0, %v216
  %v218 = vpop.f32.mrb[0].mxu0
  %v219 = vpop.f32.mrb[0].mxu0
  %v220 = vadd.f32 0.0, %v219
  %v221 = vpop.f32.mrb[0].mxu0
  %222 = vmatprep.mubr.bf16.mxu0 0
  %223 = vmatmul.mubr.bf16.gmra.mrb[0].mxu0 %v80
  %v224 = vpop.f32.mrb[0].mxu0
  %v225 = vadd.f32 0.0, %v224
  %v226 = vpop.f32.mrb[0].mxu0
  %v227 = vpop.f32.mrb[0].mxu0
  %v228 = vadd.f32 0.0, %v227
  %v229 = vpop.f32.mrb[0].mxu0
  %230 = vmatprep.mubr.bf16.mxu0 0
  %231 = vmatmul.mubr.bf16.gmra.mrb[0].mxu0 %v81
  %v232 = vpop.f32.mrb[0].mxu0
  %v233 = vadd.f32 0.0, %v232
  %v234 = vpop.f32.mrb[0].mxu0
  %v235 = vpop.f32.mrb[0].mxu0
  %v236 = vadd.f32 0.0, %v235
  %v237 = vpop.f32.mrb[0].mxu0
  %238 = vmatprep.mubr.bf16.mxu0 0
  %239 = vmatmul.mubr.bf16.gmra.mrb[0].mxu0 %v82
  %v240 = vpop.f32.mrb[0].mxu0
  %v241 = vadd.f32 0.0, %v240
  %v242 = vpop.f32.mrb[0].mxu0
  %v243 = vpop.f32.mrb[0].mxu0
  %v244 = vadd.f32 0.0, %v243
  %v245 = vpop.f32.mrb[0].mxu0
  %246 = vmatprep.mubr.bf16.mxu0 0
  %247 = vmatmul.mubr.bf16.gmra.mrb[0].mxu0 %v83
  %v248 = vpop.f32.mrb[0].mxu0
  %v249 = vadd.f32 0.0, %v248
  %v250 = vpop.f32.mrb[0].mxu0
  %v251 = vpop.f32.mrb[0].mxu0
  %v252 = vadd.f32 0.0, %v251
  %v253 = vpop.f32.mrb[0].mxu0
  %254 = vmatprep.mubr.bf16.mxu0 0
  %255 = vmatmul.mubr.bf16.gmra.mrb[0].mxu0 %v84
  %v256 = vpop.f32.mrb[0].mxu0
  %v257 = vadd.f32 0.0, %v256
  %v258 = vpop.f32.mrb[0].mxu0
  %v259 = vpop.f32.mrb[0].mxu0
  %v260 = vadd.f32 0.0, %v259
  %v261 = vpop.f32.mrb[0].mxu0
  %262 = vmatprep.mubr.bf16.mxu0 0
  %263 = vmatmul.mubr.bf16.gmra.mrb[0].mxu0 %v85
  %v264 = vpop.f32.mrb[0].mxu0
  %v265 = vadd.f32 0.0, %v264
  %v266 = vpop.f32.mrb[0].mxu0
  %v267 = vpop.f32.mrb[0].mxu0
  %v268 = vadd.f32 0.0, %v267
  %v269 = vpop.f32.mrb[0].mxu0
  %270 = vmatprep.mubr.bf16.mxu0 0
  %271 = vmatmul.mubr.bf16.gmra.mrb[0].mxu0 %v86
  %v272 = vpop.f32.mrb[0].mxu0
  %v273 = vadd.f32 0.0, %v272
  %v274 = vpop.f32.mrb[0].mxu0
  %v275 = vpop.f32.mrb[0].mxu0
  %v276 = vadd.f32 0.0, %v275
  %v277 = vpop.f32.mrb[0].mxu0
  %278 = vmatprep.mubr.bf16.mxu0 0
  %279 = vmatmul.mubr.bf16.gmra.mrb[0].mxu0 %v87
  %v280 = vpop.f32.mrb[0].mxu0
  %v281 = vadd.f32 0.0, %v280
  %v282 = vpop.f32.mrb[0].mxu0
  %v283 = vpop.f32.mrb[0].mxu0
  %v284 = vadd.f32 0.0, %v283
  %v285 = vpop.f32.mrb[0].mxu0
  %286 = vmatprep.mubr.bf16.mxu0 0
  %287 = vmatmul.mubr.bf16.gmra.mrb[0].mxu0 %v88
  %v288 = vpop.f32.mrb[0].mxu0
  %v289 = vadd.f32 0.0, %v288
  %v290 = vpop.f32.mrb[0].mxu0
  %v291 = vpop.f32.mrb[0].mxu0
  %v292 = vadd.f32 0.0, %v291
  %v293 = vpop.f32.mrb[0].mxu0
  %294 = vmatprep.mubr.bf16.mxu0 0
  %295 = vmatmul.mubr.bf16.gmra.mrb[0].mxu0 %v89
  %v296 = vpop.f32.mrb[0].mxu0
  %v297 = vadd.f32 0.0, %v296
  %v298 = vpop.f32.mrb[0].mxu0
  %v299 = vpop.f32.mrb[0].mxu0
  %v300 = vadd.f32 0.0, %v299
  %v301 = vpop.f32.mrb[0].mxu0
  %302 = vmatprep.mubr.bf16.mxu0 0
  %303 = vmatmul.mubr.bf16.gmra.mrb[0].mxu0 %v90
  %v304 = vpop.f32.mrb[0].mxu0
  %v305 = vadd.f32 0.0, %v304
  %v306 = vpop.f32.mrb[0].mxu0
  %v307 = vpop.f32.mrb[0].mxu0
  %v308 = vadd.f32 0.0, %v307
  %v309 = vpop.f32.mrb[0].mxu0
  %310 = vmatprep.mubr.bf16.mxu0 0
  %311 = vmatmul.mubr.bf16.gmra.mrb[0].mxu0 %v91
  %v312 = vpop.f32.mrb[0].mxu0
  %v313 = vadd.f32 0.0, %v312
  %v314 = vpop.f32.mrb[0].mxu0
  %v315 = vpop.f32.mrb[0].mxu0
  %v316 = vadd.f32 0.0, %v315
  %v317 = vpop.f32.mrb[0].mxu0
  %318 = vmatprep.mubr.bf16.mxu0 0
  %319 = vmatmul.mubr.bf16.gmra.mrb[0].mxu0 %v92
  %v320 = vpop.f32.mrb[0].mxu0
  %v321 = vadd.f32 0.0, %v320
  %v322 = vpop.f32.mrb[0].mxu0
  %v323 = vpop.f32.mrb[0].mxu0
  %v324 = vadd.f32 0.0, %v323
  %v325 = vpop.f32.mrb[0].mxu0
  %326 = vmatprep.mubr.bf16.mxu0 0
  %327 = vmatmul.mubr.bf16.gmra.mrb[0].mxu0 %v93
  %v328 = vpop.f32.mrb[0].mxu0
  %v329 = vadd.f32 0.0, %v328
  %v330 = vpop.f32.mrb[0].mxu0
  %v331 = vpop.f32.mrb[0].mxu0
  %v332 = vadd.f32 0.0, %v331
  %v333 = vpop.f32.mrb[0].mxu0
  %334 = vmatprep.mubr.bf16.mxu0 0
  %335 = vmatmul.mubr.bf16.gmra.mrb[0].mxu0 %v94
  %v336 = vpop.f32.mrb[0].mxu0
  %v337 = vadd.f32 0.0, %v336
  %v338 = vpop.f32.mrb[0].mxu0
  %v339 = vpop.f32.mrb[0].mxu0
  %v340 = vadd.f32 0.0, %v339
  %v341 = vpop.f32.mrb[0].mxu0
  %342 = vmatprep.mubr.bf16.mxu0 0
  %343 = vmatmul.mubr.bf16.gmra.mrb[0].mxu0 %v95
  %v344 = vpop.f32.mrb[0].mxu0
  %v345 = vadd.f32 0.0, %v344
  %v346 = vpop.f32.mrb[0].mxu0
  %v347 = vpop.f32.mrb[0].mxu0
  %v348 = vadd.f32 0.0, %v347
  %v349 = vpop.f32.mrb[0].mxu0
  %350 = vmatprep.mubr.bf16.mxu0 0
  %351 = vmatmul.mubr.bf16.gmra.mrb[0].mxu0 %v96
  %v352 = vpop.f32.mrb[0].mxu0
  %v353 = vadd.f32 0.0, %v352
  %v354 = vpop.f32.mrb[0].mxu0
  %v355 = vpop.f32.mrb[0].mxu0
  %v356 = vadd.f32 0.0, %v355
  %v357 = vpop.f32.mrb[0].mxu0
  %358 = vmatprep.mubr.bf16.mxu0 0
  %359 = vmatmul.mubr.bf16.gmra.mrb[0].mxu0 %v97
  %v360 = vpop.f32.mrb[0].mxu0
  %v361 = vadd.f32 0.0, %v360
  %v362 = vpop.f32.mrb[0].mxu0
  %v363 = vpop.f32.mrb[0].mxu0
  %v364 = vadd.f32 0.0, %v363
  %v365 = vpop.f32.mrb[0].mxu0
  %366 = vmatprep.mubr.bf16.mxu0 0
  %367 = vmatmul.mubr.bf16.gmra.mrb[0].mxu0 %v98
  %v368 = vpop.f32.mrb[0].mxu0
  %v369 = vadd.f32 0.0, %v368
  %v370 = vpop.f32.mrb[0].mxu0
  %v371 = vpop.f32.mrb[0].mxu0
  %v372 = vadd.f32 0.0, %v371
  %v373 = vpop.f32.mrb[0].mxu0
  %374 = vmatprep.mubr.bf16.mxu0 0
  %375 = vmatmul.mubr.bf16.gmra.mrb[0].mxu0 %v99
  %v376 = vpop.f32.mrb[0].mxu0
  %v377 = vadd.f32 0.0, %v376
  %v378 = vpop.f32.mrb[0].mxu0
  %v379 = vpop.f32.mrb[0].mxu0
  %v380 = vadd.f32 0.0, %v379
  %v381 = vpop.f32.mrb[0].mxu0
  %382 = vmatprep.mubr.bf16.mxu0 0
  %383 = vmatmul.mubr.bf16.gmra.mrb[0].mxu0 %v100
  %v384 = vpop.f32.mrb[0].mxu0
  %v385 = vadd.f32 0.0, %v384
  %v386 = vpop.f32.mrb[0].mxu0
  %v387 = vpop.f32.mrb[0].mxu0
  %v388 = vadd.f32 0.0, %v387
  %v389 = vpop.f32.mrb[0].mxu0
  %390 = vmatprep.mubr.bf16.mxu0 0
  %391 = vmatmul.mubr.bf16.gmra.mrb[0].mxu0 %v101
  %v392 = vpop.f32.mrb[0].mxu0
  %v393 = vadd.f32 0.0, %v392
  %v394 = vpop.f32.mrb[0].mxu0
  %v395 = vpop.f32.mrb[0].mxu0
  %v396 = vadd.f32 0.0, %v395
  %v397 = vpop.f32.mrb[0].mxu0
  %398 = vmatprep.mubr.bf16.mxu0 0
  %399 = vmatmul.mubr.bf16.gmra.mrb[0].mxu0 %v102
  %v400 = vpop.f32.mrb[0].mxu0
  %v401 = vadd.f32 0.0, %v400
  %v402 = vpop.f32.mrb[0].mxu0
  %v403 = vpop.f32.mrb[0].mxu0
  %v404 = vadd.f32 0.0, %v403
  %v405 = vpop.f32.mrb[0].mxu0
  %406 = vmatprep.mubr.bf16.mxu0 0
  %407 = vmatmul.mubr.bf16.gmra.mrb[0].mxu0 %v103
  %v408 = vpop.f32.mrb[0].mxu0
  %v409 = vadd.f32 0.0, %v408
  %v410 = vpop.f32.mrb[0].mxu0
  %v411 = vpop.f32.mrb[0].mxu0
  %v412 = vadd.f32 0.0, %v411
  %v413 = vpop.f32.mrb[0].mxu0
  %414 = vmatprep.mubr.bf16.mxu0 0
  %415 = vmatmul.mubr.bf16.gmra.mrb[0].mxu0 %v104
  %v416 = vpop.f32.mrb[0].mxu0
  %v417 = vadd.f32 0.0, %v416
  %v418 = vpop.f32.mrb[0].mxu0
  %v419 = vpop.f32.mrb[0].mxu0
  %v420 = vadd.f32 0.0, %v419
  %v421 = vpop.f32.mrb[0].mxu0
  %422 = vmatprep.mubr.bf16.mxu0 0
  %423 = vmatmul.mubr.bf16.gmra.mrb[0].mxu0 %v105
  %v424 = vpop.f32.mrb[0].mxu0
  %v425 = vadd.f32 0.0, %v424
  %v426 = vpop.f32.mrb[0].mxu0
  %v427 = vpop.f32.mrb[0].mxu0
  %v428 = vadd.f32 0.0, %v427
  %v429 = vpop.f32.mrb[0].mxu0
  %430 = vmatprep.mubr.bf16.mxu0 0
  %431 = vmatmul.mubr.bf16.gmra.mrb[0].mxu0 %v106
  %v432 = vpop.f32.mrb[0].mxu0
  %v433 = vadd.f32 0.0, %v432
  %v434 = vpop.f32.mrb[0].mxu0
  %v435 = vpop.f32.mrb[0].mxu0
  %v436 = vadd.f32 0.0, %v435
  %v437 = vpop.f32.mrb[0].mxu0
  %438 = vmatprep.mubr.bf16.mxu0 0
  %439 = vmatmul.mubr.bf16.gmra.mrb[0].mxu0 %v107
  %v440 = vpop.f32.mrb[0].mxu0
  %v441 = vadd.f32 0.0, %v440
  %v442 = vpop.f32.mrb[0].mxu0
  %v443 = vpop.f32.mrb[0].mxu0
  %v444 = vadd.f32 0.0, %v443
  %v445 = vpop.f32.mrb[0].mxu0
  %446 = vmatprep.mubr.bf16.mxu0 0
  %447 = vmatmul.mubr.bf16.gmra.mrb[0].mxu0 %v108
  %v448 = vpop.f32.mrb[0].mxu0
  %v449 = vadd.f32 0.0, %v448
  %v450 = vpop.f32.mrb[0].mxu0
  %v451 = vpop.f32.mrb[0].mxu0
  %v452 = vadd.f32 0.0, %v451
  %v453 = vpop.f32.mrb[0].mxu0
  %454 = vmatprep.mubr.bf16.mxu0 0
  %455 = vmatmul.mubr.bf16.gmra.mrb[0].mxu0 %v109
  %v456 = vpop.f32.mrb[0].mxu0
  %v457 = vadd.f32 0.0, %v456
  %v458 = vpop.f32.mrb[0].mxu0
  %v459 = vpop.f32.mrb[0].mxu0
  %v460 = vadd.f32 0.0, %v459
  %v461 = vpop.f32.mrb[0].mxu0
  %462 = vdwg.mxu0
  %463 = vst [vmem:[%s2] sm:$0xff] %v209
  %464 = vst [vmem:[%s2 + $0x8] sm:$0xff] %v212
  %465 = vst [vmem:[%s2 + $0x10] sm:$0xff] %v217
  %466 = vst [vmem:[%s2 + $0x18] sm:$0xff] %v220
  %467 = vst [vmem:[%s2 + $0x20] sm:$0xff] %v225
  %468 = vst [vmem:[%s2 + $0x28] sm:$0xff] %v228
  %469 = vst [vmem:[%s2 + $0x30] sm:$0xff] %v233
  %470 = vst [vmem:[%s2 + $0x38] sm:$0xff] %v236
  %471 = vst [vmem:[%s2 + $0x40] sm:$0xff] %v241
  %472 = vst [vmem:[%s2 + $0x48] sm:$0xff] %v244
  %473 = vst [vmem:[%s2 + $0x50] sm:$0xff] %v249
  %474 = vst [vmem:[%s2 + $0x58] sm:$0xff] %v252
  %475 = vst [vmem:[%s2 + $0x60] sm:$0xff] %v257
  %476 = vst [vmem:[%s2 + $0x68] sm:$0xff] %v260
  %477 = vst [vmem:[%s2 + $0x70] sm:$0xff] %v265
  %478 = vst [vmem:[%s2 + $0x78] sm:$0xff] %v268
  %479 = vst [vmem:[%s2 + $0x80] sm:$0xff] %v273
  %480 = vst [vmem:[%s2 + $0x88] sm:$0xff] %v276
  %481 = vst [vmem:[%s2 + $0x90] sm:$0xff] %v281
  %482 = vst [vmem:[%s2 + $0x98] sm:$0xff] %v284
  %483 = vst [vmem:[%s2 + $0xa0] sm:$0xff] %v289
  %484 = vst [vmem:[%s2 + $0xa8] sm:$0xff] %v292
  %485 = vst [vmem:[%s2 + $0xb0] sm:$0xff] %v297
  %486 = vst [vmem:[%s2 + $0xb8] sm:$0xff] %v300
  %487 = vst [vmem:[%s2 + $0xc0] sm:$0xff] %v305
  %488 = vst [vmem:[%s2 + $0xc8] sm:$0xff] %v308
  %489 = vst [vmem:[%s2 + $0xd0] sm:$0xff] %v313
  %490 = vst [vmem:[%s2 + $0xd8] sm:$0xff] %v316
  %491 = vst [vmem:[%s2 + $0xe0] sm:$0xff] %v321
  %492 = vst [vmem:[%s2 + $0xe8] sm:$0xff] %v324
  %493 = vst [vmem:[%s2 + $0xf0] sm:$0xff] %v329
  %494 = vst [vmem:[%s2 + $0xf8] sm:$0xff] %v332
  %495 = vst [vmem:[%s2 + $0x100] sm:$0xff] %v337
  %496 = vst [vmem:[%s2 + $0x108] sm:$0xff] %v340
  %497 = vst [vmem:[%s2 + $0x110] sm:$0xff] %v345
  %498 = vst [vmem:[%s2 + $0x118] sm:$0xff] %v348
  %499 = vst [vmem:[%s2 + $0x120] sm:$0xff] %v353
  %500 = vst [vmem:[%s2 + $0x128] sm:$0xff] %v356
  %501 = vst [vmem:[%s2 + $0x130] sm:$0xff] %v361
  %502 = vst [vmem:[%s2 + $0x138] sm:$0xff] %v364
  %503 = vst [vmem:[%s2 + $0x140] sm:$0xff] %v369
  %504 = vst [vmem:[%s2 + $0x148] sm:$0xff] %v372
  %505 = vst [vmem:[%s2 + $0x150] sm:$0xff] %v377
  %506 = vst [vmem:[%s2 + $0x158] sm:$0xff] %v380
  %507 = vst [vmem:[%s2 + $0x160] sm:$0xff] %v385
  %508 = vst [vmem:[%s2 + $0x168] sm:$0xff] %v388
  %509 = vst [vmem:[%s2 + $0x170] sm:$0xff] %v393
  %510 = vst [vmem:[%s2 + $0x178] sm:$0xff] %v396
  %511 = vst [vmem:[%s2 + $0x180] sm:$0xff] %v401
  %512 = vst [vmem:[%s2 + $0x188] sm:$0xff] %v404
  %513 = vst [vmem:[%s2 + $0x190] sm:$0xff] %v409
  %514 = vst [vmem:[%s2 + $0x198] sm:$0xff] %v412
  %515 = vst [vmem:[%s2 + $0x1a0] sm:$0xff] %v417
  %516 = vst [vmem:[%s2 + $0x1a8] sm:$0xff] %v420
  %517 = vst [vmem:[%s2 + $0x1b0] sm:$0xff] %v425
  %518 = vst [vmem:[%s2 + $0x1b8] sm:$0xff] %v428
  %519 = vst [vmem:[%s2 + $0x1c0] sm:$0xff] %v433
  %520 = vst [vmem:[%s2 + $0x1c8] sm:$0xff] %v436
  %521 = vst [vmem:[%s2 + $0x1d0] sm:$0xff] %v441
  %522 = vst [vmem:[%s2 + $0x1d8] sm:$0xff] %v444
  %523 = vst [vmem:[%s2 + $0x1e0] sm:$0xff] %v449
  %524 = vst [vmem:[%s2 + $0x1e8] sm:$0xff] %v452
  %525 = vst [vmem:[%s2 + $0x1f0] sm:$0xff] %v457
  %526 = vst [vmem:[%s2 + $0x1f8] sm:$0xff] %v460
  %v527 = vadd.f32 %v209, %v212
  %v528 = vadd.f32 %v527, %v217
  %v529 = vadd.f32 %v528, %v220
  %v530 = vadd.f32 %v529, %v225
  %v531 = vadd.f32 %v530, %v228
  %v532 = vadd.f32 %v531, %v233
  %v533 = vadd.f32 %v532, %v236
  %v534 = vadd.f32 %v533, %v241
  %v535 = vadd.f32 %v534, %v244
  %v536 = vadd.f32 %v535, %v249
  %v537 = vadd.f32 %v536, %v252
  %v538 = vadd.f32 %v537, %v257
  %v539 = vadd.f32 %v538, %v260
  %v540 = vadd.f32 %v539, %v265
  %v541 = vadd.f32 %v540, %v268
  %v542 = vadd.f32 %v541, %v273
  %v543 = vadd.f32 %v542, %v276
  %v544 = vadd.f32 %v543, %v281
  %v545 = vadd.f32 %v544, %v284
  %v546 = vadd.f32 %v545, %v289
  %v547 = vadd.f32 %v546, %v292
  %v548 = vadd.f32 %v547, %v297
  %v549 = vadd.f32 %v548, %v300
  %v550 = vadd.f32 %v549, %v305
  %v551 = vadd.f32 %v550, %v308
  %v552 = vadd.f32 %v551, %v313
  %v553 = vadd.f32 %v552, %v316
  %v554 = vadd.f32 %v553, %v321
  %v555 = vadd.f32 %v554, %v324
  %v556 = vadd.f32 %v555, %v329
  %v557 = vadd.f32 %v556, %v332
  %v558 = vadd.f32 %v557, %v337
  %v559 = vadd.f32 %v558, %v340
  %v560 = vadd.f32 %v559, %v345
  %v561 = vadd.f32 %v560, %v348
  %v562 = vadd.f32 %v561, %v353
  %v563 = vadd.f32 %v562, %v356
  %v564 = vadd.f32 %v563, %v361
  %v565 = vadd.f32 %v564, %v364
  %v566 = vadd.f32 %v565, %v369
  %v567 = vadd.f32 %v566, %v372
  %v568 = vadd.f32 %v567, %v377
  %v569 = vadd.f32 %v568, %v380
  %v570 = vadd.f32 %v569, %v385
  %v571 = vadd.f32 %v570, %v388
  %v572 = vadd.f32 %v571, %v393
  %v573 = vadd.f32 %v572, %v396
  %v574 = vadd.f32 %v573, %v401
  %v575 = vadd.f32 %v574, %v404
  %v576 = vadd.f32 %v575, %v409
  %v577 = vadd.f32 %v576, %v412
  %v578 = vadd.f32 %v577, %v417
  %v579 = vadd.f32 %v578, %v420
  %v580 = vadd.f32 %v579, %v425
  %v581 = vadd.f32 %v580, %v428
  %v582 = vadd.f32 %v581, %v433
  %v583 = vadd.f32 %v582, %v436
  %v584 = vadd.f32 %v583, %v441
  %v585 = vadd.f32 %v584, %v444
  %v586 = vadd.f32 %v585, %v449
  %v587 = vadd.f32 %v586, %v452
  %v588 = vadd.f32 %v587, %v457
  %v589 = vadd.f32 %v588, %v460
  %v590 = vrot.slane %v589, 4
  %v591 = vadd.f32 %v589, %v590
  %v592 = vrot.slane %v591, 2
  %v593 = vadd.f32 %v591, %v592
  %v594 = vrot.slane %v593, 1
  %v595 = vadd.f32 %v593, %v594
  %596 = vst [vmem:[%s3] sm:$0x1] %v595
  %v597 = vmul.f32 %v209, %v209
  %v598 = vmul.f32 %v212, %v212
  %v599 = vmul.f32 %v217, %v217
  %v600 = vmul.f32 %v220, %v220
  %v601 = vmul.f32 %v225, %v225
  %v602 = vmul.f32 %v228, %v228
  %v603 = vmul.f32 %v233, %v233
  %v604 = vmul.f32 %v236, %v236
  %v605 = vmul.f32 %v241, %v241
  %v606 = vmul.f32 %v244, %v244
  %v607 = vmul.f32 %v249, %v249
  %v608 = vmul.f32 %v252, %v252
  %v609 = vmul.f32 %v257, %v257
  %v610 = vmul.f32 %v260, %v260
  %v611 = vmul.f32 %v265, %v265
  %v612 = vmul.f32 %v268, %v268
  %v613 = vmul.f32 %v273, %v273
  %v614 = vmul.f32 %v276, %v276
  %v615 = vmul.f32 %v281, %v281
  %v616 = vmul.f32 %v284, %v284
  %v617 = vmul.f32 %v289, %v289
  %v618 = vmul.f32 %v292, %v292
  %v619 = vmul.f32 %v297, %v297
  %v620 = vmul.f32 %v300, %v300
  %v621 = vmul.f32 %v305, %v305
  %v622 = vmul.f32 %v308, %v308
  %v623 = vmul.f32 %v313, %v313
  %v624 = vmul.f32 %v316, %v316
  %v625 = vmul.f32 %v321, %v321
  %v626 = vmul.f32 %v324, %v324
  %v627 = vmul.f32 %v329, %v329
  %v628 = vmul.f32 %v332, %v332
  %v629 = vmul.f32 %v337, %v337
  %v630 = vmul.f32 %v340, %v340
  %v631 = vmul.f32 %v345, %v345
  %v632 = vmul.f32 %v348, %v348
  %v633 = vmul.f32 %v353, %v353
  %v634 = vmul.f32 %v356, %v356
  %v635 = vmul.f32 %v361, %v361
  %v636 = vmul.f32 %v364, %v364
  %v637 = vmul.f32 %v369, %v369
  %v638 = vmul.f32 %v372, %v372
  %v639 = vmul.f32 %v377, %v377
  %v640 = vmul.f32 %v380, %v380
  %v641 = vmul.f32 %v385, %v385
  %v642 = vmul.f32 %v388, %v388
  %v643 = vmul.f32 %v393, %v393
  %v644 = vmul.f32 %v396, %v396
  %v645 = vmul.f32 %v401, %v401
  %v646 = vmul.f32 %v404, %v404
  %v647 = vmul.f32 %v409, %v409
  %v648 = vmul.f32 %v412, %v412
  %v649 = vmul.f32 %v417, %v417
  %v650 = vmul.f32 %v420, %v420
  %v651 = vmul.f32 %v425, %v425
  %v652 = vmul.f32 %v428, %v428
  %v653 = vmul.f32 %v433, %v433
  %v654 = vmul.f32 %v436, %v436
  %v655 = vmul.f32 %v441, %v441
  %v656 = vmul.f32 %v444, %v444
  %v657 = vmul.f32 %v449, %v449
  %v658 = vmul.f32 %v452, %v452
  %v659 = vmul.f32 %v457, %v457
  %v660 = vmul.f32 %v460, %v460
  %v661 = vadd.f32 %v597, %v598
  %v662 = vadd.f32 %v661, %v599
  %v663 = vadd.f32 %v662, %v600
  %v664 = vadd.f32 %v663, %v601
  %v665 = vadd.f32 %v664, %v602
  %v666 = vadd.f32 %v665, %v603
  %v667 = vadd.f32 %v666, %v604
  %v668 = vadd.f32 %v667, %v605
  %v669 = vadd.f32 %v668, %v606
  %v670 = vadd.f32 %v669, %v607
  %v671 = vadd.f32 %v670, %v608
  %v672 = vadd.f32 %v671, %v609
  %v673 = vadd.f32 %v672, %v610
  %v674 = vadd.f32 %v673, %v611
  %v675 = vadd.f32 %v674, %v612
  %v676 = vadd.f32 %v675, %v613
  %v677 = vadd.f32 %v676, %v614
  %v678 = vadd.f32 %v677, %v615
  %v679 = vadd.f32 %v678, %v616
  %v680 = vadd.f32 %v679, %v617
  %v681 = vadd.f32 %v680, %v618
  %v682 = vadd.f32 %v681, %v619
  %v683 = vadd.f32 %v682, %v620
  %v684 = vadd.f32 %v683, %v621
  %v685 = vadd.f32 %v684, %v622
  %v686 = vadd.f32 %v685, %v623
  %v687 = vadd.f32 %v686, %v624
  %v688 = vadd.f32 %v687, %v625
  %v689 = vadd.f32 %v688, %v626
  %v690 = vadd.f32 %v689, %v627
  %v691 = vadd.f32 %v690, %v628
  %v692 = vadd.f32 %v691, %v629
  %v693 = vadd.f32 %v692, %v630
  %v694 = vadd.f32 %v693, %v631
  %v695 = vadd.f32 %v694, %v632
  %v696 = vadd.f32 %v695, %v633
  %v697 = vadd.f32 %v696, %v634
  %v698 = vadd.f32 %v697, %v635
  %v699 = vadd.f32 %v698, %v636
  %v700 = vadd.f32 %v699, %v637
  %v701 = vadd.f32 %v700, %v638
  %v702 = vadd.f32 %v701, %v639
  %v703 = vadd.f32 %v702, %v640
  %v704 = vadd.f32 %v703, %v641
  %v705 = vadd.f32 %v704, %v642
  %v706 = vadd.f32 %v705, %v643
  %v707 = vadd.f32 %v706, %v644
  %v708 = vadd.f32 %v707, %v645
  %v709 = vadd.f32 %v708, %v646
  %v710 = vadd.f32 %v709, %v647
  %v711 = vadd.f32 %v710, %v648
  %v712 = vadd.f32 %v711, %v649
  %v713 = vadd.f32 %v712, %v650
  %v714 = vadd.f32 %v713, %v651
  %v715 = vadd.f32 %v714, %v652
  %v716 = vadd.f32 %v715, %v653
  %v717 = vadd.f32 %v716, %v654
  %v718 = vadd.f32 %v717, %v655
  %v719 = vadd.f32 %v718, %v656
  %v720 = vadd.f32 %v719, %v657
  %v721 = vadd.f32 %v720, %v658
  %v722 = vadd.f32 %v721, %v659
  %v723 = vadd.f32 %v722, %v660
  %v724 = vrot.slane %v723, 4
  %v725 = vadd.f32 %v723, %v724
  %v726 = vrot.slane %v725, 2
  %v727 = vadd.f32 %v725, %v726
  %v728 = vrot.slane %v727, 1
  %v729 = vadd.f32 %v727, %v728
  %730 = vst [vmem:[%s3 + $0x1] sm:$0x1] %v729
  // Predicated region
  $region10: #{inception_v3_module_2_forward.6} parent=0 // pred_check
    _
  $region11: #{inception_v3_module_2_forward.6} parent=0 // pred_check_branch
    %732 = sbr.rel (0) target = $region13
  $region12: #{inception_v3_module_2_forward.6} parent=0 // pred_region
    _
  $region13: #{inception_v3_module_2_forward.6} parent=0 // pred_fallthru
    _
  // Predicated region
  $region14: #{inception_v3_module_2_forward.6} parent=0 // pred_check
    _
  $region15: #{inception_v3_module_2_forward.6} parent=0 // pred_check_branch
    %734 = sbr.rel (0) target = $region17
  $region16: #{inception_v3_module_2_forward.6} parent=0 // pred_region
    _
  $region17: #{inception_v3_module_2_forward.6} parent=0 // pred_fallthru
    _
  // Predicated region
  $region18: #{inception_v3_module_2_forward.6} parent=0 // pred_check
    _
  $region19: #{inception_v3_module_2_forward.6} parent=0 // pred_check_branch
    %736 = sbr.rel (0) target = $region21
  $region20: #{inception_v3_module_2_forward.6} parent=0 // pred_region
    _
  $region21: #{inception_v3_module_2_forward.6} parent=0 // pred_fallthru
    _
  // Predicated region
  $region22: #{inception_v3_module_2_forward.6} parent=0 // pred_check
    _
  $region23: #{inception_v3_module_2_forward.6} parent=0 // pred_check_branch
    %738 = sbr.rel (0) target = $region25
  $region24: #{inception_v3_module_2_forward.6} parent=0 // pred_region
    _
  $region25: #{inception_v3_module_2_forward.6} parent=0 // pred_fallthru
    _

// kernel: inception_v3_module_2_forward.9
$region0: #{inception_v3_module_2_forward.9}
  #allocation0 [shape = 'u32[]', space=smem, size = 0x4, offset = 0x4, fixed_abs, tag = 'smem constant byte address 0x4 - core index']
  #allocation1 [shape = 'u32[144,128]{1,0:T(1,128)}', space=vmem, size = 0x12000, scoped, tag = 'internal scratch']
  #allocation2 [shape = 'f32[18,18,128]{2,1,0:T(8,128)}', space=vmem, size = 0x36000, scoped, tag = 'scratch operand']
  %s0 = inlined_call_operand.vmem [shape: f32[2,16,16,128], index: 0, kind: input, shape index: {}]
  %s1 = inlined_call_operand.vmem [shape: f32[2,128], index: 1, kind: input, shape index: {}]
  %s2 = inlined_call_operand.vmem [shape: bf16[512,128], index: 2, kind: output, shape index: {}]
  %s3 = sld [smem:[#allocation0]]
  $region41: #{inception_v3_module_2_forward.9} parent=0
    _
  %s5 = ssub.s32 1, %s3
  %s6 = scalar_select 0, %s5, %s3
  loop: start=0, step=1, limit=4
  $region2: #{inception_v3_module_2_forward.9} parent=0 // loop_pre_header
    _
  $region3: #{inception_v3_module_2_forward.9} parent=0 // loop_header
    %s8 = sphi 0, %s12
    %p9 = scmp.ge.s32.totalorder %s8, 4
    %s18 = sphi 0, %s20
    %s21 = sphi 0, %s18
    %s22 = sphi 0, %s21
    %s38 = sphi 0, %s22
    %s42 = sphi 0, %s42
    %s44 = sphi 0, %s42
    %s45 = sphi 0, %s44
    %s59 = sphi 0, %s45
    %s65 = sphi 0, %s67
    %s68 = sphi 0, %s65
    %s69 = sphi 0, %s68
    %s85 = sphi 0, %s69
  $region4: #{inception_v3_module_2_forward.9} parent=0 // loop_header_branch
    %11 = sbr.rel (%p9) target = $region8
  $region5: #{inception_v3_module_2_forward.9} parent=0 // loop_body
    %s13 = ssub.s32 %s8, 1
    %s14 = ssub.s32 %s8, 2
    %s15 = sadd.s32 %s8, 1
    %s16 = ssub.s32 %s8, %s15
    %p17 = scmp.eq.s32.totalorder %s16, 0
    %s19 = sadd.s32 %s18, 1
    %s20 = scalar_select %p17, %s18, %s19
    %p23 = pneg %p17
    %p24 = scmp.eq.s32.totalorder %s8, 1
    %p25 = por %p23, %p24
    %p26 = scmp.ne.s32.totalorder %s18, %s21
    %p27 = scmp.eq.s32.totalorder %s8, 0
    %p28 = por %p26, %p27
    %p29 = scmp.ne.s32.totalorder %s18, %s21
    %p30 = scmp.eq.s32.totalorder %s13, 1
    %p31 = por %p29, %p30
    %p32 = scmp.ne.s32.totalorder %s21, %s22
    %p33 = scmp.eq.s32.totalorder %s13, 0
    %p34 = por %p32, %p33
    %p35 = scmp.ne.s32.totalorder %s21, %s22
    %p36 = scmp.eq.s32.totalorder %s14, 1
    %p37 = por %p35, %p36
    %p39 = scmp.ne.s32.totalorder %s22, %s38
    %p40 = scmp.eq.s32.totalorder %s14, 0
    %p41 = por %p39, %p40
    %s43 = sadd.s32 %s42, 1
    %p46 = scmp.eq.s32.totalorder %s8, 1
    %p47 = scmp.ne.s32.totalorder %s42, %s44
    %p48 = scmp.eq.s32.totalorder %s8, 0
    %p49 = por %p47, %p48
    %p50 = scmp.ne.s32.totalorder %s42, %s44
    %p51 = scmp.eq.s32.totalorder %s13, 1
    %p52 = por %p50, %p51
    %p53 = scmp.ne.s32.totalorder %s44, %s45
    %p54 = scmp.eq.s32.totalorder %s13, 0
    %p55 = por %p53, %p54
    %p56 = scmp.ne.s32.totalorder %s44, %s45
    %p57 = scmp.eq.s32.totalorder %s14, 1
    %p58 = por %p56, %p57
    %p60 = scmp.ne.s32.totalorder %s45, %s59
    %p61 = scmp.eq.s32.totalorder %s14, 0
    %p62 = por %p60, %p61
    %s63 = ssub.s32 %s8, %s15
    %p64 = scmp.eq.s32.totalorder %s63, 0
    %s66 = sadd.s32 %s65, 1
    %s67 = scalar_select %p64, %s65, %s66
    %p70 = pneg %p64
    %p71 = scmp.eq.s32.totalorder %s8, 1
    %p72 = por %p70, %p71
    %p73 = scmp.ne.s32.totalorder %s65, %s68
    %p74 = scmp.eq.s32.totalorder %s8, 0
    %p75 = por %p73, %p74
    %p76 = scmp.ne.s32.totalorder %s65, %s68
    %p77 = scmp.eq.s32.totalorder %s13, 1
    %p78 = por %p76, %p77
    %p79 = scmp.ne.s32.totalorder %s68, %s69
    %p80 = scmp.eq.s32.totalorder %s13, 0
    %p81 = por %p79, %p80
    %p82 = scmp.ne.s32.totalorder %s68, %s69
    %p83 = scmp.eq.s32.totalorder %s14, 1
    %p84 = por %p82, %p83
    %p86 = scmp.ne.s32.totalorder %s69, %s85
    %p87 = scmp.eq.s32.totalorder %s14, 0
    %p88 = por %p86, %p87
    %p89 = scmp.le.s32.totalorder 1, %s8
    %p90 = scmp.lt.s32.totalorder %s8, 3
    %p91 = pnand %p89, %p90
    %p92 = pneg %p91
    // Predicated region
    $region9: #{inception_v3_module_2_forward.9} parent=5 // pred_check
      _
    $region10: #{inception_v3_module_2_forward.9} parent=5 // pred_check_branch
      %94 = sbr.rel (%p91) target = $region12
    $region11: #{inception_v3_module_2_forward.9} parent=5 // pred_region
      %s95 = ssub.s32 %s8, 1
      // Predicated region
      $region13: #{inception_v3_module_2_forward.9} parent=11 // pred_check
        %p96 = pneg %p55
      $region14: #{inception_v3_module_2_forward.9} parent=11 // pred_check_branch
        %98 = sbr.rel (%p96) target = $region16
      $region15: #{inception_v3_module_2_forward.9} parent=11 // pred_region
        _
      $region16: #{inception_v3_module_2_forward.9} parent=11 // pred_fallthru
        _
    $region12: #{inception_v3_module_2_forward.9} parent=5 // pred_fallthru
      _
    %p99 = scmp.lt.s32.totalorder %s8, 2
    // Predicated region
    $region17: #{inception_v3_module_2_forward.9} parent=5 // pred_check
      %p100 = pneg %p99
    $region18: #{inception_v3_module_2_forward.9} parent=5 // pred_check_branch
      %102 = sbr.rel (%p100) target = $region20
    $region19: #{inception_v3_module_2_forward.9} parent=5 // pred_region
      // Predicated region
      $region21: #{inception_v3_module_2_forward.9} parent=19 // pred_check
        %p103 = pneg %p28
      $region22: #{inception_v3_module_2_forward.9} parent=19 // pred_check_branch
        %105 = sbr.rel (%p103) target = $region24
      $region23: #{inception_v3_module_2_forward.9} parent=19 // pred_region
        %p106 = scmp.lt.s32.totalorder %s8, 1
        %s107 = scalar_select %p106, %s8, 1
        %s108 = smul.addr %s107, 32
        %s109 = smul.addr %s108, 8
        %s110 = scalar_lea.vmem %s0, %s109
      $region24: #{inception_v3_module_2_forward.9} parent=19 // pred_fallthru
        _
    $region20: #{inception_v3_module_2_forward.9} parent=5 // pred_fallthru
      _
    %p111 = scmp.le.s32.totalorder 1, %s8
    %p112 = scmp.lt.s32.totalorder %s8, 3
    %p113 = pnand %p111, %p112
    %p114 = pneg %p113
    // Predicated region
    $region25: #{inception_v3_module_2_forward.9} parent=5 // pred_check
      _
    $region26: #{inception_v3_module_2_forward.9} parent=5 // pred_check_branch
      %116 = sbr.rel (%p113) target = $region28
    $region27: #{inception_v3_module_2_forward.9} parent=5 // pred_region
      %s117 = ssub.s32 %s8, 1
      %p118 = scmp.lt.s32.totalorder %s13, 1
      %s119 = scalar_select %p118, %s13, 1
      %s120 = smul.addr %s119, 32
      %s121 = smul.addr %s120, 8
      %s122 = scalar_lea.vmem %s0, %s121
      %p123 = pneg %p34
      %p124 = pneg %p31
      %p125 = pneg %p55
      %p126 = pneg %p52
      %p127 = pneg %p81
      %p128 = pneg %p78
      %s129 = smul.u32 32, %s13
      %p130 = scmp.lt.s32.totalorder %s129, 63
      %s131 = scalar_select %p130, %s129, 63
      %s132 = smul.addr %s131, 4
      %s133 = scalar_lea.vmem %s2, %s132
      %p134 = scmp.lt.s32.totalorder %s13, 1
      %s135 = scalar_select %p134, %s13, 1
      %s136 = smul.addr %s135, 32
      %s137 = smul.addr %s136, 8
      %s138 = scalar_lea.vmem %s0, %s137
      %s139 = smul.u32 32, %s13
      %p140 = scmp.lt.s32.totalorder %s139, 63
      %s141 = scalar_select %p140, %s139, 63
      %s142 = smul.addr %s141, 4
      %s143 = scalar_lea.vmem %s2, %s142
      %s144 = smul.u32 32, %s13
      %v145 = vld [vmem:[%s1] sm:$0x1]
      %v146 = vld [vmem:[%s1 + $0x1] sm:$0x1]
      %v147 = vld [vmem:[%s138] sm:$0xff]
      %v148 = vld [vmem:[%s138 + $0x8] sm:$0xff]
      %v149 = vld [vmem:[%s138 + $0x10] sm:$0xff]
      %v150 = vld [vmem:[%s138 + $0x18] sm:$0xff]
      %v151 = vld [vmem:[%s138 + $0x20] sm:$0xff]
      %v152 = vld [vmem:[%s138 + $0x28] sm:$0xff]
      %v153 = vld [vmem:[%s138 + $0x30] sm:$0xff]
      %v154 = vld [vmem:[%s138 + $0x38] sm:$0xff]
      %v155 = vld [vmem:[%s138 + $0x40] sm:$0xff]
      %v156 = vld [vmem:[%s138 + $0x48] sm:$0xff]
      %v157 = vld [vmem:[%s138 + $0x50] sm:$0xff]
      %v158 = vld [vmem:[%s138 + $0x58] sm:$0xff]
      %v159 = vld [vmem:[%s138 + $0x60] sm:$0xff]
      %v160 = vld [vmem:[%s138 + $0x68] sm:$0xff]
      %v161 = vld [vmem:[%s138 + $0x70] sm:$0xff]
      %v162 = vld [vmem:[%s138 + $0x78] sm:$0xff]
      %v163 = vld [vmem:[%s138 + $0x80] sm:$0xff]
      %v164 = vld [vmem:[%s138 + $0x88] sm:$0xff]
      %v165 = vld [vmem:[%s138 + $0x90] sm:$0xff]
      %v166 = vld [vmem:[%s138 + $0x98] sm:$0xff]
      %v167 = vld [vmem:[%s138 + $0xa0] sm:$0xff]
      %v168 = vld [vmem:[%s138 + $0xa8] sm:$0xff]
      %v169 = vld [vmem:[%s138 + $0xb0] sm:$0xff]
      %v170 = vld [vmem:[%s138 + $0xb8] sm:$0xff]
      %v171 = vld [vmem:[%s138 + $0xc0] sm:$0xff]
      %v172 = vld [vmem:[%s138 + $0xc8] sm:$0xff]
      %v173 = vld [vmem:[%s138 + $0xd0] sm:$0xff]
      %v174 = vld [vmem:[%s138 + $0xd8] sm:$0xff]
      %v175 = vld [vmem:[%s138 + $0xe0] sm:$0xff]
      %v176 = vld [vmem:[%s138 + $0xe8] sm:$0xff]
      %v177 = vld [vmem:[%s138 + $0xf0] sm:$0xff]
      %v178 = vld [vmem:[%s138 + $0xf8] sm:$0xff]
      %v179 = vlaneseq
      %v180 = vshrl.u32 %v179, 7
      %v181 = vsub.s32 0, %v180
      %v182 = vrot.slane %v145, %v181
      %v183 = vmul.f32 %v147, %v182
      %v184 = vmul.f32 %v148, %v182
      %v185 = vmul.f32 %v149, %v182
      %v186 = vmul.f32 %v150, %v182
      %v187 = vmul.f32 %v151, %v182
      %v188 = vmul.f32 %v152, %v182
      %v189 = vmul.f32 %v153, %v182
      %v190 = vmul.f32 %v154, %v182
      %v191 = vmul.f32 %v155, %v182
      %v192 = vmul.f32 %v156, %v182
      %v193 = vmul.f32 %v157, %v182
      %v194 = vmul.f32 %v158, %v182
      %v195 = vmul.f32 %v159, %v182
      %v196 = vmul.f32 %v160, %v182
      %v197 = vmul.f32 %v161, %v182
      %v198 = vmul.f32 %v162, %v182
      %v199 = vmul.f32 %v163, %v182
      %v200 = vmul.f32 %v164, %v182
      %v201 = vmul.f32 %v165, %v182
      %v202 = vmul.f32 %v166, %v182
      %v203 = vmul.f32 %v167, %v182
      %v204 = vmul.f32 %v168, %v182
      %v205 = vmul.f32 %v169, %v182
      %v206 = vmul.f32 %v170, %v182
      %v207 = vmul.f32 %v171, %v182
      %v208 = vmul.f32 %v172, %v182
      %v209 = vmul.f32 %v173, %v182
      %v210 = vmul.f32 %v174, %v182
      %v211 = vmul.f32 %v175, %v182
      %v212 = vmul.f32 %v176, %v182
      %v213 = vmul.f32 %v177, %v182
      %v214 = vmul.f32 %v178, %v182
      %v215 = vlaneseq
      %v216 = vshrl.u32 %v215, 7
      %v217 = vsub.s32 0, %v216
      %v218 = vrot.slane %v146, %v217
      %v219 = vadd.f32 %v183, %v218
      %v220 = vadd.f32 %v184, %v218
      %v221 = vadd.f32 %v185, %v218
      %v222 = vadd.f32 %v186, %v218
      %v223 = vadd.f32 %v187, %v218
      %v224 = vadd.f32 %v188, %v218
      %v225 = vadd.f32 %v189, %v218
      %v226 = vadd.f32 %v190, %v218
      %v227 = vadd.f32 %v191, %v218
      %v228 = vadd.f32 %v192, %v218
      %v229 = vadd.f32 %v193, %v218
      %v230 = vadd.f32 %v194, %v218
      %v231 = vadd.f32 %v195, %v218
      %v232 = vadd.f32 %v196, %v218
      %v233 = vadd.f32 %v197, %v218
      %v234 = vadd.f32 %v198, %v218
      %v235 = vadd.f32 %v199, %v218
      %v236 = vadd.f32 %v200, %v218
      %v237 = vadd.f32 %v201, %v218
      %v238 = vadd.f32 %v202, %v218
      %v239 = vadd.f32 %v203, %v218
      %v240 = vadd.f32 %v204, %v218
      %v241 = vadd.f32 %v205, %v218
      %v242 = vadd.f32 %v206, %v218
      %v243 = vadd.f32 %v207, %v218
      %v244 = vadd.f32 %v208, %v218
      %v245 = vadd.f32 %v209, %v218
      %v246 = vadd.f32 %v210, %v218
      %v247 = vadd.f32 %v211, %v218
      %v248 = vadd.f32 %v212, %v218
      %v249 = vadd.f32 %v213, %v218
      %v250 = vadd.f32 %v214, %v218
      %v251 = vmul.f32 %v219, 0.16666667
      %v252 = vmul.f32 %v220, 0.16666667
      %v253 = vmul.f32 %v221, 0.16666667
      %v254 = vmul.f32 %v222, 0.16666667
      %v255 = vmul.f32 %v223, 0.16666667
      %v256 = vmul.f32 %v224, 0.16666667
      %v257 = vmul.f32 %v225, 0.16666667
      %v258 = vmul.f32 %v226, 0.16666667
      %v259 = vmul.f32 %v227, 0.16666667
      %v260 = vmul.f32 %v228, 0.16666667
      %v261 = vmul.f32 %v229, 0.16666667
      %v262 = vmul.f32 %v230, 0.16666667
      %v263 = vmul.f32 %v231, 0.16666667
      %v264 = vmul.f32 %v232, 0.16666667
      %v265 = vmul.f32 %v233, 0.16666667
      %v266 = vmul.f32 %v234, 0.16666667
      %v267 = vmul.f32 %v235, 0.16666667
      %v268 = vmul.f32 %v236, 0.16666667
      %v269 = vmul.f32 %v237, 0.16666667
      %v270 = vmul.f32 %v238, 0.16666667
      %v271 = vmul.f32 %v239, 0.16666667
      %v272 = vmul.f32 %v240, 0.16666667
      %v273 = vmul.f32 %v241, 0.16666667
      %v274 = vmul.f32 %v242, 0.16666667
      %v275 = vmul.f32 %v243, 0.16666667
      %v276 = vmul.f32 %v244, 0.16666667
      %v277 = vmul.f32 %v245, 0.16666667
      %v278 = vmul.f32 %v246, 0.16666667
      %v279 = vmul.f32 %v247, 0.16666667
      %v280 = vmul.f32 %v248, 0.16666667
      %v281 = vmul.f32 %v249, 0.16666667
      %v282 = vmul.f32 %v250, 0.16666667
      %v283 = vadd.f32 %v251, 0.5
      %v284 = vadd.f32 %v252, 0.5
      %v285 = vadd.f32 %v253, 0.5
      %v286 = vadd.f32 %v254, 0.5
      %v287 = vadd.f32 %v255, 0.5
      %v288 = vadd.f32 %v256, 0.5
      %v289 = vadd.f32 %v257, 0.5
      %v290 = vadd.f32 %v258, 0.5
      %v291 = vadd.f32 %v259, 0.5
      %v292 = vadd.f32 %v260, 0.5
      %v293 = vadd.f32 %v261, 0.5
      %v294 = vadd.f32 %v262, 0.5
      %v295 = vadd.f32 %v263, 0.5
      %v296 = vadd.f32 %v264, 0.5
      %v297 = vadd.f32 %v265, 0.5
      %v298 = vadd.f32 %v266, 0.5
      %v299 = vadd.f32 %v267, 0.5
      %v300 = vadd.f32 %v268, 0.5
      %v301 = vadd.f32 %v269, 0.5
      %v302 = vadd.f32 %v270, 0.5
      %v303 = vadd.f32 %v271, 0.5
      %v304 = vadd.f32 %v272, 0.5
      %v305 = vadd.f32 %v273, 0.5
      %v306 = vadd.f32 %v274, 0.5
      %v307 = vadd.f32 %v275, 0.5
      %v308 = vadd.f32 %v276, 0.5
      %v309 = vadd.f32 %v277, 0.5
      %v310 = vadd.f32 %v278, 0.5
      %v311 = vadd.f32 %v279, 0.5
      %v312 = vadd.f32 %v280, 0.5
      %v313 = vadd.f32 %v281, 0.5
      %v314 = vadd.f32 %v282, 0.5
      %v315 = vmax.f32 %v283, 0.0
      %v316 = vmax.f32 %v284, 0.0
      %v317 = vmax.f32 %v285, 0.0
      %v318 = vmax.f32 %v286, 0.0
      %v319 = vmax.f32 %v287, 0.0
      %v320 = vmax.f32 %v288, 0.0
      %v321 = vmax.f32 %v289, 0.0
      %v322 = vmax.f32 %v290, 0.0
      %v323 = vmax.f32 %v291, 0.0
      %v324 = vmax.f32 %v292, 0.0
      %v325 = vmax.f32 %v293, 0.0
      %v326 = vmax.f32 %v294, 0.0
      %v327 = vmax.f32 %v295, 0.0
      %v328 = vmax.f32 %v296, 0.0
      %v329 = vmax.f32 %v297, 0.0
      %v330 = vmax.f32 %v298, 0.0
      %v331 = vmax.f32 %v299, 0.0
      %v332 = vmax.f32 %v300, 0.0
      %v333 = vmax.f32 %v301, 0.0
      %v334 = vmax.f32 %v302, 0.0
      %v335 = vmax.f32 %v303, 0.0
      %v336 = vmax.f32 %v304, 0.0
      %v337 = vmax.f32 %v305, 0.0
      %v338 = vmax.f32 %v306, 0.0
      %v339 = vmax.f32 %v307, 0.0
      %v340 = vmax.f32 %v308, 0.0
      %v341 = vmax.f32 %v309, 0.0
      %v342 = vmax.f32 %v310, 0.0
      %v343 = vmax.f32 %v311, 0.0
      %v344 = vmax.f32 %v312, 0.0
      %v345 = vmax.f32 %v313, 0.0
      %v346 = vmax.f32 %v314, 0.0
      %v347 = vmin.f32 %v315, 1.0
      %v348 = vmin.f32 %v316, 1.0
      %v349 = vmin.f32 %v317, 1.0
      %v350 = vmin.f32 %v318, 1.0
      %v351 = vmin.f32 %v319, 1.0
      %v352 = vmin.f32 %v320, 1.0
      %v353 = vmin.f32 %v321, 1.0
      %v354 = vmin.f32 %v322, 1.0
      %v355 = vmin.f32 %v323, 1.0
      %v356 = vmin.f32 %v324, 1.0
      %v357 = vmin.f32 %v325, 1.0
      %v358 = vmin.f32 %v326, 1.0
      %v359 = vmin.f32 %v327, 1.0
      %v360 = vmin.f32 %v328, 1.0
      %v361 = vmin.f32 %v329, 1.0
      %v362 = vmin.f32 %v330, 1.0
      %v363 = vmin.f32 %v331, 1.0
      %v364 = vmin.f32 %v332, 1.0
      %v365 = vmin.f32 %v333, 1.0
      %v366 = vmin.f32 %v334, 1.0
      %v367 = vmin.f32 %v335, 1.0
      %v368 = vmin.f32 %v336, 1.0
      %v369 = vmin.f32 %v337, 1.0
      %v370 = vmin.f32 %v338, 1.0
      %v371 = vmin.f32 %v339, 1.0
      %v372 = vmin.f32 %v340, 1.0
      %v373 = vmin.f32 %v341, 1.0
      %v374 = vmin.f32 %v342, 1.0
      %v375 = vmin.f32 %v343, 1.0
      %v376 = vmin.f32 %v344, 1.0
      %v377 = vmin.f32 %v345, 1.0
      %v378 = vmin.f32 %v346, 1.0
      %v379 = vmul.f32 %v219, %v347
      %v380 = vmul.f32 %v220, %v348
      %v381 = vmul.f32 %v221, %v349
      %v382 = vmul.f32 %v222, %v350
      %v383 = vmul.f32 %v223, %v351
      %v384 = vmul.f32 %v224, %v352
      %v385 = vmul.f32 %v225, %v353
      %v386 = vmul.f32 %v226, %v354
      %v387 = vmul.f32 %v227, %v355
      %v388 = vmul.f32 %v228, %v356
      %v389 = vmul.f32 %v229, %v357
      %v390 = vmul.f32 %v230, %v358
      %v391 = vmul.f32 %v231, %v359
      %v392 = vmul.f32 %v232, %v360
      %v393 = vmul.f32 %v233, %v361
      %v394 = vmul.f32 %v234, %v362
      %v395 = vmul.f32 %v235, %v363
      %v396 = vmul.f32 %v236, %v364
      %v397 = vmul.f32 %v237, %v365
      %v398 = vmul.f32 %v238, %v366
      %v399 = vmul.f32 %v239, %v367
      %v400 = vmul.f32 %v240, %v368
      %v401 = vmul.f32 %v241, %v369
      %v402 = vmul.f32 %v242, %v370
      %v403 = vmul.f32 %v243, %v371
      %v404 = vmul.f32 %v244, %v372
      %v405 = vmul.f32 %v245, %v373
      %v406 = vmul.f32 %v246, %v374
      %v407 = vmul.f32 %v247, %v375
      %v408 = vmul.f32 %v248, %v376
      %v409 = vmul.f32 %v249, %v377
      %v410 = vmul.f32 %v250, %v378
      %411 = vst [vmem:[#allocation2] sm:$0xff] -1e+30
      %412 = vst [vmem:[#allocation2 + $0x8] sm:$0xff] -1e+30
      %413 = vst [vmem:[#allocation2 + $0x10] sm:$0x3] -1e+30
      %414 = vst [vmem:[#allocation2 + $0x18] sm:$0xff] -1e+30
      %415 = vst [vmem:[#allocation2 + $0x20] sm:$0xff] -1e+30
      %416 = vst [vmem:[#allocation2 + $0x28] sm:$0x3] -1e+30
      %417 = vst [vmem:[#allocation2 + $0x30] sm:$0xff] -1e+30
      %418 = vst [vmem:[#allocation2 + $0x38] sm:$0xff] -1e+30
      %419 = vst [vmem:[#allocation2 + $0x40] sm:$0x3] -1e+30
      %420 = vst [vmem:[#allocation2 + $0x48] sm:$0xff] -1e+30
      %421 = vst [vmem:[#allocation2 + $0x50] sm:$0xff] -1e+30
      %422 = vst [vmem:[#allocation2 + $0x58] sm:$0x3] -1e+30
      %423 = vst [vmem:[#allocation2 + $0x60] sm:$0xff] -1e+30
      %424 = vst [vmem:[#allocation2 + $0x68] sm:$0xff] -1e+30
      %425 = vst [vmem:[#allocation2 + $0x70] sm:$0x3] -1e+30
      %426 = vst [vmem:[#allocation2 + $0x78] sm:$0xff] -1e+30
      %427 = vst [vmem:[#allocation2 + $0x80] sm:$0xff] -1e+30
      %428 = vst [vmem:[#allocation2 + $0x88] sm:$0x3] -1e+30
      %429 = vst [vmem:[#allocation2 + $0x90] sm:$0xff] -1e+30
      %430 = vst [vmem:[#allocation2 + $0x98] sm:$0xff] -1e+30
      %431 = vst [vmem:[#allocation2 + $0xa0] sm:$0x3] -1e+30
      %432 = vst [vmem:[#allocation2 + $0xa8] sm:$0xff] -1e+30
      %433 = vst [vmem:[#allocation2 + $0xb0] sm:$0xff] -1e+30
      %434 = vst [vmem:[#allocation2 + $0xb8] sm:$0x3] -1e+30
      %435 = vst [vmem:[#allocation2 + $0xc0] sm:$0xff] -1e+30
      %436 = vst [vmem:[#allocation2 + $0xc8] sm:$0xff] -1e+30
      %437 = vst [vmem:[#allocation2 + $0xd0] sm:$0x3] -1e+30
      %438 = vst [vmem:[#allocation2 + $0xd8] sm:$0xff] -1e+30
      %439 = vst [vmem:[#allocation2 + $0xe0] sm:$0xff] -1e+30
      %440 = vst [vmem:[#allocation2 + $0xe8] sm:$0x3] -1e+30
      %441 = vst [vmem:[#allocation2 + $0xf0] sm:$0xff] -1e+30
      %442 = vst [vmem:[#allocation2 + $0xf8] sm:$0xff] -1e+30
      %443 = vst [vmem:[#allocation2 + $0x100] sm:$0x3] -1e+30
      %444 = vst [vmem:[#allocation2 + $0x108] sm:$0xff] -1e+30
      %445 = vst [vmem:[#allocation2 + $0x110] sm:$0xff] -1e+30
      %446 = vst [vmem:[#allocation2 + $0x118] sm:$0x3] -1e+30
      %447 = vst [vmem:[#allocation2 + $0x120] sm:$0xff] -1e+30
      %448 = vst [vmem:[#allocation2 + $0x128] sm:$0xff] -1e+30
      %449 = vst [vmem:[#allocation2 + $0x130] sm:$0x3] -1e+30
      %450 = vst [vmem:[#allocation2 + $0x138] sm:$0xff] -1e+30
      %451 = vst [vmem:[#allocation2 + $0x140] sm:$0xff] -1e+30
      %452 = vst [vmem:[#allocation2 + $0x148] sm:$0x3] -1e+30
      %453 = vst [vmem:[#allocation2 + $0x150] sm:$0xff] -1e+30
      %454 = vst [vmem:[#allocation2 + $0x158] sm:$0xff] -1e+30
      %455 = vst [vmem:[#allocation2 + $0x160] sm:$0x3] -1e+30
      %456 = vst [vmem:[#allocation2 + $0x168] sm:$0xff] -1e+30
      %457 = vst [vmem:[#allocation2 + $0x170] sm:$0xff] -1e+30
      %458 = vst [vmem:[#allocation2 + $0x178] sm:$0x3] -1e+30
      %459 = vst [vmem:[#allocation2 + $0x180] sm:$0xff] -1e+30
      %460 = vst [vmem:[#allocation2 + $0x188] sm:$0xff] -1e+30
      %461 = vst [vmem:[#allocation2 + $0x190] sm:$0x3] -1e+30
      %462 = vst [vmem:[#allocation2 + $0x198] sm:$0xff] -1e+30
      %463 = vst [vmem:[#allocation2 + $0x1a0] sm:$0xff] -1e+30
      %464 = vst [vmem:[#allocation2 + $0x1a8] sm:$0x3] -1e+30
      %s465 = scalar_lea.vmem [#allocation2], 24
      %466 = vst [vmem:[%s465 + $0x1] sm:$0xff] %v379
      %467 = vst [vmem:[%s465 + $0x9] sm:$0xff] %v380
      %468 = vst [vmem:[%s465 + $0x19] sm:$0xff] %v381
      %469 = vst [vmem:[%s465 + $0x21] sm:$0xff] %v382
      %470 = vst [vmem:[%s465 + $0x31] sm:$0xff] %v383
      %471 = vst [vmem:[%s465 + $0x39] sm:$0xff] %v384
      %472 = vst [vmem:[%s465 + $0x49] sm:$0xff] %v385
      %473 = vst [vmem:[%s465 + $0x51] sm:$0xff] %v386
      %474 = vst [vmem:[%s465 + $0x61] sm:$0xff] %v387
      %475 = vst [vmem:[%s465 + $0x69] sm:$0xff] %v388
      %476 = vst [vmem:[%s465 + $0x79] sm:$0xff] %v389
      %477 = vst [vmem:[%s465 + $0x81] sm:$0xff] %v390
      %478 = vst [vmem:[%s465 + $0x91] sm:$0xff] %v391
      %479 = vst [vmem:[%s465 + $0x99] sm:$0xff] %v392
      %480 = vst [vmem:[%s465 + $0xa9] sm:$0xff] %v393
      %481 = vst [vmem:[%s465 + $0xb1] sm:$0xff] %v394
      %482 = vst [vmem:[%s465 + $0xc1] sm:$0xff] %v395
      %483 = vst [vmem:[%s465 + $0xc9] sm:$0xff] %v396
      %484 = vst [vmem:[%s465 + $0xd9] sm:$0xff] %v397
      %485 = vst [vmem:[%s465 + $0xe1] sm:$0xff] %v398
      %486 = vst [vmem:[%s465 + $0xf1] sm:$0xff] %v399
      %487 = vst [vmem:[%s465 + $0xf9] sm:$0xff] %v400
      %488 = vst [vmem:[%s465 + $0x109] sm:$0xff] %v401
      %489 = vst [vmem:[%s465 + $0x111] sm:$0xff] %v402
      %490 = vst [vmem:[%s465 + $0x121] sm:$0xff] %v403
      %491 = vst [vmem:[%s465 + $0x129] sm:$0xff] %v404
      %492 = vst [vmem:[%s465 + $0x139] sm:$0xff] %v405
      %493 = vst [vmem:[%s465 + $0x141] sm:$0xff] %v406
      %494 = vst [vmem:[%s465 + $0x151] sm:$0xff] %v407
      %495 = vst [vmem:[%s465 + $0x159] sm:$0xff] %v408
      %496 = vst [vmem:[%s465 + $0x169] sm:$0xff] %v409
      %497 = vst [vmem:[%s465 + $0x171] sm:$0xff] %v410
      %v498 = vld [vmem:[#allocation2] sm:$0xff]
      %v499 = vld [vmem:[#allocation2 + $0x8] sm:$0xff]
      %v500 = vld [vmem:[#allocation2 + $0x18] sm:$0xff]
      %v501 = vld [vmem:[#allocation2 + $0x20] sm:$0xff]
      %v502 = vld [vmem:[#allocation2 + $0x30] sm:$0xff]
      %v503 = vld [vmem:[#allocation2 + $0x38] sm:$0xff]
      %v504 = vld [vmem:[#allocation2 + $0x48] sm:$0xff]
      %v505 = vld [vmem:[#allocation2 + $0x50] sm:$0xff]
      %v506 = vld [vmem:[#allocation2 + $0x60] sm:$0xff]
      %v507 = vld [vmem:[#allocation2 + $0x68] sm:$0xff]
      %v508 = vld [vmem:[#allocation2 + $0x78] sm:$0xff]
      %v509 = vld [vmem:[#allocation2 + $0x80] sm:$0xff]
      %v510 = vld [vmem:[#allocation2 + $0x90] sm:$0xff]
      %v511 = vld [vmem:[#allocation2 + $0x98] sm:$0xff]
      %v512 = vld [vmem:[#allocation2 + $0xa8] sm:$0xff]
      %v513 = vld [vmem:[#allocation2 + $0xb0] sm:$0xff]
      %v514 = vld [vmem:[#allocation2 + $0xc0] sm:$0xff]
      %v515 = vld [vmem:[#allocation2 + $0xc8] sm:$0xff]
      %v516 = vld [vmem:[#allocation2 + $0xd8] sm:$0xff]
      %v517 = vld [vmem:[#allocation2 + $0xe0] sm:$0xff]
      %v518 = vld [vmem:[#allocation2 + $0xf0] sm:$0xff]
      %v519 = vld [vmem:[#allocation2 + $0xf8] sm:$0xff]
      %v520 = vld [vmem:[#allocation2 + $0x108] sm:$0xff]
      %v521 = vld [vmem:[#allocation2 + $0x110] sm:$0xff]
      %v522 = vld [vmem:[#allocation2 + $0x120] sm:$0xff]
      %v523 = vld [vmem:[#allocation2 + $0x128] sm:$0xff]
      %v524 = vld [vmem:[#allocation2 + $0x138] sm:$0xff]
      %v525 = vld [vmem:[#allocation2 + $0x140] sm:$0xff]
      %v526 = vld [vmem:[#allocation2 + $0x150] sm:$0xff]
      %v527 = vld [vmem:[#allocation2 + $0x158] sm:$0xff]
      %v528 = vld [vmem:[#allocation2 + $0x168] sm:$0xff]
      %v529 = vld [vmem:[#allocation2 + $0x170] sm:$0xff]
      %v530 = vld [vmem:[#allocation2 + $0x1] sm:$0xff]
      %v531 = vld [vmem:[#allocation2 + $0x9] sm:$0xff]
      %v532 = vld [vmem:[#allocation2 + $0x19] sm:$0xff]
      %v533 = vld [vmem:[#allocation2 + $0x21] sm:$0xff]
      %v534 = vld [vmem:[#allocation2 + $0x31] sm:$0xff]
      %v535 = vld [vmem:[#allocation2 + $0x39] sm:$0xff]
      %v536 = vld [vmem:[#allocation2 + $0x49] sm:$0xff]
      %v537 = vld [vmem:[#allocation2 + $0x51] sm:$0xff]
      %v538 = vld [vmem:[#allocation2 + $0x61] sm:$0xff]
      %v539 = vld [vmem:[#allocation2 + $0x69] sm:$0xff]
      %v540 = vld [vmem:[#allocation2 + $0x79] sm:$0xff]
      %v541 = vld [vmem:[#allocation2 + $0x81] sm:$0xff]
      %v542 = vld [vmem:[#allocation2 + $0x91] sm:$0xff]
      %v543 = vld [vmem:[#allocation2 + $0x99] sm:$0xff]
      %v544 = vld [vmem:[#allocation2 + $0xa9] sm:$0xff]
      %v545 = vld [vmem:[#allocation2 + $0xb1] sm:$0xff]
      %v546 = vld [vmem:[#allocation2 + $0xc1] sm:$0xff]
      %v547 = vld [vmem:[#allocation2 + $0xc9] sm:$0xff]
      %v548 = vld [vmem:[#allocation2 + $0xd9] sm:$0xff]
      %v549 = vld [vmem:[#allocation2 + $0xe1] sm:$0xff]
      %v550 = vld [vmem:[#allocation2 + $0xf1] sm:$0xff]
      %v551 = vld [vmem:[#allocation2 + $0xf9] sm:$0xff]
      %v552 = vld [vmem:[#allocation2 + $0x109] sm:$0xff]
      %v553 = vld [vmem:[#allocation2 + $0x111] sm:$0xff]
      %v554 = vld [vmem:[#allocation2 + $0x121] sm:$0xff]
      %v555 = vld [vmem:[#allocation2 + $0x129] sm:$0xff]
      %v556 = vld [vmem:[#allocation2 + $0x139] sm:$0xff]
      %v557 = vld [vmem:[#allocation2 + $0x141] sm:$0xff]
      %v558 = vld [vmem:[#allocation2 + $0x151] sm:$0xff]
      %v559 = vld [vmem:[#allocation2 + $0x159] sm:$0xff]
      %v560 = vld [vmem:[#allocation2 + $0x169] sm:$0xff]
      %v561 = vld [vmem:[#allocation2 + $0x171] sm:$0xff]
      %v562 = vmax.f32 %v498, %v530
      %v563 = vmax.f32 %v499, %v531
      %v564 = vmax.f32 %v500, %v532
      %v565 = vmax.f32 %v501, %v533
      %v566 = vmax.f32 %v502, %v534
      %v567 = vmax.f32 %v503, %v535
      %v568 = vmax.f32 %v504, %v536
      %v569 = vmax.f32 %v505, %v537
      %v570 = vmax.f32 %v506, %v538
      %v571 = vmax.f32 %v507, %v539
      %v572 = vmax.f32 %v508, %v540
      %v573 = vmax.f32 %v509, %v541
      %v574 = vmax.f32 %v510, %v542
      %v575 = vmax.f32 %v511, %v543
      %v576 = vmax.f32 %v512, %v544
      %v577 = vmax.f32 %v513, %v545
      %v578 = vmax.f32 %v514, %v546
      %v579 = vmax.f32 %v515, %v547
      %v580 = vmax.f32 %v516, %v548
      %v581 = vmax.f32 %v517, %v549
      %v582 = vmax.f32 %v518, %v550
      %v583 = vmax.f32 %v519, %v551
      %v584 = vmax.f32 %v520, %v552
      %v585 = vmax.f32 %v521, %v553
      %v586 = vmax.f32 %v522, %v554
      %v587 = vmax.f32 %v523, %v555
      %v588 = vmax.f32 %v524, %v556
      %v589 = vmax.f32 %v525, %v557
      %v590 = vmax.f32 %v526, %v558
      %v591 = vmax.f32 %v527, %v559
      %v592 = vmax.f32 %v528, %v560
      %v593 = vmax.f32 %v529, %v561
      %v594 = vld [vmem:[#allocation2 + $0x2] sm:$0xff]
      %v595 = vld [vmem:[#allocation2 + $0xa] sm:$0xff]
      %v596 = vld [vmem:[#allocation2 + $0x1a] sm:$0xff]
      %v597 = vld [vmem:[#allocation2 + $0x22] sm:$0xff]
      %v598 = vld [vmem:[#allocation2 + $0x32] sm:$0xff]
      %v599 = vld [vmem:[#allocation2 + $0x3a] sm:$0xff]
      %v600 = vld [vmem:[#allocation2 + $0x4a] sm:$0xff]
      %v601 = vld [vmem:[#allocation2 + $0x52] sm:$0xff]
      %v602 = vld [vmem:[#allocation2 + $0x62] sm:$0xff]
      %v603 = vld [vmem:[#allocation2 + $0x6a] sm:$0xff]
      %v604 = vld [vmem:[#allocation2 + $0x7a] sm:$0xff]
      %v605 = vld [vmem:[#allocation2 + $0x82] sm:$0xff]
      %v606 = vld [vmem:[#allocation2 + $0x92] sm:$0xff]
      %v607 = vld [vmem:[#allocation2 + $0x9a] sm:$0xff]
      %v608 = vld [vmem:[#allocation2 + $0xaa] sm:$0xff]
      %v609 = vld [vmem:[#allocation2 + $0xb2] sm:$0xff]
      %v610 = vld [vmem:[#allocation2 + $0xc2] sm:$0xff]
      %v611 = vld [vmem:[#allocation2 + $0xca] sm:$0xff]
      %v612 = vld [vmem:[#allocation2 + $0xda] sm:$0xff]
      %v613 = vld [vmem:[#allocation2 + $0xe2] sm:$0xff]
      %v614 = vld [vmem:[#allocation2 + $0xf2] sm:$0xff]
      %v615 = vld [vmem:[#allocation2 + $0xfa] sm:$0xff]
      %v616 = vld [vmem:[#allocation2 + $0x10a] sm:$0xff]
      %v617 = vld [vmem:[#allocation2 + $0x112] sm:$0xff]
      %v618 = vld [vmem:[#allocation2 + $0x122] sm:$0xff]
      %v619 = vld [vmem:[#allocation2 + $0x12a] sm:$0xff]
      %v620 = vld [vmem:[#allocation2 + $0x13a] sm:$0xff]
      %v621 = vld [vmem:[#allocation2 + $0x142] sm:$0xff]
      %v622 = vld [vmem:[#allocation2 + $0x152] sm:$0xff]
      %v623 = vld [vmem:[#allocation2 + $0x15a] sm:$0xff]
      %v624 = vld [vmem:[#allocation2 + $0x16a] sm:$0xff]
      %v625 = vld [vmem:[#allocation2 + $0x172] sm:$0xff]
      %v626 = vmax.f32 %v562, %v594
      %v627 = vmax.f32 %v563, %v595
      %v628 = vmax.f32 %v564, %v596
      %v629 = vmax.f32 %v565, %v597
      %v630 = vmax.f32 %v566, %v598
      %v631 = vmax.f32 %v567, %v599
      %v632 = vmax.f32 %v568, %v600
      %v633 = vmax.f32 %v569, %v601
      %v634 = vmax.f32 %v570, %v602
      %v635 = vmax.f32 %v571, %v603
      %v636 = vmax.f32 %v572, %v604
      %v637 = vmax.f32 %v573, %v605
      %v638 = vmax.f32 %v574, %v606
      %v639 = vmax.f32 %v575, %v607
      %v640 = vmax.f32 %v576, %v608
      %v641 = vmax.f32 %v577, %v609
      %v642 = vmax.f32 %v578, %v610
      %v643 = vmax.f32 %v579, %v611
      %v644 = vmax.f32 %v580, %v612
      %v645 = vmax.f32 %v581, %v613
      %v646 = vmax.f32 %v582, %v614
      %v647 = vmax.f32 %v583, %v615
      %v648 = vmax.f32 %v584, %v616
      %v649 = vmax.f32 %v585, %v617
      %v650 = vmax.f32 %v586, %v618
      %v651 = vmax.f32 %v587, %v619
      %v652 = vmax.f32 %v588, %v620
      %v653 = vmax.f32 %v589, %v621
      %v654 = vmax.f32 %v590, %v622
      %v655 = vmax.f32 %v591, %v623
      %v656 = vmax.f32 %v592, %v624
      %v657 = vmax.f32 %v593, %v625
      %v658 = vld [vmem:[%s465] sm:$0xff]
      %v659 = vld [vmem:[%s465 + $0x8] sm:$0xff]
      %v660 = vld [vmem:[%s465 + $0x18] sm:$0xff]
      %v661 = vld [vmem:[%s465 + $0x20] sm:$0xff]
      %v662 = vld [vmem:[%s465 + $0x30] sm:$0xff]
      %v663 = vld [vmem:[%s465 + $0x38] sm:$0xff]
      %v664 = vld [vmem:[%s465 + $0x48] sm:$0xff]
      %v665 = vld [vmem:[%s465 + $0x50] sm:$0xff]
      %v666 = vld [vmem:[%s465 + $0x60] sm:$0xff]
      %v667 = vld [vmem:[%s465 + $0x68] sm:$0xff]
      %v668 = vld [vmem:[%s465 + $0x78] sm:$0xff]
      %v669 = vld [vmem:[%s465 + $0x80] sm:$0xff]
      %v670 = vld [vmem:[%s465 + $0x90] sm:$0xff]
      %v671 = vld [vmem:[%s465 + $0x98] sm:$0xff]
      %v672 = vld [vmem:[%s465 + $0xa8] sm:$0xff]
      %v673 = vld [vmem:[%s465 + $0xb0] sm:$0xff]
      %v674 = vld [vmem:[%s465 + $0xc0] sm:$0xff]
      %v675 = vld [vmem:[%s465 + $0xc8] sm:$0xff]
      %v676 = vld [vmem:[%s465 + $0xd8] sm:$0xff]
      %v677 = vld [vmem:[%s465 + $0xe0] sm:$0xff]
      %v678 = vld [vmem:[%s465 + $0xf0] sm:$0xff]
      %v679 = vld [vmem:[%s465 + $0xf8] sm:$0xff]
      %v680 = vld [vmem:[%s465 + $0x108] sm:$0xff]
      %v681 = vld [vmem:[%s465 + $0x110] sm:$0xff]
      %v682 = vld [vmem:[%s465 + $0x120] sm:$0xff]
      %v683 = vld [vmem:[%s465 + $0x128] sm:$0xff]
      %v684 = vld [vmem:[%s465 + $0x138] sm:$0xff]
      %v685 = vld [vmem:[%s465 + $0x140] sm:$0xff]
      %v686 = vld [vmem:[%s465 + $0x150] sm:$0xff]
      %v687 = vld [vmem:[%s465 + $0x158] sm:$0xff]
      %v688 = vld [vmem:[%s465 + $0x168] sm:$0xff]
      %v689 = vld [vmem:[%s465 + $0x170] sm:$0xff]
      %v690 = vmax.f32 %v626, %v658
      %v691 = vmax.f32 %v627, %v659
      %v692 = vmax.f32 %v628, %v660
      %v693 = vmax.f32 %v629, %v661
      %v694 = vmax.f32 %v630, %v662
      %v695 = vmax.f32 %v631, %v663
      %v696 = vmax.f32 %v632, %v664
      %v697 = vmax.f32 %v633, %v665
      %v698 = vmax.f32 %v634, %v666
      %v699 = vmax.f32 %v635, %v667
      %v700 = vmax.f32 %v636, %v668
      %v701 = vmax.f32 %v637, %v669
      %v702 = vmax.f32 %v638, %v670
      %v703 = vmax.f32 %v639, %v671
      %v704 = vmax.f32 %v640, %v672
      %v705 = vmax.f32 %v641, %v673
      %v706 = vmax.f32 %v642, %v674
      %v707 = vmax.f32 %v643, %v675
      %v708 = vmax.f32 %v644, %v676
      %v709 = vmax.f32 %v645, %v677
      %v710 = vmax.f32 %v646, %v678
      %v711 = vmax.f32 %v647, %v679
      %v712 = vmax.f32 %v648, %v680
      %v713 = vmax.f32 %v649, %v681
      %v714 = vmax.f32 %v650, %v682
      %v715 = vmax.f32 %v651, %v683
      %v716 = vmax.f32 %v652, %v684
      %v717 = vmax.f32 %v653, %v685
      %v718 = vmax.f32 %v654, %v686
      %v719 = vmax.f32 %v655, %v687
      %v720 = vmax.f32 %v656, %v688
      %v721 = vmax.f32 %v657, %v689
      %v722 = vld [vmem:[%s465 + $0x1] sm:$0xff]
      %v723 = vld [vmem:[%s465 + $0x9] sm:$0xff]
      %v724 = vld [vmem:[%s465 + $0x19] sm:$0xff]
      %v725 = vld [vmem:[%s465 + $0x21] sm:$0xff]
      %v726 = vld [vmem:[%s465 + $0x31] sm:$0xff]
      %v727 = vld [vmem:[%s465 + $0x39] sm:$0xff]
      %v728 = vld [vmem:[%s465 + $0x49] sm:$0xff]
      %v729 = vld [vmem:[%s465 + $0x51] sm:$0xff]
      %v730 = vld [vmem:[%s465 + $0x61] sm:$0xff]
      %v731 = vld [vmem:[%s465 + $0x69] sm:$0xff]
      %v732 = vld [vmem:[%s465 + $0x79] sm:$0xff]
      %v733 = vld [vmem:[%s465 + $0x81] sm:$0xff]
      %v734 = vld [vmem:[%s465 + $0x91] sm:$0xff]
      %v735 = vld [vmem:[%s465 + $0x99] sm:$0xff]
      %v736 = vld [vmem:[%s465 + $0xa9] sm:$0xff]
      %v737 = vld [vmem:[%s465 + $0xb1] sm:$0xff]
      %v738 = vld [vmem:[%s465 + $0xc1] sm:$0xff]
      %v739 = vld [vmem:[%s465 + $0xc9] sm:$0xff]
      %v740 = vld [vmem:[%s465 + $0xd9] sm:$0xff]
      %v741 = vld [vmem:[%s465 + $0xe1] sm:$0xff]
      %v742 = vld [vmem:[%s465 + $0xf1] sm:$0xff]
      %v743 = vld [vmem:[%s465 + $0xf9] sm:$0xff]
      %v744 = vld [vmem:[%s465 + $0x109] sm:$0xff]
      %v745 = vld [vmem:[%s465 + $0x111] sm:$0xff]
      %v746 = vld [vmem:[%s465 + $0x121] sm:$0xff]
      %v747 = vld [vmem:[%s465 + $0x129] sm:$0xff]
      %v748 = vld [vmem:[%s465 + $0x139] sm:$0xff]
      %v749 = vld [vmem:[%s465 + $0x141] sm:$0xff]
      %v750 = vld [vmem:[%s465 + $0x151] sm:$0xff]
      %v751 = vld [vmem:[%s465 + $0x159] sm:$0xff]
      %v752 = vld [vmem:[%s465 + $0x169] sm:$0xff]
      %v753 = vld [vmem:[%s465 + $0x171] sm:$0xff]
      %v754 = vmax.f32 %v690, %v722
      %v755 = vmax.f32 %v691, %v723
      %v756 = vmax.f32 %v692, %v724
      %v757 = vmax.f32 %v693, %v725
      %v758 = vmax.f32 %v694, %v726
      %v759 = vmax.f32 %v695, %v727
      %v760 = vmax.f32 %v696, %v728
      %v761 = vmax.f32 %v697, %v729
      %v762 = vmax.f32 %v698, %v730
      %v763 = vmax.f32 %v699, %v731
      %v764 = vmax.f32 %v700, %v732
      %v765 = vmax.f32 %v701, %v733
      %v766 = vmax.f32 %v702, %v734
      %v767 = vmax.f32 %v703, %v735
      %v768 = vmax.f32 %v704, %v736
      %v769 = vmax.f32 %v705, %v737
      %v770 = vmax.f32 %v706, %v738
      %v771 = vmax.f32 %v707, %v739
      %v772 = vmax.f32 %v708, %v740
      %v773 = vmax.f32 %v709, %v741
      %v774 = vmax.f32 %v710, %v742
      %v775 = vmax.f32 %v711, %v743
      %v776 = vmax.f32 %v712, %v744
      %v777 = vmax.f32 %v713, %v745
      %v778 = vmax.f32 %v714, %v746
      %v779 = vmax.f32 %v715, %v747
      %v780 = vmax.f32 %v716, %v748
      %v781 = vmax.f32 %v717, %v749
      %v782 = vmax.f32 %v718, %v750
      %v783 = vmax.f32 %v719, %v751
      %v784 = vmax.f32 %v720, %v752
      %v785 = vmax.f32 %v721, %v753
      %v786 = vld [vmem:[%s465 + $0x2] sm:$0xff]
      %v787 = vld [vmem:[%s465 + $0xa] sm:$0xff]
      %v788 = vld [vmem:[%s465 + $0x1a] sm:$0xff]
      %v789 = vld [vmem:[%s465 + $0x22] sm:$0xff]
      %v790 = vld [vmem:[%s465 + $0x32] sm:$0xff]
      %v791 = vld [vmem:[%s465 + $0x3a] sm:$0xff]
      %v792 = vld [vmem:[%s465 + $0x4a] sm:$0xff]
      %v793 = vld [vmem:[%s465 + $0x52] sm:$0xff]
      %v794 = vld [vmem:[%s465 + $0x62] sm:$0xff]
      %v795 = vld [vmem:[%s465 + $0x6a] sm:$0xff]
      %v796 = vld [vmem:[%s465 + $0x7a] sm:$0xff]
      %v797 = vld [vmem:[%s465 + $0x82] sm:$0xff]
      %v798 = vld [vmem:[%s465 + $0x92] sm:$0xff]
      %v799 = vld [vmem:[%s465 + $0x9a] sm:$0xff]
      %v800 = vld [vmem:[%s465 + $0xaa] sm:$0xff]
      %v801 = vld [vmem:[%s465 + $0xb2] sm:$0xff]
      %v802 = vld [vmem:[%s465 + $0xc2] sm:$0xff]
      %v803 = vld [vmem:[%s465 + $0xca] sm:$0xff]
      %v804 = vld [vmem:[%s465 + $0xda] sm:$0xff]
      %v805 = vld [vmem:[%s465 + $0xe2] sm:$0xff]
      %v806 = vld [vmem:[%s465 + $0xf2] sm:$0xff]
      %v807 = vld [vmem:[%s465 + $0xfa] sm:$0xff]
      %v808 = vld [vmem:[%s465 + $0x10a] sm:$0xff]
      %v809 = vld [vmem:[%s465 + $0x112] sm:$0xff]
      %v810 = vld [vmem:[%s465 + $0x122] sm:$0xff]
      %v811 = vld [vmem:[%s465 + $0x12a] sm:$0xff]
      %v812 = vld [vmem:[%s465 + $0x13a] sm:$0xff]
      %v813 = vld [vmem:[%s465 + $0x142] sm:$0xff]
      %v814 = vld [vmem:[%s465 + $0x152] sm:$0xff]
      %v815 = vld [vmem:[%s465 + $0x15a] sm:$0xff]
      %v816 = vld [vmem:[%s465 + $0x16a] sm:$0xff]
      %v817 = vld [vmem:[%s465 + $0x172] sm:$0xff]
      %v818 = vmax.f32 %v754, %v786
      %v819 = vmax.f32 %v755, %v787
      %v820 = vmax.f32 %v756, %v788
      %v821 = vmax.f32 %v757, %v789
      %v822 = vmax.f32 %v758, %v790
      %v823 = vmax.f32 %v759, %v791
      %v824 = vmax.f32 %v760, %v792
      %v825 = vmax.f32 %v761, %v793
      %v826 = vmax.f32 %v762, %v794
      %v827 = vmax.f32 %v763, %v795
      %v828 = vmax.f32 %v764, %v796
      %v829 = vmax.f32 %v765, %v797
      %v830 = vmax.f32 %v766, %v798
      %v831 = vmax.f32 %v767, %v799
      %v832 = vmax.f32 %v768, %v800
      %v833 = vmax.f32 %v769, %v801
      %v834 = vmax.f32 %v770, %v802
      %v835 = vmax.f32 %v771, %v803
      %v836 = vmax.f32 %v772, %v804
      %v837 = vmax.f32 %v773, %v805
      %v838 = vmax.f32 %v774, %v806
      %v839 = vmax.f32 %v775, %v807
      %v840 = vmax.f32 %v776, %v808
      %v841 = vmax.f32 %v777, %v809
      %v842 = vmax.f32 %v778, %v810
      %v843 = vmax.f32 %v779, %v811
      %v844 = vmax.f32 %v780, %v812
      %v845 = vmax.f32 %v781, %v813
      %v846 = vmax.f32 %v782, %v814
      %v847 = vmax.f32 %v783, %v815
      %v848 = vmax.f32 %v784, %v816
      %v849 = vmax.f32 %v785, %v817
      %s850 = scalar_lea.vmem [#allocation2], 48
      %v851 = vld [vmem:[%s850] sm:$0xff]
      %v852 = vld [vmem:[%s850 + $0x8] sm:$0xff]
      %v853 = vld [vmem:[%s850 + $0x18] sm:$0xff]
      %v854 = vld [vmem:[%s850 + $0x20] sm:$0xff]
      %v855 = vld [vmem:[%s850 + $0x30] sm:$0xff]
      %v856 = vld [vmem:[%s850 + $0x38] sm:$0xff]
      %v857 = vld [vmem:[%s850 + $0x48] sm:$0xff]
      %v858 = vld [vmem:[%s850 + $0x50] sm:$0xff]
      %v859 = vld [vmem:[%s850 + $0x60] sm:$0xff]
      %v860 = vld [vmem:[%s850 + $0x68] sm:$0xff]
      %v861 = vld [vmem:[%s850 + $0x78] sm:$0xff]
      %v862 = vld [vmem:[%s850 + $0x80] sm:$0xff]
      %v863 = vld [vmem:[%s850 + $0x90] sm:$0xff]
      %v864 = vld [vmem:[%s850 + $0x98] sm:$0xff]
      %v865 = vld [vmem:[%s850 + $0xa8] sm:$0xff]
      %v866 = vld [vmem:[%s850 + $0xb0] sm:$0xff]
      %v867 = vld [vmem:[%s850 + $0xc0] sm:$0xff]
      %v868 = vld [vmem:[%s850 + $0xc8] sm:$0xff]
      %v869 = vld [vmem:[%s850 + $0xd8] sm:$0xff]
      %v870 = vld [vmem:[%s850 + $0xe0] sm:$0xff]
      %v871 = vld [vmem:[%s850 + $0xf0] sm:$0xff]
      %v872 = vld [vmem:[%s850 + $0xf8] sm:$0xff]
      %v873 = vld [vmem:[%s850 + $0x108] sm:$0xff]
      %v874 = vld [vmem:[%s850 + $0x110] sm:$0xff]
      %v875 = vld [vmem:[%s850 + $0x120] sm:$0xff]
      %v876 = vld [vmem:[%s850 + $0x128] sm:$0xff]
      %v877 = vld [vmem:[%s850 + $0x138] sm:$0xff]
      %v878 = vld [vmem:[%s850 + $0x140] sm:$0xff]
      %v879 = vld [vmem:[%s850 + $0x150] sm:$0xff]
      %v880 = vld [vmem:[%s850 + $0x158] sm:$0xff]
      %v881 = vld [vmem:[%s850 + $0x168] sm:$0xff]
      %v882 = vld [vmem:[%s850 + $0x170] sm:$0xff]
      %v883 = vmax.f32 %v818, %v851
      %v884 = vmax.f32 %v819, %v852
      %v885 = vmax.f32 %v820, %v853
      %v886 = vmax.f32 %v821, %v854
      %v887 = vmax.f32 %v822, %v855
      %v888 = vmax.f32 %v823, %v856
      %v889 = vmax.f32 %v824, %v857
      %v890 = vmax.f32 %v825, %v858
      %v891 = vmax.f32 %v826, %v859
      %v892 = vmax.f32 %v827, %v860
      %v893 = vmax.f32 %v828, %v861
      %v894 = vmax.f32 %v829, %v862
      %v895 = vmax.f32 %v830, %v863
      %v896 = vmax.f32 %v831, %v864
      %v897 = vmax.f32 %v832, %v865
      %v898 = vmax.f32 %v833, %v866
      %v899 = vmax.f32 %v834, %v867
      %v900 = vmax.f32 %v835, %v868
      %v901 = vmax.f32 %v836, %v869
      %v902 = vmax.f32 %v837, %v870
      %v903 = vmax.f32 %v838, %v871
      %v904 = vmax.f32 %v839, %v872
      %v905 = vmax.f32 %v840, %v873
      %v906 = vmax.f32 %v841, %v874
      %v907 = vmax.f32 %v842, %v875
      %v908 = vmax.f32 %v843, %v876
      %v909 = vmax.f32 %v844, %v877
      %v910 = vmax.f32 %v845, %v878
      %v911 = vmax.f32 %v846, %v879
      %v912 = vmax.f32 %v847, %v880
      %v913 = vmax.f32 %v848, %v881
      %v914 = vmax.f32 %v849, %v882
      %v915 = vld [vmem:[%s850 + $0x1] sm:$0xff]
      %v916 = vld [vmem:[%s850 + $0x9] sm:$0xff]
      %v917 = vld [vmem:[%s850 + $0x19] sm:$0xff]
      %v918 = vld [vmem:[%s850 + $0x21] sm:$0xff]
      %v919 = vld [vmem:[%s850 + $0x31] sm:$0xff]
      %v920 = vld [vmem:[%s850 + $0x39] sm:$0xff]
      %v921 = vld [vmem:[%s850 + $0x49] sm:$0xff]
      %v922 = vld [vmem:[%s850 + $0x51] sm:$0xff]
      %v923 = vld [vmem:[%s850 + $0x61] sm:$0xff]
      %v924 = vld [vmem:[%s850 + $0x69] sm:$0xff]
      %v925 = vld [vmem:[%s850 + $0x79] sm:$0xff]
      %v926 = vld [vmem:[%s850 + $0x81] sm:$0xff]
      %v927 = vld [vmem:[%s850 + $0x91] sm:$0xff]
      %v928 = vld [vmem:[%s850 + $0x99] sm:$0xff]
      %v929 = vld [vmem:[%s850 + $0xa9] sm:$0xff]
      %v930 = vld [vmem:[%s850 + $0xb1] sm:$0xff]
      %v931 = vld [vmem:[%s850 + $0xc1] sm:$0xff]
      %v932 = vld [vmem:[%s850 + $0xc9] sm:$0xff]
      %v933 = vld [vmem:[%s850 + $0xd9] sm:$0xff]
      %v934 = vld [vmem:[%s850 + $0xe1] sm:$0xff]
      %v935 = vld [vmem:[%s850 + $0xf1] sm:$0xff]
      %v936 = vld [vmem:[%s850 + $0xf9] sm:$0xff]
      %v937 = vld [vmem:[%s850 + $0x109] sm:$0xff]
      %v938 = vld [vmem:[%s850 + $0x111] sm:$0xff]
      %v939 = vld [vmem:[%s850 + $0x121] sm:$0xff]
      %v940 = vld [vmem:[%s850 + $0x129] sm:$0xff]
      %v941 = vld [vmem:[%s850 + $0x139] sm:$0xff]
      %v942 = vld [vmem:[%s850 + $0x141] sm:$0xff]
      %v943 = vld [vmem:[%s850 + $0x151] sm:$0xff]
      %v944 = vld [vmem:[%s850 + $0x159] sm:$0xff]
      %v945 = vld [vmem:[%s850 + $0x169] sm:$0xff]
      %v946 = vld [vmem:[%s850 + $0x171] sm:$0xff]
      %v947 = vmax.f32 %v883, %v915
      %v948 = vmax.f32 %v884, %v916
      %v949 = vmax.f32 %v885, %v917
      %v950 = vmax.f32 %v886, %v918
      %v951 = vmax.f32 %v887, %v919
      %v952 = vmax.f32 %v888, %v920
      %v953 = vmax.f32 %v889, %v921
      %v954 = vmax.f32 %v890, %v922
      %v955 = vmax.f32 %v891, %v923
      %v956 = vmax.f32 %v892, %v924
      %v957 = vmax.f32 %v893, %v925
      %v958 = vmax.f32 %v894, %v926
      %v959 = vmax.f32 %v895, %v927
      %v960 = vmax.f32 %v896, %v928
      %v961 = vmax.f32 %v897, %v929
      %v962 = vmax.f32 %v898, %v930
      %v963 = vmax.f32 %v899, %v931
      %v964 = vmax.f32 %v900, %v932
      %v965 = vmax.f32 %v901, %v933
      %v966 = vmax.f32 %v902, %v934
      %v967 = vmax.f32 %v903, %v935
      %v968 = vmax.f32 %v904, %v936
      %v969 = vmax.f32 %v905, %v937
      %v970 = vmax.f32 %v906, %v938
      %v971 = vmax.f32 %v907, %v939
      %v972 = vmax.f32 %v908, %v940
      %v973 = vmax.f32 %v909, %v941
      %v974 = vmax.f32 %v910, %v942
      %v975 = vmax.f32 %v911, %v943
      %v976 = vmax.f32 %v912, %v944
      %v977 = vmax.f32 %v913, %v945
      %v978 = vmax.f32 %v914, %v946
      %v979 = vld [vmem:[%s850 + $0x2] sm:$0xff]
      %v980 = vld [vmem:[%s850 + $0xa] sm:$0xff]
      %v981 = vld [vmem:[%s850 + $0x1a] sm:$0xff]
      %v982 = vld [vmem:[%s850 + $0x22] sm:$0xff]
      %v983 = vld [vmem:[%s850 + $0x32] sm:$0xff]
      %v984 = vld [vmem:[%s850 + $0x3a] sm:$0xff]
      %v985 = vld [vmem:[%s850 + $0x4a] sm:$0xff]
      %v986 = vld [vmem:[%s850 + $0x52] sm:$0xff]
      %v987 = vld [vmem:[%s850 + $0x62] sm:$0xff]
      %v988 = vld [vmem:[%s850 + $0x6a] sm:$0xff]
      %v989 = vld [vmem:[%s850 + $0x7a] sm:$0xff]
      %v990 = vld [vmem:[%s850 + $0x82] sm:$0xff]
      %v991 = vld [vmem:[%s850 + $0x92] sm:$0xff]
      %v992 = vld [vmem:[%s850 + $0x9a] sm:$0xff]
      %v993 = vld [vmem:[%s850 + $0xaa] sm:$0xff]
      %v994 = vld [vmem:[%s850 + $0xb2] sm:$0xff]
      %v995 = vld [vmem:[%s850 + $0xc2] sm:$0xff]
      %v996 = vld [vmem:[%s850 + $0xca] sm:$0xff]
      %v997 = vld [vmem:[%s850 + $0xda] sm:$0xff]
      %v998 = vld [vmem:[%s850 + $0xe2] sm:$0xff]
      %v999 = vld [vmem:[%s850 + $0xf2] sm:$0xff]
      %v1000 = vld [vmem:[%s850 + $0xfa] sm:$0xff]
      %v1001 = vld [vmem:[%s850 + $0x10a] sm:$0xff]
      %v1002 = vld [vmem:[%s850 + $0x112] sm:$0xff]
      %v1003 = vld [vmem:[%s850 + $0x122] sm:$0xff]
      %v1004 = vld [vmem:[%s850 + $0x12a] sm:$0xff]
      %v1005 = vld [vmem:[%s850 + $0x13a] sm:$0xff]
      %v1006 = vld [vmem:[%s850 + $0x142] sm:$0xff]
      %v1007 = vld [vmem:[%s850 + $0x152] sm:$0xff]
      %v1008 = vld [vmem:[%s850 + $0x15a] sm:$0xff]
      %v1009 = vld [vmem:[%s850 + $0x16a] sm:$0xff]
      %v1010 = vld [vmem:[%s850 + $0x172] sm:$0xff]
      %v1011 = vmax.f32 %v947, %v979
      %v1012 = vmax.f32 %v948, %v980
      %v1013 = vmax.f32 %v949, %v981
      %v1014 = vmax.f32 %v950, %v982
      %v1015 = vmax.f32 %v951, %v983
      %v1016 = vmax.f32 %v952, %v984
      %v1017 = vmax.f32 %v953, %v985
      %v1018 = vmax.f32 %v954, %v986
      %v1019 = vmax.f32 %v955, %v987
      %v1020 = vmax.f32 %v956, %v988
      %v1021 = vmax.f32 %v957, %v989
      %v1022 = vmax.f32 %v958, %v990
      %v1023 = vmax.f32 %v959, %v991
      %v1024 = vmax.f32 %v960, %v992
      %v1025 = vmax.f32 %v961, %v993
      %v1026 = vmax.f32 %v962, %v994
      %v1027 = vmax.f32 %v963, %v995
      %v1028 = vmax.f32 %v964, %v996
      %v1029 = vmax.f32 %v965, %v997
      %v1030 = vmax.f32 %v966, %v998
      %v1031 = vmax.f32 %v967, %v999
      %v1032 = vmax.f32 %v968, %v1000
      %v1033 = vmax.f32 %v969, %v1001
      %v1034 = vmax.f32 %v970, %v1002
      %v1035 = vmax.f32 %v971, %v1003
      %v1036 = vmax.f32 %v972, %v1004
      %v1037 = vmax.f32 %v973, %v1005
      %v1038 = vmax.f32 %v974, %v1006
      %v1039 = vmax.f32 %v975, %v1007
      %v1040 = vmax.f32 %v976, %v1008
      %v1041 = vmax.f32 %v977, %v1009
      %v1042 = vmax.f32 %v978, %v1010
      %v1043 = vpack.c.bf16 %v1012, %v1011
      %v1044 = vpack.c.bf16 %v1014, %v1013
      %v1045 = vpack.c.bf16 %v1016, %v1015
      %v1046 = vpack.c.bf16 %v1018, %v1017
      %v1047 = vpack.c.bf16 %v1020, %v1019
      %v1048 = vpack.c.bf16 %v1022, %v1021
      %v1049 = vpack.c.bf16 %v1024, %v1023
      %v1050 = vpack.c.bf16 %v1026, %v1025
      %v1051 = vpack.c.bf16 %v1028, %v1027
      %v1052 = vpack.c.bf16 %v1030, %v1029
      %v1053 = vpack.c.bf16 %v1032, %v1031
      %v1054 = vpack.c.bf16 %v1034, %v1033
      %v1055 = vpack.c.bf16 %v1036, %v1035
      %v1056 = vpack.c.bf16 %v1038, %v1037
      %v1057 = vpack.c.bf16 %v1040, %v1039
      %v1058 = vpack.c.bf16 %v1042, %v1041
      %v1075 = vunpack.c.l.b16 %v1043
      %v1076 = vunpack.c.h.b16 %v1043
      %v1077 = vunpack.c.l.b16 %v1044
      %v1078 = vunpack.c.h.b16 %v1044
      %v1079 = vunpack.c.l.b16 %v1045
      %v1080 = vunpack.c.h.b16 %v1045
      %v1081 = vunpack.c.l.b16 %v1046
      %v1082 = vunpack.c.h.b16 %v1046
      %v1083 = vunpack.c.l.b16 %v1047
      %v1084 = vunpack.c.h.b16 %v1047
      %v1085 = vunpack.c.l.b16 %v1048
      %v1086 = vunpack.c.h.b16 %v1048
      %v1087 = vunpack.c.l.b16 %v1049
      %v1088 = vunpack.c.h.b16 %v1049
      %v1089 = vunpack.c.l.b16 %v1050
      %v1090 = vunpack.c.h.b16 %v1050
      %v1091 = vunpack.c.l.b16 %v1051
      %v1092 = vunpack.c.h.b16 %v1051
      %v1093 = vunpack.c.l.b16 %v1052
      %v1094 = vunpack.c.h.b16 %v1052
      %v1095 = vunpack.c.l.b16 %v1053
      %v1096 = vunpack.c.h.b16 %v1053
      %v1097 = vunpack.c.l.b16 %v1054
      %v1098 = vunpack.c.h.b16 %v1054
      %v1099 = vunpack.c.l.b16 %v1055
      %v1100 = vunpack.c.h.b16 %v1055
      %v1101 = vunpack.c.l.b16 %v1056
      %v1102 = vunpack.c.h.b16 %v1056
      %v1103 = vunpack.c.l.b16 %v1057
      %v1104 = vunpack.c.h.b16 %v1057
      %v1105 = vunpack.c.l.b16 %v1058
      %v1106 = vunpack.c.h.b16 %v1058
      %v1107 = vpack.c.b16 %v1075, %v1075
      %v1108 = vpack.c.b16 %v1076, %v1076
      %v1109 = vpack.c.b16 %v1077, %v1077
      %v1110 = vpack.c.b16 %v1078, %v1078
      %v1111 = vpack.c.b16 %v1079, %v1079
      %v1112 = vpack.c.b16 %v1080, %v1080
      %v1113 = vpack.c.b16 %v1081, %v1081
      %v1114 = vpack.c.b16 %v1082, %v1082
      %v1115 = vpack.c.b16 %v1083, %v1083
      %v1116 = vpack.c.b16 %v1084, %v1084
      %v1117 = vpack.c.b16 %v1085, %v1085
      %v1118 = vpack.c.b16 %v1086, %v1086
      %v1119 = vpack.c.b16 %v1087, %v1087
      %v1120 = vpack.c.b16 %v1088, %v1088
      %v1121 = vpack.c.b16 %v1089, %v1089
      %v1122 = vpack.c.b16 %v1090, %v1090
      %v1123 = vpack.c.b16 %v1091, %v1091
      %v1124 = vpack.c.b16 %v1092, %v1092
      %v1125 = vpack.c.b16 %v1093, %v1093
      %v1126 = vpack.c.b16 %v1094, %v1094
      %v1127 = vpack.c.b16 %v1095, %v1095
      %v1128 = vpack.c.b16 %v1096, %v1096
      %v1129 = vpack.c.b16 %v1097, %v1097
      %v1130 = vpack.c.b16 %v1098, %v1098
      %v1131 = vpack.c.b16 %v1099, %v1099
      %v1132 = vpack.c.b16 %v1100, %v1100
      %v1133 = vpack.c.b16 %v1101, %v1101
      %v1134 = vpack.c.b16 %v1102, %v1102
      %v1135 = vpack.c.b16 %v1103, %v1103
      %v1136 = vpack.c.b16 %v1104, %v1104
      %v1137 = vpack.c.b16 %v1105, %v1105
      %v1138 = vpack.c.b16 %v1106, %v1106
      %1171 = vst [vmem:[%s143] sm:$0xf] %v1107
      %1172 = vst [vmem:[%s143 + $0x4] sm:$0xf] %v1108
      %1173 = vst [vmem:[%s143 + $0x8] sm:$0xf] %v1109
      %1174 = vst [vmem:[%s143 + $0xc] sm:$0xf] %v1110
      %1175 = vst [vmem:[%s143 + $0x10] sm:$0xf] %v1111
      %1176 = vst [vmem:[%s143 + $0x14] sm:$0xf] %v1112
      %1177 = vst [vmem:[%s143 + $0x18] sm:$0xf] %v1113
      %1178 = vst [vmem:[%s143 + $0x1c] sm:$0xf] %v1114
      %1179 = vst [vmem:[%s143 + $0x20] sm:$0xf] %v1115
      %1180 = vst [vmem:[%s143 + $0x24] sm:$0xf] %v1116
      %1181 = vst [vmem:[%s143 + $0x28] sm:$0xf] %v1117
      %1182 = vst [vmem:[%s143 + $0x2c] sm:$0xf] %v1118
      %1183 = vst [vmem:[%s143 + $0x30] sm:$0xf] %v1119
      %1184 = vst [vmem:[%s143 + $0x34] sm:$0xf] %v1120
      %1185 = vst [vmem:[%s143 + $0x38] sm:$0xf] %v1121
      %1186 = vst [vmem:[%s143 + $0x3c] sm:$0xf] %v1122
      %1187 = vst [vmem:[%s143 + $0x40] sm:$0xf] %v1123
      %1188 = vst [vmem:[%s143 + $0x44] sm:$0xf] %v1124
      %1189 = vst [vmem:[%s143 + $0x48] sm:$0xf] %v1125
      %1190 = vst [vmem:[%s143 + $0x4c] sm:$0xf] %v1126
      %1191 = vst [vmem:[%s143 + $0x50] sm:$0xf] %v1127
      %1192 = vst [vmem:[%s143 + $0x54] sm:$0xf] %v1128
      %1193 = vst [vmem:[%s143 + $0x58] sm:$0xf] %v1129
      %1194 = vst [vmem:[%s143 + $0x5c] sm:$0xf] %v1130
      %1195 = vst [vmem:[%s143 + $0x60] sm:$0xf] %v1131
      %1196 = vst [vmem:[%s143 + $0x64] sm:$0xf] %v1132
      %1197 = vst [vmem:[%s143 + $0x68] sm:$0xf] %v1133
      %1198 = vst [vmem:[%s143 + $0x6c] sm:$0xf] %v1134
      %1199 = vst [vmem:[%s143 + $0x70] sm:$0xf] %v1135
      %1200 = vst [vmem:[%s143 + $0x74] sm:$0xf] %v1136
      %1201 = vst [vmem:[%s143 + $0x78] sm:$0xf] %v1137
      %1202 = vst [vmem:[%s143 + $0x7c] sm:$0xf] %v1138
      %s1203 = smul.u32 32, %s13
      %p1204 = scmp.lt.s32.totalorder %s1203, 63
      %s1205 = scalar_select %p1204, %s1203, 63
      %s1206 = smul.addr %s1205, 4
      %s1207 = scalar_lea.vmem %s2, %s1206
      // Predicated region
      $region29: #{inception_v3_module_2_forward.9} parent=27 // pred_check
        %p1208 = pneg %p78
      $region30: #{inception_v3_module_2_forward.9} parent=27 // pred_check_branch
        %1210 = sbr.rel (%p1208) target = $region32
      $region31: #{inception_v3_module_2_forward.9} parent=27 // pred_region
        %s1211 = smul.u32 32, %s13
      $region32: #{inception_v3_module_2_forward.9} parent=27 // pred_fallthru
        _
    $region28: #{inception_v3_module_2_forward.9} parent=5 // pred_fallthru
      _
    %p1212 = scmp.le.s32.totalorder 2, %s8
    // Predicated region
    $region33: #{inception_v3_module_2_forward.9} parent=5 // pred_check
      %p1213 = pneg %p1212
    $region34: #{inception_v3_module_2_forward.9} parent=5 // pred_check_branch
      %1215 = sbr.rel (%p1213) target = $region36
    $region35: #{inception_v3_module_2_forward.9} parent=5 // pred_region
      %s1216 = ssub.s32 %s8, 2
      // Predicated region
      $region37: #{inception_v3_module_2_forward.9} parent=35 // pred_check
        %p1217 = pneg %p84
      $region38: #{inception_v3_module_2_forward.9} parent=35 // pred_check_branch
        %1219 = sbr.rel (%p1217) target = $region40
      $region39: #{inception_v3_module_2_forward.9} parent=35 // pred_region
        %s1220 = smul.u32 32, %s14
        %p1221 = scmp.lt.s32.totalorder %s1220, 63
        %s1222 = scalar_select %p1221, %s1220, 63
        %s1223 = smul.addr %s1222, 4
        %s1224 = scalar_lea.vmem %s2, %s1223
      $region40: #{inception_v3_module_2_forward.9} parent=35 // pred_fallthru
        _
    $region36: #{inception_v3_module_2_forward.9} parent=5 // pred_fallthru
      _
  $region6: #{inception_v3_module_2_forward.9} parent=0 // loop_footer
    %s12 = sadd.s32 1, %s8
  $region7: #{inception_v3_module_2_forward.9} parent=0 // loop_footer_branch
    %7 = sbr.rel target = $region3
  $region8: #{inception_v3_module_2_forward.9} parent=0 // loop_exit
    _

// kernel: inception_v3_module_2_forward.10
$region0: #{inception_v3_module_2_forward.10}
  #allocation0 [shape = 'u32[]', space=smem, size = 0x4, offset = 0x4, fixed_abs, tag = 'smem constant byte address 0x4 - core index']
  #allocation1 [shape = 'u32[144,128]{1,0:T(1,128)}', space=vmem, size = 0x12000, scoped, tag = 'internal scratch']
  %s0 = inlined_call_operand.vmem [shape: f32[512,128], index: 0, kind: input, shape index: {}]
  %s1 = inlined_call_operand.vmem [shape: f32[512,128], index: 1, kind: input, shape index: {}]
  %s2 = inlined_call_operand.vmem [shape: f32[512,128], index: 2, kind: input, shape index: {}]
  %s3 = inlined_call_operand.vmem [shape: bf16[512,128], index: 3, kind: input, shape index: {}]
  %s4 = inlined_call_operand.vmem [shape: f32[2,128], index: 4, kind: input, shape index: {}]
  %s5 = inlined_call_operand.vmem [shape: f32[2,128], index: 5, kind: input, shape index: {}]
  %s6 = inlined_call_operand.vmem [shape: f32[2,128], index: 6, kind: input, shape index: {}]
  %s7 = inlined_call_operand.vmem [shape: f32[1,128], index: 7, kind: input, shape index: {}]
  %s8 = inlined_call_operand.vmem [shape: bf16[128,128], index: 8, kind: input, shape index: {}]
  %s9 = inlined_call_operand.vmem [shape: f32[512,128], index: 9, kind: output, shape index: {0}]
  %s10 = inlined_call_operand.vmem [shape: f32[1,2,128], index: 10, kind: output, shape index: {1}]
  %11 = xla_tuple %s9, %s10
  %s12 = sld [smem:[#allocation0]]
  $region54: #{inception_v3_module_2_forward.10} parent=0
    _
  %s14 = ssub.s32 1, %s12
  %s15 = scalar_select 0, %s14, %s12
  // Predicated region
  $region2: #{inception_v3_module_2_forward.10} parent=0 // pred_check
    _
  $region3: #{inception_v3_module_2_forward.10} parent=0 // pred_check_branch
    %17 = sbr.rel (0) target = $region5
  $region4: #{inception_v3_module_2_forward.10} parent=0 // pred_region
    _
  $region5: #{inception_v3_module_2_forward.10} parent=0 // pred_fallthru
    _
  // Predicated region
  $region6: #{inception_v3_module_2_forward.10} parent=0 // pred_check
    _
  $region7: #{inception_v3_module_2_forward.10} parent=0 // pred_check_branch
    %19 = sbr.rel (0) target = $region9
  $region8: #{inception_v3_module_2_forward.10} parent=0 // pred_region
    _
  $region9: #{inception_v3_module_2_forward.10} parent=0 // pred_fallthru
    _
  // Predicated region
  $region10: #{inception_v3_module_2_forward.10} parent=0 // pred_check
    _
  $region11: #{inception_v3_module_2_forward.10} parent=0 // pred_check_branch
    %21 = sbr.rel (0) target = $region13
  $region12: #{inception_v3_module_2_forward.10} parent=0 // pred_region
    _
  $region13: #{inception_v3_module_2_forward.10} parent=0 // pred_fallthru
    _
  // Predicated region
  $region14: #{inception_v3_module_2_forward.10} parent=0 // pred_check
    _
  $region15: #{inception_v3_module_2_forward.10} parent=0 // pred_check_branch
    %23 = sbr.rel (0) target = $region17
  $region16: #{inception_v3_module_2_forward.10} parent=0 // pred_region
    _
  $region17: #{inception_v3_module_2_forward.10} parent=0 // pred_fallthru
    _
  // Predicated region
  $region18: #{inception_v3_module_2_forward.10} parent=0 // pred_check
    _
  $region19: #{inception_v3_module_2_forward.10} parent=0 // pred_check_branch
    %25 = sbr.rel (0) target = $region21
  $region20: #{inception_v3_module_2_forward.10} parent=0 // pred_region
    _
  $region21: #{inception_v3_module_2_forward.10} parent=0 // pred_fallthru
    _
  // Predicated region
  $region22: #{inception_v3_module_2_forward.10} parent=0 // pred_check
    _
  $region23: #{inception_v3_module_2_forward.10} parent=0 // pred_check_branch
    %27 = sbr.rel (0) target = $region25
  $region24: #{inception_v3_module_2_forward.10} parent=0 // pred_region
    _
  $region25: #{inception_v3_module_2_forward.10} parent=0 // pred_fallthru
    _
  // Predicated region
  $region26: #{inception_v3_module_2_forward.10} parent=0 // pred_check
    _
  $region27: #{inception_v3_module_2_forward.10} parent=0 // pred_check_branch
    %29 = sbr.rel (0) target = $region29
  $region28: #{inception_v3_module_2_forward.10} parent=0 // pred_region
    _
  $region29: #{inception_v3_module_2_forward.10} parent=0 // pred_fallthru
    _
  // Predicated region
  $region30: #{inception_v3_module_2_forward.10} parent=0 // pred_check
    _
  $region31: #{inception_v3_module_2_forward.10} parent=0 // pred_check_branch
    %31 = sbr.rel (0) target = $region33
  $region32: #{inception_v3_module_2_forward.10} parent=0 // pred_region
    _
  $region33: #{inception_v3_module_2_forward.10} parent=0 // pred_fallthru
    _
  // Predicated region
  $region34: #{inception_v3_module_2_forward.10} parent=0 // pred_check
    _
  $region35: #{inception_v3_module_2_forward.10} parent=0 // pred_check_branch
    %33 = sbr.rel (0) target = $region37
  $region36: #{inception_v3_module_2_forward.10} parent=0 // pred_region
    _
  $region37: #{inception_v3_module_2_forward.10} parent=0 // pred_fallthru
    _
  %v35 = vld [vmem:[%s0] sm:$0xff]
  %v36 = vld [vmem:[%s0 + $0x8] sm:$0xff]
  %v37 = vld [vmem:[%s0 + $0x10] sm:$0xff]
  %v38 = vld [vmem:[%s0 + $0x18] sm:$0xff]
  %v39 = vld [vmem:[%s0 + $0x20] sm:$0xff]
  %v40 = vld [vmem:[%s0 + $0x28] sm:$0xff]
  %v41 = vld [vmem:[%s0 + $0x30] sm:$0xff]
  %v42 = vld [vmem:[%s0 + $0x38] sm:$0xff]
  %v43 = vld [vmem:[%s0 + $0x40] sm:$0xff]
  %v44 = vld [vmem:[%s0 + $0x48] sm:$0xff]
  %v45 = vld [vmem:[%s0 + $0x50] sm:$0xff]
  %v46 = vld [vmem:[%s0 + $0x58] sm:$0xff]
  %v47 = vld [vmem:[%s0 + $0x60] sm:$0xff]
  %v48 = vld [vmem:[%s0 + $0x68] sm:$0xff]
  %v49 = vld [vmem:[%s0 + $0x70] sm:$0xff]
  %v50 = vld [vmem:[%s0 + $0x78] sm:$0xff]
  %v51 = vld [vmem:[%s0 + $0x80] sm:$0xff]
  %v52 = vld [vmem:[%s0 + $0x88] sm:$0xff]
  %v53 = vld [vmem:[%s0 + $0x90] sm:$0xff]
  %v54 = vld [vmem:[%s0 + $0x98] sm:$0xff]
  %v55 = vld [vmem:[%s0 + $0xa0] sm:$0xff]
  %v56 = vld [vmem:[%s0 + $0xa8] sm:$0xff]
  %v57 = vld [vmem:[%s0 + $0xb0] sm:$0xff]
  %v58 = vld [vmem:[%s0 + $0xb8] sm:$0xff]
  %v59 = vld [vmem:[%s0 + $0xc0] sm:$0xff]
  %v60 = vld [vmem:[%s0 + $0xc8] sm:$0xff]
  %v61 = vld [vmem:[%s0 + $0xd0] sm:$0xff]
  %v62 = vld [vmem:[%s0 + $0xd8] sm:$0xff]
  %v63 = vld [vmem:[%s0 + $0xe0] sm:$0xff]
  %v64 = vld [vmem:[%s0 + $0xe8] sm:$0xff]
  %v65 = vld [vmem:[%s0 + $0xf0] sm:$0xff]
  %v66 = vld [vmem:[%s0 + $0xf8] sm:$0xff]
  %v67 = vld [vmem:[%s0 + $0x100] sm:$0xff]
  %v68 = vld [vmem:[%s0 + $0x108] sm:$0xff]
  %v69 = vld [vmem:[%s0 + $0x110] sm:$0xff]
  %v70 = vld [vmem:[%s0 + $0x118] sm:$0xff]
  %v71 = vld [vmem:[%s0 + $0x120] sm:$0xff]
  %v72 = vld [vmem:[%s0 + $0x128] sm:$0xff]
  %v73 = vld [vmem:[%s0 + $0x130] sm:$0xff]
  %v74 = vld [vmem:[%s0 + $0x138] sm:$0xff]
  %v75 = vld [vmem:[%s0 + $0x140] sm:$0xff]
  %v76 = vld [vmem:[%s0 + $0x148] sm:$0xff]
  %v77 = vld [vmem:[%s0 + $0x150] sm:$0xff]
  %v78 = vld [vmem:[%s0 + $0x158] sm:$0xff]
  %v79 = vld [vmem:[%s0 + $0x160] sm:$0xff]
  %v80 = vld [vmem:[%s0 + $0x168] sm:$0xff]
  %v81 = vld [vmem:[%s0 + $0x170] sm:$0xff]
  %v82 = vld [vmem:[%s0 + $0x178] sm:$0xff]
  %v83 = vld [vmem:[%s0 + $0x180] sm:$0xff]
  %v84 = vld [vmem:[%s0 + $0x188] sm:$0xff]
  %v85 = vld [vmem:[%s0 + $0x190] sm:$0xff]
  %v86 = vld [vmem:[%s0 + $0x198] sm:$0xff]
  %v87 = vld [vmem:[%s0 + $0x1a0] sm:$0xff]
  %v88 = vld [vmem:[%s0 + $0x1a8] sm:$0xff]
  %v89 = vld [vmem:[%s0 + $0x1b0] sm:$0xff]
  %v90 = vld [vmem:[%s0 + $0x1b8] sm:$0xff]
  %v91 = vld [vmem:[%s0 + $0x1c0] sm:$0xff]
  %v92 = vld [vmem:[%s0 + $0x1c8] sm:$0xff]
  %v93 = vld [vmem:[%s0 + $0x1d0] sm:$0xff]
  %v94 = vld [vmem:[%s0 + $0x1d8] sm:$0xff]
  %v95 = vld [vmem:[%s0 + $0x1e0] sm:$0xff]
  %v96 = vld [vmem:[%s0 + $0x1e8] sm:$0xff]
  %v97 = vld [vmem:[%s0 + $0x1f0] sm:$0xff]
  %v98 = vld [vmem:[%s0 + $0x1f8] sm:$0xff]
  %v99 = vld [vmem:[%s4] sm:$0x1]
  %v100 = vlaneseq
  %v101 = vshrl.u32 %v100, 7
  %v102 = vsub.s32 0, %v101
  %v103 = vrot.slane %v99, %v102
  %v104 = vmul.f32 %v35, %v103
  %v105 = vmul.f32 %v36, %v103
  %v106 = vmul.f32 %v37, %v103
  %v107 = vmul.f32 %v38, %v103
  %v108 = vmul.f32 %v39, %v103
  %v109 = vmul.f32 %v40, %v103
  %v110 = vmul.f32 %v41, %v103
  %v111 = vmul.f32 %v42, %v103
  %v112 = vmul.f32 %v43, %v103
  %v113 = vmul.f32 %v44, %v103
  %v114 = vmul.f32 %v45, %v103
  %v115 = vmul.f32 %v46, %v103
  %v116 = vmul.f32 %v47, %v103
  %v117 = vmul.f32 %v48, %v103
  %v118 = vmul.f32 %v49, %v103
  %v119 = vmul.f32 %v50, %v103
  %v120 = vmul.f32 %v51, %v103
  %v121 = vmul.f32 %v52, %v103
  %v122 = vmul.f32 %v53, %v103
  %v123 = vmul.f32 %v54, %v103
  %v124 = vmul.f32 %v55, %v103
  %v125 = vmul.f32 %v56, %v103
  %v126 = vmul.f32 %v57, %v103
  %v127 = vmul.f32 %v58, %v103
  %v128 = vmul.f32 %v59, %v103
  %v129 = vmul.f32 %v60, %v103
  %v130 = vmul.f32 %v61, %v103
  %v131 = vmul.f32 %v62, %v103
  %v132 = vmul.f32 %v63, %v103
  %v133 = vmul.f32 %v64, %v103
  %v134 = vmul.f32 %v65, %v103
  %v135 = vmul.f32 %v66, %v103
  %v136 = vmul.f32 %v67, %v103
  %v137 = vmul.f32 %v68, %v103
  %v138 = vmul.f32 %v69, %v103
  %v139 = vmul.f32 %v70, %v103
  %v140 = vmul.f32 %v71, %v103
  %v141 = vmul.f32 %v72, %v103
  %v142 = vmul.f32 %v73, %v103
  %v143 = vmul.f32 %v74, %v103
  %v144 = vmul.f32 %v75, %v103
  %v145 = vmul.f32 %v76, %v103
  %v146 = vmul.f32 %v77, %v103
  %v147 = vmul.f32 %v78, %v103
  %v148 = vmul.f32 %v79, %v103
  %v149 = vmul.f32 %v80, %v103
  %v150 = vmul.f32 %v81, %v103
  %v151 = vmul.f32 %v82, %v103
  %v152 = vmul.f32 %v83, %v103
  %v153 = vmul.f32 %v84, %v103
  %v154 = vmul.f32 %v85, %v103
  %v155 = vmul.f32 %v86, %v103
  %v156 = vmul.f32 %v87, %v103
  %v157 = vmul.f32 %v88, %v103
  %v158 = vmul.f32 %v89, %v103
  %v159 = vmul.f32 %v90, %v103
  %v160 = vmul.f32 %v91, %v103
  %v161 = vmul.f32 %v92, %v103
  %v162 = vmul.f32 %v93, %v103
  %v163 = vmul.f32 %v94, %v103
  %v164 = vmul.f32 %v95, %v103
  %v165 = vmul.f32 %v96, %v103
  %v166 = vmul.f32 %v97, %v103
  %v167 = vmul.f32 %v98, %v103
  %v168 = vld [vmem:[%s4 + $0x1] sm:$0x1]
  %v169 = vlaneseq
  %v170 = vshrl.u32 %v169, 7
  %v171 = vsub.s32 0, %v170
  %v172 = vrot.slane %v168, %v171
  %v173 = vadd.f32 %v104, %v172
  %v174 = vadd.f32 %v105, %v172
  %v175 = vadd.f32 %v106, %v172
  %v176 = vadd.f32 %v107, %v172
  %v177 = vadd.f32 %v108, %v172
  %v178 = vadd.f32 %v109, %v172
  %v179 = vadd.f32 %v110, %v172
  %v180 = vadd.f32 %v111, %v172
  %v181 = vadd.f32 %v112, %v172
  %v182 = vadd.f32 %v113, %v172
  %v183 = vadd.f32 %v114, %v172
  %v184 = vadd.f32 %v115, %v172
  %v185 = vadd.f32 %v116, %v172
  %v186 = vadd.f32 %v117, %v172
  %v187 = vadd.f32 %v118, %v172
  %v188 = vadd.f32 %v119, %v172
  %v189 = vadd.f32 %v120, %v172
  %v190 = vadd.f32 %v121, %v172
  %v191 = vadd.f32 %v122, %v172
  %v192 = vadd.f32 %v123, %v172
  %v193 = vadd.f32 %v124, %v172
  %v194 = vadd.f32 %v125, %v172
  %v195 = vadd.f32 %v126, %v172
  %v196 = vadd.f32 %v127, %v172
  %v197 = vadd.f32 %v128, %v172
  %v198 = vadd.f32 %v129, %v172
  %v199 = vadd.f32 %v130, %v172
  %v200 = vadd.f32 %v131, %v172
  %v201 = vadd.f32 %v132, %v172
  %v202 = vadd.f32 %v133, %v172
  %v203 = vadd.f32 %v134, %v172
  %v204 = vadd.f32 %v135, %v172
  %v205 = vadd.f32 %v136, %v172
  %v206 = vadd.f32 %v137, %v172
  %v207 = vadd.f32 %v138, %v172
  %v208 = vadd.f32 %v139, %v172
  %v209 = vadd.f32 %v140, %v172
  %v210 = vadd.f32 %v141, %v172
  %v211 = vadd.f32 %v142, %v172
  %v212 = vadd.f32 %v143, %v172
  %v213 = vadd.f32 %v144, %v172
  %v214 = vadd.f32 %v145, %v172
  %v215 = vadd.f32 %v146, %v172
  %v216 = vadd.f32 %v147, %v172
  %v217 = vadd.f32 %v148, %v172
  %v218 = vadd.f32 %v149, %v172
  %v219 = vadd.f32 %v150, %v172
  %v220 = vadd.f32 %v151, %v172
  %v221 = vadd.f32 %v152, %v172
  %v222 = vadd.f32 %v153, %v172
  %v223 = vadd.f32 %v154, %v172
  %v224 = vadd.f32 %v155, %v172
  %v225 = vadd.f32 %v156, %v172
  %v226 = vadd.f32 %v157, %v172
  %v227 = vadd.f32 %v158, %v172
  %v228 = vadd.f32 %v159, %v172
  %v229 = vadd.f32 %v160, %v172
  %v230 = vadd.f32 %v161, %v172
  %v231 = vadd.f32 %v162, %v172
  %v232 = vadd.f32 %v163, %v172
  %v233 = vadd.f32 %v164, %v172
  %v234 = vadd.f32 %v165, %v172
  %v235 = vadd.f32 %v166, %v172
  %v236 = vadd.f32 %v167, %v172
  %v237 = vmul.f32 %v173, 0.16666667
  %v238 = vmul.f32 %v174, 0.16666667
  %v239 = vmul.f32 %v175, 0.16666667
  %v240 = vmul.f32 %v176, 0.16666667
  %v241 = vmul.f32 %v177, 0.16666667
  %v242 = vmul.f32 %v178, 0.16666667
  %v243 = vmul.f32 %v179, 0.16666667
  %v244 = vmul.f32 %v180, 0.16666667
  %v245 = vmul.f32 %v181, 0.16666667
  %v246 = vmul.f32 %v182, 0.16666667
  %v247 = vmul.f32 %v183, 0.16666667
  %v248 = vmul.f32 %v184, 0.16666667
  %v249 = vmul.f32 %v185, 0.16666667
  %v250 = vmul.f32 %v186, 0.16666667
  %v251 = vmul.f32 %v187, 0.16666667
  %v252 = vmul.f32 %v188, 0.16666667
  %v253 = vmul.f32 %v189, 0.16666667
  %v254 = vmul.f32 %v190, 0.16666667
  %v255 = vmul.f32 %v191, 0.16666667
  %v256 = vmul.f32 %v192, 0.16666667
  %v257 = vmul.f32 %v193, 0.16666667
  %v258 = vmul.f32 %v194, 0.16666667
  %v259 = vmul.f32 %v195, 0.16666667
  %v260 = vmul.f32 %v196, 0.16666667
  %v261 = vmul.f32 %v197, 0.16666667
  %v262 = vmul.f32 %v198, 0.16666667
  %v263 = vmul.f32 %v199, 0.16666667
  %v264 = vmul.f32 %v200, 0.16666667
  %v265 = vmul.f32 %v201, 0.16666667
  %v266 = vmul.f32 %v202, 0.16666667
  %v267 = vmul.f32 %v203, 0.16666667
  %v268 = vmul.f32 %v204, 0.16666667
  %v269 = vmul.f32 %v205, 0.16666667
  %v270 = vmul.f32 %v206, 0.16666667
  %v271 = vmul.f32 %v207, 0.16666667
  %v272 = vmul.f32 %v208, 0.16666667
  %v273 = vmul.f32 %v209, 0.16666667
  %v274 = vmul.f32 %v210, 0.16666667
  %v275 = vmul.f32 %v211, 0.16666667
  %v276 = vmul.f32 %v212, 0.16666667
  %v277 = vmul.f32 %v213, 0.16666667
  %v278 = vmul.f32 %v214, 0.16666667
  %v279 = vmul.f32 %v215, 0.16666667
  %v280 = vmul.f32 %v216, 0.16666667
  %v281 = vmul.f32 %v217, 0.16666667
  %v282 = vmul.f32 %v218, 0.16666667
  %v283 = vmul.f32 %v219, 0.16666667
  %v284 = vmul.f32 %v220, 0.16666667
  %v285 = vmul.f32 %v221, 0.16666667
  %v286 = vmul.f32 %v222, 0.16666667
  %v287 = vmul.f32 %v223, 0.16666667
  %v288 = vmul.f32 %v224, 0.16666667
  %v289 = vmul.f32 %v225, 0.16666667
  %v290 = vmul.f32 %v226, 0.16666667
  %v291 = vmul.f32 %v227, 0.16666667
  %v292 = vmul.f32 %v228, 0.16666667
  %v293 = vmul.f32 %v229, 0.16666667
  %v294 = vmul.f32 %v230, 0.16666667
  %v295 = vmul.f32 %v231, 0.16666667
  %v296 = vmul.f32 %v232, 0.16666667
  %v297 = vmul.f32 %v233, 0.16666667
  %v298 = vmul.f32 %v234, 0.16666667
  %v299 = vmul.f32 %v235, 0.16666667
  %v300 = vmul.f32 %v236, 0.16666667
  %v301 = vadd.f32 %v237, 0.5
  %v302 = vadd.f32 %v238, 0.5
  %v303 = vadd.f32 %v239, 0.5
  %v304 = vadd.f32 %v240, 0.5
  %v305 = vadd.f32 %v241, 0.5
  %v306 = vadd.f32 %v242, 0.5
  %v307 = vadd.f32 %v243, 0.5
  %v308 = vadd.f32 %v244, 0.5
  %v309 = vadd.f32 %v245, 0.5
  %v310 = vadd.f32 %v246, 0.5
  %v311 = vadd.f32 %v247, 0.5
  %v312 = vadd.f32 %v248, 0.5
  %v313 = vadd.f32 %v249, 0.5
  %v314 = vadd.f32 %v250, 0.5
  %v315 = vadd.f32 %v251, 0.5
  %v316 = vadd.f32 %v252, 0.5
  %v317 = vadd.f32 %v253, 0.5
  %v318 = vadd.f32 %v254, 0.5
  %v319 = vadd.f32 %v255, 0.5
  %v320 = vadd.f32 %v256, 0.5
  %v321 = vadd.f32 %v257, 0.5
  %v322 = vadd.f32 %v258, 0.5
  %v323 = vadd.f32 %v259, 0.5
  %v324 = vadd.f32 %v260, 0.5
  %v325 = vadd.f32 %v261, 0.5
  %v326 = vadd.f32 %v262, 0.5
  %v327 = vadd.f32 %v263, 0.5
  %v328 = vadd.f32 %v264, 0.5
  %v329 = vadd.f32 %v265, 0.5
  %v330 = vadd.f32 %v266, 0.5
  %v331 = vadd.f32 %v267, 0.5
  %v332 = vadd.f32 %v268, 0.5
  %v333 = vadd.f32 %v269, 0.5
  %v334 = vadd.f32 %v270, 0.5
  %v335 = vadd.f32 %v271, 0.5
  %v336 = vadd.f32 %v272, 0.5
  %v337 = vadd.f32 %v273, 0.5
  %v338 = vadd.f32 %v274, 0.5
  %v339 = vadd.f32 %v275, 0.5
  %v340 = vadd.f32 %v276, 0.5
  %v341 = vadd.f32 %v277, 0.5
  %v342 = vadd.f32 %v278, 0.5
  %v343 = vadd.f32 %v279, 0.5
  %v344 = vadd.f32 %v280, 0.5
  %v345 = vadd.f32 %v281, 0.5
  %v346 = vadd.f32 %v282, 0.5
  %v347 = vadd.f32 %v283, 0.5
  %v348 = vadd.f32 %v284, 0.5
  %v349 = vadd.f32 %v285, 0.5
  %v350 = vadd.f32 %v286, 0.5
  %v351 = vadd.f32 %v287, 0.5
  %v352 = vadd.f32 %v288, 0.5
  %v353 = vadd.f32 %v289, 0.5
  %v354 = vadd.f32 %v290, 0.5
  %v355 = vadd.f32 %v291, 0.5
  %v356 = vadd.f32 %v292, 0.5
  %v357 = vadd.f32 %v293, 0.5
  %v358 = vadd.f32 %v294, 0.5
  %v359 = vadd.f32 %v295, 0.5
  %v360 = vadd.f32 %v296, 0.5
  %v361 = vadd.f32 %v297, 0.5
  %v362 = vadd.f32 %v298, 0.5
  %v363 = vadd.f32 %v299, 0.5
  %v364 = vadd.f32 %v300, 0.5
  %v365 = vmax.f32 %v301, 0.0
  %v366 = vmax.f32 %v302, 0.0
  %v367 = vmax.f32 %v303, 0.0
  %v368 = vmax.f32 %v304, 0.0
  %v369 = vmax.f32 %v305, 0.0
  %v370 = vmax.f32 %v306, 0.0
  %v371 = vmax.f32 %v307, 0.0
  %v372 = vmax.f32 %v308, 0.0
  %v373 = vmax.f32 %v309, 0.0
  %v374 = vmax.f32 %v310, 0.0
  %v375 = vmax.f32 %v311, 0.0
  %v376 = vmax.f32 %v312, 0.0
  %v377 = vmax.f32 %v313, 0.0
  %v378 = vmax.f32 %v314, 0.0
  %v379 = vmax.f32 %v315, 0.0
  %v380 = vmax.f32 %v316, 0.0
  %v381 = vmax.f32 %v317, 0.0
  %v382 = vmax.f32 %v318, 0.0
  %v383 = vmax.f32 %v319, 0.0
  %v384 = vmax.f32 %v320, 0.0
  %v385 = vmax.f32 %v321, 0.0
  %v386 = vmax.f32 %v322, 0.0
  %v387 = vmax.f32 %v323, 0.0
  %v388 = vmax.f32 %v324, 0.0
  %v389 = vmax.f32 %v325, 0.0
  %v390 = vmax.f32 %v326, 0.0
  %v391 = vmax.f32 %v327, 0.0
  %v392 = vmax.f32 %v328, 0.0
  %v393 = vmax.f32 %v329, 0.0
  %v394 = vmax.f32 %v330, 0.0
  %v395 = vmax.f32 %v331, 0.0
  %v396 = vmax.f32 %v332, 0.0
  %v397 = vmax.f32 %v333, 0.0
  %v398 = vmax.f32 %v334, 0.0
  %v399 = vmax.f32 %v335, 0.0
  %v400 = vmax.f32 %v336, 0.0
  %v401 = vmax.f32 %v337, 0.0
  %v402 = vmax.f32 %v338, 0.0
  %v403 = vmax.f32 %v339, 0.0
  %v404 = vmax.f32 %v340, 0.0
  %v405 = vmax.f32 %v341, 0.0
  %v406 = vmax.f32 %v342, 0.0
  %v407 = vmax.f32 %v343, 0.0
  %v408 = vmax.f32 %v344, 0.0
  %v409 = vmax.f32 %v345, 0.0
  %v410 = vmax.f32 %v346, 0.0
  %v411 = vmax.f32 %v347, 0.0
  %v412 = vmax.f32 %v348, 0.0
  %v413 = vmax.f32 %v349, 0.0
  %v414 = vmax.f32 %v350, 0.0
  %v415 = vmax.f32 %v351, 0.0
  %v416 = vmax.f32 %v352, 0.0
  %v417 = vmax.f32 %v353, 0.0
  %v418 = vmax.f32 %v354, 0.0
  %v419 = vmax.f32 %v355, 0.0
  %v420 = vmax.f32 %v356, 0.0
  %v421 = vmax.f32 %v357, 0.0
  %v422 = vmax.f32 %v358, 0.0
  %v423 = vmax.f32 %v359, 0.0
  %v424 = vmax.f32 %v360, 0.0
  %v425 = vmax.f32 %v361, 0.0
  %v426 = vmax.f32 %v362, 0.0
  %v427 = vmax.f32 %v363, 0.0
  %v428 = vmax.f32 %v364, 0.0
  %v429 = vmin.f32 %v365, 1.0
  %v430 = vmin.f32 %v366, 1.0
  %v431 = vmin.f32 %v367, 1.0
  %v432 = vmin.f32 %v368, 1.0
  %v433 = vmin.f32 %v369, 1.0
  %v434 = vmin.f32 %v370, 1.0
  %v435 = vmin.f32 %v371, 1.0
  %v436 = vmin.f32 %v372, 1.0
  %v437 = vmin.f32 %v373, 1.0
  %v438 = vmin.f32 %v374, 1.0
  %v439 = vmin.f32 %v375, 1.0
  %v440 = vmin.f32 %v376, 1.0
  %v441 = vmin.f32 %v377, 1.0
  %v442 = vmin.f32 %v378, 1.0
  %v443 = vmin.f32 %v379, 1.0
  %v444 = vmin.f32 %v380, 1.0
  %v445 = vmin.f32 %v381, 1.0
  %v446 = vmin.f32 %v382, 1.0
  %v447 = vmin.f32 %v383, 1.0
  %v448 = vmin.f32 %v384, 1.0
  %v449 = vmin.f32 %v385, 1.0
  %v450 = vmin.f32 %v386, 1.0
  %v451 = vmin.f32 %v387, 1.0
  %v452 = vmin.f32 %v388, 1.0
  %v453 = vmin.f32 %v389, 1.0
  %v454 = vmin.f32 %v390, 1.0
  %v455 = vmin.f32 %v391, 1.0
  %v456 = vmin.f32 %v392, 1.0
  %v457 = vmin.f32 %v393, 1.0
  %v458 = vmin.f32 %v394, 1.0
  %v459 = vmin.f32 %v395, 1.0
  %v460 = vmin.f32 %v396, 1.0
  %v461 = vmin.f32 %v397, 1.0
  %v462 = vmin.f32 %v398, 1.0
  %v463 = vmin.f32 %v399, 1.0
  %v464 = vmin.f32 %v400, 1.0
  %v465 = vmin.f32 %v401, 1.0
  %v466 = vmin.f32 %v402, 1.0
  %v467 = vmin.f32 %v403, 1.0
  %v468 = vmin.f32 %v404, 1.0
  %v469 = vmin.f32 %v405, 1.0
  %v470 = vmin.f32 %v406, 1.0
  %v471 = vmin.f32 %v407, 1.0
  %v472 = vmin.f32 %v408, 1.0
  %v473 = vmin.f32 %v409, 1.0
  %v474 = vmin.f32 %v410, 1.0
  %v475 = vmin.f32 %v411, 1.0
  %v476 = vmin.f32 %v412, 1.0
  %v477 = vmin.f32 %v413, 1.0
  %v478 = vmin.f32 %v414, 1.0
  %v479 = vmin.f32 %v415, 1.0
  %v480 = vmin.f32 %v416, 1.0
  %v481 = vmin.f32 %v417, 1.0
  %v482 = vmin.f32 %v418, 1.0
  %v483 = vmin.f32 %v419, 1.0
  %v484 = vmin.f32 %v420, 1.0
  %v485 = vmin.f32 %v421, 1.0
  %v486 = vmin.f32 %v422, 1.0
  %v487 = vmin.f32 %v423, 1.0
  %v488 = vmin.f32 %v424, 1.0
  %v489 = vmin.f32 %v425, 1.0
  %v490 = vmin.f32 %v426, 1.0
  %v491 = vmin.f32 %v427, 1.0
  %v492 = vmin.f32 %v428, 1.0
  %v493 = vmul.f32 %v173, %v429
  %v494 = vmul.f32 %v174, %v430
  %v495 = vmul.f32 %v175, %v431
  %v496 = vmul.f32 %v176, %v432
  %v497 = vmul.f32 %v177, %v433
  %v498 = vmul.f32 %v178, %v434
  %v499 = vmul.f32 %v179, %v435
  %v500 = vmul.f32 %v180, %v436
  %v501 = vmul.f32 %v181, %v437
  %v502 = vmul.f32 %v182, %v438
  %v503 = vmul.f32 %v183, %v439
  %v504 = vmul.f32 %v184, %v440
  %v505 = vmul.f32 %v185, %v441
  %v506 = vmul.f32 %v186, %v442
  %v507 = vmul.f32 %v187, %v443
  %v508 = vmul.f32 %v188, %v444
  %v509 = vmul.f32 %v189, %v445
  %v510 = vmul.f32 %v190, %v446
  %v511 = vmul.f32 %v191, %v447
  %v512 = vmul.f32 %v192, %v448
  %v513 = vmul.f32 %v193, %v449
  %v514 = vmul.f32 %v194, %v450
  %v515 = vmul.f32 %v195, %v451
  %v516 = vmul.f32 %v196, %v452
  %v517 = vmul.f32 %v197, %v453
  %v518 = vmul.f32 %v198, %v454
  %v519 = vmul.f32 %v199, %v455
  %v520 = vmul.f32 %v200, %v456
  %v521 = vmul.f32 %v201, %v457
  %v522 = vmul.f32 %v202, %v458
  %v523 = vmul.f32 %v203, %v459
  %v524 = vmul.f32 %v204, %v460
  %v525 = vmul.f32 %v205, %v461
  %v526 = vmul.f32 %v206, %v462
  %v527 = vmul.f32 %v207, %v463
  %v528 = vmul.f32 %v208, %v464
  %v529 = vmul.f32 %v209, %v465
  %v530 = vmul.f32 %v210, %v466
  %v531 = vmul.f32 %v211, %v467
  %v532 = vmul.f32 %v212, %v468
  %v533 = vmul.f32 %v213, %v469
  %v534 = vmul.f32 %v214, %v470
  %v535 = vmul.f32 %v215, %v471
  %v536 = vmul.f32 %v216, %v472
  %v537 = vmul.f32 %v217, %v473
  %v538 = vmul.f32 %v218, %v474
  %v539 = vmul.f32 %v219, %v475
  %v540 = vmul.f32 %v220, %v476
  %v541 = vmul.f32 %v221, %v477
  %v542 = vmul.f32 %v222, %v478
  %v543 = vmul.f32 %v223, %v479
  %v544 = vmul.f32 %v224, %v480
  %v545 = vmul.f32 %v225, %v481
  %v546 = vmul.f32 %v226, %v482
  %v547 = vmul.f32 %v227, %v483
  %v548 = vmul.f32 %v228, %v484
  %v549 = vmul.f32 %v229, %v485
  %v550 = vmul.f32 %v230, %v486
  %v551 = vmul.f32 %v231, %v487
  %v552 = vmul.f32 %v232, %v488
  %v553 = vmul.f32 %v233, %v489
  %v554 = vmul.f32 %v234, %v490
  %v555 = vmul.f32 %v235, %v491
  %v556 = vmul.f32 %v236, %v492
  %v557 = vld [vmem:[%s1] sm:$0xff]
  %v558 = vld [vmem:[%s1 + $0x8] sm:$0xff]
  %v559 = vld [vmem:[%s1 + $0x10] sm:$0xff]
  %v560 = vld [vmem:[%s1 + $0x18] sm:$0xff]
  %v561 = vld [vmem:[%s1 + $0x20] sm:$0xff]
  %v562 = vld [vmem:[%s1 + $0x28] sm:$0xff]
  %v563 = vld [vmem:[%s1 + $0x30] sm:$0xff]
  %v564 = vld [vmem:[%s1 + $0x38] sm:$0xff]
  %v565 = vld [vmem:[%s1 + $0x40] sm:$0xff]
  %v566 = vld [vmem:[%s1 + $0x48] sm:$0xff]
  %v567 = vld [vmem:[%s1 + $0x50] sm:$0xff]
  %v568 = vld [vmem:[%s1 + $0x58] sm:$0xff]
  %v569 = vld [vmem:[%s1 + $0x60] sm:$0xff]
  %v570 = vld [vmem:[%s1 + $0x68] sm:$0xff]
  %v571 = vld [vmem:[%s1 + $0x70] sm:$0xff]
  %v572 = vld [vmem:[%s1 + $0x78] sm:$0xff]
  %v573 = vld [vmem:[%s1 + $0x80] sm:$0xff]
  %v574 = vld [vmem:[%s1 + $0x88] sm:$0xff]
  %v575 = vld [vmem:[%s1 + $0x90] sm:$0xff]
  %v576 = vld [vmem:[%s1 + $0x98] sm:$0xff]
  %v577 = vld [vmem:[%s1 + $0xa0] sm:$0xff]
  %v578 = vld [vmem:[%s1 + $0xa8] sm:$0xff]
  %v579 = vld [vmem:[%s1 + $0xb0] sm:$0xff]
  %v580 = vld [vmem:[%s1 + $0xb8] sm:$0xff]
  %v581 = vld [vmem:[%s1 + $0xc0] sm:$0xff]
  %v582 = vld [vmem:[%s1 + $0xc8] sm:$0xff]
  %v583 = vld [vmem:[%s1 + $0xd0] sm:$0xff]
  %v584 = vld [vmem:[%s1 + $0xd8] sm:$0xff]
  %v585 = vld [vmem:[%s1 + $0xe0] sm:$0xff]
  %v586 = vld [vmem:[%s1 + $0xe8] sm:$0xff]
  %v587 = vld [vmem:[%s1 + $0xf0] sm:$0xff]
  %v588 = vld [vmem:[%s1 + $0xf8] sm:$0xff]
  %v589 = vld [vmem:[%s1 + $0x100] sm:$0xff]
  %v590 = vld [vmem:[%s1 + $0x108] sm:$0xff]
  %v591 = vld [vmem:[%s1 + $0x110] sm:$0xff]
  %v592 = vld [vmem:[%s1 + $0x118] sm:$0xff]
  %v593 = vld [vmem:[%s1 + $0x120] sm:$0xff]
  %v594 = vld [vmem:[%s1 + $0x128] sm:$0xff]
  %v595 = vld [vmem:[%s1 + $0x130] sm:$0xff]
  %v596 = vld [vmem:[%s1 + $0x138] sm:$0xff]
  %v597 = vld [vmem:[%s1 + $0x140] sm:$0xff]
  %v598 = vld [vmem:[%s1 + $0x148] sm:$0xff]
  %v599 = vld [vmem:[%s1 + $0x150] sm:$0xff]
  %v600 = vld [vmem:[%s1 + $0x158] sm:$0xff]
  %v601 = vld [vmem:[%s1 + $0x160] sm:$0xff]
  %v602 = vld [vmem:[%s1 + $0x168] sm:$0xff]
  %v603 = vld [vmem:[%s1 + $0x170] sm:$0xff]
  %v604 = vld [vmem:[%s1 + $0x178] sm:$0xff]
  %v605 = vld [vmem:[%s1 + $0x180] sm:$0xff]
  %v606 = vld [vmem:[%s1 + $0x188] sm:$0xff]
  %v607 = vld [vmem:[%s1 + $0x190] sm:$0xff]
  %v608 = vld [vmem:[%s1 + $0x198] sm:$0xff]
  %v609 = vld [vmem:[%s1 + $0x1a0] sm:$0xff]
  %v610 = vld [vmem:[%s1 + $0x1a8] sm:$0xff]
  %v611 = vld [vmem:[%s1 + $0x1b0] sm:$0xff]
  %v612 = vld [vmem:[%s1 + $0x1b8] sm:$0xff]
  %v613 = vld [vmem:[%s1 + $0x1c0] sm:$0xff]
  %v614 = vld [vmem:[%s1 + $0x1c8] sm:$0xff]
  %v615 = vld [vmem:[%s1 + $0x1d0] sm:$0xff]
  %v616 = vld [vmem:[%s1 + $0x1d8] sm:$0xff]
  %v617 = vld [vmem:[%s1 + $0x1e0] sm:$0xff]
  %v618 = vld [vmem:[%s1 + $0x1e8] sm:$0xff]
  %v619 = vld [vmem:[%s1 + $0x1f0] sm:$0xff]
  %v620 = vld [vmem:[%s1 + $0x1f8] sm:$0xff]
  %v621 = vld [vmem:[%s5] sm:$0x1]
  %v622 = vlaneseq
  %v623 = vshrl.u32 %v622, 7
  %v624 = vsub.s32 0, %v623
  %v625 = vrot.slane %v621, %v624
  %v626 = vmul.f32 %v557, %v625
  %v627 = vmul.f32 %v558, %v625
  %v628 = vmul.f32 %v559, %v625
  %v629 = vmul.f32 %v560, %v625
  %v630 = vmul.f32 %v561, %v625
  %v631 = vmul.f32 %v562, %v625
  %v632 = vmul.f32 %v563, %v625
  %v633 = vmul.f32 %v564, %v625
  %v634 = vmul.f32 %v565, %v625
  %v635 = vmul.f32 %v566, %v625
  %v636 = vmul.f32 %v567, %v625
  %v637 = vmul.f32 %v568, %v625
  %v638 = vmul.f32 %v569, %v625
  %v639 = vmul.f32 %v570, %v625
  %v640 = vmul.f32 %v571, %v625
  %v641 = vmul.f32 %v572, %v625
  %v642 = vmul.f32 %v573, %v625
  %v643 = vmul.f32 %v574, %v625
  %v644 = vmul.f32 %v575, %v625
  %v645 = vmul.f32 %v576, %v625
  %v646 = vmul.f32 %v577, %v625
  %v647 = vmul.f32 %v578, %v625
  %v648 = vmul.f32 %v579, %v625
  %v649 = vmul.f32 %v580, %v625
  %v650 = vmul.f32 %v581, %v625
  %v651 = vmul.f32 %v582, %v625
  %v652 = vmul.f32 %v583, %v625
  %v653 = vmul.f32 %v584, %v625
  %v654 = vmul.f32 %v585, %v625
  %v655 = vmul.f32 %v586, %v625
  %v656 = vmul.f32 %v587, %v625
  %v657 = vmul.f32 %v588, %v625
  %v658 = vmul.f32 %v589, %v625
  %v659 = vmul.f32 %v590, %v625
  %v660 = vmul.f32 %v591, %v625
  %v661 = vmul.f32 %v592, %v625
  %v662 = vmul.f32 %v593, %v625
  %v663 = vmul.f32 %v594, %v625
  %v664 = vmul.f32 %v595, %v625
  %v665 = vmul.f32 %v596, %v625
  %v666 = vmul.f32 %v597, %v625
  %v667 = vmul.f32 %v598, %v625
  %v668 = vmul.f32 %v599, %v625
  %v669 = vmul.f32 %v600, %v625
  %v670 = vmul.f32 %v601, %v625
  %v671 = vmul.f32 %v602, %v625
  %v672 = vmul.f32 %v603, %v625
  %v673 = vmul.f32 %v604, %v625
  %v674 = vmul.f32 %v605, %v625
  %v675 = vmul.f32 %v606, %v625
  %v676 = vmul.f32 %v607, %v625
  %v677 = vmul.f32 %v608, %v625
  %v678 = vmul.f32 %v609, %v625
  %v679 = vmul.f32 %v610, %v625
  %v680 = vmul.f32 %v611, %v625
  %v681 = vmul.f32 %v612, %v625
  %v682 = vmul.f32 %v613, %v625
  %v683 = vmul.f32 %v614, %v625
  %v684 = vmul.f32 %v615, %v625
  %v685 = vmul.f32 %v616, %v625
  %v686 = vmul.f32 %v617, %v625
  %v687 = vmul.f32 %v618, %v625
  %v688 = vmul.f32 %v619, %v625
  %v689 = vmul.f32 %v620, %v625
  %v690 = vld [vmem:[%s5 + $0x1] sm:$0x1]
  %v691 = vlaneseq
  %v692 = vshrl.u32 %v691, 7
  %v693 = vsub.s32 0, %v692
  %v694 = vrot.slane %v690, %v693
  %v695 = vadd.f32 %v626, %v694
  %v696 = vadd.f32 %v627, %v694
  %v697 = vadd.f32 %v628, %v694
  %v698 = vadd.f32 %v629, %v694
  %v699 = vadd.f32 %v630, %v694
  %v700 = vadd.f32 %v631, %v694
  %v701 = vadd.f32 %v632, %v694
  %v702 = vadd.f32 %v633, %v694
  %v703 = vadd.f32 %v634, %v694
  %v704 = vadd.f32 %v635, %v694
  %v705 = vadd.f32 %v636, %v694
  %v706 = vadd.f32 %v637, %v694
  %v707 = vadd.f32 %v638, %v694
  %v708 = vadd.f32 %v639, %v694
  %v709 = vadd.f32 %v640, %v694
  %v710 = vadd.f32 %v641, %v694
  %v711 = vadd.f32 %v642, %v694
  %v712 = vadd.f32 %v643, %v694
  %v713 = vadd.f32 %v644, %v694
  %v714 = vadd.f32 %v645, %v694
  %v715 = vadd.f32 %v646, %v694
  %v716 = vadd.f32 %v647, %v694
  %v717 = vadd.f32 %v648, %v694
  %v718 = vadd.f32 %v649, %v694
  %v719 = vadd.f32 %v650, %v694
  %v720 = vadd.f32 %v651, %v694
  %v721 = vadd.f32 %v652, %v694
  %v722 = vadd.f32 %v653, %v694
  %v723 = vadd.f32 %v654, %v694
  %v724 = vadd.f32 %v655, %v694
  %v725 = vadd.f32 %v656, %v694
  %v726 = vadd.f32 %v657, %v694
  %v727 = vadd.f32 %v658, %v694
  %v728 = vadd.f32 %v659, %v694
  %v729 = vadd.f32 %v660, %v694
  %v730 = vadd.f32 %v661, %v694
  %v731 = vadd.f32 %v662, %v694
  %v732 = vadd.f32 %v663, %v694
  %v733 = vadd.f32 %v664, %v694
  %v734 = vadd.f32 %v665, %v694
  %v735 = vadd.f32 %v666, %v694
  %v736 = vadd.f32 %v667, %v694
  %v737 = vadd.f32 %v668, %v694
  %v738 = vadd.f32 %v669, %v694
  %v739 = vadd.f32 %v670, %v694
  %v740 = vadd.f32 %v671, %v694
  %v741 = vadd.f32 %v672, %v694
  %v742 = vadd.f32 %v673, %v694
  %v743 = vadd.f32 %v674, %v694
  %v744 = vadd.f32 %v675, %v694
  %v745 = vadd.f32 %v676, %v694
  %v746 = vadd.f32 %v677, %v694
  %v747 = vadd.f32 %v678, %v694
  %v748 = vadd.f32 %v679, %v694
  %v749 = vadd.f32 %v680, %v694
  %v750 = vadd.f32 %v681, %v694
  %v751 = vadd.f32 %v682, %v694
  %v752 = vadd.f32 %v683, %v694
  %v753 = vadd.f32 %v684, %v694
  %v754 = vadd.f32 %v685, %v694
  %v755 = vadd.f32 %v686, %v694
  %v756 = vadd.f32 %v687, %v694
  %v757 = vadd.f32 %v688, %v694
  %v758 = vadd.f32 %v689, %v694
  %v759 = vmul.f32 %v695, 0.16666667
  %v760 = vmul.f32 %v696, 0.16666667
  %v761 = vmul.f32 %v697, 0.16666667
  %v762 = vmul.f32 %v698, 0.16666667
  %v763 = vmul.f32 %v699, 0.16666667
  %v764 = vmul.f32 %v700, 0.16666667
  %v765 = vmul.f32 %v701, 0.16666667
  %v766 = vmul.f32 %v702, 0.16666667
  %v767 = vmul.f32 %v703, 0.16666667
  %v768 = vmul.f32 %v704, 0.16666667
  %v769 = vmul.f32 %v705, 0.16666667
  %v770 = vmul.f32 %v706, 0.16666667
  %v771 = vmul.f32 %v707, 0.16666667
  %v772 = vmul.f32 %v708, 0.16666667
  %v773 = vmul.f32 %v709, 0.16666667
  %v774 = vmul.f32 %v710, 0.16666667
  %v775 = vmul.f32 %v711, 0.16666667
  %v776 = vmul.f32 %v712, 0.16666667
  %v777 = vmul.f32 %v713, 0.16666667
  %v778 = vmul.f32 %v714, 0.16666667
  %v779 = vmul.f32 %v715, 0.16666667
  %v780 = vmul.f32 %v716, 0.16666667
  %v781 = vmul.f32 %v717, 0.16666667
  %v782 = vmul.f32 %v718, 0.16666667
  %v783 = vmul.f32 %v719, 0.16666667
  %v784 = vmul.f32 %v720, 0.16666667
  %v785 = vmul.f32 %v721, 0.16666667
  %v786 = vmul.f32 %v722, 0.16666667
  %v787 = vmul.f32 %v723, 0.16666667
  %v788 = vmul.f32 %v724, 0.16666667
  %v789 = vmul.f32 %v725, 0.16666667
  %v790 = vmul.f32 %v726, 0.16666667
  %v791 = vmul.f32 %v727, 0.16666667
  %v792 = vmul.f32 %v728, 0.16666667
  %v793 = vmul.f32 %v729, 0.16666667
  %v794 = vmul.f32 %v730, 0.16666667
  %v795 = vmul.f32 %v731, 0.16666667
  %v796 = vmul.f32 %v732, 0.16666667
  %v797 = vmul.f32 %v733, 0.16666667
  %v798 = vmul.f32 %v734, 0.16666667
  %v799 = vmul.f32 %v735, 0.16666667
  %v800 = vmul.f32 %v736, 0.16666667
  %v801 = vmul.f32 %v737, 0.16666667
  %v802 = vmul.f32 %v738, 0.16666667
  %v803 = vmul.f32 %v739, 0.16666667
  %v804 = vmul.f32 %v740, 0.16666667
  %v805 = vmul.f32 %v741, 0.16666667
  %v806 = vmul.f32 %v742, 0.16666667
  %v807 = vmul.f32 %v743, 0.16666667
  %v808 = vmul.f32 %v744, 0.16666667
  %v809 = vmul.f32 %v745, 0.16666667
  %v810 = vmul.f32 %v746, 0.16666667
  %v811 = vmul.f32 %v747, 0.16666667
  %v812 = vmul.f32 %v748, 0.16666667
  %v813 = vmul.f32 %v749, 0.16666667
  %v814 = vmul.f32 %v750, 0.16666667
  %v815 = vmul.f32 %v751, 0.16666667
  %v816 = vmul.f32 %v752, 0.16666667
  %v817 = vmul.f32 %v753, 0.16666667
  %v818 = vmul.f32 %v754, 0.16666667
  %v819 = vmul.f32 %v755, 0.16666667
  %v820 = vmul.f32 %v756, 0.16666667
  %v821 = vmul.f32 %v757, 0.16666667
  %v822 = vmul.f32 %v758, 0.16666667
  %v823 = vadd.f32 %v759, 0.5
  %v824 = vadd.f32 %v760, 0.5
  %v825 = vadd.f32 %v761, 0.5
  %v826 = vadd.f32 %v762, 0.5
  %v827 = vadd.f32 %v763, 0.5
  %v828 = vadd.f32 %v764, 0.5
  %v829 = vadd.f32 %v765, 0.5
  %v830 = vadd.f32 %v766, 0.5
  %v831 = vadd.f32 %v767, 0.5
  %v832 = vadd.f32 %v768, 0.5
  %v833 = vadd.f32 %v769, 0.5
  %v834 = vadd.f32 %v770, 0.5
  %v835 = vadd.f32 %v771, 0.5
  %v836 = vadd.f32 %v772, 0.5
  %v837 = vadd.f32 %v773, 0.5
  %v838 = vadd.f32 %v774, 0.5
  %v839 = vadd.f32 %v775, 0.5
  %v840 = vadd.f32 %v776, 0.5
  %v841 = vadd.f32 %v777, 0.5
  %v842 = vadd.f32 %v778, 0.5
  %v843 = vadd.f32 %v779, 0.5
  %v844 = vadd.f32 %v780, 0.5
  %v845 = vadd.f32 %v781, 0.5
  %v846 = vadd.f32 %v782, 0.5
  %v847 = vadd.f32 %v783, 0.5
  %v848 = vadd.f32 %v784, 0.5
  %v849 = vadd.f32 %v785, 0.5
  %v850 = vadd.f32 %v786, 0.5
  %v851 = vadd.f32 %v787, 0.5
  %v852 = vadd.f32 %v788, 0.5
  %v853 = vadd.f32 %v789, 0.5
  %v854 = vadd.f32 %v790, 0.5
  %v855 = vadd.f32 %v791, 0.5
  %v856 = vadd.f32 %v792, 0.5
  %v857 = vadd.f32 %v793, 0.5
  %v858 = vadd.f32 %v794, 0.5
  %v859 = vadd.f32 %v795, 0.5
  %v860 = vadd.f32 %v796, 0.5
  %v861 = vadd.f32 %v797, 0.5
  %v862 = vadd.f32 %v798, 0.5
  %v863 = vadd.f32 %v799, 0.5
  %v864 = vadd.f32 %v800, 0.5
  %v865 = vadd.f32 %v801, 0.5
  %v866 = vadd.f32 %v802, 0.5
  %v867 = vadd.f32 %v803, 0.5
  %v868 = vadd.f32 %v804, 0.5
  %v869 = vadd.f32 %v805, 0.5
  %v870 = vadd.f32 %v806, 0.5
  %v871 = vadd.f32 %v807, 0.5
  %v872 = vadd.f32 %v808, 0.5
  %v873 = vadd.f32 %v809, 0.5
  %v874 = vadd.f32 %v810, 0.5
  %v875 = vadd.f32 %v811, 0.5
  %v876 = vadd.f32 %v812, 0.5
  %v877 = vadd.f32 %v813, 0.5
  %v878 = vadd.f32 %v814, 0.5
  %v879 = vadd.f32 %v815, 0.5
  %v880 = vadd.f32 %v816, 0.5
  %v881 = vadd.f32 %v817, 0.5
  %v882 = vadd.f32 %v818, 0.5
  %v883 = vadd.f32 %v819, 0.5
  %v884 = vadd.f32 %v820, 0.5
  %v885 = vadd.f32 %v821, 0.5
  %v886 = vadd.f32 %v822, 0.5
  %v887 = vmax.f32 %v823, 0.0
  %v888 = vmax.f32 %v824, 0.0
  %v889 = vmax.f32 %v825, 0.0
  %v890 = vmax.f32 %v826, 0.0
  %v891 = vmax.f32 %v827, 0.0
  %v892 = vmax.f32 %v828, 0.0
  %v893 = vmax.f32 %v829, 0.0
  %v894 = vmax.f32 %v830, 0.0
  %v895 = vmax.f32 %v831, 0.0
  %v896 = vmax.f32 %v832, 0.0
  %v897 = vmax.f32 %v833, 0.0
  %v898 = vmax.f32 %v834, 0.0
  %v899 = vmax.f32 %v835, 0.0
  %v900 = vmax.f32 %v836, 0.0
  %v901 = vmax.f32 %v837, 0.0
  %v902 = vmax.f32 %v838, 0.0
  %v903 = vmax.f32 %v839, 0.0
  %v904 = vmax.f32 %v840, 0.0
  %v905 = vmax.f32 %v841, 0.0
  %v906 = vmax.f32 %v842, 0.0
  %v907 = vmax.f32 %v843, 0.0
  %v908 = vmax.f32 %v844, 0.0
  %v909 = vmax.f32 %v845, 0.0
  %v910 = vmax.f32 %v846, 0.0
  %v911 = vmax.f32 %v847, 0.0
  %v912 = vmax.f32 %v848, 0.0
  %v913 = vmax.f32 %v849, 0.0
  %v914 = vmax.f32 %v850, 0.0
  %v915 = vmax.f32 %v851, 0.0
  %v916 = vmax.f32 %v852, 0.0
  %v917 = vmax.f32 %v853, 0.0
  %v918 = vmax.f32 %v854, 0.0
  %v919 = vmax.f32 %v855, 0.0
  %v920 = vmax.f32 %v856, 0.0
  %v921 = vmax.f32 %v857, 0.0
  %v922 = vmax.f32 %v858, 0.0
  %v923 = vmax.f32 %v859, 0.0
  %v924 = vmax.f32 %v860, 0.0
  %v925 = vmax.f32 %v861, 0.0
  %v926 = vmax.f32 %v862, 0.0
  %v927 = vmax.f32 %v863, 0.0
  %v928 = vmax.f32 %v864, 0.0
  %v929 = vmax.f32 %v865, 0.0
  %v930 = vmax.f32 %v866, 0.0
  %v931 = vmax.f32 %v867, 0.0
  %v932 = vmax.f32 %v868, 0.0
  %v933 = vmax.f32 %v869, 0.0
  %v934 = vmax.f32 %v870, 0.0
  %v935 = vmax.f32 %v871, 0.0
  %v936 = vmax.f32 %v872, 0.0
  %v937 = vmax.f32 %v873, 0.0
  %v938 = vmax.f32 %v874, 0.0
  %v939 = vmax.f32 %v875, 0.0
  %v940 = vmax.f32 %v876, 0.0
  %v941 = vmax.f32 %v877, 0.0
  %v942 = vmax.f32 %v878, 0.0
  %v943 = vmax.f32 %v879, 0.0
  %v944 = vmax.f32 %v880, 0.0
  %v945 = vmax.f32 %v881, 0.0
  %v946 = vmax.f32 %v882, 0.0
  %v947 = vmax.f32 %v883, 0.0
  %v948 = vmax.f32 %v884, 0.0
  %v949 = vmax.f32 %v885, 0.0
  %v950 = vmax.f32 %v886, 0.0
  %v951 = vmin.f32 %v887, 1.0
  %v952 = vmin.f32 %v888, 1.0
  %v953 = vmin.f32 %v889, 1.0
  %v954 = vmin.f32 %v890, 1.0
  %v955 = vmin.f32 %v891, 1.0
  %v956 = vmin.f32 %v892, 1.0
  %v957 = vmin.f32 %v893, 1.0
  %v958 = vmin.f32 %v894, 1.0
  %v959 = vmin.f32 %v895, 1.0
  %v960 = vmin.f32 %v896, 1.0
  %v961 = vmin.f32 %v897, 1.0
  %v962 = vmin.f32 %v898, 1.0
  %v963 = vmin.f32 %v899, 1.0
  %v964 = vmin.f32 %v900, 1.0
  %v965 = vmin.f32 %v901, 1.0
  %v966 = vmin.f32 %v902, 1.0
  %v967 = vmin.f32 %v903, 1.0
  %v968 = vmin.f32 %v904, 1.0
  %v969 = vmin.f32 %v905, 1.0
  %v970 = vmin.f32 %v906, 1.0
  %v971 = vmin.f32 %v907, 1.0
  %v972 = vmin.f32 %v908, 1.0
  %v973 = vmin.f32 %v909, 1.0
  %v974 = vmin.f32 %v910, 1.0
  %v975 = vmin.f32 %v911, 1.0
  %v976 = vmin.f32 %v912, 1.0
  %v977 = vmin.f32 %v913, 1.0
  %v978 = vmin.f32 %v914, 1.0
  %v979 = vmin.f32 %v915, 1.0
  %v980 = vmin.f32 %v916, 1.0
  %v981 = vmin.f32 %v917, 1.0
  %v982 = vmin.f32 %v918, 1.0
  %v983 = vmin.f32 %v919, 1.0
  %v984 = vmin.f32 %v920, 1.0
  %v985 = vmin.f32 %v921, 1.0
  %v986 = vmin.f32 %v922, 1.0
  %v987 = vmin.f32 %v923, 1.0
  %v988 = vmin.f32 %v924, 1.0
  %v989 = vmin.f32 %v925, 1.0
  %v990 = vmin.f32 %v926, 1.0
  %v991 = vmin.f32 %v927, 1.0
  %v992 = vmin.f32 %v928, 1.0
  %v993 = vmin.f32 %v929, 1.0
  %v994 = vmin.f32 %v930, 1.0
  %v995 = vmin.f32 %v931, 1.0
  %v996 = vmin.f32 %v932, 1.0
  %v997 = vmin.f32 %v933, 1.0
  %v998 = vmin.f32 %v934, 1.0
  %v999 = vmin.f32 %v935, 1.0
  %v1000 = vmin.f32 %v936, 1.0
  %v1001 = vmin.f32 %v937, 1.0
  %v1002 = vmin.f32 %v938, 1.0
  %v1003 = vmin.f32 %v939, 1.0
  %v1004 = vmin.f32 %v940, 1.0
  %v1005 = vmin.f32 %v941, 1.0
  %v1006 = vmin.f32 %v942, 1.0
  %v1007 = vmin.f32 %v943, 1.0
  %v1008 = vmin.f32 %v944, 1.0
  %v1009 = vmin.f32 %v945, 1.0
  %v1010 = vmin.f32 %v946, 1.0
  %v1011 = vmin.f32 %v947, 1.0
  %v1012 = vmin.f32 %v948, 1.0
  %v1013 = vmin.f32 %v949, 1.0
  %v1014 = vmin.f32 %v950, 1.0
  %v1015 = vmul.f32 %v695, %v951
  %v1016 = vmul.f32 %v696, %v952
  %v1017 = vmul.f32 %v697, %v953
  %v1018 = vmul.f32 %v698, %v954
  %v1019 = vmul.f32 %v699, %v955
  %v1020 = vmul.f32 %v700, %v956
  %v1021 = vmul.f32 %v701, %v957
  %v1022 = vmul.f32 %v702, %v958
  %v1023 = vmul.f32 %v703, %v959
  %v1024 = vmul.f32 %v704, %v960
  %v1025 = vmul.f32 %v705, %v961
  %v1026 = vmul.f32 %v706, %v962
  %v1027 = vmul.f32 %v707, %v963
  %v1028 = vmul.f32 %v708, %v964
  %v1029 = vmul.f32 %v709, %v965
  %v1030 = vmul.f32 %v710, %v966
  %v1031 = vmul.f32 %v711, %v967
  %v1032 = vmul.f32 %v712, %v968
  %v1033 = vmul.f32 %v713, %v969
  %v1034 = vmul.f32 %v714, %v970
  %v1035 = vmul.f32 %v715, %v971
  %v1036 = vmul.f32 %v716, %v972
  %v1037 = vmul.f32 %v717, %v973
  %v1038 = vmul.f32 %v718, %v974
  %v1039 = vmul.f32 %v719, %v975
  %v1040 = vmul.f32 %v720, %v976
  %v1041 = vmul.f32 %v721, %v977
  %v1042 = vmul.f32 %v722, %v978
  %v1043 = vmul.f32 %v723, %v979
  %v1044 = vmul.f32 %v724, %v980
  %v1045 = vmul.f32 %v725, %v981
  %v1046 = vmul.f32 %v726, %v982
  %v1047 = vmul.f32 %v727, %v983
  %v1048 = vmul.f32 %v728, %v984
  %v1049 = vmul.f32 %v729, %v985
  %v1050 = vmul.f32 %v730, %v986
  %v1051 = vmul.f32 %v731, %v987
  %v1052 = vmul.f32 %v732, %v988
  %v1053 = vmul.f32 %v733, %v989
  %v1054 = vmul.f32 %v734, %v990
  %v1055 = vmul.f32 %v735, %v991
  %v1056 = vmul.f32 %v736, %v992
  %v1057 = vmul.f32 %v737, %v993
  %v1058 = vmul.f32 %v738, %v994
  %v1059 = vmul.f32 %v739, %v995
  %v1060 = vmul.f32 %v740, %v996
  %v1061 = vmul.f32 %v741, %v997
  %v1062 = vmul.f32 %v742, %v998
  %v1063 = vmul.f32 %v743, %v999
  %v1064 = vmul.f32 %v744, %v1000
  %v1065 = vmul.f32 %v745, %v1001
  %v1066 = vmul.f32 %v746, %v1002
  %v1067 = vmul.f32 %v747, %v1003
  %v1068 = vmul.f32 %v748, %v1004
  %v1069 = vmul.f32 %v749, %v1005
  %v1070 = vmul.f32 %v750, %v1006
  %v1071 = vmul.f32 %v751, %v1007
  %v1072 = vmul.f32 %v752, %v1008
  %v1073 = vmul.f32 %v753, %v1009
  %v1074 = vmul.f32 %v754, %v1010
  %v1075 = vmul.f32 %v755, %v1011
  %v1076 = vmul.f32 %v756, %v1012
  %v1077 = vmul.f32 %v757, %v1013
  %v1078 = vmul.f32 %v758, %v1014
  %v1079 = vld [vmem:[%s2] sm:$0xff]
  %v1080 = vld [vmem:[%s2 + $0x8] sm:$0xff]
  %v1081 = vld [vmem:[%s2 + $0x10] sm:$0xff]
  %v1082 = vld [vmem:[%s2 + $0x18] sm:$0xff]
  %v1083 = vld [vmem:[%s2 + $0x20] sm:$0xff]
  %v1084 = vld [vmem:[%s2 + $0x28] sm:$0xff]
  %v1085 = vld [vmem:[%s2 + $0x30] sm:$0xff]
  %v1086 = vld [vmem:[%s2 + $0x38] sm:$0xff]
  %v1087 = vld [vmem:[%s2 + $0x40] sm:$0xff]
  %v1088 = vld [vmem:[%s2 + $0x48] sm:$0xff]
  %v1089 = vld [vmem:[%s2 + $0x50] sm:$0xff]
  %v1090 = vld [vmem:[%s2 + $0x58] sm:$0xff]
  %v1091 = vld [vmem:[%s2 + $0x60] sm:$0xff]
  %v1092 = vld [vmem:[%s2 + $0x68] sm:$0xff]
  %v1093 = vld [vmem:[%s2 + $0x70] sm:$0xff]
  %v1094 = vld [vmem:[%s2 + $0x78] sm:$0xff]
  %v1095 = vld [vmem:[%s2 + $0x80] sm:$0xff]
  %v1096 = vld [vmem:[%s2 + $0x88] sm:$0xff]
  %v1097 = vld [vmem:[%s2 + $0x90] sm:$0xff]
  %v1098 = vld [vmem:[%s2 + $0x98] sm:$0xff]
  %v1099 = vld [vmem:[%s2 + $0xa0] sm:$0xff]
  %v1100 = vld [vmem:[%s2 + $0xa8] sm:$0xff]
  %v1101 = vld [vmem:[%s2 + $0xb0] sm:$0xff]
  %v1102 = vld [vmem:[%s2 + $0xb8] sm:$0xff]
  %v1103 = vld [vmem:[%s2 + $0xc0] sm:$0xff]
  %v1104 = vld [vmem:[%s2 + $0xc8] sm:$0xff]
  %v1105 = vld [vmem:[%s2 + $0xd0] sm:$0xff]
  %v1106 = vld [vmem:[%s2 + $0xd8] sm:$0xff]
  %v1107 = vld [vmem:[%s2 + $0xe0] sm:$0xff]
  %v1108 = vld [vmem:[%s2 + $0xe8] sm:$0xff]
  %v1109 = vld [vmem:[%s2 + $0xf0] sm:$0xff]
  %v1110 = vld [vmem:[%s2 + $0xf8] sm:$0xff]
  %v1111 = vld [vmem:[%s2 + $0x100] sm:$0xff]
  %v1112 = vld [vmem:[%s2 + $0x108] sm:$0xff]
  %v1113 = vld [vmem:[%s2 + $0x110] sm:$0xff]
  %v1114 = vld [vmem:[%s2 + $0x118] sm:$0xff]
  %v1115 = vld [vmem:[%s2 + $0x120] sm:$0xff]
  %v1116 = vld [vmem:[%s2 + $0x128] sm:$0xff]
  %v1117 = vld [vmem:[%s2 + $0x130] sm:$0xff]
  %v1118 = vld [vmem:[%s2 + $0x138] sm:$0xff]
  %v1119 = vld [vmem:[%s2 + $0x140] sm:$0xff]
  %v1120 = vld [vmem:[%s2 + $0x148] sm:$0xff]
  %v1121 = vld [vmem:[%s2 + $0x150] sm:$0xff]
  %v1122 = vld [vmem:[%s2 + $0x158] sm:$0xff]
  %v1123 = vld [vmem:[%s2 + $0x160] sm:$0xff]
  %v1124 = vld [vmem:[%s2 + $0x168] sm:$0xff]
  %v1125 = vld [vmem:[%s2 + $0x170] sm:$0xff]
  %v1126 = vld [vmem:[%s2 + $0x178] sm:$0xff]
  %v1127 = vld [vmem:[%s2 + $0x180] sm:$0xff]
  %v1128 = vld [vmem:[%s2 + $0x188] sm:$0xff]
  %v1129 = vld [vmem:[%s2 + $0x190] sm:$0xff]
  %v1130 = vld [vmem:[%s2 + $0x198] sm:$0xff]
  %v1131 = vld [vmem:[%s2 + $0x1a0] sm:$0xff]
  %v1132 = vld [vmem:[%s2 + $0x1a8] sm:$0xff]
  %v1133 = vld [vmem:[%s2 + $0x1b0] sm:$0xff]
  %v1134 = vld [vmem:[%s2 + $0x1b8] sm:$0xff]
  %v1135 = vld [vmem:[%s2 + $0x1c0] sm:$0xff]
  %v1136 = vld [vmem:[%s2 + $0x1c8] sm:$0xff]
  %v1137 = vld [vmem:[%s2 + $0x1d0] sm:$0xff]
  %v1138 = vld [vmem:[%s2 + $0x1d8] sm:$0xff]
  %v1139 = vld [vmem:[%s2 + $0x1e0] sm:$0xff]
  %v1140 = vld [vmem:[%s2 + $0x1e8] sm:$0xff]
  %v1141 = vld [vmem:[%s2 + $0x1f0] sm:$0xff]
  %v1142 = vld [vmem:[%s2 + $0x1f8] sm:$0xff]
  %v1143 = vld [vmem:[%s6] sm:$0x1]
  %v1144 = vlaneseq
  %v1145 = vshrl.u32 %v1144, 7
  %v1146 = vsub.s32 0, %v1145
  %v1147 = vrot.slane %v1143, %v1146
  %v1148 = vmul.f32 %v1079, %v1147
  %v1149 = vmul.f32 %v1080, %v1147
  %v1150 = vmul.f32 %v1081, %v1147
  %v1151 = vmul.f32 %v1082, %v1147
  %v1152 = vmul.f32 %v1083, %v1147
  %v1153 = vmul.f32 %v1084, %v1147
  %v1154 = vmul.f32 %v1085, %v1147
  %v1155 = vmul.f32 %v1086, %v1147
  %v1156 = vmul.f32 %v1087, %v1147
  %v1157 = vmul.f32 %v1088, %v1147
  %v1158 = vmul.f32 %v1089, %v1147
  %v1159 = vmul.f32 %v1090, %v1147
  %v1160 = vmul.f32 %v1091, %v1147
  %v1161 = vmul.f32 %v1092, %v1147
  %v1162 = vmul.f32 %v1093, %v1147
  %v1163 = vmul.f32 %v1094, %v1147
  %v1164 = vmul.f32 %v1095, %v1147
  %v1165 = vmul.f32 %v1096, %v1147
  %v1166 = vmul.f32 %v1097, %v1147
  %v1167 = vmul.f32 %v1098, %v1147
  %v1168 = vmul.f32 %v1099, %v1147
  %v1169 = vmul.f32 %v1100, %v1147
  %v1170 = vmul.f32 %v1101, %v1147
  %v1171 = vmul.f32 %v1102, %v1147
  %v1172 = vmul.f32 %v1103, %v1147
  %v1173 = vmul.f32 %v1104, %v1147
  %v1174 = vmul.f32 %v1105, %v1147
  %v1175 = vmul.f32 %v1106, %v1147
  %v1176 = vmul.f32 %v1107, %v1147
  %v1177 = vmul.f32 %v1108, %v1147
  %v1178 = vmul.f32 %v1109, %v1147
  %v1179 = vmul.f32 %v1110, %v1147
  %v1180 = vmul.f32 %v1111, %v1147
  %v1181 = vmul.f32 %v1112, %v1147
  %v1182 = vmul.f32 %v1113, %v1147
  %v1183 = vmul.f32 %v1114, %v1147
  %v1184 = vmul.f32 %v1115, %v1147
  %v1185 = vmul.f32 %v1116, %v1147
  %v1186 = vmul.f32 %v1117, %v1147
  %v1187 = vmul.f32 %v1118, %v1147
  %v1188 = vmul.f32 %v1119, %v1147
  %v1189 = vmul.f32 %v1120, %v1147
  %v1190 = vmul.f32 %v1121, %v1147
  %v1191 = vmul.f32 %v1122, %v1147
  %v1192 = vmul.f32 %v1123, %v1147
  %v1193 = vmul.f32 %v1124, %v1147
  %v1194 = vmul.f32 %v1125, %v1147
  %v1195 = vmul.f32 %v1126, %v1147
  %v1196 = vmul.f32 %v1127, %v1147
  %v1197 = vmul.f32 %v1128, %v1147
  %v1198 = vmul.f32 %v1129, %v1147
  %v1199 = vmul.f32 %v1130, %v1147
  %v1200 = vmul.f32 %v1131, %v1147
  %v1201 = vmul.f32 %v1132, %v1147
  %v1202 = vmul.f32 %v1133, %v1147
  %v1203 = vmul.f32 %v1134, %v1147
  %v1204 = vmul.f32 %v1135, %v1147
  %v1205 = vmul.f32 %v1136, %v1147
  %v1206 = vmul.f32 %v1137, %v1147
  %v1207 = vmul.f32 %v1138, %v1147
  %v1208 = vmul.f32 %v1139, %v1147
  %v1209 = vmul.f32 %v1140, %v1147
  %v1210 = vmul.f32 %v1141, %v1147
  %v1211 = vmul.f32 %v1142, %v1147
  %v1212 = vld [vmem:[%s6 + $0x1] sm:$0x1]
  %v1213 = vlaneseq
  %v1214 = vshrl.u32 %v1213, 7
  %v1215 = vsub.s32 0, %v1214
  %v1216 = vrot.slane %v1212, %v1215
  %v1217 = vadd.f32 %v1148, %v1216
  %v1218 = vadd.f32 %v1149, %v1216
  %v1219 = vadd.f32 %v1150, %v1216
  %v1220 = vadd.f32 %v1151, %v1216
  %v1221 = vadd.f32 %v1152, %v1216
  %v1222 = vadd.f32 %v1153, %v1216
  %v1223 = vadd.f32 %v1154, %v1216
  %v1224 = vadd.f32 %v1155, %v1216
  %v1225 = vadd.f32 %v1156, %v1216
  %v1226 = vadd.f32 %v1157, %v1216
  %v1227 = vadd.f32 %v1158, %v1216
  %v1228 = vadd.f32 %v1159, %v1216
  %v1229 = vadd.f32 %v1160, %v1216
  %v1230 = vadd.f32 %v1161, %v1216
  %v1231 = vadd.f32 %v1162, %v1216
  %v1232 = vadd.f32 %v1163, %v1216
  %v1233 = vadd.f32 %v1164, %v1216
  %v1234 = vadd.f32 %v1165, %v1216
  %v1235 = vadd.f32 %v1166, %v1216
  %v1236 = vadd.f32 %v1167, %v1216
  %v1237 = vadd.f32 %v1168, %v1216
  %v1238 = vadd.f32 %v1169, %v1216
  %v1239 = vadd.f32 %v1170, %v1216
  %v1240 = vadd.f32 %v1171, %v1216
  %v1241 = vadd.f32 %v1172, %v1216
  %v1242 = vadd.f32 %v1173, %v1216
  %v1243 = vadd.f32 %v1174, %v1216
  %v1244 = vadd.f32 %v1175, %v1216
  %v1245 = vadd.f32 %v1176, %v1216
  %v1246 = vadd.f32 %v1177, %v1216
  %v1247 = vadd.f32 %v1178, %v1216
  %v1248 = vadd.f32 %v1179, %v1216
  %v1249 = vadd.f32 %v1180, %v1216
  %v1250 = vadd.f32 %v1181, %v1216
  %v1251 = vadd.f32 %v1182, %v1216
  %v1252 = vadd.f32 %v1183, %v1216
  %v1253 = vadd.f32 %v1184, %v1216
  %v1254 = vadd.f32 %v1185, %v1216
  %v1255 = vadd.f32 %v1186, %v1216
  %v1256 = vadd.f32 %v1187, %v1216
  %v1257 = vadd.f32 %v1188, %v1216
  %v1258 = vadd.f32 %v1189, %v1216
  %v1259 = vadd.f32 %v1190, %v1216
  %v1260 = vadd.f32 %v1191, %v1216
  %v1261 = vadd.f32 %v1192, %v1216
  %v1262 = vadd.f32 %v1193, %v1216
  %v1263 = vadd.f32 %v1194, %v1216
  %v1264 = vadd.f32 %v1195, %v1216
  %v1265 = vadd.f32 %v1196, %v1216
  %v1266 = vadd.f32 %v1197, %v1216
  %v1267 = vadd.f32 %v1198, %v1216
  %v1268 = vadd.f32 %v1199, %v1216
  %v1269 = vadd.f32 %v1200, %v1216
  %v1270 = vadd.f32 %v1201, %v1216
  %v1271 = vadd.f32 %v1202, %v1216
  %v1272 = vadd.f32 %v1203, %v1216
  %v1273 = vadd.f32 %v1204, %v1216
  %v1274 = vadd.f32 %v1205, %v1216
  %v1275 = vadd.f32 %v1206, %v1216
  %v1276 = vadd.f32 %v1207, %v1216
  %v1277 = vadd.f32 %v1208, %v1216
  %v1278 = vadd.f32 %v1209, %v1216
  %v1279 = vadd.f32 %v1210, %v1216
  %v1280 = vadd.f32 %v1211, %v1216
  %v1281 = vmul.f32 %v1217, 0.16666667
  %v1282 = vmul.f32 %v1218, 0.16666667
  %v1283 = vmul.f32 %v1219, 0.16666667
  %v1284 = vmul.f32 %v1220, 0.16666667
  %v1285 = vmul.f32 %v1221, 0.16666667
  %v1286 = vmul.f32 %v1222, 0.16666667
  %v1287 = vmul.f32 %v1223, 0.16666667
  %v1288 = vmul.f32 %v1224, 0.16666667
  %v1289 = vmul.f32 %v1225, 0.16666667
  %v1290 = vmul.f32 %v1226, 0.16666667
  %v1291 = vmul.f32 %v1227, 0.16666667
  %v1292 = vmul.f32 %v1228, 0.16666667
  %v1293 = vmul.f32 %v1229, 0.16666667
  %v1294 = vmul.f32 %v1230, 0.16666667
  %v1295 = vmul.f32 %v1231, 0.16666667
  %v1296 = vmul.f32 %v1232, 0.16666667
  %v1297 = vmul.f32 %v1233, 0.16666667
  %v1298 = vmul.f32 %v1234, 0.16666667
  %v1299 = vmul.f32 %v1235, 0.16666667
  %v1300 = vmul.f32 %v1236, 0.16666667
  %v1301 = vmul.f32 %v1237, 0.16666667
  %v1302 = vmul.f32 %v1238, 0.16666667
  %v1303 = vmul.f32 %v1239, 0.16666667
  %v1304 = vmul.f32 %v1240, 0.16666667
  %v1305 = vmul.f32 %v1241, 0.16666667
  %v1306 = vmul.f32 %v1242, 0.16666667
  %v1307 = vmul.f32 %v1243, 0.16666667
  %v1308 = vmul.f32 %v1244, 0.16666667
  %v1309 = vmul.f32 %v1245, 0.16666667
  %v1310 = vmul.f32 %v1246, 0.16666667
  %v1311 = vmul.f32 %v1247, 0.16666667
  %v1312 = vmul.f32 %v1248, 0.16666667
  %v1313 = vmul.f32 %v1249, 0.16666667
  %v1314 = vmul.f32 %v1250, 0.16666667
  %v1315 = vmul.f32 %v1251, 0.16666667
  %v1316 = vmul.f32 %v1252, 0.16666667
  %v1317 = vmul.f32 %v1253, 0.16666667
  %v1318 = vmul.f32 %v1254, 0.16666667
  %v1319 = vmul.f32 %v1255, 0.16666667
  %v1320 = vmul.f32 %v1256, 0.16666667
  %v1321 = vmul.f32 %v1257, 0.16666667
  %v1322 = vmul.f32 %v1258, 0.16666667
  %v1323 = vmul.f32 %v1259, 0.16666667
  %v1324 = vmul.f32 %v1260, 0.16666667
  %v1325 = vmul.f32 %v1261, 0.16666667
  %v1326 = vmul.f32 %v1262, 0.16666667
  %v1327 = vmul.f32 %v1263, 0.16666667
  %v1328 = vmul.f32 %v1264, 0.16666667
  %v1329 = vmul.f32 %v1265, 0.16666667
  %v1330 = vmul.f32 %v1266, 0.16666667
  %v1331 = vmul.f32 %v1267, 0.16666667
  %v1332 = vmul.f32 %v1268, 0.16666667
  %v1333 = vmul.f32 %v1269, 0.16666667
  %v1334 = vmul.f32 %v1270, 0.16666667
  %v1335 = vmul.f32 %v1271, 0.16666667
  %v1336 = vmul.f32 %v1272, 0.16666667
  %v1337 = vmul.f32 %v1273, 0.16666667
  %v1338 = vmul.f32 %v1274, 0.16666667
  %v1339 = vmul.f32 %v1275, 0.16666667
  %v1340 = vmul.f32 %v1276, 0.16666667
  %v1341 = vmul.f32 %v1277, 0.16666667
  %v1342 = vmul.f32 %v1278, 0.16666667
  %v1343 = vmul.f32 %v1279, 0.16666667
  %v1344 = vmul.f32 %v1280, 0.16666667
  %v1345 = vadd.f32 %v1281, 0.5
  %v1346 = vadd.f32 %v1282, 0.5
  %v1347 = vadd.f32 %v1283, 0.5
  %v1348 = vadd.f32 %v1284, 0.5
  %v1349 = vadd.f32 %v1285, 0.5
  %v1350 = vadd.f32 %v1286, 0.5
  %v1351 = vadd.f32 %v1287, 0.5
  %v1352 = vadd.f32 %v1288, 0.5
  %v1353 = vadd.f32 %v1289, 0.5
  %v1354 = vadd.f32 %v1290, 0.5
  %v1355 = vadd.f32 %v1291, 0.5
  %v1356 = vadd.f32 %v1292, 0.5
  %v1357 = vadd.f32 %v1293, 0.5
  %v1358 = vadd.f32 %v1294, 0.5
  %v1359 = vadd.f32 %v1295, 0.5
  %v1360 = vadd.f32 %v1296, 0.5
  %v1361 = vadd.f32 %v1297, 0.5
  %v1362 = vadd.f32 %v1298, 0.5
  %v1363 = vadd.f32 %v1299, 0.5
  %v1364 = vadd.f32 %v1300, 0.5
  %v1365 = vadd.f32 %v1301, 0.5
  %v1366 = vadd.f32 %v1302, 0.5
  %v1367 = vadd.f32 %v1303, 0.5
  %v1368 = vadd.f32 %v1304, 0.5
  %v1369 = vadd.f32 %v1305, 0.5
  %v1370 = vadd.f32 %v1306, 0.5
  %v1371 = vadd.f32 %v1307, 0.5
  %v1372 = vadd.f32 %v1308, 0.5
  %v1373 = vadd.f32 %v1309, 0.5
  %v1374 = vadd.f32 %v1310, 0.5
  %v1375 = vadd.f32 %v1311, 0.5
  %v1376 = vadd.f32 %v1312, 0.5
  %v1377 = vadd.f32 %v1313, 0.5
  %v1378 = vadd.f32 %v1314, 0.5
  %v1379 = vadd.f32 %v1315, 0.5
  %v1380 = vadd.f32 %v1316, 0.5
  %v1381 = vadd.f32 %v1317, 0.5
  %v1382 = vadd.f32 %v1318, 0.5
  %v1383 = vadd.f32 %v1319, 0.5
  %v1384 = vadd.f32 %v1320, 0.5
  %v1385 = vadd.f32 %v1321, 0.5
  %v1386 = vadd.f32 %v1322, 0.5
  %v1387 = vadd.f32 %v1323, 0.5
  %v1388 = vadd.f32 %v1324, 0.5
  %v1389 = vadd.f32 %v1325, 0.5
  %v1390 = vadd.f32 %v1326, 0.5
  %v1391 = vadd.f32 %v1327, 0.5
  %v1392 = vadd.f32 %v1328, 0.5
  %v1393 = vadd.f32 %v1329, 0.5
  %v1394 = vadd.f32 %v1330, 0.5
  %v1395 = vadd.f32 %v1331, 0.5
  %v1396 = vadd.f32 %v1332, 0.5
  %v1397 = vadd.f32 %v1333, 0.5
  %v1398 = vadd.f32 %v1334, 0.5
  %v1399 = vadd.f32 %v1335, 0.5
  %v1400 = vadd.f32 %v1336, 0.5
  %v1401 = vadd.f32 %v1337, 0.5
  %v1402 = vadd.f32 %v1338, 0.5
  %v1403 = vadd.f32 %v1339, 0.5
  %v1404 = vadd.f32 %v1340, 0.5
  %v1405 = vadd.f32 %v1341, 0.5
  %v1406 = vadd.f32 %v1342, 0.5
  %v1407 = vadd.f32 %v1343, 0.5
  %v1408 = vadd.f32 %v1344, 0.5
  %v1409 = vmax.f32 %v1345, 0.0
  %v1410 = vmax.f32 %v1346, 0.0
  %v1411 = vmax.f32 %v1347, 0.0
  %v1412 = vmax.f32 %v1348, 0.0
  %v1413 = vmax.f32 %v1349, 0.0
  %v1414 = vmax.f32 %v1350, 0.0
  %v1415 = vmax.f32 %v1351, 0.0
  %v1416 = vmax.f32 %v1352, 0.0
  %v1417 = vmax.f32 %v1353, 0.0
  %v1418 = vmax.f32 %v1354, 0.0
  %v1419 = vmax.f32 %v1355, 0.0
  %v1420 = vmax.f32 %v1356, 0.0
  %v1421 = vmax.f32 %v1357, 0.0
  %v1422 = vmax.f32 %v1358, 0.0
  %v1423 = vmax.f32 %v1359, 0.0
  %v1424 = vmax.f32 %v1360, 0.0
  %v1425 = vmax.f32 %v1361, 0.0
  %v1426 = vmax.f32 %v1362, 0.0
  %v1427 = vmax.f32 %v1363, 0.0
  %v1428 = vmax.f32 %v1364, 0.0
  %v1429 = vmax.f32 %v1365, 0.0
  %v1430 = vmax.f32 %v1366, 0.0
  %v1431 = vmax.f32 %v1367, 0.0
  %v1432 = vmax.f32 %v1368, 0.0
  %v1433 = vmax.f32 %v1369, 0.0
  %v1434 = vmax.f32 %v1370, 0.0
  %v1435 = vmax.f32 %v1371, 0.0
  %v1436 = vmax.f32 %v1372, 0.0
  %v1437 = vmax.f32 %v1373, 0.0
  %v1438 = vmax.f32 %v1374, 0.0
  %v1439 = vmax.f32 %v1375, 0.0
  %v1440 = vmax.f32 %v1376, 0.0
  %v1441 = vmax.f32 %v1377, 0.0
  %v1442 = vmax.f32 %v1378, 0.0
  %v1443 = vmax.f32 %v1379, 0.0
  %v1444 = vmax.f32 %v1380, 0.0
  %v1445 = vmax.f32 %v1381, 0.0
  %v1446 = vmax.f32 %v1382, 0.0
  %v1447 = vmax.f32 %v1383, 0.0
  %v1448 = vmax.f32 %v1384, 0.0
  %v1449 = vmax.f32 %v1385, 0.0
  %v1450 = vmax.f32 %v1386, 0.0
  %v1451 = vmax.f32 %v1387, 0.0
  %v1452 = vmax.f32 %v1388, 0.0
  %v1453 = vmax.f32 %v1389, 0.0
  %v1454 = vmax.f32 %v1390, 0.0
  %v1455 = vmax.f32 %v1391, 0.0
  %v1456 = vmax.f32 %v1392, 0.0
  %v1457 = vmax.f32 %v1393, 0.0
  %v1458 = vmax.f32 %v1394, 0.0
  %v1459 = vmax.f32 %v1395, 0.0
  %v1460 = vmax.f32 %v1396, 0.0
  %v1461 = vmax.f32 %v1397, 0.0
  %v1462 = vmax.f32 %v1398, 0.0
  %v1463 = vmax.f32 %v1399, 0.0
  %v1464 = vmax.f32 %v1400, 0.0
  %v1465 = vmax.f32 %v1401, 0.0
  %v1466 = vmax.f32 %v1402, 0.0
  %v1467 = vmax.f32 %v1403, 0.0
  %v1468 = vmax.f32 %v1404, 0.0
  %v1469 = vmax.f32 %v1405, 0.0
  %v1470 = vmax.f32 %v1406, 0.0
  %v1471 = vmax.f32 %v1407, 0.0
  %v1472 = vmax.f32 %v1408, 0.0
  %v1473 = vmin.f32 %v1409, 1.0
  %v1474 = vmin.f32 %v1410, 1.0
  %v1475 = vmin.f32 %v1411, 1.0
  %v1476 = vmin.f32 %v1412, 1.0
  %v1477 = vmin.f32 %v1413, 1.0
  %v1478 = vmin.f32 %v1414, 1.0
  %v1479 = vmin.f32 %v1415, 1.0
  %v1480 = vmin.f32 %v1416, 1.0
  %v1481 = vmin.f32 %v1417, 1.0
  %v1482 = vmin.f32 %v1418, 1.0
  %v1483 = vmin.f32 %v1419, 1.0
  %v1484 = vmin.f32 %v1420, 1.0
  %v1485 = vmin.f32 %v1421, 1.0
  %v1486 = vmin.f32 %v1422, 1.0
  %v1487 = vmin.f32 %v1423, 1.0
  %v1488 = vmin.f32 %v1424, 1.0
  %v1489 = vmin.f32 %v1425, 1.0
  %v1490 = vmin.f32 %v1426, 1.0
  %v1491 = vmin.f32 %v1427, 1.0
  %v1492 = vmin.f32 %v1428, 1.0
  %v1493 = vmin.f32 %v1429, 1.0
  %v1494 = vmin.f32 %v1430, 1.0
  %v1495 = vmin.f32 %v1431, 1.0
  %v1496 = vmin.f32 %v1432, 1.0
  %v1497 = vmin.f32 %v1433, 1.0
  %v1498 = vmin.f32 %v1434, 1.0
  %v1499 = vmin.f32 %v1435, 1.0
  %v1500 = vmin.f32 %v1436, 1.0
  %v1501 = vmin.f32 %v1437, 1.0
  %v1502 = vmin.f32 %v1438, 1.0
  %v1503 = vmin.f32 %v1439, 1.0
  %v1504 = vmin.f32 %v1440, 1.0
  %v1505 = vmin.f32 %v1441, 1.0
  %v1506 = vmin.f32 %v1442, 1.0
  %v1507 = vmin.f32 %v1443, 1.0
  %v1508 = vmin.f32 %v1444, 1.0
  %v1509 = vmin.f32 %v1445, 1.0
  %v1510 = vmin.f32 %v1446, 1.0
  %v1511 = vmin.f32 %v1447, 1.0
  %v1512 = vmin.f32 %v1448, 1.0
  %v1513 = vmin.f32 %v1449, 1.0
  %v1514 = vmin.f32 %v1450, 1.0
  %v1515 = vmin.f32 %v1451, 1.0
  %v1516 = vmin.f32 %v1452, 1.0
  %v1517 = vmin.f32 %v1453, 1.0
  %v1518 = vmin.f32 %v1454, 1.0
  %v1519 = vmin.f32 %v1455, 1.0
  %v1520 = vmin.f32 %v1456, 1.0
  %v1521 = vmin.f32 %v1457, 1.0
  %v1522 = vmin.f32 %v1458, 1.0
  %v1523 = vmin.f32 %v1459, 1.0
  %v1524 = vmin.f32 %v1460, 1.0
  %v1525 = vmin.f32 %v1461, 1.0
  %v1526 = vmin.f32 %v1462, 1.0
  %v1527 = vmin.f32 %v1463, 1.0
  %v1528 = vmin.f32 %v1464, 1.0
  %v1529 = vmin.f32 %v1465, 1.0
  %v1530 = vmin.f32 %v1466, 1.0
  %v1531 = vmin.f32 %v1467, 1.0
  %v1532 = vmin.f32 %v1468, 1.0
  %v1533 = vmin.f32 %v1469, 1.0
  %v1534 = vmin.f32 %v1470, 1.0
  %v1535 = vmin.f32 %v1471, 1.0
  %v1536 = vmin.f32 %v1472, 1.0
  %v1537 = vmul.f32 %v1217, %v1473
  %v1538 = vmul.f32 %v1218, %v1474
  %v1539 = vmul.f32 %v1219, %v1475
  %v1540 = vmul.f32 %v1220, %v1476
  %v1541 = vmul.f32 %v1221, %v1477
  %v1542 = vmul.f32 %v1222, %v1478
  %v1543 = vmul.f32 %v1223, %v1479
  %v1544 = vmul.f32 %v1224, %v1480
  %v1545 = vmul.f32 %v1225, %v1481
  %v1546 = vmul.f32 %v1226, %v1482
  %v1547 = vmul.f32 %v1227, %v1483
  %v1548 = vmul.f32 %v1228, %v1484
  %v1549 = vmul.f32 %v1229, %v1485
  %v1550 = vmul.f32 %v1230, %v1486
  %v1551 = vmul.f32 %v1231, %v1487
  %v1552 = vmul.f32 %v1232, %v1488
  %v1553 = vmul.f32 %v1233, %v1489
  %v1554 = vmul.f32 %v1234, %v1490
  %v1555 = vmul.f32 %v1235, %v1491
  %v1556 = vmul.f32 %v1236, %v1492
  %v1557 = vmul.f32 %v1237, %v1493
  %v1558 = vmul.f32 %v1238, %v1494
  %v1559 = vmul.f32 %v1239, %v1495
  %v1560 = vmul.f32 %v1240, %v1496
  %v1561 = vmul.f32 %v1241, %v1497
  %v1562 = vmul.f32 %v1242, %v1498
  %v1563 = vmul.f32 %v1243, %v1499
  %v1564 = vmul.f32 %v1244, %v1500
  %v1565 = vmul.f32 %v1245, %v1501
  %v1566 = vmul.f32 %v1246, %v1502
  %v1567 = vmul.f32 %v1247, %v1503
  %v1568 = vmul.f32 %v1248, %v1504
  %v1569 = vmul.f32 %v1249, %v1505
  %v1570 = vmul.f32 %v1250, %v1506
  %v1571 = vmul.f32 %v1251, %v1507
  %v1572 = vmul.f32 %v1252, %v1508
  %v1573 = vmul.f32 %v1253, %v1509
  %v1574 = vmul.f32 %v1254, %v1510
  %v1575 = vmul.f32 %v1255, %v1511
  %v1576 = vmul.f32 %v1256, %v1512
  %v1577 = vmul.f32 %v1257, %v1513
  %v1578 = vmul.f32 %v1258, %v1514
  %v1579 = vmul.f32 %v1259, %v1515
  %v1580 = vmul.f32 %v1260, %v1516
  %v1581 = vmul.f32 %v1261, %v1517
  %v1582 = vmul.f32 %v1262, %v1518
  %v1583 = vmul.f32 %v1263, %v1519
  %v1584 = vmul.f32 %v1264, %v1520
  %v1585 = vmul.f32 %v1265, %v1521
  %v1586 = vmul.f32 %v1266, %v1522
  %v1587 = vmul.f32 %v1267, %v1523
  %v1588 = vmul.f32 %v1268, %v1524
  %v1589 = vmul.f32 %v1269, %v1525
  %v1590 = vmul.f32 %v1270, %v1526
  %v1591 = vmul.f32 %v1271, %v1527
  %v1592 = vmul.f32 %v1272, %v1528
  %v1593 = vmul.f32 %v1273, %v1529
  %v1594 = vmul.f32 %v1274, %v1530
  %v1595 = vmul.f32 %v1275, %v1531
  %v1596 = vmul.f32 %v1276, %v1532
  %v1597 = vmul.f32 %v1277, %v1533
  %v1598 = vmul.f32 %v1278, %v1534
  %v1599 = vmul.f32 %v1279, %v1535
  %v1600 = vmul.f32 %v1280, %v1536
  %v1601 = vld [vmem:[%s3] sm:$0xf]
  %v1602 = vld [vmem:[%s3 + $0x4] sm:$0xf]
  %v1603 = vld [vmem:[%s3 + $0x8] sm:$0xf]
  %v1604 = vld [vmem:[%s3 + $0xc] sm:$0xf]
  %v1605 = vld [vmem:[%s3 + $0x10] sm:$0xf]
  %v1606 = vld [vmem:[%s3 + $0x14] sm:$0xf]
  %v1607 = vld [vmem:[%s3 + $0x18] sm:$0xf]
  %v1608 = vld [vmem:[%s3 + $0x1c] sm:$0xf]
  %v1609 = vld [vmem:[%s3 + $0x20] sm:$0xf]
  %v1610 = vld [vmem:[%s3 + $0x24] sm:$0xf]
  %v1611 = vld [vmem:[%s3 + $0x28] sm:$0xf]
  %v1612 = vld [vmem:[%s3 + $0x2c] sm:$0xf]
  %v1613 = vld [vmem:[%s3 + $0x30] sm:$0xf]
  %v1614 = vld [vmem:[%s3 + $0x34] sm:$0xf]
  %v1615 = vld [vmem:[%s3 + $0x38] sm:$0xf]
  %v1616 = vld [vmem:[%s3 + $0x3c] sm:$0xf]
  %v1617 = vld [vmem:[%s3 + $0x40] sm:$0xf]
  %v1618 = vld [vmem:[%s3 + $0x44] sm:$0xf]
  %v1619 = vld [vmem:[%s3 + $0x48] sm:$0xf]
  %v1620 = vld [vmem:[%s3 + $0x4c] sm:$0xf]
  %v1621 = vld [vmem:[%s3 + $0x50] sm:$0xf]
  %v1622 = vld [vmem:[%s3 + $0x54] sm:$0xf]
  %v1623 = vld [vmem:[%s3 + $0x58] sm:$0xf]
  %v1624 = vld [vmem:[%s3 + $0x5c] sm:$0xf]
  %v1625 = vld [vmem:[%s3 + $0x60] sm:$0xf]
  %v1626 = vld [vmem:[%s3 + $0x64] sm:$0xf]
  %v1627 = vld [vmem:[%s3 + $0x68] sm:$0xf]
  %v1628 = vld [vmem:[%s3 + $0x6c] sm:$0xf]
  %v1629 = vld [vmem:[%s3 + $0x70] sm:$0xf]
  %v1630 = vld [vmem:[%s3 + $0x74] sm:$0xf]
  %v1631 = vld [vmem:[%s3 + $0x78] sm:$0xf]
  %v1632 = vld [vmem:[%s3 + $0x7c] sm:$0xf]
  %v1633 = vld [vmem:[%s3 + $0x80] sm:$0xf]
  %v1634 = vld [vmem:[%s3 + $0x84] sm:$0xf]
  %v1635 = vld [vmem:[%s3 + $0x88] sm:$0xf]
  %v1636 = vld [vmem:[%s3 + $0x8c] sm:$0xf]
  %v1637 = vld [vmem:[%s3 + $0x90] sm:$0xf]
  %v1638 = vld [vmem:[%s3 + $0x94] sm:$0xf]
  %v1639 = vld [vmem:[%s3 + $0x98] sm:$0xf]
  %v1640 = vld [vmem:[%s3 + $0x9c] sm:$0xf]
  %v1641 = vld [vmem:[%s3 + $0xa0] sm:$0xf]
  %v1642 = vld [vmem:[%s3 + $0xa4] sm:$0xf]
  %v1643 = vld [vmem:[%s3 + $0xa8] sm:$0xf]
  %v1644 = vld [vmem:[%s3 + $0xac] sm:$0xf]
  %v1645 = vld [vmem:[%s3 + $0xb0] sm:$0xf]
  %v1646 = vld [vmem:[%s3 + $0xb4] sm:$0xf]
  %v1647 = vld [vmem:[%s3 + $0xb8] sm:$0xf]
  %v1648 = vld [vmem:[%s3 + $0xbc] sm:$0xf]
  %v1649 = vld [vmem:[%s3 + $0xc0] sm:$0xf]
  %v1650 = vld [vmem:[%s3 + $0xc4] sm:$0xf]
  %v1651 = vld [vmem:[%s3 + $0xc8] sm:$0xf]
  %v1652 = vld [vmem:[%s3 + $0xcc] sm:$0xf]
  %v1653 = vld [vmem:[%s3 + $0xd0] sm:$0xf]
  %v1654 = vld [vmem:[%s3 + $0xd4] sm:$0xf]
  %v1655 = vld [vmem:[%s3 + $0xd8] sm:$0xf]
  %v1656 = vld [vmem:[%s3 + $0xdc] sm:$0xf]
  %v1657 = vld [vmem:[%s3 + $0xe0] sm:$0xf]
  %v1658 = vld [vmem:[%s3 + $0xe4] sm:$0xf]
  %v1659 = vld [vmem:[%s3 + $0xe8] sm:$0xf]
  %v1660 = vld [vmem:[%s3 + $0xec] sm:$0xf]
  %v1661 = vld [vmem:[%s3 + $0xf0] sm:$0xf]
  %v1662 = vld [vmem:[%s3 + $0xf4] sm:$0xf]
  %v1663 = vld [vmem:[%s3 + $0xf8] sm:$0xf]
  %v1664 = vld [vmem:[%s3 + $0xfc] sm:$0xf]
  %v1665 = vunpack.c.l.bf16 %v1601
  %v1666 = vunpack.c.l.bf16 %v1602
  %v1667 = vunpack.c.l.bf16 %v1603
  %v1668 = vunpack.c.l.bf16 %v1604
  %v1669 = vunpack.c.l.bf16 %v1605
  %v1670 = vunpack.c.l.bf16 %v1606
  %v1671 = vunpack.c.l.bf16 %v1607
  %v1672 = vunpack.c.l.bf16 %v1608
  %v1673 = vunpack.c.l.bf16 %v1609
  %v1674 = vunpack.c.l.bf16 %v1610
  %v1675 = vunpack.c.l.bf16 %v1611
  %v1676 = vunpack.c.l.bf16 %v1612
  %v1677 = vunpack.c.l.bf16 %v1613
  %v1678 = vunpack.c.l.bf16 %v1614
  %v1679 = vunpack.c.l.bf16 %v1615
  %v1680 = vunpack.c.l.bf16 %v1616
  %v1681 = vunpack.c.l.bf16 %v1617
  %v1682 = vunpack.c.l.bf16 %v1618
  %v1683 = vunpack.c.l.bf16 %v1619
  %v1684 = vunpack.c.l.bf16 %v1620
  %v1685 = vunpack.c.l.bf16 %v1621
  %v1686 = vunpack.c.l.bf16 %v1622
  %v1687 = vunpack.c.l.bf16 %v1623
  %v1688 = vunpack.c.l.bf16 %v1624
  %v1689 = vunpack.c.l.bf16 %v1625
  %v1690 = vunpack.c.l.bf16 %v1626
  %v1691 = vunpack.c.l.bf16 %v1627
  %v1692 = vunpack.c.l.bf16 %v1628
  %v1693 = vunpack.c.l.bf16 %v1629
  %v1694 = vunpack.c.l.bf16 %v1630
  %v1695 = vunpack.c.l.bf16 %v1631
  %v1696 = vunpack.c.l.bf16 %v1632
  %v1697 = vunpack.c.l.bf16 %v1633
  %v1698 = vunpack.c.l.bf16 %v1634
  %v1699 = vunpack.c.l.bf16 %v1635
  %v1700 = vunpack.c.l.bf16 %v1636
  %v1701 = vunpack.c.l.bf16 %v1637
  %v1702 = vunpack.c.l.bf16 %v1638
  %v1703 = vunpack.c.l.bf16 %v1639
  %v1704 = vunpack.c.l.bf16 %v1640
  %v1705 = vunpack.c.l.bf16 %v1641
  %v1706 = vunpack.c.l.bf16 %v1642
  %v1707 = vunpack.c.l.bf16 %v1643
  %v1708 = vunpack.c.l.bf16 %v1644
  %v1709 = vunpack.c.l.bf16 %v1645
  %v1710 = vunpack.c.l.bf16 %v1646
  %v1711 = vunpack.c.l.bf16 %v1647
  %v1712 = vunpack.c.l.bf16 %v1648
  %v1713 = vunpack.c.l.bf16 %v1649
  %v1714 = vunpack.c.l.bf16 %v1650
  %v1715 = vunpack.c.l.bf16 %v1651
  %v1716 = vunpack.c.l.bf16 %v1652
  %v1717 = vunpack.c.l.bf16 %v1653
  %v1718 = vunpack.c.l.bf16 %v1654
  %v1719 = vunpack.c.l.bf16 %v1655
  %v1720 = vunpack.c.l.bf16 %v1656
  %v1721 = vunpack.c.l.bf16 %v1657
  %v1722 = vunpack.c.l.bf16 %v1658
  %v1723 = vunpack.c.l.bf16 %v1659
  %v1724 = vunpack.c.l.bf16 %v1660
  %v1725 = vunpack.c.l.bf16 %v1661
  %v1726 = vunpack.c.l.bf16 %v1662
  %v1727 = vunpack.c.l.bf16 %v1663
  %v1728 = vunpack.c.l.bf16 %v1664
  %v1729 = vld [vmem:[%s7] sm:$0x1]
  %vm1730 = vcmp.eq.f32.partialorder %v1729, 0.0
  %vm1731 = vcmp.eq.f32.partialorder %v1729, 1.0
  %vm1732 = vcmp.eq.f32.partialorder %v1729, 2.0
  %v1733 = vsel %vm1732, 1, 0
  %v1734 = vlaneseq
  %v1735 = vshrl.u32 %v1734, 7
  %v1736 = vsub.s32 0, %v1735
  %v1737 = vrot.slane %v1733, %v1736
  %vm1738 = vcmp.eq.s32.totalorder %v1737, 1
  %v1739 = vsel %vm1738, %v1537, %v1665
  %v1740 = vsel %vm1738, %v1538, %v1666
  %v1741 = vsel %vm1738, %v1539, %v1667
  %v1742 = vsel %vm1738, %v1540, %v1668
  %v1743 = vsel %vm1738, %v1541, %v1669
  %v1744 = vsel %vm1738, %v1542, %v1670
  %v1745 = vsel %vm1738, %v1543, %v1671
  %v1746 = vsel %vm1738, %v1544, %v1672
  %v1747 = vsel %vm1738, %v1545, %v1673
  %v1748 = vsel %vm1738, %v1546, %v1674
  %v1749 = vsel %vm1738, %v1547, %v1675
  %v1750 = vsel %vm1738, %v1548, %v1676
  %v1751 = vsel %vm1738, %v1549, %v1677
  %v1752 = vsel %vm1738, %v1550, %v1678
  %v1753 = vsel %vm1738, %v1551, %v1679
  %v1754 = vsel %vm1738, %v1552, %v1680
  %v1755 = vsel %vm1738, %v1553, %v1681
  %v1756 = vsel %vm1738, %v1554, %v1682
  %v1757 = vsel %vm1738, %v1555, %v1683
  %v1758 = vsel %vm1738, %v1556, %v1684
  %v1759 = vsel %vm1738, %v1557, %v1685
  %v1760 = vsel %vm1738, %v1558, %v1686
  %v1761 = vsel %vm1738, %v1559, %v1687
  %v1762 = vsel %vm1738, %v1560, %v1688
  %v1763 = vsel %vm1738, %v1561, %v1689
  %v1764 = vsel %vm1738, %v1562, %v1690
  %v1765 = vsel %vm1738, %v1563, %v1691
  %v1766 = vsel %vm1738, %v1564, %v1692
  %v1767 = vsel %vm1738, %v1565, %v1693
  %v1768 = vsel %vm1738, %v1566, %v1694
  %v1769 = vsel %vm1738, %v1567, %v1695
  %v1770 = vsel %vm1738, %v1568, %v1696
  %v1771 = vsel %vm1738, %v1569, %v1697
  %v1772 = vsel %vm1738, %v1570, %v1698
  %v1773 = vsel %vm1738, %v1571, %v1699
  %v1774 = vsel %vm1738, %v1572, %v1700
  %v1775 = vsel %vm1738, %v1573, %v1701
  %v1776 = vsel %vm1738, %v1574, %v1702
  %v1777 = vsel %vm1738, %v1575, %v1703
  %v1778 = vsel %vm1738, %v1576, %v1704
  %v1779 = vsel %vm1738, %v1577, %v1705
  %v1780 = vsel %vm1738, %v1578, %v1706
  %v1781 = vsel %vm1738, %v1579, %v1707
  %v1782 = vsel %vm1738, %v1580, %v1708
  %v1783 = vsel %vm1738, %v1581, %v1709
  %v1784 = vsel %vm1738, %v1582, %v1710
  %v1785 = vsel %vm1738, %v1583, %v1711
  %v1786 = vsel %vm1738, %v1584, %v1712
  %v1787 = vsel %vm1738, %v1585, %v1713
  %v1788 = vsel %vm1738, %v1586, %v1714
  %v1789 = vsel %vm1738, %v1587, %v1715
  %v1790 = vsel %vm1738, %v1588, %v1716
  %v1791 = vsel %vm1738, %v1589, %v1717
  %v1792 = vsel %vm1738, %v1590, %v1718
  %v1793 = vsel %vm1738, %v1591, %v1719
  %v1794 = vsel %vm1738, %v1592, %v1720
  %v1795 = vsel %vm1738, %v1593, %v1721
  %v1796 = vsel %vm1738, %v1594, %v1722
  %v1797 = vsel %vm1738, %v1595, %v1723
  %v1798 = vsel %vm1738, %v1596, %v1724
  %v1799 = vsel %vm1738, %v1597, %v1725
  %v1800 = vsel %vm1738, %v1598, %v1726
  %v1801 = vsel %vm1738, %v1599, %v1727
  %v1802 = vsel %vm1738, %v1600, %v1728
  %v1803 = vsel %vm1731, 1, 0
  %v1804 = vlaneseq
  %v1805 = vshrl.u32 %v1804, 7
  %v1806 = vsub.s32 0, %v1805
  %v1807 = vrot.slane %v1803, %v1806
  %vm1808 = vcmp.eq.s32.totalorder %v1807, 1
  %v1809 = vsel %vm1808, %v1015, %v1739
  %v1810 = vsel %vm1808, %v1016, %v1740
  %v1811 = vsel %vm1808, %v1017, %v1741
  %v1812 = vsel %vm1808, %v1018, %v1742
  %v1813 = vsel %vm1808, %v1019, %v1743
  %v1814 = vsel %vm1808, %v1020, %v1744
  %v1815 = vsel %vm1808, %v1021, %v1745
  %v1816 = vsel %vm1808, %v1022, %v1746
  %v1817 = vsel %vm1808, %v1023, %v1747
  %v1818 = vsel %vm1808, %v1024, %v1748
  %v1819 = vsel %vm1808, %v1025, %v1749
  %v1820 = vsel %vm1808, %v1026, %v1750
  %v1821 = vsel %vm1808, %v1027, %v1751
  %v1822 = vsel %vm1808, %v1028, %v1752
  %v1823 = vsel %vm1808, %v1029, %v1753
  %v1824 = vsel %vm1808, %v1030, %v1754
  %v1825 = vsel %vm1808, %v1031, %v1755
  %v1826 = vsel %vm1808, %v1032, %v1756
  %v1827 = vsel %vm1808, %v1033, %v1757
  %v1828 = vsel %vm1808, %v1034, %v1758
  %v1829 = vsel %vm1808, %v1035, %v1759
  %v1830 = vsel %vm1808, %v1036, %v1760
  %v1831 = vsel %vm1808, %v1037, %v1761
  %v1832 = vsel %vm1808, %v1038, %v1762
  %v1833 = vsel %vm1808, %v1039, %v1763
  %v1834 = vsel %vm1808, %v1040, %v1764
  %v1835 = vsel %vm1808, %v1041, %v1765
  %v1836 = vsel %vm1808, %v1042, %v1766
  %v1837 = vsel %vm1808, %v1043, %v1767
  %v1838 = vsel %vm1808, %v1044, %v1768
  %v1839 = vsel %vm1808, %v1045, %v1769
  %v1840 = vsel %vm1808, %v1046, %v1770
  %v1841 = vsel %vm1808, %v1047, %v1771
  %v1842 = vsel %vm1808, %v1048, %v1772
  %v1843 = vsel %vm1808, %v1049, %v1773
  %v1844 = vsel %vm1808, %v1050, %v1774
  %v1845 = vsel %vm1808, %v1051, %v1775
  %v1846 = vsel %vm1808, %v1052, %v1776
  %v1847 = vsel %vm1808, %v1053, %v1777
  %v1848 = vsel %vm1808, %v1054, %v1778
  %v1849 = vsel %vm1808, %v1055, %v1779
  %v1850 = vsel %vm1808, %v1056, %v1780
  %v1851 = vsel %vm1808, %v1057, %v1781
  %v1852 = vsel %vm1808, %v1058, %v1782
  %v1853 = vsel %vm1808, %v1059, %v1783
  %v1854 = vsel %vm1808, %v1060, %v1784
  %v1855 = vsel %vm1808, %v1061, %v1785
  %v1856 = vsel %vm1808, %v1062, %v1786
  %v1857 = vsel %vm1808, %v1063, %v1787
  %v1858 = vsel %vm1808, %v1064, %v1788
  %v1859 = vsel %vm1808, %v1065, %v1789
  %v1860 = vsel %vm1808, %v1066, %v1790
  %v1861 = vsel %vm1808, %v1067, %v1791
  %v1862 = vsel %vm1808, %v1068, %v1792
  %v1863 = vsel %vm1808, %v1069, %v1793
  %v1864 = vsel %vm1808, %v1070, %v1794
  %v1865 = vsel %vm1808, %v1071, %v1795
  %v1866 = vsel %vm1808, %v1072, %v1796
  %v1867 = vsel %vm1808, %v1073, %v1797
  %v1868 = vsel %vm1808, %v1074, %v1798
  %v1869 = vsel %vm1808, %v1075, %v1799
  %v1870 = vsel %vm1808, %v1076, %v1800
  %v1871 = vsel %vm1808, %v1077, %v1801
  %v1872 = vsel %vm1808, %v1078, %v1802
  %v1873 = vsel %vm1730, 1, 0
  %v1874 = vlaneseq
  %v1875 = vshrl.u32 %v1874, 7
  %v1876 = vsub.s32 0, %v1875
  %v1877 = vrot.slane %v1873, %v1876
  %vm1878 = vcmp.eq.s32.totalorder %v1877, 1
  %v1879 = vsel %vm1878, %v493, %v1809
  %v1880 = vsel %vm1878, %v494, %v1810
  %v1881 = vsel %vm1878, %v495, %v1811
  %v1882 = vsel %vm1878, %v496, %v1812
  %v1883 = vsel %vm1878, %v497, %v1813
  %v1884 = vsel %vm1878, %v498, %v1814
  %v1885 = vsel %vm1878, %v499, %v1815
  %v1886 = vsel %vm1878, %v500, %v1816
  %v1887 = vsel %vm1878, %v501, %v1817
  %v1888 = vsel %vm1878, %v502, %v1818
  %v1889 = vsel %vm1878, %v503, %v1819
  %v1890 = vsel %vm1878, %v504, %v1820
  %v1891 = vsel %vm1878, %v505, %v1821
  %v1892 = vsel %vm1878, %v506, %v1822
  %v1893 = vsel %vm1878, %v507, %v1823
  %v1894 = vsel %vm1878, %v508, %v1824
  %v1895 = vsel %vm1878, %v509, %v1825
  %v1896 = vsel %vm1878, %v510, %v1826
  %v1897 = vsel %vm1878, %v511, %v1827
  %v1898 = vsel %vm1878, %v512, %v1828
  %v1899 = vsel %vm1878, %v513, %v1829
  %v1900 = vsel %vm1878, %v514, %v1830
  %v1901 = vsel %vm1878, %v515, %v1831
  %v1902 = vsel %vm1878, %v516, %v1832
  %v1903 = vsel %vm1878, %v517, %v1833
  %v1904 = vsel %vm1878, %v518, %v1834
  %v1905 = vsel %vm1878, %v519, %v1835
  %v1906 = vsel %vm1878, %v520, %v1836
  %v1907 = vsel %vm1878, %v521, %v1837
  %v1908 = vsel %vm1878, %v522, %v1838
  %v1909 = vsel %vm1878, %v523, %v1839
  %v1910 = vsel %vm1878, %v524, %v1840
  %v1911 = vsel %vm1878, %v525, %v1841
  %v1912 = vsel %vm1878, %v526, %v1842
  %v1913 = vsel %vm1878, %v527, %v1843
  %v1914 = vsel %vm1878, %v528, %v1844
  %v1915 = vsel %vm1878, %v529, %v1845
  %v1916 = vsel %vm1878, %v530, %v1846
  %v1917 = vsel %vm1878, %v531, %v1847
  %v1918 = vsel %vm1878, %v532, %v1848
  %v1919 = vsel %vm1878, %v533, %v1849
  %v1920 = vsel %vm1878, %v534, %v1850
  %v1921 = vsel %vm1878, %v535, %v1851
  %v1922 = vsel %vm1878, %v536, %v1852
  %v1923 = vsel %vm1878, %v537, %v1853
  %v1924 = vsel %vm1878, %v538, %v1854
  %v1925 = vsel %vm1878, %v539, %v1855
  %v1926 = vsel %vm1878, %v540, %v1856
  %v1927 = vsel %vm1878, %v541, %v1857
  %v1928 = vsel %vm1878, %v542, %v1858
  %v1929 = vsel %vm1878, %v543, %v1859
  %v1930 = vsel %vm1878, %v544, %v1860
  %v1931 = vsel %vm1878, %v545, %v1861
  %v1932 = vsel %vm1878, %v546, %v1862
  %v1933 = vsel %vm1878, %v547, %v1863
  %v1934 = vsel %vm1878, %v548, %v1864
  %v1935 = vsel %vm1878, %v549, %v1865
  %v1936 = vsel %vm1878, %v550, %v1866
  %v1937 = vsel %vm1878, %v551, %v1867
  %v1938 = vsel %vm1878, %v552, %v1868
  %v1939 = vsel %vm1878, %v553, %v1869
  %v1940 = vsel %vm1878, %v554, %v1870
  %v1941 = vsel %vm1878, %v555, %v1871
  %v1942 = vsel %vm1878, %v556, %v1872
  %v1943 = vpack.c.bf16 %v1880, %v1879
  %v1944 = vpack.c.bf16 %v1882, %v1881
  %v1945 = vpack.c.bf16 %v1884, %v1883
  %v1946 = vpack.c.bf16 %v1886, %v1885
  %v1947 = vpack.c.bf16 %v1888, %v1887
  %v1948 = vpack.c.bf16 %v1890, %v1889
  %v1949 = vpack.c.bf16 %v1892, %v1891
  %v1950 = vpack.c.bf16 %v1894, %v1893
  %v1951 = vpack.c.bf16 %v1896, %v1895
  %v1952 = vpack.c.bf16 %v1898, %v1897
  %v1953 = vpack.c.bf16 %v1900, %v1899
  %v1954 = vpack.c.bf16 %v1902, %v1901
  %v1955 = vpack.c.bf16 %v1904, %v1903
  %v1956 = vpack.c.bf16 %v1906, %v1905
  %v1957 = vpack.c.bf16 %v1908, %v1907
  %v1958 = vpack.c.bf16 %v1910, %v1909
  %v1959 = vpack.c.bf16 %v1912, %v1911
  %v1960 = vpack.c.bf16 %v1914, %v1913
  %v1961 = vpack.c.bf16 %v1916, %v1915
  %v1962 = vpack.c.bf16 %v1918, %v1917
  %v1963 = vpack.c.bf16 %v1920, %v1919
  %v1964 = vpack.c.bf16 %v1922, %v1921
  %v1965 = vpack.c.bf16 %v1924, %v1923
  %v1966 = vpack.c.bf16 %v1926, %v1925
  %v1967 = vpack.c.bf16 %v1928, %v1927
  %v1968 = vpack.c.bf16 %v1930, %v1929
  %v1969 = vpack.c.bf16 %v1932, %v1931
  %v1970 = vpack.c.bf16 %v1934, %v1933
  %v1971 = vpack.c.bf16 %v1936, %v1935
  %v1972 = vpack.c.bf16 %v1938, %v1937
  %v1973 = vpack.c.bf16 %v1940, %v1939
  %v1974 = vpack.c.bf16 %v1942, %v1941
  %v1975 = vld [vmem:[%s8] sm:$0xf]
  %v1976 = vld [vmem:[%s8 + $0x4] sm:$0xf]
  %v1977 = vld [vmem:[%s8 + $0x8] sm:$0xf]
  %v1978 = vld [vmem:[%s8 + $0xc] sm:$0xf]
  %v1979 = vld [vmem:[%s8 + $0x10] sm:$0xf]
  %v1980 = vld [vmem:[%s8 + $0x14] sm:$0xf]
  %v1981 = vld [vmem:[%s8 + $0x18] sm:$0xf]
  %v1982 = vld [vmem:[%s8 + $0x1c] sm:$0xf]
  %v1983 = vld [vmem:[%s8 + $0x20] sm:$0xf]
  %v1984 = vld [vmem:[%s8 + $0x24] sm:$0xf]
  %v1985 = vld [vmem:[%s8 + $0x28] sm:$0xf]
  %v1986 = vld [vmem:[%s8 + $0x2c] sm:$0xf]
  %v1987 = vld [vmem:[%s8 + $0x30] sm:$0xf]
  %v1988 = vld [vmem:[%s8 + $0x34] sm:$0xf]
  %v1989 = vld [vmem:[%s8 + $0x38] sm:$0xf]
  %v1990 = vld [vmem:[%s8 + $0x3c] sm:$0xf]
  %v2007 = vunpack.c.l.b16 %v1975
  %v2008 = vunpack.c.l.b16 %v1976
  %v2009 = vunpack.c.l.b16 %v1977
  %v2010 = vunpack.c.l.b16 %v1978
  %v2011 = vunpack.c.l.b16 %v1979
  %v2012 = vunpack.c.l.b16 %v1980
  %v2013 = vunpack.c.l.b16 %v1981
  %v2014 = vunpack.c.l.b16 %v1982
  %v2015 = vunpack.c.l.b16 %v1983
  %v2016 = vunpack.c.l.b16 %v1984
  %v2017 = vunpack.c.l.b16 %v1985
  %v2018 = vunpack.c.l.b16 %v1986
  %v2019 = vunpack.c.l.b16 %v1987
  %v2020 = vunpack.c.l.b16 %v1988
  %v2021 = vunpack.c.l.b16 %v1989
  %v2022 = vunpack.c.l.b16 %v1990
  %v2023 = vpack.c.b16 %v2008, %v2007
  %v2024 = vpack.c.b16 %v2010, %v2009
  %v2025 = vpack.c.b16 %v2012, %v2011
  %v2026 = vpack.c.b16 %v2014, %v2013
  %v2027 = vpack.c.b16 %v2016, %v2015
  %v2028 = vpack.c.b16 %v2018, %v2017
  %v2029 = vpack.c.b16 %v2020, %v2019
  %v2030 = vpack.c.b16 %v2022, %v2021
  %2039 = vmatprep.subr.bf16.mxu0 0
  %2040 = vmatpush1.bf16.msra.mxu0 %v2023
  %2041 = vmatprep.subr.bf16.mxu0 0
  %2042 = vmatpush1.bf16.msra.mxu0 %v2024
  %2043 = vmatprep.subr.bf16.mxu0 0
  %2044 = vmatpush1.bf16.msra.mxu0 %v2025
  %2045 = vmatprep.subr.bf16.mxu0 0
  %2046 = vmatpush1.bf16.msra.mxu0 %v2026
  %2047 = vmatprep.subr.bf16.mxu0 0
  %2048 = vmatpush1.bf16.msra.mxu0 %v2027
  %2049 = vmatprep.subr.bf16.mxu0 0
  %2050 = vmatpush1.bf16.msra.mxu0 %v2028
  %2051 = vmatprep.subr.bf16.mxu0 0
  %2052 = vmatpush1.bf16.msra.mxu0 %v2029
  %2053 = vmatprep.subr.bf16.mxu0 0
  %2054 = vmatpush1.bf16.msra.mxu0 %v2030
  %2055 = vmatprep.subr.bf16.mxu0 0
  %2056 = vmatpush1.bf16.msra.mxu0 0
  %2057 = vmatprep.subr.bf16.mxu0 0
  %2058 = vmatpush1.bf16.msra.mxu0 0
  %2059 = vmatprep.subr.bf16.mxu0 0
  %2060 = vmatpush1.bf16.msra.mxu0 0
  %2061 = vmatprep.subr.bf16.mxu0 0
  %2062 = vmatpush1.bf16.msra.mxu0 0
  %2063 = vmatprep.subr.bf16.mxu0 0
  %2064 = vmatpush1.bf16.msra.mxu0 0
  %2065 = vmatprep.subr.bf16.mxu0 0
  %2066 = vmatpush1.bf16.msra.mxu0 0
  %2067 = vmatprep.subr.bf16.mxu0 0
  %2068 = vmatpush1.bf16.msra.mxu0 0
  %2069 = vmatprep.subr.bf16.mxu0 0
  %2070 = vmatpush1.bf16.msra.mxu0 0
  %2071 = vmatprep.mubr.bf16.mxu0 0
  %2072 = vmatmul.mubr.bf16.gmra.mrb[0].mxu0 %v1943
  %v2073 = vpop.f32.mrb[0].mxu0
  %v2074 = vadd.f32 0.0, %v2073
  %v2075 = vpop.f32.mrb[0].mxu0
  %v2076 = vpop.f32.mrb[0].mxu0
  %v2077 = vadd.f32 0.0, %v2076
  %v2078 = vpop.f32.mrb[0].mxu0
  %2079 = vmatprep.mubr.bf16.mxu0 0
  %2080 = vmatmul.mubr.bf16.gmra.mrb[0].mxu0 %v1944
  %v2081 = vpop.f32.mrb[0].mxu0
  %v2082 = vadd.f32 0.0, %v2081
  %v2083 = vpop.f32.mrb[0].mxu0
  %v2084 = vpop.f32.mrb[0].mxu0
  %v2085 = vadd.f32 0.0, %v2084
  %v2086 = vpop.f32.mrb[0].mxu0
  %2087 = vmatprep.mubr.bf16.mxu0 0
  %2088 = vmatmul.mubr.bf16.gmra.mrb[0].mxu0 %v1945
  %v2089 = vpop.f32.mrb[0].mxu0
  %v2090 = vadd.f32 0.0, %v2089
  %v2091 = vpop.f32.mrb[0].mxu0
  %v2092 = vpop.f32.mrb[0].mxu0
  %v2093 = vadd.f32 0.0, %v2092
  %v2094 = vpop.f32.mrb[0].mxu0
  %2095 = vmatprep.mubr.bf16.mxu0 0
  %2096 = vmatmul.mubr.bf16.gmra.mrb[0].mxu0 %v1946
  %v2097 = vpop.f32.mrb[0].mxu0
  %v2098 = vadd.f32 0.0, %v2097
  %v2099 = vpop.f32.mrb[0].mxu0
  %v2100 = vpop.f32.mrb[0].mxu0
  %v2101 = vadd.f32 0.0, %v2100
  %v2102 = vpop.f32.mrb[0].mxu0
  %2103 = vmatprep.mubr.bf16.mxu0 0
  %2104 = vmatmul.mubr.bf16.gmra.mrb[0].mxu0 %v1947
  %v2105 = vpop.f32.mrb[0].mxu0
  %v2106 = vadd.f32 0.0, %v2105
  %v2107 = vpop.f32.mrb[0].mxu0
  %v2108 = vpop.f32.mrb[0].mxu0
  %v2109 = vadd.f32 0.0, %v2108
  %v2110 = vpop.f32.mrb[0].mxu0
  %2111 = vmatprep.mubr.bf16.mxu0 0
  %2112 = vmatmul.mubr.bf16.gmra.mrb[0].mxu0 %v1948
  %v2113 = vpop.f32.mrb[0].mxu0
  %v2114 = vadd.f32 0.0, %v2113
  %v2115 = vpop.f32.mrb[0].mxu0
  %v2116 = vpop.f32.mrb[0].mxu0
  %v2117 = vadd.f32 0.0, %v2116
  %v2118 = vpop.f32.mrb[0].mxu0
  %2119 = vmatprep.mubr.bf16.mxu0 0
  %2120 = vmatmul.mubr.bf16.gmra.mrb[0].mxu0 %v1949
  %v2121 = vpop.f32.mrb[0].mxu0
  %v2122 = vadd.f32 0.0, %v2121
  %v2123 = vpop.f32.mrb[0].mxu0
  %v2124 = vpop.f32.mrb[0].mxu0
  %v2125 = vadd.f32 0.0, %v2124
  %v2126 = vpop.f32.mrb[0].mxu0
  %2127 = vmatprep.mubr.bf16.mxu0 0
  %2128 = vmatmul.mubr.bf16.gmra.mrb[0].mxu0 %v1950
  %v2129 = vpop.f32.mrb[0].mxu0
  %v2130 = vadd.f32 0.0, %v2129
  %v2131 = vpop.f32.mrb[0].mxu0
  %v2132 = vpop.f32.mrb[0].mxu0
  %v2133 = vadd.f32 0.0, %v2132
  %v2134 = vpop.f32.mrb[0].mxu0
  %2135 = vmatprep.mubr.bf16.mxu0 0
  %2136 = vmatmul.mubr.bf16.gmra.mrb[0].mxu0 %v1951
  %v2137 = vpop.f32.mrb[0].mxu0
  %v2138 = vadd.f32 0.0, %v2137
  %v2139 = vpop.f32.mrb[0].mxu0
  %v2140 = vpop.f32.mrb[0].mxu0
  %v2141 = vadd.f32 0.0, %v2140
  %v2142 = vpop.f32.mrb[0].mxu0
  %2143 = vmatprep.mubr.bf16.mxu0 0
  %2144 = vmatmul.mubr.bf16.gmra.mrb[0].mxu0 %v1952
  %v2145 = vpop.f32.mrb[0].mxu0
  %v2146 = vadd.f32 0.0, %v2145
  %v2147 = vpop.f32.mrb[0].mxu0
  %v2148 = vpop.f32.mrb[0].mxu0
  %v2149 = vadd.f32 0.0, %v2148
  %v2150 = vpop.f32.mrb[0].mxu0
  %2151 = vmatprep.mubr.bf16.mxu0 0
  %2152 = vmatmul.mubr.bf16.gmra.mrb[0].mxu0 %v1953
  %v2153 = vpop.f32.mrb[0].mxu0
  %v2154 = vadd.f32 0.0, %v2153
  %v2155 = vpop.f32.mrb[0].mxu0
  %v2156 = vpop.f32.mrb[0].mxu0
  %v2157 = vadd.f32 0.0, %v2156
  %v2158 = vpop.f32.mrb[0].mxu0
  %2159 = vmatprep.mubr.bf16.mxu0 0
  %2160 = vmatmul.mubr.bf16.gmra.mrb[0].mxu0 %v1954
  %v2161 = vpop.f32.mrb[0].mxu0
  %v2162 = vadd.f32 0.0, %v2161
  %v2163 = vpop.f32.mrb[0].mxu0
  %v2164 = vpop.f32.mrb[0].mxu0
  %v2165 = vadd.f32 0.0, %v2164
  %v2166 = vpop.f32.mrb[0].mxu0
  %2167 = vmatprep.mubr.bf16.mxu0 0
  %2168 = vmatmul.mubr.bf16.gmra.mrb[0].mxu0 %v1955
  %v2169 = vpop.f32.mrb[0].mxu0
  %v2170 = vadd.f32 0.0, %v2169
  %v2171 = vpop.f32.mrb[0].mxu0
  %v2172 = vpop.f32.mrb[0].mxu0
  %v2173 = vadd.f32 0.0, %v2172
  %v2174 = vpop.f32.mrb[0].mxu0
  %2175 = vmatprep.mubr.bf16.mxu0 0
  %2176 = vmatmul.mubr.bf16.gmra.mrb[0].mxu0 %v1956
  %v2177 = vpop.f32.mrb[0].mxu0
  %v2178 = vadd.f32 0.0, %v2177
  %v2179 = vpop.f32.mrb[0].mxu0
  %v2180 = vpop.f32.mrb[0].mxu0
  %v2181 = vadd.f32 0.0, %v2180
  %v2182 = vpop.f32.mrb[0].mxu0
  %2183 = vmatprep.mubr.bf16.mxu0 0
  %2184 = vmatmul.mubr.bf16.gmra.mrb[0].mxu0 %v1957
  %v2185 = vpop.f32.mrb[0].mxu0
  %v2186 = vadd.f32 0.0, %v2185
  %v2187 = vpop.f32.mrb[0].mxu0
  %v2188 = vpop.f32.mrb[0].mxu0
  %v2189 = vadd.f32 0.0, %v2188
  %v2190 = vpop.f32.mrb[0].mxu0
  %2191 = vmatprep.mubr.bf16.mxu0 0
  %2192 = vmatmul.mubr.bf16.gmra.mrb[0].mxu0 %v1958
  %v2193 = vpop.f32.mrb[0].mxu0
  %v2194 = vadd.f32 0.0, %v2193
  %v2195 = vpop.f32.mrb[0].mxu0
  %v2196 = vpop.f32.mrb[0].mxu0
  %v2197 = vadd.f32 0.0, %v2196
  %v2198 = vpop.f32.mrb[0].mxu0
  %2199 = vmatprep.mubr.bf16.mxu0 0
  %2200 = vmatmul.mubr.bf16.gmra.mrb[0].mxu0 %v1959
  %v2201 = vpop.f32.mrb[0].mxu0
  %v2202 = vadd.f32 0.0, %v2201
  %v2203 = vpop.f32.mrb[0].mxu0
  %v2204 = vpop.f32.mrb[0].mxu0
  %v2205 = vadd.f32 0.0, %v2204
  %v2206 = vpop.f32.mrb[0].mxu0
  %2207 = vmatprep.mubr.bf16.mxu0 0
  %2208 = vmatmul.mubr.bf16.gmra.mrb[0].mxu0 %v1960
  %v2209 = vpop.f32.mrb[0].mxu0
  %v2210 = vadd.f32 0.0, %v2209
  %v2211 = vpop.f32.mrb[0].mxu0
  %v2212 = vpop.f32.mrb[0].mxu0
  %v2213 = vadd.f32 0.0, %v2212
  %v2214 = vpop.f32.mrb[0].mxu0
  %2215 = vmatprep.mubr.bf16.mxu0 0
  %2216 = vmatmul.mubr.bf16.gmra.mrb[0].mxu0 %v1961
  %v2217 = vpop.f32.mrb[0].mxu0
  %v2218 = vadd.f32 0.0, %v2217
  %v2219 = vpop.f32.mrb[0].mxu0
  %v2220 = vpop.f32.mrb[0].mxu0
  %v2221 = vadd.f32 0.0, %v2220
  %v2222 = vpop.f32.mrb[0].mxu0
  %2223 = vmatprep.mubr.bf16.mxu0 0
  %2224 = vmatmul.mubr.bf16.gmra.mrb[0].mxu0 %v1962
  %v2225 = vpop.f32.mrb[0].mxu0
  %v2226 = vadd.f32 0.0, %v2225
  %v2227 = vpop.f32.mrb[0].mxu0
  %v2228 = vpop.f32.mrb[0].mxu0
  %v2229 = vadd.f32 0.0, %v2228
  %v2230 = vpop.f32.mrb[0].mxu0
  %2231 = vmatprep.mubr.bf16.mxu0 0
  %2232 = vmatmul.mubr.bf16.gmra.mrb[0].mxu0 %v1963
  %v2233 = vpop.f32.mrb[0].mxu0
  %v2234 = vadd.f32 0.0, %v2233
  %v2235 = vpop.f32.mrb[0].mxu0
  %v2236 = vpop.f32.mrb[0].mxu0
  %v2237 = vadd.f32 0.0, %v2236
  %v2238 = vpop.f32.mrb[0].mxu0
  %2239 = vmatprep.mubr.bf16.mxu0 0
  %2240 = vmatmul.mubr.bf16.gmra.mrb[0].mxu0 %v1964
  %v2241 = vpop.f32.mrb[0].mxu0
  %v2242 = vadd.f32 0.0, %v2241
  %v2243 = vpop.f32.mrb[0].mxu0
  %v2244 = vpop.f32.mrb[0].mxu0
  %v2245 = vadd.f32 0.0, %v2244
  %v2246 = vpop.f32.mrb[0].mxu0
  %2247 = vmatprep.mubr.bf16.mxu0 0
  %2248 = vmatmul.mubr.bf16.gmra.mrb[0].mxu0 %v1965
  %v2249 = vpop.f32.mrb[0].mxu0
  %v2250 = vadd.f32 0.0, %v2249
  %v2251 = vpop.f32.mrb[0].mxu0
  %v2252 = vpop.f32.mrb[0].mxu0
  %v2253 = vadd.f32 0.0, %v2252
  %v2254 = vpop.f32.mrb[0].mxu0
  %2255 = vmatprep.mubr.bf16.mxu0 0
  %2256 = vmatmul.mubr.bf16.gmra.mrb[0].mxu0 %v1966
  %v2257 = vpop.f32.mrb[0].mxu0
  %v2258 = vadd.f32 0.0, %v2257
  %v2259 = vpop.f32.mrb[0].mxu0
  %v2260 = vpop.f32.mrb[0].mxu0
  %v2261 = vadd.f32 0.0, %v2260
  %v2262 = vpop.f32.mrb[0].mxu0
  %2263 = vmatprep.mubr.bf16.mxu0 0
  %2264 = vmatmul.mubr.bf16.gmra.mrb[0].mxu0 %v1967
  %v2265 = vpop.f32.mrb[0].mxu0
  %v2266 = vadd.f32 0.0, %v2265
  %v2267 = vpop.f32.mrb[0].mxu0
  %v2268 = vpop.f32.mrb[0].mxu0
  %v2269 = vadd.f32 0.0, %v2268
  %v2270 = vpop.f32.mrb[0].mxu0
  %2271 = vmatprep.mubr.bf16.mxu0 0
  %2272 = vmatmul.mubr.bf16.gmra.mrb[0].mxu0 %v1968
  %v2273 = vpop.f32.mrb[0].mxu0
  %v2274 = vadd.f32 0.0, %v2273
  %v2275 = vpop.f32.mrb[0].mxu0
  %v2276 = vpop.f32.mrb[0].mxu0
  %v2277 = vadd.f32 0.0, %v2276
  %v2278 = vpop.f32.mrb[0].mxu0
  %2279 = vmatprep.mubr.bf16.mxu0 0
  %2280 = vmatmul.mubr.bf16.gmra.mrb[0].mxu0 %v1969
  %v2281 = vpop.f32.mrb[0].mxu0
  %v2282 = vadd.f32 0.0, %v2281
  %v2283 = vpop.f32.mrb[0].mxu0
  %v2284 = vpop.f32.mrb[0].mxu0
  %v2285 = vadd.f32 0.0, %v2284
  %v2286 = vpop.f32.mrb[0].mxu0
  %2287 = vmatprep.mubr.bf16.mxu0 0
  %2288 = vmatmul.mubr.bf16.gmra.mrb[0].mxu0 %v1970
  %v2289 = vpop.f32.mrb[0].mxu0
  %v2290 = vadd.f32 0.0, %v2289
  %v2291 = vpop.f32.mrb[0].mxu0
  %v2292 = vpop.f32.mrb[0].mxu0
  %v2293 = vadd.f32 0.0, %v2292
  %v2294 = vpop.f32.mrb[0].mxu0
  %2295 = vmatprep.mubr.bf16.mxu0 0
  %2296 = vmatmul.mubr.bf16.gmra.mrb[0].mxu0 %v1971
  %v2297 = vpop.f32.mrb[0].mxu0
  %v2298 = vadd.f32 0.0, %v2297
  %v2299 = vpop.f32.mrb[0].mxu0
  %v2300 = vpop.f32.mrb[0].mxu0
  %v2301 = vadd.f32 0.0, %v2300
  %v2302 = vpop.f32.mrb[0].mxu0
  %2303 = vmatprep.mubr.bf16.mxu0 0
  %2304 = vmatmul.mubr.bf16.gmra.mrb[0].mxu0 %v1972
  %v2305 = vpop.f32.mrb[0].mxu0
  %v2306 = vadd.f32 0.0, %v2305
  %v2307 = vpop.f32.mrb[0].mxu0
  %v2308 = vpop.f32.mrb[0].mxu0
  %v2309 = vadd.f32 0.0, %v2308
  %v2310 = vpop.f32.mrb[0].mxu0
  %2311 = vmatprep.mubr.bf16.mxu0 0
  %2312 = vmatmul.mubr.bf16.gmra.mrb[0].mxu0 %v1973
  %v2313 = vpop.f32.mrb[0].mxu0
  %v2314 = vadd.f32 0.0, %v2313
  %v2315 = vpop.f32.mrb[0].mxu0
  %v2316 = vpop.f32.mrb[0].mxu0
  %v2317 = vadd.f32 0.0, %v2316
  %v2318 = vpop.f32.mrb[0].mxu0
  %2319 = vmatprep.mubr.bf16.mxu0 0
  %2320 = vmatmul.mubr.bf16.gmra.mrb[0].mxu0 %v1974
  %v2321 = vpop.f32.mrb[0].mxu0
  %v2322 = vadd.f32 0.0, %v2321
  %v2323 = vpop.f32.mrb[0].mxu0
  %v2324 = vpop.f32.mrb[0].mxu0
  %v2325 = vadd.f32 0.0, %v2324
  %v2326 = vpop.f32.mrb[0].mxu0
  %2327 = vdwg.mxu0
  %2328 = vst [vmem:[%s9] sm:$0xff] %v2074
  %2329 = vst [vmem:[%s9 + $0x8] sm:$0xff] %v2077
  %2330 = vst [vmem:[%s9 + $0x10] sm:$0xff] %v2082
  %2331 = vst [vmem:[%s9 + $0x18] sm:$0xff] %v2085
  %2332 = vst [vmem:[%s9 + $0x20] sm:$0xff] %v2090
  %2333 = vst [vmem:[%s9 + $0x28] sm:$0xff] %v2093
  %2334 = vst [vmem:[%s9 + $0x30] sm:$0xff] %v2098
  %2335 = vst [vmem:[%s9 + $0x38] sm:$0xff] %v2101
  %2336 = vst [vmem:[%s9 + $0x40] sm:$0xff] %v2106
  %2337 = vst [vmem:[%s9 + $0x48] sm:$0xff] %v2109
  %2338 = vst [vmem:[%s9 + $0x50] sm:$0xff] %v2114
  %2339 = vst [vmem:[%s9 + $0x58] sm:$0xff] %v2117
  %2340 = vst [vmem:[%s9 + $0x60] sm:$0xff] %v2122
  %2341 = vst [vmem:[%s9 + $0x68] sm:$0xff] %v2125
  %2342 = vst [vmem:[%s9 + $0x70] sm:$0xff] %v2130
  %2343 = vst [vmem:[%s9 + $0x78] sm:$0xff] %v2133
  %2344 = vst [vmem:[%s9 + $0x80] sm:$0xff] %v2138
  %2345 = vst [vmem:[%s9 + $0x88] sm:$0xff] %v2141
  %2346 = vst [vmem:[%s9 + $0x90] sm:$0xff] %v2146
  %2347 = vst [vmem:[%s9 + $0x98] sm:$0xff] %v2149
  %2348 = vst [vmem:[%s9 + $0xa0] sm:$0xff] %v2154
  %2349 = vst [vmem:[%s9 + $0xa8] sm:$0xff] %v2157
  %2350 = vst [vmem:[%s9 + $0xb0] sm:$0xff] %v2162
  %2351 = vst [vmem:[%s9 + $0xb8] sm:$0xff] %v2165
  %2352 = vst [vmem:[%s9 + $0xc0] sm:$0xff] %v2170
  %2353 = vst [vmem:[%s9 + $0xc8] sm:$0xff] %v2173
  %2354 = vst [vmem:[%s9 + $0xd0] sm:$0xff] %v2178
  %2355 = vst [vmem:[%s9 + $0xd8] sm:$0xff] %v2181
  %2356 = vst [vmem:[%s9 + $0xe0] sm:$0xff] %v2186
  %2357 = vst [vmem:[%s9 + $0xe8] sm:$0xff] %v2189
  %2358 = vst [vmem:[%s9 + $0xf0] sm:$0xff] %v2194
  %2359 = vst [vmem:[%s9 + $0xf8] sm:$0xff] %v2197
  %2360 = vst [vmem:[%s9 + $0x100] sm:$0xff] %v2202
  %2361 = vst [vmem:[%s9 + $0x108] sm:$0xff] %v2205
  %2362 = vst [vmem:[%s9 + $0x110] sm:$0xff] %v2210
  %2363 = vst [vmem:[%s9 + $0x118] sm:$0xff] %v2213
  %2364 = vst [vmem:[%s9 + $0x120] sm:$0xff] %v2218
  %2365 = vst [vmem:[%s9 + $0x128] sm:$0xff] %v2221
  %2366 = vst [vmem:[%s9 + $0x130] sm:$0xff] %v2226
  %2367 = vst [vmem:[%s9 + $0x138] sm:$0xff] %v2229
  %2368 = vst [vmem:[%s9 + $0x140] sm:$0xff] %v2234
  %2369 = vst [vmem:[%s9 + $0x148] sm:$0xff] %v2237
  %2370 = vst [vmem:[%s9 + $0x150] sm:$0xff] %v2242
  %2371 = vst [vmem:[%s9 + $0x158] sm:$0xff] %v2245
  %2372 = vst [vmem:[%s9 + $0x160] sm:$0xff] %v2250
  %2373 = vst [vmem:[%s9 + $0x168] sm:$0xff] %v2253
  %2374 = vst [vmem:[%s9 + $0x170] sm:$0xff] %v2258
  %2375 = vst [vmem:[%s9 + $0x178] sm:$0xff] %v2261
  %2376 = vst [vmem:[%s9 + $0x180] sm:$0xff] %v2266
  %2377 = vst [vmem:[%s9 + $0x188] sm:$0xff] %v2269
  %2378 = vst [vmem:[%s9 + $0x190] sm:$0xff] %v2274
  %2379 = vst [vmem:[%s9 + $0x198] sm:$0xff] %v2277
  %2380 = vst [vmem:[%s9 + $0x1a0] sm:$0xff] %v2282
  %2381 = vst [vmem:[%s9 + $0x1a8] sm:$0xff] %v2285
  %2382 = vst [vmem:[%s9 + $0x1b0] sm:$0xff] %v2290
  %2383 = vst [vmem:[%s9 + $0x1b8] sm:$0xff] %v2293
  %2384 = vst [vmem:[%s9 + $0x1c0] sm:$0xff] %v2298
  %2385 = vst [vmem:[%s9 + $0x1c8] sm:$0xff] %v2301
  %2386 = vst [vmem:[%s9 + $0x1d0] sm:$0xff] %v2306
  %2387 = vst [vmem:[%s9 + $0x1d8] sm:$0xff] %v2309
  %2388 = vst [vmem:[%s9 + $0x1e0] sm:$0xff] %v2314
  %2389 = vst [vmem:[%s9 + $0x1e8] sm:$0xff] %v2317
  %2390 = vst [vmem:[%s9 + $0x1f0] sm:$0xff] %v2322
  %2391 = vst [vmem:[%s9 + $0x1f8] sm:$0xff] %v2325
  %v2392 = vadd.f32 %v2074, %v2077
  %v2393 = vadd.f32 %v2392, %v2082
  %v2394 = vadd.f32 %v2393, %v2085
  %v2395 = vadd.f32 %v2394, %v2090
  %v2396 = vadd.f32 %v2395, %v2093
  %v2397 = vadd.f32 %v2396, %v2098
  %v2398 = vadd.f32 %v2397, %v2101
  %v2399 = vadd.f32 %v2398, %v2106
  %v2400 = vadd.f32 %v2399, %v2109
  %v2401 = vadd.f32 %v2400, %v2114
  %v2402 = vadd.f32 %v2401, %v2117
  %v2403 = vadd.f32 %v2402, %v2122
  %v2404 = vadd.f32 %v2403, %v2125
  %v2405 = vadd.f32 %v2404, %v2130
  %v2406 = vadd.f32 %v2405, %v2133
  %v2407 = vadd.f32 %v2406, %v2138
  %v2408 = vadd.f32 %v2407, %v2141
  %v2409 = vadd.f32 %v2408, %v2146
  %v2410 = vadd.f32 %v2409, %v2149
  %v2411 = vadd.f32 %v2410, %v2154
  %v2412 = vadd.f32 %v2411, %v2157
  %v2413 = vadd.f32 %v2412, %v2162
  %v2414 = vadd.f32 %v2413, %v2165
  %v2415 = vadd.f32 %v2414, %v2170
  %v2416 = vadd.f32 %v2415, %v2173
  %v2417 = vadd.f32 %v2416, %v2178
  %v2418 = vadd.f32 %v2417, %v2181
  %v2419 = vadd.f32 %v2418, %v2186
  %v2420 = vadd.f32 %v2419, %v2189
  %v2421 = vadd.f32 %v2420, %v2194
  %v2422 = vadd.f32 %v2421, %v2197
  %v2423 = vadd.f32 %v2422, %v2202
  %v2424 = vadd.f32 %v2423, %v2205
  %v2425 = vadd.f32 %v2424, %v2210
  %v2426 = vadd.f32 %v2425, %v2213
  %v2427 = vadd.f32 %v2426, %v2218
  %v2428 = vadd.f32 %v2427, %v2221
  %v2429 = vadd.f32 %v2428, %v2226
  %v2430 = vadd.f32 %v2429, %v2229
  %v2431 = vadd.f32 %v2430, %v2234
  %v2432 = vadd.f32 %v2431, %v2237
  %v2433 = vadd.f32 %v2432, %v2242
  %v2434 = vadd.f32 %v2433, %v2245
  %v2435 = vadd.f32 %v2434, %v2250
  %v2436 = vadd.f32 %v2435, %v2253
  %v2437 = vadd.f32 %v2436, %v2258
  %v2438 = vadd.f32 %v2437, %v2261
  %v2439 = vadd.f32 %v2438, %v2266
  %v2440 = vadd.f32 %v2439, %v2269
  %v2441 = vadd.f32 %v2440, %v2274
  %v2442 = vadd.f32 %v2441, %v2277
  %v2443 = vadd.f32 %v2442, %v2282
  %v2444 = vadd.f32 %v2443, %v2285
  %v2445 = vadd.f32 %v2444, %v2290
  %v2446 = vadd.f32 %v2445, %v2293
  %v2447 = vadd.f32 %v2446, %v2298
  %v2448 = vadd.f32 %v2447, %v2301
  %v2449 = vadd.f32 %v2448, %v2306
  %v2450 = vadd.f32 %v2449, %v2309
  %v2451 = vadd.f32 %v2450, %v2314
  %v2452 = vadd.f32 %v2451, %v2317
  %v2453 = vadd.f32 %v2452, %v2322
  %v2454 = vadd.f32 %v2453, %v2325
  %v2455 = vrot.slane %v2454, 4
  %v2456 = vadd.f32 %v2454, %v2455
  %v2457 = vrot.slane %v2456, 2
  %v2458 = vadd.f32 %v2456, %v2457
  %v2459 = vrot.slane %v2458, 1
  %v2460 = vadd.f32 %v2458, %v2459
  %2461 = vst [vmem:[%s10] sm:$0x1] %v2460
  %v2462 = vmul.f32 %v2074, %v2074
  %v2463 = vmul.f32 %v2077, %v2077
  %v2464 = vmul.f32 %v2082, %v2082
  %v2465 = vmul.f32 %v2085, %v2085
  %v2466 = vmul.f32 %v2090, %v2090
  %v2467 = vmul.f32 %v2093, %v2093
  %v2468 = vmul.f32 %v2098, %v2098
  %v2469 = vmul.f32 %v2101, %v2101
  %v2470 = vmul.f32 %v2106, %v2106
  %v2471 = vmul.f32 %v2109, %v2109
  %v2472 = vmul.f32 %v2114, %v2114
  %v2473 = vmul.f32 %v2117, %v2117
  %v2474 = vmul.f32 %v2122, %v2122
  %v2475 = vmul.f32 %v2125, %v2125
  %v2476 = vmul.f32 %v2130, %v2130
  %v2477 = vmul.f32 %v2133, %v2133
  %v2478 = vmul.f32 %v2138, %v2138
  %v2479 = vmul.f32 %v2141, %v2141
  %v2480 = vmul.f32 %v2146, %v2146
  %v2481 = vmul.f32 %v2149, %v2149
  %v2482 = vmul.f32 %v2154, %v2154
  %v2483 = vmul.f32 %v2157, %v2157
  %v2484 = vmul.f32 %v2162, %v2162
  %v2485 = vmul.f32 %v2165, %v2165
  %v2486 = vmul.f32 %v2170, %v2170
  %v2487 = vmul.f32 %v2173, %v2173
  %v2488 = vmul.f32 %v2178, %v2178
  %v2489 = vmul.f32 %v2181, %v2181
  %v2490 = vmul.f32 %v2186, %v2186
  %v2491 = vmul.f32 %v2189, %v2189
  %v2492 = vmul.f32 %v2194, %v2194
  %v2493 = vmul.f32 %v2197, %v2197
  %v2494 = vmul.f32 %v2202, %v2202
  %v2495 = vmul.f32 %v2205, %v2205
  %v2496 = vmul.f32 %v2210, %v2210
  %v2497 = vmul.f32 %v2213, %v2213
  %v2498 = vmul.f32 %v2218, %v2218
  %v2499 = vmul.f32 %v2221, %v2221
  %v2500 = vmul.f32 %v2226, %v2226
  %v2501 = vmul.f32 %v2229, %v2229
  %v2502 = vmul.f32 %v2234, %v2234
  %v2503 = vmul.f32 %v2237, %v2237
  %v2504 = vmul.f32 %v2242, %v2242
  %v2505 = vmul.f32 %v2245, %v2245
  %v2506 = vmul.f32 %v2250, %v2250
  %v2507 = vmul.f32 %v2253, %v2253
  %v2508 = vmul.f32 %v2258, %v2258
  %v2509 = vmul.f32 %v2261, %v2261
  %v2510 = vmul.f32 %v2266, %v2266
  %v2511 = vmul.f32 %v2269, %v2269
  %v2512 = vmul.f32 %v2274, %v2274
  %v2513 = vmul.f32 %v2277, %v2277
  %v2514 = vmul.f32 %v2282, %v2282
  %v2515 = vmul.f32 %v2285, %v2285
  %v2516 = vmul.f32 %v2290, %v2290
  %v2517 = vmul.f32 %v2293, %v2293
  %v2518 = vmul.f32 %v2298, %v2298
  %v2519 = vmul.f32 %v2301, %v2301
  %v2520 = vmul.f32 %v2306, %v2306
  %v2521 = vmul.f32 %v2309, %v2309
  %v2522 = vmul.f32 %v2314, %v2314
  %v2523 = vmul.f32 %v2317, %v2317
  %v2524 = vmul.f32 %v2322, %v2322
  %v2525 = vmul.f32 %v2325, %v2325
  %v2526 = vadd.f32 %v2462, %v2463
  %v2527 = vadd.f32 %v2526, %v2464
  %v2528 = vadd.f32 %v2527, %v2465
  %v2529 = vadd.f32 %v2528, %v2466
  %v2530 = vadd.f32 %v2529, %v2467
  %v2531 = vadd.f32 %v2530, %v2468
  %v2532 = vadd.f32 %v2531, %v2469
  %v2533 = vadd.f32 %v2532, %v2470
  %v2534 = vadd.f32 %v2533, %v2471
  %v2535 = vadd.f32 %v2534, %v2472
  %v2536 = vadd.f32 %v2535, %v2473
  %v2537 = vadd.f32 %v2536, %v2474
  %v2538 = vadd.f32 %v2537, %v2475
  %v2539 = vadd.f32 %v2538, %v2476
  %v2540 = vadd.f32 %v2539, %v2477
  %v2541 = vadd.f32 %v2540, %v2478
  %v2542 = vadd.f32 %v2541, %v2479
  %v2543 = vadd.f32 %v2542, %v2480
  %v2544 = vadd.f32 %v2543, %v2481
  %v2545 = vadd.f32 %v2544, %v2482
  %v2546 = vadd.f32 %v2545, %v2483
  %v2547 = vadd.f32 %v2546, %v2484
  %v2548 = vadd.f32 %v2547, %v2485
  %v2549 = vadd.f32 %v2548, %v2486
  %v2550 = vadd.f32 %v2549, %v2487
  %v2551 = vadd.f32 %v2550, %v2488
  %v2552 = vadd.f32 %v2551, %v2489
  %v2553 = vadd.f32 %v2552, %v2490
  %v2554 = vadd.f32 %v2553, %v2491
  %v2555 = vadd.f32 %v2554, %v2492
  %v2556 = vadd.f32 %v2555, %v2493
  %v2557 = vadd.f32 %v2556, %v2494
  %v2558 = vadd.f32 %v2557, %v2495
  %v2559 = vadd.f32 %v2558, %v2496
  %v2560 = vadd.f32 %v2559, %v2497
  %v2561 = vadd.f32 %v2560, %v2498
  %v2562 = vadd.f32 %v2561, %v2499
  %v2563 = vadd.f32 %v2562, %v2500
  %v2564 = vadd.f32 %v2563, %v2501
  %v2565 = vadd.f32 %v2564, %v2502
  %v2566 = vadd.f32 %v2565, %v2503
  %v2567 = vadd.f32 %v2566, %v2504
  %v2568 = vadd.f32 %v2567, %v2505
  %v2569 = vadd.f32 %v2568, %v2506
  %v2570 = vadd.f32 %v2569, %v2507
  %v2571 = vadd.f32 %v2570, %v2508
  %v2572 = vadd.f32 %v2571, %v2509
  %v2573 = vadd.f32 %v2572, %v2510
  %v2574 = vadd.f32 %v2573, %v2511
  %v2575 = vadd.f32 %v2574, %v2512
  %v2576 = vadd.f32 %v2575, %v2513
  %v2577 = vadd.f32 %v2576, %v2514
  %v2578 = vadd.f32 %v2577, %v2515
  %v2579 = vadd.f32 %v2578, %v2516
  %v2580 = vadd.f32 %v2579, %v2517
  %v2581 = vadd.f32 %v2580, %v2518
  %v2582 = vadd.f32 %v2581, %v2519
  %v2583 = vadd.f32 %v2582, %v2520
  %v2584 = vadd.f32 %v2583, %v2521
  %v2585 = vadd.f32 %v2584, %v2522
  %v2586 = vadd.f32 %v2585, %v2523
  %v2587 = vadd.f32 %v2586, %v2524
  %v2588 = vadd.f32 %v2587, %v2525
  %v2589 = vrot.slane %v2588, 4
  %v2590 = vadd.f32 %v2588, %v2589
  %v2591 = vrot.slane %v2590, 2
  %v2592 = vadd.f32 %v2590, %v2591
  %v2593 = vrot.slane %v2592, 1
  %v2594 = vadd.f32 %v2592, %v2593
  %2595 = vst [vmem:[%s10 + $0x1] sm:$0x1] %v2594
  // Predicated region
  $region38: #{inception_v3_module_2_forward.10} parent=0 // pred_check
    _
  $region39: #{inception_v3_module_2_forward.10} parent=0 // pred_check_branch
    %2597 = sbr.rel (0) target = $region41
  $region40: #{inception_v3_module_2_forward.10} parent=0 // pred_region
    _
  $region41: #{inception_v3_module_2_forward.10} parent=0 // pred_fallthru
    _
  // Predicated region
  $region42: #{inception_v3_module_2_forward.10} parent=0 // pred_check
    _
  $region43: #{inception_v3_module_2_forward.10} parent=0 // pred_check_branch
    %2599 = sbr.rel (0) target = $region45
  $region44: #{inception_v3_module_2_forward.10} parent=0 // pred_region
    _
  $region45: #{inception_v3_module_2_forward.10} parent=0 // pred_fallthru
    _
  // Predicated region
  $region46: #{inception_v3_module_2_forward.10} parent=0 // pred_check
    _
  $region47: #{inception_v3_module_2_forward.10} parent=0 // pred_check_branch
    %2601 = sbr.rel (0) target = $region49
  $region48: #{inception_v3_module_2_forward.10} parent=0 // pred_region
    _
  $region49: #{inception_v3_module_2_forward.10} parent=0 // pred_fallthru
    _
  // Predicated region
  $region50: #{inception_v3_module_2_forward.10} parent=0 // pred_check
    _
  $region51: #{inception_v3_module_2_forward.10} parent=0 // pred_check_branch
    %2603 = sbr.rel (0) target = $region53
  $region52: #{inception_v3_module_2_forward.10} parent=0 // pred_region
    _
  $region53: #{inception_v3_module_2_forward.10} parent=0 // pred_fallthru
    _

// kernel: inception_v3_module_2_forward.11
$region0: #{inception_v3_module_2_forward.11}
  #allocation0 [shape = 'u32[]', space=smem, size = 0x4, offset = 0x4, fixed_abs, tag = 'smem constant byte address 0x4 - core index']
  #allocation1 [shape = 'u32[144,128]{1,0:T(1,128)}', space=vmem, size = 0x12000, scoped, tag = 'internal scratch']
  %s0 = inlined_call_operand.vmem [shape: f32[512,128], index: 0, kind: input, shape index: {}]
  %s1 = inlined_call_operand.vmem [shape: f32[2,128], index: 1, kind: input, shape index: {}]
  %s2 = inlined_call_operand.hbm [shape: f32[512,128], index: 2, kind: output, shape index: {}]
  %s3 = sld [smem:[#allocation0]]
  $region18: #{inception_v3_module_2_forward.11} parent=0
    _
  %s5 = ssub.s32 1, %s3
  %s6 = scalar_select 0, %s5, %s3
  $region1: #{inception_v3_module_2_forward.11} parent=0
    #allocation2 [shape = 'u8[262144]{0}', space=vmem, size = 0x40000, scoped, tag = 'output window, operand 0, single buffered']
    #allocation3 [shape = 's32[1]{0}', space=sflag, size = 0x4, scoped, tag = 'scoped memory for inception_v3_module_2_forward.11']
    %7 = vsyncpa [#allocation3], 0
    // Predicated region
    $region2: #{inception_v3_module_2_forward.11} parent=1 // pred_check
      _
    $region3: #{inception_v3_module_2_forward.11} parent=1 // pred_check_branch
      %9 = sbr.rel (0) target = $region5
    $region4: #{inception_v3_module_2_forward.11} parent=1 // pred_region
      _
    $region5: #{inception_v3_module_2_forward.11} parent=1 // pred_fallthru
      _
    // Predicated region
    $region6: #{inception_v3_module_2_forward.11} parent=1 // pred_check
      _
    $region7: #{inception_v3_module_2_forward.11} parent=1 // pred_check_branch
      %11 = sbr.rel (0) target = $region9
    $region8: #{inception_v3_module_2_forward.11} parent=1 // pred_region
      _
    $region9: #{inception_v3_module_2_forward.11} parent=1 // pred_fallthru
      _
    %v12 = vld [vmem:[%s0] sm:$0xff]
    %v13 = vld [vmem:[%s0 + $0x8] sm:$0xff]
    %v14 = vld [vmem:[%s0 + $0x10] sm:$0xff]
    %v15 = vld [vmem:[%s0 + $0x18] sm:$0xff]
    %v16 = vld [vmem:[%s0 + $0x20] sm:$0xff]
    %v17 = vld [vmem:[%s0 + $0x28] sm:$0xff]
    %v18 = vld [vmem:[%s0 + $0x30] sm:$0xff]
    %v19 = vld [vmem:[%s0 + $0x38] sm:$0xff]
    %v20 = vld [vmem:[%s0 + $0x40] sm:$0xff]
    %v21 = vld [vmem:[%s0 + $0x48] sm:$0xff]
    %v22 = vld [vmem:[%s0 + $0x50] sm:$0xff]
    %v23 = vld [vmem:[%s0 + $0x58] sm:$0xff]
    %v24 = vld [vmem:[%s0 + $0x60] sm:$0xff]
    %v25 = vld [vmem:[%s0 + $0x68] sm:$0xff]
    %v26 = vld [vmem:[%s0 + $0x70] sm:$0xff]
    %v27 = vld [vmem:[%s0 + $0x78] sm:$0xff]
    %v28 = vld [vmem:[%s0 + $0x80] sm:$0xff]
    %v29 = vld [vmem:[%s0 + $0x88] sm:$0xff]
    %v30 = vld [vmem:[%s0 + $0x90] sm:$0xff]
    %v31 = vld [vmem:[%s0 + $0x98] sm:$0xff]
    %v32 = vld [vmem:[%s0 + $0xa0] sm:$0xff]
    %v33 = vld [vmem:[%s0 + $0xa8] sm:$0xff]
    %v34 = vld [vmem:[%s0 + $0xb0] sm:$0xff]
    %v35 = vld [vmem:[%s0 + $0xb8] sm:$0xff]
    %v36 = vld [vmem:[%s0 + $0xc0] sm:$0xff]
    %v37 = vld [vmem:[%s0 + $0xc8] sm:$0xff]
    %v38 = vld [vmem:[%s0 + $0xd0] sm:$0xff]
    %v39 = vld [vmem:[%s0 + $0xd8] sm:$0xff]
    %v40 = vld [vmem:[%s0 + $0xe0] sm:$0xff]
    %v41 = vld [vmem:[%s0 + $0xe8] sm:$0xff]
    %v42 = vld [vmem:[%s0 + $0xf0] sm:$0xff]
    %v43 = vld [vmem:[%s0 + $0xf8] sm:$0xff]
    %v44 = vld [vmem:[%s0 + $0x100] sm:$0xff]
    %v45 = vld [vmem:[%s0 + $0x108] sm:$0xff]
    %v46 = vld [vmem:[%s0 + $0x110] sm:$0xff]
    %v47 = vld [vmem:[%s0 + $0x118] sm:$0xff]
    %v48 = vld [vmem:[%s0 + $0x120] sm:$0xff]
    %v49 = vld [vmem:[%s0 + $0x128] sm:$0xff]
    %v50 = vld [vmem:[%s0 + $0x130] sm:$0xff]
    %v51 = vld [vmem:[%s0 + $0x138] sm:$0xff]
    %v52 = vld [vmem:[%s0 + $0x140] sm:$0xff]
    %v53 = vld [vmem:[%s0 + $0x148] sm:$0xff]
    %v54 = vld [vmem:[%s0 + $0x150] sm:$0xff]
    %v55 = vld [vmem:[%s0 + $0x158] sm:$0xff]
    %v56 = vld [vmem:[%s0 + $0x160] sm:$0xff]
    %v57 = vld [vmem:[%s0 + $0x168] sm:$0xff]
    %v58 = vld [vmem:[%s0 + $0x170] sm:$0xff]
    %v59 = vld [vmem:[%s0 + $0x178] sm:$0xff]
    %v60 = vld [vmem:[%s0 + $0x180] sm:$0xff]
    %v61 = vld [vmem:[%s0 + $0x188] sm:$0xff]
    %v62 = vld [vmem:[%s0 + $0x190] sm:$0xff]
    %v63 = vld [vmem:[%s0 + $0x198] sm:$0xff]
    %v64 = vld [vmem:[%s0 + $0x1a0] sm:$0xff]
    %v65 = vld [vmem:[%s0 + $0x1a8] sm:$0xff]
    %v66 = vld [vmem:[%s0 + $0x1b0] sm:$0xff]
    %v67 = vld [vmem:[%s0 + $0x1b8] sm:$0xff]
    %v68 = vld [vmem:[%s0 + $0x1c0] sm:$0xff]
    %v69 = vld [vmem:[%s0 + $0x1c8] sm:$0xff]
    %v70 = vld [vmem:[%s0 + $0x1d0] sm:$0xff]
    %v71 = vld [vmem:[%s0 + $0x1d8] sm:$0xff]
    %v72 = vld [vmem:[%s0 + $0x1e0] sm:$0xff]
    %v73 = vld [vmem:[%s0 + $0x1e8] sm:$0xff]
    %v74 = vld [vmem:[%s0 + $0x1f0] sm:$0xff]
    %v75 = vld [vmem:[%s0 + $0x1f8] sm:$0xff]
    %v76 = vld [vmem:[%s1] sm:$0x1]
    %v77 = vlaneseq
    %v78 = vshrl.u32 %v77, 7
    %v79 = vsub.s32 0, %v78
    %v80 = vrot.slane %v76, %v79
    %v81 = vmul.f32 %v12, %v80
    %v82 = vmul.f32 %v13, %v80
    %v83 = vmul.f32 %v14, %v80
    %v84 = vmul.f32 %v15, %v80
    %v85 = vmul.f32 %v16, %v80
    %v86 = vmul.f32 %v17, %v80
    %v87 = vmul.f32 %v18, %v80
    %v88 = vmul.f32 %v19, %v80
    %v89 = vmul.f32 %v20, %v80
    %v90 = vmul.f32 %v21, %v80
    %v91 = vmul.f32 %v22, %v80
    %v92 = vmul.f32 %v23, %v80
    %v93 = vmul.f32 %v24, %v80
    %v94 = vmul.f32 %v25, %v80
    %v95 = vmul.f32 %v26, %v80
    %v96 = vmul.f32 %v27, %v80
    %v97 = vmul.f32 %v28, %v80
    %v98 = vmul.f32 %v29, %v80
    %v99 = vmul.f32 %v30, %v80
    %v100 = vmul.f32 %v31, %v80
    %v101 = vmul.f32 %v32, %v80
    %v102 = vmul.f32 %v33, %v80
    %v103 = vmul.f32 %v34, %v80
    %v104 = vmul.f32 %v35, %v80
    %v105 = vmul.f32 %v36, %v80
    %v106 = vmul.f32 %v37, %v80
    %v107 = vmul.f32 %v38, %v80
    %v108 = vmul.f32 %v39, %v80
    %v109 = vmul.f32 %v40, %v80
    %v110 = vmul.f32 %v41, %v80
    %v111 = vmul.f32 %v42, %v80
    %v112 = vmul.f32 %v43, %v80
    %v113 = vmul.f32 %v44, %v80
    %v114 = vmul.f32 %v45, %v80
    %v115 = vmul.f32 %v46, %v80
    %v116 = vmul.f32 %v47, %v80
    %v117 = vmul.f32 %v48, %v80
    %v118 = vmul.f32 %v49, %v80
    %v119 = vmul.f32 %v50, %v80
    %v120 = vmul.f32 %v51, %v80
    %v121 = vmul.f32 %v52, %v80
    %v122 = vmul.f32 %v53, %v80
    %v123 = vmul.f32 %v54, %v80
    %v124 = vmul.f32 %v55, %v80
    %v125 = vmul.f32 %v56, %v80
    %v126 = vmul.f32 %v57, %v80
    %v127 = vmul.f32 %v58, %v80
    %v128 = vmul.f32 %v59, %v80
    %v129 = vmul.f32 %v60, %v80
    %v130 = vmul.f32 %v61, %v80
    %v131 = vmul.f32 %v62, %v80
    %v132 = vmul.f32 %v63, %v80
    %v133 = vmul.f32 %v64, %v80
    %v134 = vmul.f32 %v65, %v80
    %v135 = vmul.f32 %v66, %v80
    %v136 = vmul.f32 %v67, %v80
    %v137 = vmul.f32 %v68, %v80
    %v138 = vmul.f32 %v69, %v80
    %v139 = vmul.f32 %v70, %v80
    %v140 = vmul.f32 %v71, %v80
    %v141 = vmul.f32 %v72, %v80
    %v142 = vmul.f32 %v73, %v80
    %v143 = vmul.f32 %v74, %v80
    %v144 = vmul.f32 %v75, %v80
    %v145 = vld [vmem:[%s1 + $0x1] sm:$0x1]
    %v146 = vlaneseq
    %v147 = vshrl.u32 %v146, 7
    %v148 = vsub.s32 0, %v147
    %v149 = vrot.slane %v145, %v148
    %v150 = vadd.f32 %v81, %v149
    %v151 = vadd.f32 %v82, %v149
    %v152 = vadd.f32 %v83, %v149
    %v153 = vadd.f32 %v84, %v149
    %v154 = vadd.f32 %v85, %v149
    %v155 = vadd.f32 %v86, %v149
    %v156 = vadd.f32 %v87, %v149
    %v157 = vadd.f32 %v88, %v149
    %v158 = vadd.f32 %v89, %v149
    %v159 = vadd.f32 %v90, %v149
    %v160 = vadd.f32 %v91, %v149
    %v161 = vadd.f32 %v92, %v149
    %v162 = vadd.f32 %v93, %v149
    %v163 = vadd.f32 %v94, %v149
    %v164 = vadd.f32 %v95, %v149
    %v165 = vadd.f32 %v96, %v149
    %v166 = vadd.f32 %v97, %v149
    %v167 = vadd.f32 %v98, %v149
    %v168 = vadd.f32 %v99, %v149
    %v169 = vadd.f32 %v100, %v149
    %v170 = vadd.f32 %v101, %v149
    %v171 = vadd.f32 %v102, %v149
    %v172 = vadd.f32 %v103, %v149
    %v173 = vadd.f32 %v104, %v149
    %v174 = vadd.f32 %v105, %v149
    %v175 = vadd.f32 %v106, %v149
    %v176 = vadd.f32 %v107, %v149
    %v177 = vadd.f32 %v108, %v149
    %v178 = vadd.f32 %v109, %v149
    %v179 = vadd.f32 %v110, %v149
    %v180 = vadd.f32 %v111, %v149
    %v181 = vadd.f32 %v112, %v149
    %v182 = vadd.f32 %v113, %v149
    %v183 = vadd.f32 %v114, %v149
    %v184 = vadd.f32 %v115, %v149
    %v185 = vadd.f32 %v116, %v149
    %v186 = vadd.f32 %v117, %v149
    %v187 = vadd.f32 %v118, %v149
    %v188 = vadd.f32 %v119, %v149
    %v189 = vadd.f32 %v120, %v149
    %v190 = vadd.f32 %v121, %v149
    %v191 = vadd.f32 %v122, %v149
    %v192 = vadd.f32 %v123, %v149
    %v193 = vadd.f32 %v124, %v149
    %v194 = vadd.f32 %v125, %v149
    %v195 = vadd.f32 %v126, %v149
    %v196 = vadd.f32 %v127, %v149
    %v197 = vadd.f32 %v128, %v149
    %v198 = vadd.f32 %v129, %v149
    %v199 = vadd.f32 %v130, %v149
    %v200 = vadd.f32 %v131, %v149
    %v201 = vadd.f32 %v132, %v149
    %v202 = vadd.f32 %v133, %v149
    %v203 = vadd.f32 %v134, %v149
    %v204 = vadd.f32 %v135, %v149
    %v205 = vadd.f32 %v136, %v149
    %v206 = vadd.f32 %v137, %v149
    %v207 = vadd.f32 %v138, %v149
    %v208 = vadd.f32 %v139, %v149
    %v209 = vadd.f32 %v140, %v149
    %v210 = vadd.f32 %v141, %v149
    %v211 = vadd.f32 %v142, %v149
    %v212 = vadd.f32 %v143, %v149
    %v213 = vadd.f32 %v144, %v149
    %v214 = vmul.f32 %v150, 0.16666667
    %v215 = vmul.f32 %v151, 0.16666667
    %v216 = vmul.f32 %v152, 0.16666667
    %v217 = vmul.f32 %v153, 0.16666667
    %v218 = vmul.f32 %v154, 0.16666667
    %v219 = vmul.f32 %v155, 0.16666667
    %v220 = vmul.f32 %v156, 0.16666667
    %v221 = vmul.f32 %v157, 0.16666667
    %v222 = vmul.f32 %v158, 0.16666667
    %v223 = vmul.f32 %v159, 0.16666667
    %v224 = vmul.f32 %v160, 0.16666667
    %v225 = vmul.f32 %v161, 0.16666667
    %v226 = vmul.f32 %v162, 0.16666667
    %v227 = vmul.f32 %v163, 0.16666667
    %v228 = vmul.f32 %v164, 0.16666667
    %v229 = vmul.f32 %v165, 0.16666667
    %v230 = vmul.f32 %v166, 0.16666667
    %v231 = vmul.f32 %v167, 0.16666667
    %v232 = vmul.f32 %v168, 0.16666667
    %v233 = vmul.f32 %v169, 0.16666667
    %v234 = vmul.f32 %v170, 0.16666667
    %v235 = vmul.f32 %v171, 0.16666667
    %v236 = vmul.f32 %v172, 0.16666667
    %v237 = vmul.f32 %v173, 0.16666667
    %v238 = vmul.f32 %v174, 0.16666667
    %v239 = vmul.f32 %v175, 0.16666667
    %v240 = vmul.f32 %v176, 0.16666667
    %v241 = vmul.f32 %v177, 0.16666667
    %v242 = vmul.f32 %v178, 0.16666667
    %v243 = vmul.f32 %v179, 0.16666667
    %v244 = vmul.f32 %v180, 0.16666667
    %v245 = vmul.f32 %v181, 0.16666667
    %v246 = vmul.f32 %v182, 0.16666667
    %v247 = vmul.f32 %v183, 0.16666667
    %v248 = vmul.f32 %v184, 0.16666667
    %v249 = vmul.f32 %v185, 0.16666667
    %v250 = vmul.f32 %v186, 0.16666667
    %v251 = vmul.f32 %v187, 0.16666667
    %v252 = vmul.f32 %v188, 0.16666667
    %v253 = vmul.f32 %v189, 0.16666667
    %v254 = vmul.f32 %v190, 0.16666667
    %v255 = vmul.f32 %v191, 0.16666667
    %v256 = vmul.f32 %v192, 0.16666667
    %v257 = vmul.f32 %v193, 0.16666667
    %v258 = vmul.f32 %v194, 0.16666667
    %v259 = vmul.f32 %v195, 0.16666667
    %v260 = vmul.f32 %v196, 0.16666667
    %v261 = vmul.f32 %v197, 0.16666667
    %v262 = vmul.f32 %v198, 0.16666667
    %v263 = vmul.f32 %v199, 0.16666667
    %v264 = vmul.f32 %v200, 0.16666667
    %v265 = vmul.f32 %v201, 0.16666667
    %v266 = vmul.f32 %v202, 0.16666667
    %v267 = vmul.f32 %v203, 0.16666667
    %v268 = vmul.f32 %v204, 0.16666667
    %v269 = vmul.f32 %v205, 0.16666667
    %v270 = vmul.f32 %v206, 0.16666667
    %v271 = vmul.f32 %v207, 0.16666667
    %v272 = vmul.f32 %v208, 0.16666667
    %v273 = vmul.f32 %v209, 0.16666667
    %v274 = vmul.f32 %v210, 0.16666667
    %v275 = vmul.f32 %v211, 0.16666667
    %v276 = vmul.f32 %v212, 0.16666667
    %v277 = vmul.f32 %v213, 0.16666667
    %v278 = vadd.f32 %v214, 0.5
    %v279 = vadd.f32 %v215, 0.5
    %v280 = vadd.f32 %v216, 0.5
    %v281 = vadd.f32 %v217, 0.5
    %v282 = vadd.f32 %v218, 0.5
    %v283 = vadd.f32 %v219, 0.5
    %v284 = vadd.f32 %v220, 0.5
    %v285 = vadd.f32 %v221, 0.5
    %v286 = vadd.f32 %v222, 0.5
    %v287 = vadd.f32 %v223, 0.5
    %v288 = vadd.f32 %v224, 0.5
    %v289 = vadd.f32 %v225, 0.5
    %v290 = vadd.f32 %v226, 0.5
    %v291 = vadd.f32 %v227, 0.5
    %v292 = vadd.f32 %v228, 0.5
    %v293 = vadd.f32 %v229, 0.5
    %v294 = vadd.f32 %v230, 0.5
    %v295 = vadd.f32 %v231, 0.5
    %v296 = vadd.f32 %v232, 0.5
    %v297 = vadd.f32 %v233, 0.5
    %v298 = vadd.f32 %v234, 0.5
    %v299 = vadd.f32 %v235, 0.5
    %v300 = vadd.f32 %v236, 0.5
    %v301 = vadd.f32 %v237, 0.5
    %v302 = vadd.f32 %v238, 0.5
    %v303 = vadd.f32 %v239, 0.5
    %v304 = vadd.f32 %v240, 0.5
    %v305 = vadd.f32 %v241, 0.5
    %v306 = vadd.f32 %v242, 0.5
    %v307 = vadd.f32 %v243, 0.5
    %v308 = vadd.f32 %v244, 0.5
    %v309 = vadd.f32 %v245, 0.5
    %v310 = vadd.f32 %v246, 0.5
    %v311 = vadd.f32 %v247, 0.5
    %v312 = vadd.f32 %v248, 0.5
    %v313 = vadd.f32 %v249, 0.5
    %v314 = vadd.f32 %v250, 0.5
    %v315 = vadd.f32 %v251, 0.5
    %v316 = vadd.f32 %v252, 0.5
    %v317 = vadd.f32 %v253, 0.5
    %v318 = vadd.f32 %v254, 0.5
    %v319 = vadd.f32 %v255, 0.5
    %v320 = vadd.f32 %v256, 0.5
    %v321 = vadd.f32 %v257, 0.5
    %v322 = vadd.f32 %v258, 0.5
    %v323 = vadd.f32 %v259, 0.5
    %v324 = vadd.f32 %v260, 0.5
    %v325 = vadd.f32 %v261, 0.5
    %v326 = vadd.f32 %v262, 0.5
    %v327 = vadd.f32 %v263, 0.5
    %v328 = vadd.f32 %v264, 0.5
    %v329 = vadd.f32 %v265, 0.5
    %v330 = vadd.f32 %v266, 0.5
    %v331 = vadd.f32 %v267, 0.5
    %v332 = vadd.f32 %v268, 0.5
    %v333 = vadd.f32 %v269, 0.5
    %v334 = vadd.f32 %v270, 0.5
    %v335 = vadd.f32 %v271, 0.5
    %v336 = vadd.f32 %v272, 0.5
    %v337 = vadd.f32 %v273, 0.5
    %v338 = vadd.f32 %v274, 0.5
    %v339 = vadd.f32 %v275, 0.5
    %v340 = vadd.f32 %v276, 0.5
    %v341 = vadd.f32 %v277, 0.5
    %v342 = vmax.f32 %v278, 0.0
    %v343 = vmax.f32 %v279, 0.0
    %v344 = vmax.f32 %v280, 0.0
    %v345 = vmax.f32 %v281, 0.0
    %v346 = vmax.f32 %v282, 0.0
    %v347 = vmax.f32 %v283, 0.0
    %v348 = vmax.f32 %v284, 0.0
    %v349 = vmax.f32 %v285, 0.0
    %v350 = vmax.f32 %v286, 0.0
    %v351 = vmax.f32 %v287, 0.0
    %v352 = vmax.f32 %v288, 0.0
    %v353 = vmax.f32 %v289, 0.0
    %v354 = vmax.f32 %v290, 0.0
    %v355 = vmax.f32 %v291, 0.0
    %v356 = vmax.f32 %v292, 0.0
    %v357 = vmax.f32 %v293, 0.0
    %v358 = vmax.f32 %v294, 0.0
    %v359 = vmax.f32 %v295, 0.0
    %v360 = vmax.f32 %v296, 0.0
    %v361 = vmax.f32 %v297, 0.0
    %v362 = vmax.f32 %v298, 0.0
    %v363 = vmax.f32 %v299, 0.0
    %v364 = vmax.f32 %v300, 0.0
    %v365 = vmax.f32 %v301, 0.0
    %v366 = vmax.f32 %v302, 0.0
    %v367 = vmax.f32 %v303, 0.0
    %v368 = vmax.f32 %v304, 0.0
    %v369 = vmax.f32 %v305, 0.0
    %v370 = vmax.f32 %v306, 0.0
    %v371 = vmax.f32 %v307, 0.0
    %v372 = vmax.f32 %v308, 0.0
    %v373 = vmax.f32 %v309, 0.0
    %v374 = vmax.f32 %v310, 0.0
    %v375 = vmax.f32 %v311, 0.0
    %v376 = vmax.f32 %v312, 0.0
    %v377 = vmax.f32 %v313, 0.0
    %v378 = vmax.f32 %v314, 0.0
    %v379 = vmax.f32 %v315, 0.0
    %v380 = vmax.f32 %v316, 0.0
    %v381 = vmax.f32 %v317, 0.0
    %v382 = vmax.f32 %v318, 0.0
    %v383 = vmax.f32 %v319, 0.0
    %v384 = vmax.f32 %v320, 0.0
    %v385 = vmax.f32 %v321, 0.0
    %v386 = vmax.f32 %v322, 0.0
    %v387 = vmax.f32 %v323, 0.0
    %v388 = vmax.f32 %v324, 0.0
    %v389 = vmax.f32 %v325, 0.0
    %v390 = vmax.f32 %v326, 0.0
    %v391 = vmax.f32 %v327, 0.0
    %v392 = vmax.f32 %v328, 0.0
    %v393 = vmax.f32 %v329, 0.0
    %v394 = vmax.f32 %v330, 0.0
    %v395 = vmax.f32 %v331, 0.0
    %v396 = vmax.f32 %v332, 0.0
    %v397 = vmax.f32 %v333, 0.0
    %v398 = vmax.f32 %v334, 0.0
    %v399 = vmax.f32 %v335, 0.0
    %v400 = vmax.f32 %v336, 0.0
    %v401 = vmax.f32 %v337, 0.0
    %v402 = vmax.f32 %v338, 0.0
    %v403 = vmax.f32 %v339, 0.0
    %v404 = vmax.f32 %v340, 0.0
    %v405 = vmax.f32 %v341, 0.0
    %v406 = vmin.f32 %v342, 1.0
    %v407 = vmin.f32 %v343, 1.0
    %v408 = vmin.f32 %v344, 1.0
    %v409 = vmin.f32 %v345, 1.0
    %v410 = vmin.f32 %v346, 1.0
    %v411 = vmin.f32 %v347, 1.0
    %v412 = vmin.f32 %v348, 1.0
    %v413 = vmin.f32 %v349, 1.0
    %v414 = vmin.f32 %v350, 1.0
    %v415 = vmin.f32 %v351, 1.0
    %v416 = vmin.f32 %v352, 1.0
    %v417 = vmin.f32 %v353, 1.0
    %v418 = vmin.f32 %v354, 1.0
    %v419 = vmin.f32 %v355, 1.0
    %v420 = vmin.f32 %v356, 1.0
    %v421 = vmin.f32 %v357, 1.0
    %v422 = vmin.f32 %v358, 1.0
    %v423 = vmin.f32 %v359, 1.0
    %v424 = vmin.f32 %v360, 1.0
    %v425 = vmin.f32 %v361, 1.0
    %v426 = vmin.f32 %v362, 1.0
    %v427 = vmin.f32 %v363, 1.0
    %v428 = vmin.f32 %v364, 1.0
    %v429 = vmin.f32 %v365, 1.0
    %v430 = vmin.f32 %v366, 1.0
    %v431 = vmin.f32 %v367, 1.0
    %v432 = vmin.f32 %v368, 1.0
    %v433 = vmin.f32 %v369, 1.0
    %v434 = vmin.f32 %v370, 1.0
    %v435 = vmin.f32 %v371, 1.0
    %v436 = vmin.f32 %v372, 1.0
    %v437 = vmin.f32 %v373, 1.0
    %v438 = vmin.f32 %v374, 1.0
    %v439 = vmin.f32 %v375, 1.0
    %v440 = vmin.f32 %v376, 1.0
    %v441 = vmin.f32 %v377, 1.0
    %v442 = vmin.f32 %v378, 1.0
    %v443 = vmin.f32 %v379, 1.0
    %v444 = vmin.f32 %v380, 1.0
    %v445 = vmin.f32 %v381, 1.0
    %v446 = vmin.f32 %v382, 1.0
    %v447 = vmin.f32 %v383, 1.0
    %v448 = vmin.f32 %v384, 1.0
    %v449 = vmin.f32 %v385, 1.0
    %v450 = vmin.f32 %v386, 1.0
    %v451 = vmin.f32 %v387, 1.0
    %v452 = vmin.f32 %v388, 1.0
    %v453 = vmin.f32 %v389, 1.0
    %v454 = vmin.f32 %v390, 1.0
    %v455 = vmin.f32 %v391, 1.0
    %v456 = vmin.f32 %v392, 1.0
    %v457 = vmin.f32 %v393, 1.0
    %v458 = vmin.f32 %v394, 1.0
    %v459 = vmin.f32 %v395, 1.0
    %v460 = vmin.f32 %v396, 1.0
    %v461 = vmin.f32 %v397, 1.0
    %v462 = vmin.f32 %v398, 1.0
    %v463 = vmin.f32 %v399, 1.0
    %v464 = vmin.f32 %v400, 1.0
    %v465 = vmin.f32 %v401, 1.0
    %v466 = vmin.f32 %v402, 1.0
    %v467 = vmin.f32 %v403, 1.0
    %v468 = vmin.f32 %v404, 1.0
    %v469 = vmin.f32 %v405, 1.0
    %v470 = vmul.f32 %v150, %v406
    %v471 = vmul.f32 %v151, %v407
    %v472 = vmul.f32 %v152, %v408
    %v473 = vmul.f32 %v153, %v409
    %v474 = vmul.f32 %v154, %v410
    %v475 = vmul.f32 %v155, %v411
    %v476 = vmul.f32 %v156, %v412
    %v477 = vmul.f32 %v157, %v413
    %v478 = vmul.f32 %v158, %v414
    %v479 = vmul.f32 %v159, %v415
    %v480 = vmul.f32 %v160, %v416
    %v481 = vmul.f32 %v161, %v417
    %v482 = vmul.f32 %v162, %v418
    %v483 = vmul.f32 %v163, %v419
    %v484 = vmul.f32 %v164, %v420
    %v485 = vmul.f32 %v165, %v421
    %v486 = vmul.f32 %v166, %v422
    %v487 = vmul.f32 %v167, %v423
    %v488 = vmul.f32 %v168, %v424
    %v489 = vmul.f32 %v169, %v425
    %v490 = vmul.f32 %v170, %v426
    %v491 = vmul.f32 %v171, %v427
    %v492 = vmul.f32 %v172, %v428
    %v493 = vmul.f32 %v173, %v429
    %v494 = vmul.f32 %v174, %v430
    %v495 = vmul.f32 %v175, %v431
    %v496 = vmul.f32 %v176, %v432
    %v497 = vmul.f32 %v177, %v433
    %v498 = vmul.f32 %v178, %v434
    %v499 = vmul.f32 %v179, %v435
    %v500 = vmul.f32 %v180, %v436
    %v501 = vmul.f32 %v181, %v437
    %v502 = vmul.f32 %v182, %v438
    %v503 = vmul.f32 %v183, %v439
    %v504 = vmul.f32 %v184, %v440
    %v505 = vmul.f32 %v185, %v441
    %v506 = vmul.f32 %v186, %v442
    %v507 = vmul.f32 %v187, %v443
    %v508 = vmul.f32 %v188, %v444
    %v509 = vmul.f32 %v189, %v445
    %v510 = vmul.f32 %v190, %v446
    %v511 = vmul.f32 %v191, %v447
    %v512 = vmul.f32 %v192, %v448
    %v513 = vmul.f32 %v193, %v449
    %v514 = vmul.f32 %v194, %v450
    %v515 = vmul.f32 %v195, %v451
    %v516 = vmul.f32 %v196, %v452
    %v517 = vmul.f32 %v197, %v453
    %v518 = vmul.f32 %v198, %v454
    %v519 = vmul.f32 %v199, %v455
    %v520 = vmul.f32 %v200, %v456
    %v521 = vmul.f32 %v201, %v457
    %v522 = vmul.f32 %v202, %v458
    %v523 = vmul.f32 %v203, %v459
    %v524 = vmul.f32 %v204, %v460
    %v525 = vmul.f32 %v205, %v461
    %v526 = vmul.f32 %v206, %v462
    %v527 = vmul.f32 %v207, %v463
    %v528 = vmul.f32 %v208, %v464
    %v529 = vmul.f32 %v209, %v465
    %v530 = vmul.f32 %v210, %v466
    %v531 = vmul.f32 %v211, %v467
    %v532 = vmul.f32 %v212, %v468
    %v533 = vmul.f32 %v213, %v469
    %534 = vst [vmem:[#allocation2] sm:$0xff] %v470
    %535 = vst [vmem:[#allocation2 + $0x8] sm:$0xff] %v471
    %536 = vst [vmem:[#allocation2 + $0x10] sm:$0xff] %v472
    %537 = vst [vmem:[#allocation2 + $0x18] sm:$0xff] %v473
    %538 = vst [vmem:[#allocation2 + $0x20] sm:$0xff] %v474
    %539 = vst [vmem:[#allocation2 + $0x28] sm:$0xff] %v475
    %540 = vst [vmem:[#allocation2 + $0x30] sm:$0xff] %v476
    %541 = vst [vmem:[#allocation2 + $0x38] sm:$0xff] %v477
    %542 = vst [vmem:[#allocation2 + $0x40] sm:$0xff] %v478
    %543 = vst [vmem:[#allocation2 + $0x48] sm:$0xff] %v479
    %544 = vst [vmem:[#allocation2 + $0x50] sm:$0xff] %v480
    %545 = vst [vmem:[#allocation2 + $0x58] sm:$0xff] %v481
    %546 = vst [vmem:[#allocation2 + $0x60] sm:$0xff] %v482
    %547 = vst [vmem:[#allocation2 + $0x68] sm:$0xff] %v483
    %548 = vst [vmem:[#allocation2 + $0x70] sm:$0xff] %v484
    %549 = vst [vmem:[#allocation2 + $0x78] sm:$0xff] %v485
    %550 = vst [vmem:[#allocation2 + $0x80] sm:$0xff] %v486
    %551 = vst [vmem:[#allocation2 + $0x88] sm:$0xff] %v487
    %552 = vst [vmem:[#allocation2 + $0x90] sm:$0xff] %v488
    %553 = vst [vmem:[#allocation2 + $0x98] sm:$0xff] %v489
    %554 = vst [vmem:[#allocation2 + $0xa0] sm:$0xff] %v490
    %555 = vst [vmem:[#allocation2 + $0xa8] sm:$0xff] %v491
    %556 = vst [vmem:[#allocation2 + $0xb0] sm:$0xff] %v492
    %557 = vst [vmem:[#allocation2 + $0xb8] sm:$0xff] %v493
    %558 = vst [vmem:[#allocation2 + $0xc0] sm:$0xff] %v494
    %559 = vst [vmem:[#allocation2 + $0xc8] sm:$0xff] %v495
    %560 = vst [vmem:[#allocation2 + $0xd0] sm:$0xff] %v496
    %561 = vst [vmem:[#allocation2 + $0xd8] sm:$0xff] %v497
    %562 = vst [vmem:[#allocation2 + $0xe0] sm:$0xff] %v498
    %563 = vst [vmem:[#allocation2 + $0xe8] sm:$0xff] %v499
    %564 = vst [vmem:[#allocation2 + $0xf0] sm:$0xff] %v500
    %565 = vst [vmem:[#allocation2 + $0xf8] sm:$0xff] %v501
    %566 = vst [vmem:[#allocation2 + $0x100] sm:$0xff] %v502
    %567 = vst [vmem:[#allocation2 + $0x108] sm:$0xff] %v503
    %568 = vst [vmem:[#allocation2 + $0x110] sm:$0xff] %v504
    %569 = vst [vmem:[#allocation2 + $0x118] sm:$0xff] %v505
    %570 = vst [vmem:[#allocation2 + $0x120] sm:$0xff] %v506
    %571 = vst [vmem:[#allocation2 + $0x128] sm:$0xff] %v507
    %572 = vst [vmem:[#allocation2 + $0x130] sm:$0xff] %v508
    %573 = vst [vmem:[#allocation2 + $0x138] sm:$0xff] %v509
    %574 = vst [vmem:[#allocation2 + $0x140] sm:$0xff] %v510
    %575 = vst [vmem:[#allocation2 + $0x148] sm:$0xff] %v511
    %576 = vst [vmem:[#allocation2 + $0x150] sm:$0xff] %v512
    %577 = vst [vmem:[#allocation2 + $0x158] sm:$0xff] %v513
    %578 = vst [vmem:[#allocation2 + $0x160] sm:$0xff] %v514
    %579 = vst [vmem:[#allocation2 + $0x168] sm:$0xff] %v515
    %580 = vst [vmem:[#allocation2 + $0x170] sm:$0xff] %v516
    %581 = vst [vmem:[#allocation2 + $0x178] sm:$0xff] %v517
    %582 = vst [vmem:[#allocation2 + $0x180] sm:$0xff] %v518
    %583 = vst [vmem:[#allocation2 + $0x188] sm:$0xff] %v519
    %584 = vst [vmem:[#allocation2 + $0x190] sm:$0xff] %v520
    %585 = vst [vmem:[#allocation2 + $0x198] sm:$0xff] %v521
    %586 = vst [vmem:[#allocation2 + $0x1a0] sm:$0xff] %v522
    %587 = vst [vmem:[#allocation2 + $0x1a8] sm:$0xff] %v523
    %588 = vst [vmem:[#allocation2 + $0x1b0] sm:$0xff] %v524
    %589 = vst [vmem:[#allocation2 + $0x1b8] sm:$0xff] %v525
    %590 = vst [vmem:[#allocation2 + $0x1c0] sm:$0xff] %v526
    %591 = vst [vmem:[#allocation2 + $0x1c8] sm:$0xff] %v527
    %592 = vst [vmem:[#allocation2 + $0x1d0] sm:$0xff] %v528
    %593 = vst [vmem:[#allocation2 + $0x1d8] sm:$0xff] %v529
    %594 = vst [vmem:[#allocation2 + $0x1e0] sm:$0xff] %v530
    %595 = vst [vmem:[#allocation2 + $0x1e8] sm:$0xff] %v531
    %596 = vst [vmem:[#allocation2 + $0x1f0] sm:$0xff] %v532
    %597 = vst [vmem:[#allocation2 + $0x1f8] sm:$0xff] %v533
    // Predicated region
    $region10: #{inception_v3_module_2_forward.11} parent=1 // pred_check
      _
    $region11: #{inception_v3_module_2_forward.11} parent=1 // pred_check_branch
      %599 = sbr.rel (0) target = $region13
    $region12: #{inception_v3_module_2_forward.11} parent=1 // pred_region
      %s601 = ssub.s32 8192, 8192
      %602 = vsyncadd [#allocation3], %s601
      %s603 = sshll.u32 [#allocation2], 4
      %s604 = int_to_ptr.vmem [resolvable:$true] %s603
      %609 = dma.vmem_to_hbm [thread:$0]  %s604, 8192, %s2, [#allocation3], 128, 128, 8
    $region13: #{inception_v3_module_2_forward.11} parent=1 // pred_fallthru
      _
    // Predicated region
    $region14: #{inception_v3_module_2_forward.11} parent=1 // pred_check
      _
    $region15: #{inception_v3_module_2_forward.11} parent=1 // pred_check_branch
      %611 = sbr.rel (0) target = $region17
    $region16: #{inception_v3_module_2_forward.11} parent=1 // pred_region
      %612 = dma.done [#allocation3], 8192
    $region17: #{inception_v3_module_2_forward.11} parent=1 // pred_fallthru
      _
    %613 = vsyncpa [#allocation3], 1

// kernel: inception_v3_module_2_forward.7
$region0: #{inception_v3_module_2_forward.7}
  #allocation0 [shape = 'u32[]', space=smem, size = 0x4, offset = 0x4, fixed_abs, tag = 'smem constant byte address 0x4 - core index']
  #allocation1 [shape = 'u32[144,128]{1,0:T(1,128)}', space=vmem, size = 0x12000, scoped, tag = 'internal scratch']
  #allocation2 [shape = 'f32[20,20,128]{2,1,0:T(8,128)}', space=vmem, size = 0x3c000, scoped, tag = 'scratch operand']
  #allocation3 [shape = 'f32[5,20,16,128]{3,2,1,0:T(8,128)}', space=vmem, size = 0xc8000, scoped, tag = 'scratch operand']
  %s0 = inlined_call_operand.vmem [shape: f32[2,16,16,128], index: 0, kind: input, shape index: {}]
  %s1 = inlined_call_operand.vmem [shape: f32[2,128], index: 1, kind: input, shape index: {}]
  %s2 = inlined_call_operand.vmem [shape: f32[25,128], index: 2, kind: input, shape index: {}]
  %s3 = inlined_call_operand.vmem [shape: f32[512,128], index: 3, kind: output, shape index: {0}]
  %s4 = inlined_call_operand.vmem [shape: f32[2,2,128], index: 4, kind: output, shape index: {1}]
  %5 = xla_tuple %s3, %s4
  %s6 = sld [smem:[#allocation0]]
  $region53: #{inception_v3_module_2_forward.7} parent=0
    _
  %s8 = ssub.s32 1, %s6
  %s9 = scalar_select 0, %s8, %s6
  loop: start=0, step=1, limit=4
  $region2: #{inception_v3_module_2_forward.7} parent=0 // loop_pre_header
    _
  $region3: #{inception_v3_module_2_forward.7} parent=0 // loop_header
    %s11 = sphi 0, %s15
    %p12 = scmp.ge.s32.totalorder %s11, 4
    %s21 = sphi 0, %s23
    %s24 = sphi 0, %s21
    %s25 = sphi 0, %s24
    %s41 = sphi 0, %s25
    %s45 = sphi 0, %s45
    %s47 = sphi 0, %s45
    %s48 = sphi 0, %s47
    %s62 = sphi 0, %s48
    %s66 = sphi 0, %s66
    %s68 = sphi 0, %s66
    %s69 = sphi 0, %s68
    %s83 = sphi 0, %s69
    %s89 = sphi 0, %s91
    %s92 = sphi 0, %s89
    %s93 = sphi 0, %s92
    %s109 = sphi 0, %s93
    %s115 = sphi 0, %s117
    %s118 = sphi 0, %s115
    %s119 = sphi 0, %s118
    %s135 = sphi 0, %s119
  $region4: #{inception_v3_module_2_forward.7} parent=0 // loop_header_branch
    %14 = sbr.rel (%p12) target = $region8
  $region5: #{inception_v3_module_2_forward.7} parent=0 // loop_body
    %s16 = ssub.s32 %s11, 1
    %s17 = ssub.s32 %s11, 2
    %s18 = sadd.s32 %s11, 1
    %s19 = ssub.s32 %s11, %s18
    %p20 = scmp.eq.s32.totalorder %s19, 0
    %s22 = sadd.s32 %s21, 1
    %s23 = scalar_select %p20, %s21, %s22
    %p26 = pneg %p20
    %p27 = scmp.eq.s32.totalorder %s11, 1
    %p28 = por %p26, %p27
    %p29 = scmp.ne.s32.totalorder %s21, %s24
    %p30 = scmp.eq.s32.totalorder %s11, 0
    %p31 = por %p29, %p30
    %p32 = scmp.ne.s32.totalorder %s21, %s24
    %p33 = scmp.eq.s32.totalorder %s16, 1
    %p34 = por %p32, %p33
    %p35 = scmp.ne.s32.totalorder %s24, %s25
    %p36 = scmp.eq.s32.totalorder %s16, 0
    %p37 = por %p35, %p36
    %p38 = scmp.ne.s32.totalorder %s24, %s25
    %p39 = scmp.eq.s32.totalorder %s17, 1
    %p40 = por %p38, %p39
    %p42 = scmp.ne.s32.totalorder %s25, %s41
    %p43 = scmp.eq.s32.totalorder %s17, 0
    %p44 = por %p42, %p43
    %s46 = sadd.s32 %s45, 1
    %p49 = scmp.eq.s32.totalorder %s11, 1
    %p50 = scmp.ne.s32.totalorder %s45, %s47
    %p51 = scmp.eq.s32.totalorder %s11, 0
    %p52 = por %p50, %p51
    %p53 = scmp.ne.s32.totalorder %s45, %s47
    %p54 = scmp.eq.s32.totalorder %s16, 1
    %p55 = por %p53, %p54
    %p56 = scmp.ne.s32.totalorder %s47, %s48
    %p57 = scmp.eq.s32.totalorder %s16, 0
    %p58 = por %p56, %p57
    %p59 = scmp.ne.s32.totalorder %s47, %s48
    %p60 = scmp.eq.s32.totalorder %s17, 1
    %p61 = por %p59, %p60
    %p63 = scmp.ne.s32.totalorder %s48, %s62
    %p64 = scmp.eq.s32.totalorder %s17, 0
    %p65 = por %p63, %p64
    %s67 = sadd.s32 %s66, 1
    %p70 = scmp.eq.s32.totalorder %s11, 1
    %p71 = scmp.ne.s32.totalorder %s66, %s68
    %p72 = scmp.eq.s32.totalorder %s11, 0
    %p73 = por %p71, %p72
    %p74 = scmp.ne.s32.totalorder %s66, %s68
    %p75 = scmp.eq.s32.totalorder %s16, 1
    %p76 = por %p74, %p75
    %p77 = scmp.ne.s32.totalorder %s68, %s69
    %p78 = scmp.eq.s32.totalorder %s16, 0
    %p79 = por %p77, %p78
    %p80 = scmp.ne.s32.totalorder %s68, %s69
    %p81 = scmp.eq.s32.totalorder %s17, 1
    %p82 = por %p80, %p81
    %p84 = scmp.ne.s32.totalorder %s69, %s83
    %p85 = scmp.eq.s32.totalorder %s17, 0
    %p86 = por %p84, %p85
    %s87 = ssub.s32 %s11, %s18
    %p88 = scmp.eq.s32.totalorder %s87, 0
    %s90 = sadd.s32 %s89, 1
    %s91 = scalar_select %p88, %s89, %s90
    %p94 = pneg %p88
    %p95 = scmp.eq.s32.totalorder %s11, 1
    %p96 = por %p94, %p95
    %p97 = scmp.ne.s32.totalorder %s89, %s92
    %p98 = scmp.eq.s32.totalorder %s11, 0
    %p99 = por %p97, %p98
    %p100 = scmp.ne.s32.totalorder %s89, %s92
    %p101 = scmp.eq.s32.totalorder %s16, 1
    %p102 = por %p100, %p101
    %p103 = scmp.ne.s32.totalorder %s92, %s93
    %p104 = scmp.eq.s32.totalorder %s16, 0
    %p105 = por %p103, %p104
    %p106 = scmp.ne.s32.totalorder %s92, %s93
    %p107 = scmp.eq.s32.totalorder %s17, 1
    %p108 = por %p106, %p107
    %p110 = scmp.ne.s32.totalorder %s93, %s109
    %p111 = scmp.eq.s32.totalorder %s17, 0
    %p112 = por %p110, %p111
    %s113 = ssub.s32 %s11, %s18
    %p114 = scmp.eq.s32.totalorder %s113, 0
    %s116 = sadd.s32 %s115, 1
    %s117 = scalar_select %p114, %s115, %s116
    %p120 = pneg %p114
    %p121 = scmp.eq.s32.totalorder %s11, 1
    %p122 = por %p120, %p121
    %p123 = scmp.ne.s32.totalorder %s115, %s118
    %p124 = scmp.eq.s32.totalorder %s11, 0
    %p125 = por %p123, %p124
    %p126 = scmp.ne.s32.totalorder %s115, %s118
    %p127 = scmp.eq.s32.totalorder %s16, 1
    %p128 = por %p126, %p127
    %p129 = scmp.ne.s32.totalorder %s118, %s119
    %p130 = scmp.eq.s32.totalorder %s16, 0
    %p131 = por %p129, %p130
    %p132 = scmp.ne.s32.totalorder %s118, %s119
    %p133 = scmp.eq.s32.totalorder %s17, 1
    %p134 = por %p132, %p133
    %p136 = scmp.ne.s32.totalorder %s119, %s135
    %p137 = scmp.eq.s32.totalorder %s17, 0
    %p138 = por %p136, %p137
    %p139 = scmp.le.s32.totalorder 1, %s11
    %p140 = scmp.lt.s32.totalorder %s11, 3
    %p141 = pnand %p139, %p140
    %p142 = pneg %p141
    // Predicated region
    $region9: #{inception_v3_module_2_forward.7} parent=5 // pred_check
      _
    $region10: #{inception_v3_module_2_forward.7} parent=5 // pred_check_branch
      %144 = sbr.rel (%p141) target = $region12
    $region11: #{inception_v3_module_2_forward.7} parent=5 // pred_region
      %s145 = ssub.s32 %s11, 1
      // Predicated region
      $region13: #{inception_v3_module_2_forward.7} parent=11 // pred_check
        %p146 = pneg %p58
      $region14: #{inception_v3_module_2_forward.7} parent=11 // pred_check_branch
        %148 = sbr.rel (%p146) target = $region16
      $region15: #{inception_v3_module_2_forward.7} parent=11 // pred_region
        _
      $region16: #{inception_v3_module_2_forward.7} parent=11 // pred_fallthru
        _
      // Predicated region
      $region17: #{inception_v3_module_2_forward.7} parent=11 // pred_check
        %p149 = pneg %p79
      $region18: #{inception_v3_module_2_forward.7} parent=11 // pred_check_branch
        %151 = sbr.rel (%p149) target = $region20
      $region19: #{inception_v3_module_2_forward.7} parent=11 // pred_region
        _
      $region20: #{inception_v3_module_2_forward.7} parent=11 // pred_fallthru
        _
    $region12: #{inception_v3_module_2_forward.7} parent=5 // pred_fallthru
      _
    %p152 = scmp.lt.s32.totalorder %s11, 2
    // Predicated region
    $region21: #{inception_v3_module_2_forward.7} parent=5 // pred_check
      %p153 = pneg %p152
    $region22: #{inception_v3_module_2_forward.7} parent=5 // pred_check_branch
      %155 = sbr.rel (%p153) target = $region24
    $region23: #{inception_v3_module_2_forward.7} parent=5 // pred_region
      // Predicated region
      $region25: #{inception_v3_module_2_forward.7} parent=23 // pred_check
        %p156 = pneg %p31
      $region26: #{inception_v3_module_2_forward.7} parent=23 // pred_check_branch
        %158 = sbr.rel (%p156) target = $region28
      $region27: #{inception_v3_module_2_forward.7} parent=23 // pred_region
        %p159 = scmp.lt.s32.totalorder %s11, 1
        %s160 = scalar_select %p159, %s11, 1
        %s161 = smul.addr %s160, 32
        %s162 = smul.addr %s161, 8
        %s163 = scalar_lea.vmem %s0, %s162
      $region28: #{inception_v3_module_2_forward.7} parent=23 // pred_fallthru
        _
    $region24: #{inception_v3_module_2_forward.7} parent=5 // pred_fallthru
      _
    %p164 = scmp.le.s32.totalorder 1, %s11
    %p165 = scmp.lt.s32.totalorder %s11, 3
    %p166 = pnand %p164, %p165
    %p167 = pneg %p166
    // Predicated region
    $region29: #{inception_v3_module_2_forward.7} parent=5 // pred_check
      _
    $region30: #{inception_v3_module_2_forward.7} parent=5 // pred_check_branch
      %169 = sbr.rel (%p166) target = $region32
    $region31: #{inception_v3_module_2_forward.7} parent=5 // pred_region
      %s170 = ssub.s32 %s11, 1
      %p171 = scmp.lt.s32.totalorder %s16, 1
      %s172 = scalar_select %p171, %s16, 1
      %s173 = smul.addr %s172, 32
      %s174 = smul.addr %s173, 8
      %s175 = scalar_lea.vmem %s0, %s174
      %p176 = pneg %p37
      %p177 = pneg %p34
      %p178 = pneg %p58
      %p179 = pneg %p55
      %p180 = pneg %p79
      %p181 = pneg %p76
      %p182 = pneg %p105
      %p183 = pneg %p102
      %s184 = smul.u32 32, %s16
      %p185 = scmp.lt.s32.totalorder %s184, 63
      %s186 = scalar_select %p185, %s184, 63
      %s187 = smul.addr %s186, 8
      %s188 = scalar_lea.vmem %s3, %s187
      %p189 = pneg %p131
      %p190 = pneg %p128
      %p191 = scmp.lt.s32.totalorder %s16, 1
      %s192 = scalar_select %p191, %s16, 1
      %s193 = smul.addr %s192, 2
      %s194 = scalar_lea.vmem %s4, %s193
      %p195 = scmp.lt.s32.totalorder %s16, 1
      %s196 = scalar_select %p195, %s16, 1
      %s197 = smul.addr %s196, 32
      %s198 = smul.addr %s197, 8
      %s199 = scalar_lea.vmem %s0, %s198
      %s200 = smul.u32 32, %s16
      %p201 = scmp.lt.s32.totalorder %s200, 63
      %s202 = scalar_select %p201, %s200, 63
      %s203 = smul.addr %s202, 8
      %s204 = scalar_lea.vmem %s3, %s203
      %s205 = smul.u32 32, %s16
      %p206 = scmp.lt.s32.totalorder %s16, 1
      %s207 = scalar_select %p206, %s16, 1
      %s208 = smul.addr %s207, 2
      %s209 = scalar_lea.vmem %s4, %s208
      %v210 = vld [vmem:[%s1] sm:$0x1]
      %v211 = vld [vmem:[%s1 + $0x1] sm:$0x1]
      %v212 = vld [vmem:[%s199] sm:$0xff]
      %v213 = vld [vmem:[%s199 + $0x8] sm:$0xff]
      %v214 = vld [vmem:[%s199 + $0x10] sm:$0xff]
      %v215 = vld [vmem:[%s199 + $0x18] sm:$0xff]
      %v216 = vld [vmem:[%s199 + $0x20] sm:$0xff]
      %v217 = vld [vmem:[%s199 + $0x28] sm:$0xff]
      %v218 = vld [vmem:[%s199 + $0x30] sm:$0xff]
      %v219 = vld [vmem:[%s199 + $0x38] sm:$0xff]
      %v220 = vld [vmem:[%s199 + $0x40] sm:$0xff]
      %v221 = vld [vmem:[%s199 + $0x48] sm:$0xff]
      %v222 = vld [vmem:[%s199 + $0x50] sm:$0xff]
      %v223 = vld [vmem:[%s199 + $0x58] sm:$0xff]
      %v224 = vld [vmem:[%s199 + $0x60] sm:$0xff]
      %v225 = vld [vmem:[%s199 + $0x68] sm:$0xff]
      %v226 = vld [vmem:[%s199 + $0x70] sm:$0xff]
      %v227 = vld [vmem:[%s199 + $0x78] sm:$0xff]
      %v228 = vld [vmem:[%s199 + $0x80] sm:$0xff]
      %v229 = vld [vmem:[%s199 + $0x88] sm:$0xff]
      %v230 = vld [vmem:[%s199 + $0x90] sm:$0xff]
      %v231 = vld [vmem:[%s199 + $0x98] sm:$0xff]
      %v232 = vld [vmem:[%s199 + $0xa0] sm:$0xff]
      %v233 = vld [vmem:[%s199 + $0xa8] sm:$0xff]
      %v234 = vld [vmem:[%s199 + $0xb0] sm:$0xff]
      %v235 = vld [vmem:[%s199 + $0xb8] sm:$0xff]
      %v236 = vld [vmem:[%s199 + $0xc0] sm:$0xff]
      %v237 = vld [vmem:[%s199 + $0xc8] sm:$0xff]
      %v238 = vld [vmem:[%s199 + $0xd0] sm:$0xff]
      %v239 = vld [vmem:[%s199 + $0xd8] sm:$0xff]
      %v240 = vld [vmem:[%s199 + $0xe0] sm:$0xff]
      %v241 = vld [vmem:[%s199 + $0xe8] sm:$0xff]
      %v242 = vld [vmem:[%s199 + $0xf0] sm:$0xff]
      %v243 = vld [vmem:[%s199 + $0xf8] sm:$0xff]
      %v244 = vlaneseq
      %v245 = vshrl.u32 %v244, 7
      %v246 = vsub.s32 0, %v245
      %v247 = vrot.slane %v210, %v246
      %v248 = vmul.f32 %v212, %v247
      %v249 = vmul.f32 %v213, %v247
      %v250 = vmul.f32 %v214, %v247
      %v251 = vmul.f32 %v215, %v247
      %v252 = vmul.f32 %v216, %v247
      %v253 = vmul.f32 %v217, %v247
      %v254 = vmul.f32 %v218, %v247
      %v255 = vmul.f32 %v219, %v247
      %v256 = vmul.f32 %v220, %v247
      %v257 = vmul.f32 %v221, %v247
      %v258 = vmul.f32 %v222, %v247
      %v259 = vmul.f32 %v223, %v247
      %v260 = vmul.f32 %v224, %v247
      %v261 = vmul.f32 %v225, %v247
      %v262 = vmul.f32 %v226, %v247
      %v263 = vmul.f32 %v227, %v247
      %v264 = vmul.f32 %v228, %v247
      %v265 = vmul.f32 %v229, %v247
      %v266 = vmul.f32 %v230, %v247
      %v267 = vmul.f32 %v231, %v247
      %v268 = vmul.f32 %v232, %v247
      %v269 = vmul.f32 %v233, %v247
      %v270 = vmul.f32 %v234, %v247
      %v271 = vmul.f32 %v235, %v247
      %v272 = vmul.f32 %v236, %v247
      %v273 = vmul.f32 %v237, %v247
      %v274 = vmul.f32 %v238, %v247
      %v275 = vmul.f32 %v239, %v247
      %v276 = vmul.f32 %v240, %v247
      %v277 = vmul.f32 %v241, %v247
      %v278 = vmul.f32 %v242, %v247
      %v279 = vmul.f32 %v243, %v247
      %v280 = vlaneseq
      %v281 = vshrl.u32 %v280, 7
      %v282 = vsub.s32 0, %v281
      %v283 = vrot.slane %v211, %v282
      %v284 = vadd.f32 %v248, %v283
      %v285 = vadd.f32 %v249, %v283
      %v286 = vadd.f32 %v250, %v283
      %v287 = vadd.f32 %v251, %v283
      %v288 = vadd.f32 %v252, %v283
      %v289 = vadd.f32 %v253, %v283
      %v290 = vadd.f32 %v254, %v283
      %v291 = vadd.f32 %v255, %v283
      %v292 = vadd.f32 %v256, %v283
      %v293 = vadd.f32 %v257, %v283
      %v294 = vadd.f32 %v258, %v283
      %v295 = vadd.f32 %v259, %v283
      %v296 = vadd.f32 %v260, %v283
      %v297 = vadd.f32 %v261, %v283
      %v298 = vadd.f32 %v262, %v283
      %v299 = vadd.f32 %v263, %v283
      %v300 = vadd.f32 %v264, %v283
      %v301 = vadd.f32 %v265, %v283
      %v302 = vadd.f32 %v266, %v283
      %v303 = vadd.f32 %v267, %v283
      %v304 = vadd.f32 %v268, %v283
      %v305 = vadd.f32 %v269, %v283
      %v306 = vadd.f32 %v270, %v283
      %v307 = vadd.f32 %v271, %v283
      %v308 = vadd.f32 %v272, %v283
      %v309 = vadd.f32 %v273, %v283
      %v310 = vadd.f32 %v274, %v283
      %v311 = vadd.f32 %v275, %v283
      %v312 = vadd.f32 %v276, %v283
      %v313 = vadd.f32 %v277, %v283
      %v314 = vadd.f32 %v278, %v283
      %v315 = vadd.f32 %v279, %v283
      %v316 = vmul.f32 %v284, 0.16666667
      %v317 = vmul.f32 %v285, 0.16666667
      %v318 = vmul.f32 %v286, 0.16666667
      %v319 = vmul.f32 %v287, 0.16666667
      %v320 = vmul.f32 %v288, 0.16666667
      %v321 = vmul.f32 %v289, 0.16666667
      %v322 = vmul.f32 %v290, 0.16666667
      %v323 = vmul.f32 %v291, 0.16666667
      %v324 = vmul.f32 %v292, 0.16666667
      %v325 = vmul.f32 %v293, 0.16666667
      %v326 = vmul.f32 %v294, 0.16666667
      %v327 = vmul.f32 %v295, 0.16666667
      %v328 = vmul.f32 %v296, 0.16666667
      %v329 = vmul.f32 %v297, 0.16666667
      %v330 = vmul.f32 %v298, 0.16666667
      %v331 = vmul.f32 %v299, 0.16666667
      %v332 = vmul.f32 %v300, 0.16666667
      %v333 = vmul.f32 %v301, 0.16666667
      %v334 = vmul.f32 %v302, 0.16666667
      %v335 = vmul.f32 %v303, 0.16666667
      %v336 = vmul.f32 %v304, 0.16666667
      %v337 = vmul.f32 %v305, 0.16666667
      %v338 = vmul.f32 %v306, 0.16666667
      %v339 = vmul.f32 %v307, 0.16666667
      %v340 = vmul.f32 %v308, 0.16666667
      %v341 = vmul.f32 %v309, 0.16666667
      %v342 = vmul.f32 %v310, 0.16666667
      %v343 = vmul.f32 %v311, 0.16666667
      %v344 = vmul.f32 %v312, 0.16666667
      %v345 = vmul.f32 %v313, 0.16666667
      %v346 = vmul.f32 %v314, 0.16666667
      %v347 = vmul.f32 %v315, 0.16666667
      %v348 = vadd.f32 %v316, 0.5
      %v349 = vadd.f32 %v317, 0.5
      %v350 = vadd.f32 %v318, 0.5
      %v351 = vadd.f32 %v319, 0.5
      %v352 = vadd.f32 %v320, 0.5
      %v353 = vadd.f32 %v321, 0.5
      %v354 = vadd.f32 %v322, 0.5
      %v355 = vadd.f32 %v323, 0.5
      %v356 = vadd.f32 %v324, 0.5
      %v357 = vadd.f32 %v325, 0.5
      %v358 = vadd.f32 %v326, 0.5
      %v359 = vadd.f32 %v327, 0.5
      %v360 = vadd.f32 %v328, 0.5
      %v361 = vadd.f32 %v329, 0.5
      %v362 = vadd.f32 %v330, 0.5
      %v363 = vadd.f32 %v331, 0.5
      %v364 = vadd.f32 %v332, 0.5
      %v365 = vadd.f32 %v333, 0.5
      %v366 = vadd.f32 %v334, 0.5
      %v367 = vadd.f32 %v335, 0.5
      %v368 = vadd.f32 %v336, 0.5
      %v369 = vadd.f32 %v337, 0.5
      %v370 = vadd.f32 %v338, 0.5
      %v371 = vadd.f32 %v339, 0.5
      %v372 = vadd.f32 %v340, 0.5
      %v373 = vadd.f32 %v341, 0.5
      %v374 = vadd.f32 %v342, 0.5
      %v375 = vadd.f32 %v343, 0.5
      %v376 = vadd.f32 %v344, 0.5
      %v377 = vadd.f32 %v345, 0.5
      %v378 = vadd.f32 %v346, 0.5
      %v379 = vadd.f32 %v347, 0.5
      %v380 = vmax.f32 %v348, 0.0
      %v381 = vmax.f32 %v349, 0.0
      %v382 = vmax.f32 %v350, 0.0
      %v383 = vmax.f32 %v351, 0.0
      %v384 = vmax.f32 %v352, 0.0
      %v385 = vmax.f32 %v353, 0.0
      %v386 = vmax.f32 %v354, 0.0
      %v387 = vmax.f32 %v355, 0.0
      %v388 = vmax.f32 %v356, 0.0
      %v389 = vmax.f32 %v357, 0.0
      %v390 = vmax.f32 %v358, 0.0
      %v391 = vmax.f32 %v359, 0.0
      %v392 = vmax.f32 %v360, 0.0
      %v393 = vmax.f32 %v361, 0.0
      %v394 = vmax.f32 %v362, 0.0
      %v395 = vmax.f32 %v363, 0.0
      %v396 = vmax.f32 %v364, 0.0
      %v397 = vmax.f32 %v365, 0.0
      %v398 = vmax.f32 %v366, 0.0
      %v399 = vmax.f32 %v367, 0.0
      %v400 = vmax.f32 %v368, 0.0
      %v401 = vmax.f32 %v369, 0.0
      %v402 = vmax.f32 %v370, 0.0
      %v403 = vmax.f32 %v371, 0.0
      %v404 = vmax.f32 %v372, 0.0
      %v405 = vmax.f32 %v373, 0.0
      %v406 = vmax.f32 %v374, 0.0
      %v407 = vmax.f32 %v375, 0.0
      %v408 = vmax.f32 %v376, 0.0
      %v409 = vmax.f32 %v377, 0.0
      %v410 = vmax.f32 %v378, 0.0
      %v411 = vmax.f32 %v379, 0.0
      %v412 = vmin.f32 %v380, 1.0
      %v413 = vmin.f32 %v381, 1.0
      %v414 = vmin.f32 %v382, 1.0
      %v415 = vmin.f32 %v383, 1.0
      %v416 = vmin.f32 %v384, 1.0
      %v417 = vmin.f32 %v385, 1.0
      %v418 = vmin.f32 %v386, 1.0
      %v419 = vmin.f32 %v387, 1.0
      %v420 = vmin.f32 %v388, 1.0
      %v421 = vmin.f32 %v389, 1.0
      %v422 = vmin.f32 %v390, 1.0
      %v423 = vmin.f32 %v391, 1.0
      %v424 = vmin.f32 %v392, 1.0
      %v425 = vmin.f32 %v393, 1.0
      %v426 = vmin.f32 %v394, 1.0
      %v427 = vmin.f32 %v395, 1.0
      %v428 = vmin.f32 %v396, 1.0
      %v429 = vmin.f32 %v397, 1.0
      %v430 = vmin.f32 %v398, 1.0
      %v431 = vmin.f32 %v399, 1.0
      %v432 = vmin.f32 %v400, 1.0
      %v433 = vmin.f32 %v401, 1.0
      %v434 = vmin.f32 %v402, 1.0
      %v435 = vmin.f32 %v403, 1.0
      %v436 = vmin.f32 %v404, 1.0
      %v437 = vmin.f32 %v405, 1.0
      %v438 = vmin.f32 %v406, 1.0
      %v439 = vmin.f32 %v407, 1.0
      %v440 = vmin.f32 %v408, 1.0
      %v441 = vmin.f32 %v409, 1.0
      %v442 = vmin.f32 %v410, 1.0
      %v443 = vmin.f32 %v411, 1.0
      %v444 = vmul.f32 %v284, %v412
      %v445 = vmul.f32 %v285, %v413
      %v446 = vmul.f32 %v286, %v414
      %v447 = vmul.f32 %v287, %v415
      %v448 = vmul.f32 %v288, %v416
      %v449 = vmul.f32 %v289, %v417
      %v450 = vmul.f32 %v290, %v418
      %v451 = vmul.f32 %v291, %v419
      %v452 = vmul.f32 %v292, %v420
      %v453 = vmul.f32 %v293, %v421
      %v454 = vmul.f32 %v294, %v422
      %v455 = vmul.f32 %v295, %v423
      %v456 = vmul.f32 %v296, %v424
      %v457 = vmul.f32 %v297, %v425
      %v458 = vmul.f32 %v298, %v426
      %v459 = vmul.f32 %v299, %v427
      %v460 = vmul.f32 %v300, %v428
      %v461 = vmul.f32 %v301, %v429
      %v462 = vmul.f32 %v302, %v430
      %v463 = vmul.f32 %v303, %v431
      %v464 = vmul.f32 %v304, %v432
      %v465 = vmul.f32 %v305, %v433
      %v466 = vmul.f32 %v306, %v434
      %v467 = vmul.f32 %v307, %v435
      %v468 = vmul.f32 %v308, %v436
      %v469 = vmul.f32 %v309, %v437
      %v470 = vmul.f32 %v310, %v438
      %v471 = vmul.f32 %v311, %v439
      %v472 = vmul.f32 %v312, %v440
      %v473 = vmul.f32 %v313, %v441
      %v474 = vmul.f32 %v314, %v442
      %v475 = vmul.f32 %v315, %v443
      %476 = vst [vmem:[#allocation2] sm:$0xff] 0.0
      %477 = vst [vmem:[#allocation2 + $0x8] sm:$0xff] 0.0
      %478 = vst [vmem:[#allocation2 + $0x10] sm:$0xf] 0.0
      %479 = vst [vmem:[#allocation2 + $0x18] sm:$0xff] 0.0
      %480 = vst [vmem:[#allocation2 + $0x20] sm:$0xff] 0.0
      %481 = vst [vmem:[#allocation2 + $0x28] sm:$0xf] 0.0
      %482 = vst [vmem:[#allocation2 + $0x30] sm:$0xff] 0.0
      %483 = vst [vmem:[#allocation2 + $0x38] sm:$0xff] 0.0
      %484 = vst [vmem:[#allocation2 + $0x40] sm:$0xf] 0.0
      %485 = vst [vmem:[#allocation2 + $0x48] sm:$0xff] 0.0
      %486 = vst [vmem:[#allocation2 + $0x50] sm:$0xff] 0.0
      %487 = vst [vmem:[#allocation2 + $0x58] sm:$0xf] 0.0
      %488 = vst [vmem:[#allocation2 + $0x60] sm:$0xff] 0.0
      %489 = vst [vmem:[#allocation2 + $0x68] sm:$0xff] 0.0
      %490 = vst [vmem:[#allocation2 + $0x70] sm:$0xf] 0.0
      %491 = vst [vmem:[#allocation2 + $0x78] sm:$0xff] 0.0
      %492 = vst [vmem:[#allocation2 + $0x80] sm:$0xff] 0.0
      %493 = vst [vmem:[#allocation2 + $0x88] sm:$0xf] 0.0
      %494 = vst [vmem:[#allocation2 + $0x90] sm:$0xff] 0.0
      %495 = vst [vmem:[#allocation2 + $0x98] sm:$0xff] 0.0
      %496 = vst [vmem:[#allocation2 + $0xa0] sm:$0xf] 0.0
      %497 = vst [vmem:[#allocation2 + $0xa8] sm:$0xff] 0.0
      %498 = vst [vmem:[#allocation2 + $0xb0] sm:$0xff] 0.0
      %499 = vst [vmem:[#allocation2 + $0xb8] sm:$0xf] 0.0
      %500 = vst [vmem:[#allocation2 + $0xc0] sm:$0xff] 0.0
      %501 = vst [vmem:[#allocation2 + $0xc8] sm:$0xff] 0.0
      %502 = vst [vmem:[#allocation2 + $0xd0] sm:$0xf] 0.0
      %503 = vst [vmem:[#allocation2 + $0xd8] sm:$0xff] 0.0
      %504 = vst [vmem:[#allocation2 + $0xe0] sm:$0xff] 0.0
      %505 = vst [vmem:[#allocation2 + $0xe8] sm:$0xf] 0.0
      %506 = vst [vmem:[#allocation2 + $0xf0] sm:$0xff] 0.0
      %507 = vst [vmem:[#allocation2 + $0xf8] sm:$0xff] 0.0
      %508 = vst [vmem:[#allocation2 + $0x100] sm:$0xf] 0.0
      %509 = vst [vmem:[#allocation2 + $0x108] sm:$0xff] 0.0
      %510 = vst [vmem:[#allocation2 + $0x110] sm:$0xff] 0.0
      %511 = vst [vmem:[#allocation2 + $0x118] sm:$0xf] 0.0
      %512 = vst [vmem:[#allocation2 + $0x120] sm:$0xff] 0.0
      %513 = vst [vmem:[#allocation2 + $0x128] sm:$0xff] 0.0
      %514 = vst [vmem:[#allocation2 + $0x130] sm:$0xf] 0.0
      %515 = vst [vmem:[#allocation2 + $0x138] sm:$0xff] 0.0
      %516 = vst [vmem:[#allocation2 + $0x140] sm:$0xff] 0.0
      %517 = vst [vmem:[#allocation2 + $0x148] sm:$0xf] 0.0
      %518 = vst [vmem:[#allocation2 + $0x150] sm:$0xff] 0.0
      %519 = vst [vmem:[#allocation2 + $0x158] sm:$0xff] 0.0
      %520 = vst [vmem:[#allocation2 + $0x160] sm:$0xf] 0.0
      %521 = vst [vmem:[#allocation2 + $0x168] sm:$0xff] 0.0
      %522 = vst [vmem:[#allocation2 + $0x170] sm:$0xff] 0.0
      %523 = vst [vmem:[#allocation2 + $0x178] sm:$0xf] 0.0
      %524 = vst [vmem:[#allocation2 + $0x180] sm:$0xff] 0.0
      %525 = vst [vmem:[#allocation2 + $0x188] sm:$0xff] 0.0
      %526 = vst [vmem:[#allocation2 + $0x190] sm:$0xf] 0.0
      %527 = vst [vmem:[#allocation2 + $0x198] sm:$0xff] 0.0
      %528 = vst [vmem:[#allocation2 + $0x1a0] sm:$0xff] 0.0
      %529 = vst [vmem:[#allocation2 + $0x1a8] sm:$0xf] 0.0
      %530 = vst [vmem:[#allocation2 + $0x1b0] sm:$0xff] 0.0
      %531 = vst [vmem:[#allocation2 + $0x1b8] sm:$0xff] 0.0
      %532 = vst [vmem:[#allocation2 + $0x1c0] sm:$0xf] 0.0
      %533 = vst [vmem:[#allocation2 + $0x1c8] sm:$0xff] 0.0
      %534 = vst [vmem:[#allocation2 + $0x1d0] sm:$0xff] 0.0
      %535 = vst [vmem:[#allocation2 + $0x1d8] sm:$0xf] 0.0
      %s536 = scalar_lea.vmem [#allocation2], 48
      %537 = vst [vmem:[%s536 + $0x2] sm:$0xff] %v444
      %538 = vst [vmem:[%s536 + $0xa] sm:$0xff] %v445
      %539 = vst [vmem:[%s536 + $0x1a] sm:$0xff] %v446
      %540 = vst [vmem:[%s536 + $0x22] sm:$0xff] %v447
      %541 = vst [vmem:[%s536 + $0x32] sm:$0xff] %v448
      %542 = vst [vmem:[%s536 + $0x3a] sm:$0xff] %v449
      %543 = vst [vmem:[%s536 + $0x4a] sm:$0xff] %v450
      %544 = vst [vmem:[%s536 + $0x52] sm:$0xff] %v451
      %545 = vst [vmem:[%s536 + $0x62] sm:$0xff] %v452
      %546 = vst [vmem:[%s536 + $0x6a] sm:$0xff] %v453
      %547 = vst [vmem:[%s536 + $0x7a] sm:$0xff] %v454
      %548 = vst [vmem:[%s536 + $0x82] sm:$0xff] %v455
      %549 = vst [vmem:[%s536 + $0x92] sm:$0xff] %v456
      %550 = vst [vmem:[%s536 + $0x9a] sm:$0xff] %v457
      %551 = vst [vmem:[%s536 + $0xaa] sm:$0xff] %v458
      %552 = vst [vmem:[%s536 + $0xb2] sm:$0xff] %v459
      %553 = vst [vmem:[%s536 + $0xc2] sm:$0xff] %v460
      %554 = vst [vmem:[%s536 + $0xca] sm:$0xff] %v461
      %555 = vst [vmem:[%s536 + $0xda] sm:$0xff] %v462
      %556 = vst [vmem:[%s536 + $0xe2] sm:$0xff] %v463
      %557 = vst [vmem:[%s536 + $0xf2] sm:$0xff] %v464
      %558 = vst [vmem:[%s536 + $0xfa] sm:$0xff] %v465
      %559 = vst [vmem:[%s536 + $0x10a] sm:$0xff] %v466
      %560 = vst [vmem:[%s536 + $0x112] sm:$0xff] %v467
      %561 = vst [vmem:[%s536 + $0x122] sm:$0xff] %v468
      %562 = vst [vmem:[%s536 + $0x12a] sm:$0xff] %v469
      %563 = vst [vmem:[%s536 + $0x13a] sm:$0xff] %v470
      %564 = vst [vmem:[%s536 + $0x142] sm:$0xff] %v471
      %565 = vst [vmem:[%s536 + $0x152] sm:$0xff] %v472
      %566 = vst [vmem:[%s536 + $0x15a] sm:$0xff] %v473
      %567 = vst [vmem:[%s536 + $0x16a] sm:$0xff] %v474
      %568 = vst [vmem:[%s536 + $0x172] sm:$0xff] %v475
      %v569 = vld [vmem:[#allocation2] sm:$0xff]
      %v570 = vld [vmem:[#allocation2 + $0x8] sm:$0xff]
      %v571 = vld [vmem:[#allocation2 + $0x18] sm:$0xff]
      %v572 = vld [vmem:[#allocation2 + $0x20] sm:$0xff]
      %v573 = vld [vmem:[#allocation2 + $0x30] sm:$0xff]
      %v574 = vld [vmem:[#allocation2 + $0x38] sm:$0xff]
      %v575 = vld [vmem:[#allocation2 + $0x48] sm:$0xff]
      %v576 = vld [vmem:[#allocation2 + $0x50] sm:$0xff]
      %v577 = vld [vmem:[#allocation2 + $0x60] sm:$0xff]
      %v578 = vld [vmem:[#allocation2 + $0x68] sm:$0xff]
      %v579 = vld [vmem:[#allocation2 + $0x78] sm:$0xff]
      %v580 = vld [vmem:[#allocation2 + $0x80] sm:$0xff]
      %v581 = vld [vmem:[#allocation2 + $0x90] sm:$0xff]
      %v582 = vld [vmem:[#allocation2 + $0x98] sm:$0xff]
      %v583 = vld [vmem:[#allocation2 + $0xa8] sm:$0xff]
      %v584 = vld [vmem:[#allocation2 + $0xb0] sm:$0xff]
      %v585 = vld [vmem:[#allocation2 + $0xc0] sm:$0xff]
      %v586 = vld [vmem:[#allocation2 + $0xc8] sm:$0xff]
      %v587 = vld [vmem:[#allocation2 + $0xd8] sm:$0xff]
      %v588 = vld [vmem:[#allocation2 + $0xe0] sm:$0xff]
      %v589 = vld [vmem:[#allocation2 + $0xf0] sm:$0xff]
      %v590 = vld [vmem:[#allocation2 + $0xf8] sm:$0xff]
      %v591 = vld [vmem:[#allocation2 + $0x108] sm:$0xff]
      %v592 = vld [vmem:[#allocation2 + $0x110] sm:$0xff]
      %v593 = vld [vmem:[#allocation2 + $0x120] sm:$0xff]
      %v594 = vld [vmem:[#allocation2 + $0x128] sm:$0xff]
      %v595 = vld [vmem:[#allocation2 + $0x138] sm:$0xff]
      %v596 = vld [vmem:[#allocation2 + $0x140] sm:$0xff]
      %v597 = vld [vmem:[#allocation2 + $0x150] sm:$0xff]
      %v598 = vld [vmem:[#allocation2 + $0x158] sm:$0xff]
      %v599 = vld [vmem:[#allocation2 + $0x168] sm:$0xff]
      %v600 = vld [vmem:[#allocation2 + $0x170] sm:$0xff]
      %v601 = vld [vmem:[#allocation2 + $0x180] sm:$0xff]
      %v602 = vld [vmem:[#allocation2 + $0x188] sm:$0xff]
      %v603 = vld [vmem:[#allocation2 + $0x198] sm:$0xff]
      %v604 = vld [vmem:[#allocation2 + $0x1a0] sm:$0xff]
      %v605 = vld [vmem:[#allocation2 + $0x1b0] sm:$0xff]
      %v606 = vld [vmem:[#allocation2 + $0x1b8] sm:$0xff]
      %v607 = vld [vmem:[#allocation2 + $0x1c8] sm:$0xff]
      %v608 = vld [vmem:[#allocation2 + $0x1d0] sm:$0xff]
      %609 = vst [vmem:[#allocation3] sm:$0xff] %v569
      %610 = vst [vmem:[#allocation3 + $0x8] sm:$0xff] %v570
      %611 = vst [vmem:[#allocation3 + $0x10] sm:$0xff] %v571
      %612 = vst [vmem:[#allocation3 + $0x18] sm:$0xff] %v572
      %613 = vst [vmem:[#allocation3 + $0x20] sm:$0xff] %v573
      %614 = vst [vmem:[#allocation3 + $0x28] sm:$0xff] %v574
      %615 = vst [vmem:[#allocation3 + $0x30] sm:$0xff] %v575
      %616 = vst [vmem:[#allocation3 + $0x38] sm:$0xff] %v576
      %617 = vst [vmem:[#allocation3 + $0x40] sm:$0xff] %v577
      %618 = vst [vmem:[#allocation3 + $0x48] sm:$0xff] %v578
      %619 = vst [vmem:[#allocation3 + $0x50] sm:$0xff] %v579
      %620 = vst [vmem:[#allocation3 + $0x58] sm:$0xff] %v580
      %621 = vst [vmem:[#allocation3 + $0x60] sm:$0xff] %v581
      %622 = vst [vmem:[#allocation3 + $0x68] sm:$0xff] %v582
      %623 = vst [vmem:[#allocation3 + $0x70] sm:$0xff] %v583
      %624 = vst [vmem:[#allocation3 + $0x78] sm:$0xff] %v584
      %625 = vst [vmem:[#allocation3 + $0x80] sm:$0xff] %v585
      %626 = vst [vmem:[#allocation3 + $0x88] sm:$0xff] %v586
      %627 = vst [vmem:[#allocation3 + $0x90] sm:$0xff] %v587
      %628 = vst [vmem:[#allocation3 + $0x98] sm:$0xff] %v588
      %629 = vst [vmem:[#allocation3 + $0xa0] sm:$0xff] %v589
      %630 = vst [vmem:[#allocation3 + $0xa8] sm:$0xff] %v590
      %631 = vst [vmem:[#allocation3 + $0xb0] sm:$0xff] %v591
      %632 = vst [vmem:[#allocation3 + $0xb8] sm:$0xff] %v592
      %633 = vst [vmem:[#allocation3 + $0xc0] sm:$0xff] %v593
      %634 = vst [vmem:[#allocation3 + $0xc8] sm:$0xff] %v594
      %635 = vst [vmem:[#allocation3 + $0xd0] sm:$0xff] %v595
      %636 = vst [vmem:[#allocation3 + $0xd8] sm:$0xff] %v596
      %637 = vst [vmem:[#allocation3 + $0xe0] sm:$0xff] %v597
      %638 = vst [vmem:[#allocation3 + $0xe8] sm:$0xff] %v598
      %639 = vst [vmem:[#allocation3 + $0xf0] sm:$0xff] %v599
      %640 = vst [vmem:[#allocation3 + $0xf8] sm:$0xff] %v600
      %641 = vst [vmem:[#allocation3 + $0x100] sm:$0xff] %v601
      %642 = vst [vmem:[#allocation3 + $0x108] sm:$0xff] %v602
      %643 = vst [vmem:[#allocation3 + $0x110] sm:$0xff] %v603
      %644 = vst [vmem:[#allocation3 + $0x118] sm:$0xff] %v604
      %645 = vst [vmem:[#allocation3 + $0x120] sm:$0xff] %v605
      %646 = vst [vmem:[#allocation3 + $0x128] sm:$0xff] %v606
      %647 = vst [vmem:[#allocation3 + $0x130] sm:$0xff] %v607
      %648 = vst [vmem:[#allocation3 + $0x138] sm:$0xff] %v608
      %v649 = vld [vmem:[#allocation2 + $0x1] sm:$0xff]
      %v650 = vld [vmem:[#allocation2 + $0x9] sm:$0xff]
      %v651 = vld [vmem:[#allocation2 + $0x19] sm:$0xff]
      %v652 = vld [vmem:[#allocation2 + $0x21] sm:$0xff]
      %v653 = vld [vmem:[#allocation2 + $0x31] sm:$0xff]
      %v654 = vld [vmem:[#allocation2 + $0x39] sm:$0xff]
      %v655 = vld [vmem:[#allocation2 + $0x49] sm:$0xff]
      %v656 = vld [vmem:[#allocation2 + $0x51] sm:$0xff]
      %v657 = vld [vmem:[#allocation2 + $0x61] sm:$0xff]
      %v658 = vld [vmem:[#allocation2 + $0x69] sm:$0xff]
      %v659 = vld [vmem:[#allocation2 + $0x79] sm:$0xff]
      %v660 = vld [vmem:[#allocation2 + $0x81] sm:$0xff]
      %v661 = vld [vmem:[#allocation2 + $0x91] sm:$0xff]
      %v662 = vld [vmem:[#allocation2 + $0x99] sm:$0xff]
      %v663 = vld [vmem:[#allocation2 + $0xa9] sm:$0xff]
      %v664 = vld [vmem:[#allocation2 + $0xb1] sm:$0xff]
      %v665 = vld [vmem:[#allocation2 + $0xc1] sm:$0xff]
      %v666 = vld [vmem:[#allocation2 + $0xc9] sm:$0xff]
      %v667 = vld [vmem:[#allocation2 + $0xd9] sm:$0xff]
      %v668 = vld [vmem:[#allocation2 + $0xe1] sm:$0xff]
      %v669 = vld [vmem:[#allocation2 + $0xf1] sm:$0xff]
      %v670 = vld [vmem:[#allocation2 + $0xf9] sm:$0xff]
      %v671 = vld [vmem:[#allocation2 + $0x109] sm:$0xff]
      %v672 = vld [vmem:[#allocation2 + $0x111] sm:$0xff]
      %v673 = vld [vmem:[#allocation2 + $0x121] sm:$0xff]
      %v674 = vld [vmem:[#allocation2 + $0x129] sm:$0xff]
      %v675 = vld [vmem:[#allocation2 + $0x139] sm:$0xff]
      %v676 = vld [vmem:[#allocation2 + $0x141] sm:$0xff]
      %v677 = vld [vmem:[#allocation2 + $0x151] sm:$0xff]
      %v678 = vld [vmem:[#allocation2 + $0x159] sm:$0xff]
      %v679 = vld [vmem:[#allocation2 + $0x169] sm:$0xff]
      %v680 = vld [vmem:[#allocation2 + $0x171] sm:$0xff]
      %v681 = vld [vmem:[#allocation2 + $0x181] sm:$0xff]
      %v682 = vld [vmem:[#allocation2 + $0x189] sm:$0xff]
      %v683 = vld [vmem:[#allocation2 + $0x199] sm:$0xff]
      %v684 = vld [vmem:[#allocation2 + $0x1a1] sm:$0xff]
      %v685 = vld [vmem:[#allocation2 + $0x1b1] sm:$0xff]
      %v686 = vld [vmem:[#allocation2 + $0x1b9] sm:$0xff]
      %v687 = vld [vmem:[#allocation2 + $0x1c9] sm:$0xff]
      %v688 = vld [vmem:[#allocation2 + $0x1d1] sm:$0xff]
      %s689 = scalar_lea.vmem [#allocation3], 320
      %690 = vst [vmem:[%s689] sm:$0xff] %v649
      %691 = vst [vmem:[%s689 + $0x8] sm:$0xff] %v650
      %692 = vst [vmem:[%s689 + $0x10] sm:$0xff] %v651
      %693 = vst [vmem:[%s689 + $0x18] sm:$0xff] %v652
      %694 = vst [vmem:[%s689 + $0x20] sm:$0xff] %v653
      %695 = vst [vmem:[%s689 + $0x28] sm:$0xff] %v654
      %696 = vst [vmem:[%s689 + $0x30] sm:$0xff] %v655
      %697 = vst [vmem:[%s689 + $0x38] sm:$0xff] %v656
      %698 = vst [vmem:[%s689 + $0x40] sm:$0xff] %v657
      %699 = vst [vmem:[%s689 + $0x48] sm:$0xff] %v658
      %700 = vst [vmem:[%s689 + $0x50] sm:$0xff] %v659
      %701 = vst [vmem:[%s689 + $0x58] sm:$0xff] %v660
      %702 = vst [vmem:[%s689 + $0x60] sm:$0xff] %v661
      %703 = vst [vmem:[%s689 + $0x68] sm:$0xff] %v662
      %704 = vst [vmem:[%s689 + $0x70] sm:$0xff] %v663
      %705 = vst [vmem:[%s689 + $0x78] sm:$0xff] %v664
      %706 = vst [vmem:[%s689 + $0x80] sm:$0xff] %v665
      %707 = vst [vmem:[%s689 + $0x88] sm:$0xff] %v666
      %708 = vst [vmem:[%s689 + $0x90] sm:$0xff] %v667
      %709 = vst [vmem:[%s689 + $0x98] sm:$0xff] %v668
      %710 = vst [vmem:[%s689 + $0xa0] sm:$0xff] %v669
      %711 = vst [vmem:[%s689 + $0xa8] sm:$0xff] %v670
      %712 = vst [vmem:[%s689 + $0xb0] sm:$0xff] %v671
      %713 = vst [vmem:[%s689 + $0xb8] sm:$0xff] %v672
      %714 = vst [vmem:[%s689 + $0xc0] sm:$0xff] %v673
      %715 = vst [vmem:[%s689 + $0xc8] sm:$0xff] %v674
      %716 = vst [vmem:[%s689 + $0xd0] sm:$0xff] %v675
      %717 = vst [vmem:[%s689 + $0xd8] sm:$0xff] %v676
      %718 = vst [vmem:[%s689 + $0xe0] sm:$0xff] %v677
      %719 = vst [vmem:[%s689 + $0xe8] sm:$0xff] %v678
      %720 = vst [vmem:[%s689 + $0xf0] sm:$0xff] %v679
      %721 = vst [vmem:[%s689 + $0xf8] sm:$0xff] %v680
      %722 = vst [vmem:[%s689 + $0x100] sm:$0xff] %v681
      %723 = vst [vmem:[%s689 + $0x108] sm:$0xff] %v682
      %724 = vst [vmem:[%s689 + $0x110] sm:$0xff] %v683
      %725 = vst [vmem:[%s689 + $0x118] sm:$0xff] %v684
      %726 = vst [vmem:[%s689 + $0x120] sm:$0xff] %v685
      %727 = vst [vmem:[%s689 + $0x128] sm:$0xff] %v686
      %728 = vst [vmem:[%s689 + $0x130] sm:$0xff] %v687
      %729 = vst [vmem:[%s689 + $0x138] sm:$0xff] %v688
      %v730 = vld [vmem:[#allocation2 + $0x2] sm:$0xff]
      %v731 = vld [vmem:[#allocation2 + $0xa] sm:$0xff]
      %v732 = vld [vmem:[#allocation2 + $0x1a] sm:$0xff]
      %v733 = vld [vmem:[#allocation2 + $0x22] sm:$0xff]
      %v734 = vld [vmem:[#allocation2 + $0x32] sm:$0xff]
      %v735 = vld [vmem:[#allocation2 + $0x3a] sm:$0xff]
      %v736 = vld [vmem:[#allocation2 + $0x4a] sm:$0xff]
      %v737 = vld [vmem:[#allocation2 + $0x52] sm:$0xff]
      %v738 = vld [vmem:[#allocation2 + $0x62] sm:$0xff]
      %v739 = vld [vmem:[#allocation2 + $0x6a] sm:$0xff]
      %v740 = vld [vmem:[#allocation2 + $0x7a] sm:$0xff]
      %v741 = vld [vmem:[#allocation2 + $0x82] sm:$0xff]
      %v742 = vld [vmem:[#allocation2 + $0x92] sm:$0xff]
      %v743 = vld [vmem:[#allocation2 + $0x9a] sm:$0xff]
      %v744 = vld [vmem:[#allocation2 + $0xaa] sm:$0xff]
      %v745 = vld [vmem:[#allocation2 + $0xb2] sm:$0xff]
      %v746 = vld [vmem:[#allocation2 + $0xc2] sm:$0xff]
      %v747 = vld [vmem:[#allocation2 + $0xca] sm:$0xff]
      %v748 = vld [vmem:[#allocation2 + $0xda] sm:$0xff]
      %v749 = vld [vmem:[#allocation2 + $0xe2] sm:$0xff]
      %v750 = vld [vmem:[#allocation2 + $0xf2] sm:$0xff]
      %v751 = vld [vmem:[#allocation2 + $0xfa] sm:$0xff]
      %v752 = vld [vmem:[#allocation2 + $0x10a] sm:$0xff]
      %v753 = vld [vmem:[#allocation2 + $0x112] sm:$0xff]
      %v754 = vld [vmem:[#allocation2 + $0x122] sm:$0xff]
      %v755 = vld [vmem:[#allocation2 + $0x12a] sm:$0xff]
      %v756 = vld [vmem:[#allocation2 + $0x13a] sm:$0xff]
      %v757 = vld [vmem:[#allocation2 + $0x142] sm:$0xff]
      %v758 = vld [vmem:[#allocation2 + $0x152] sm:$0xff]
      %v759 = vld [vmem:[#allocation2 + $0x15a] sm:$0xff]
      %v760 = vld [vmem:[#allocation2 + $0x16a] sm:$0xff]
      %v761 = vld [vmem:[#allocation2 + $0x172] sm:$0xff]
      %v762 = vld [vmem:[#allocation2 + $0x182] sm:$0xff]
      %v763 = vld [vmem:[#allocation2 + $0x18a] sm:$0xff]
      %v764 = vld [vmem:[#allocation2 + $0x19a] sm:$0xff]
      %v765 = vld [vmem:[#allocation2 + $0x1a2] sm:$0xff]
      %v766 = vld [vmem:[#allocation2 + $0x1b2] sm:$0xff]
      %v767 = vld [vmem:[#allocation2 + $0x1ba] sm:$0xff]
      %v768 = vld [vmem:[#allocation2 + $0x1ca] sm:$0xff]
      %v769 = vld [vmem:[#allocation2 + $0x1d2] sm:$0xff]
      %s770 = scalar_lea.vmem [#allocation3], 640
      %771 = vst [vmem:[%s770] sm:$0xff] %v730
      %772 = vst [vmem:[%s770 + $0x8] sm:$0xff] %v731
      %773 = vst [vmem:[%s770 + $0x10] sm:$0xff] %v732
      %774 = vst [vmem:[%s770 + $0x18] sm:$0xff] %v733
      %775 = vst [vmem:[%s770 + $0x20] sm:$0xff] %v734
      %776 = vst [vmem:[%s770 + $0x28] sm:$0xff] %v735
      %777 = vst [vmem:[%s770 + $0x30] sm:$0xff] %v736
      %778 = vst [vmem:[%s770 + $0x38] sm:$0xff] %v737
      %779 = vst [vmem:[%s770 + $0x40] sm:$0xff] %v738
      %780 = vst [vmem:[%s770 + $0x48] sm:$0xff] %v739
      %781 = vst [vmem:[%s770 + $0x50] sm:$0xff] %v740
      %782 = vst [vmem:[%s770 + $0x58] sm:$0xff] %v741
      %783 = vst [vmem:[%s770 + $0x60] sm:$0xff] %v742
      %784 = vst [vmem:[%s770 + $0x68] sm:$0xff] %v743
      %785 = vst [vmem:[%s770 + $0x70] sm:$0xff] %v744
      %786 = vst [vmem:[%s770 + $0x78] sm:$0xff] %v745
      %787 = vst [vmem:[%s770 + $0x80] sm:$0xff] %v746
      %788 = vst [vmem:[%s770 + $0x88] sm:$0xff] %v747
      %789 = vst [vmem:[%s770 + $0x90] sm:$0xff] %v748
      %790 = vst [vmem:[%s770 + $0x98] sm:$0xff] %v749
      %791 = vst [vmem:[%s770 + $0xa0] sm:$0xff] %v750
      %792 = vst [vmem:[%s770 + $0xa8] sm:$0xff] %v751
      %793 = vst [vmem:[%s770 + $0xb0] sm:$0xff] %v752
      %794 = vst [vmem:[%s770 + $0xb8] sm:$0xff] %v753
      %795 = vst [vmem:[%s770 + $0xc0] sm:$0xff] %v754
      %796 = vst [vmem:[%s770 + $0xc8] sm:$0xff] %v755
      %797 = vst [vmem:[%s770 + $0xd0] sm:$0xff] %v756
      %798 = vst [vmem:[%s770 + $0xd8] sm:$0xff] %v757
      %799 = vst [vmem:[%s770 + $0xe0] sm:$0xff] %v758
      %800 = vst [vmem:[%s770 + $0xe8] sm:$0xff] %v759
      %801 = vst [vmem:[%s770 + $0xf0] sm:$0xff] %v760
      %802 = vst [vmem:[%s770 + $0xf8] sm:$0xff] %v761
      %803 = vst [vmem:[%s770 + $0x100] sm:$0xff] %v762
      %804 = vst [vmem:[%s770 + $0x108] sm:$0xff] %v763
      %805 = vst [vmem:[%s770 + $0x110] sm:$0xff] %v764
      %806 = vst [vmem:[%s770 + $0x118] sm:$0xff] %v765
      %807 = vst [vmem:[%s770 + $0x120] sm:$0xff] %v766
      %808 = vst [vmem:[%s770 + $0x128] sm:$0xff] %v767
      %809 = vst [vmem:[%s770 + $0x130] sm:$0xff] %v768
      %810 = vst [vmem:[%s770 + $0x138] sm:$0xff] %v769
      %v811 = vld [vmem:[#allocation2 + $0x3] sm:$0xff]
      %v812 = vld [vmem:[#allocation2 + $0xb] sm:$0xff]
      %v813 = vld [vmem:[#allocation2 + $0x1b] sm:$0xff]
      %v814 = vld [vmem:[#allocation2 + $0x23] sm:$0xff]
      %v815 = vld [vmem:[#allocation2 + $0x33] sm:$0xff]
      %v816 = vld [vmem:[#allocation2 + $0x3b] sm:$0xff]
      %v817 = vld [vmem:[#allocation2 + $0x4b] sm:$0xff]
      %v818 = vld [vmem:[#allocation2 + $0x53] sm:$0xff]
      %v819 = vld [vmem:[#allocation2 + $0x63] sm:$0xff]
      %v820 = vld [vmem:[#allocation2 + $0x6b] sm:$0xff]
      %v821 = vld [vmem:[#allocation2 + $0x7b] sm:$0xff]
      %v822 = vld [vmem:[#allocation2 + $0x83] sm:$0xff]
      %v823 = vld [vmem:[#allocation2 + $0x93] sm:$0xff]
      %v824 = vld [vmem:[#allocation2 + $0x9b] sm:$0xff]
      %v825 = vld [vmem:[#allocation2 + $0xab] sm:$0xff]
      %v826 = vld [vmem:[#allocation2 + $0xb3] sm:$0xff]
      %v827 = vld [vmem:[#allocation2 + $0xc3] sm:$0xff]
      %v828 = vld [vmem:[#allocation2 + $0xcb] sm:$0xff]
      %v829 = vld [vmem:[#allocation2 + $0xdb] sm:$0xff]
      %v830 = vld [vmem:[#allocation2 + $0xe3] sm:$0xff]
      %v831 = vld [vmem:[#allocation2 + $0xf3] sm:$0xff]
      %v832 = vld [vmem:[#allocation2 + $0xfb] sm:$0xff]
      %v833 = vld [vmem:[#allocation2 + $0x10b] sm:$0xff]
      %v834 = vld [vmem:[#allocation2 + $0x113] sm:$0xff]
      %v835 = vld [vmem:[#allocation2 + $0x123] sm:$0xff]
      %v836 = vld [vmem:[#allocation2 + $0x12b] sm:$0xff]
      %v837 = vld [vmem:[#allocation2 + $0x13b] sm:$0xff]
      %v838 = vld [vmem:[#allocation2 + $0x143] sm:$0xff]
      %v839 = vld [vmem:[#allocation2 + $0x153] sm:$0xff]
      %v840 = vld [vmem:[#allocation2 + $0x15b] sm:$0xff]
      %v841 = vld [vmem:[#allocation2 + $0x16b] sm:$0xff]
      %v842 = vld [vmem:[#allocation2 + $0x173] sm:$0xff]
      %v843 = vld [vmem:[#allocation2 + $0x183] sm:$0xff]
      %v844 = vld [vmem:[#allocation2 + $0x18b] sm:$0xff]
      %v845 = vld [vmem:[#allocation2 + $0x19b] sm:$0xff]
      %v846 = vld [vmem:[#allocation2 + $0x1a3] sm:$0xff]
      %v847 = vld [vmem:[#allocation2 + $0x1b3] sm:$0xff]
      %v848 = vld [vmem:[#allocation2 + $0x1bb] sm:$0xff]
      %v849 = vld [vmem:[#allocation2 + $0x1cb] sm:$0xff]
      %v850 = vld [vmem:[#allocation2 + $0x1d3] sm:$0xff]
      %s851 = scalar_lea.vmem [#allocation3], 960
      %852 = vst [vmem:[%s851] sm:$0xff] %v811
      %853 = vst [vmem:[%s851 + $0x8] sm:$0xff] %v812
      %854 = vst [vmem:[%s851 + $0x10] sm:$0xff] %v813
      %855 = vst [vmem:[%s851 + $0x18] sm:$0xff] %v814
      %856 = vst [vmem:[%s851 + $0x20] sm:$0xff] %v815
      %857 = vst [vmem:[%s851 + $0x28] sm:$0xff] %v816
      %858 = vst [vmem:[%s851 + $0x30] sm:$0xff] %v817
      %859 = vst [vmem:[%s851 + $0x38] sm:$0xff] %v818
      %860 = vst [vmem:[%s851 + $0x40] sm:$0xff] %v819
      %861 = vst [vmem:[%s851 + $0x48] sm:$0xff] %v820
      %862 = vst [vmem:[%s851 + $0x50] sm:$0xff] %v821
      %863 = vst [vmem:[%s851 + $0x58] sm:$0xff] %v822
      %864 = vst [vmem:[%s851 + $0x60] sm:$0xff] %v823
      %865 = vst [vmem:[%s851 + $0x68] sm:$0xff] %v824
      %866 = vst [vmem:[%s851 + $0x70] sm:$0xff] %v825
      %867 = vst [vmem:[%s851 + $0x78] sm:$0xff] %v826
      %868 = vst [vmem:[%s851 + $0x80] sm:$0xff] %v827
      %869 = vst [vmem:[%s851 + $0x88] sm:$0xff] %v828
      %870 = vst [vmem:[%s851 + $0x90] sm:$0xff] %v829
      %871 = vst [vmem:[%s851 + $0x98] sm:$0xff] %v830
      %872 = vst [vmem:[%s851 + $0xa0] sm:$0xff] %v831
      %873 = vst [vmem:[%s851 + $0xa8] sm:$0xff] %v832
      %874 = vst [vmem:[%s851 + $0xb0] sm:$0xff] %v833
      %875 = vst [vmem:[%s851 + $0xb8] sm:$0xff] %v834
      %876 = vst [vmem:[%s851 + $0xc0] sm:$0xff] %v835
      %877 = vst [vmem:[%s851 + $0xc8] sm:$0xff] %v836
      %878 = vst [vmem:[%s851 + $0xd0] sm:$0xff] %v837
      %879 = vst [vmem:[%s851 + $0xd8] sm:$0xff] %v838
      %880 = vst [vmem:[%s851 + $0xe0] sm:$0xff] %v839
      %881 = vst [vmem:[%s851 + $0xe8] sm:$0xff] %v840
      %882 = vst [vmem:[%s851 + $0xf0] sm:$0xff] %v841
      %883 = vst [vmem:[%s851 + $0xf8] sm:$0xff] %v842
      %884 = vst [vmem:[%s851 + $0x100] sm:$0xff] %v843
      %885 = vst [vmem:[%s851 + $0x108] sm:$0xff] %v844
      %886 = vst [vmem:[%s851 + $0x110] sm:$0xff] %v845
      %887 = vst [vmem:[%s851 + $0x118] sm:$0xff] %v846
      %888 = vst [vmem:[%s851 + $0x120] sm:$0xff] %v847
      %889 = vst [vmem:[%s851 + $0x128] sm:$0xff] %v848
      %890 = vst [vmem:[%s851 + $0x130] sm:$0xff] %v849
      %891 = vst [vmem:[%s851 + $0x138] sm:$0xff] %v850
      %v892 = vld [vmem:[#allocation2 + $0x4] sm:$0xff]
      %v893 = vld [vmem:[#allocation2 + $0xc] sm:$0xff]
      %v894 = vld [vmem:[#allocation2 + $0x1c] sm:$0xff]
      %v895 = vld [vmem:[#allocation2 + $0x24] sm:$0xff]
      %v896 = vld [vmem:[#allocation2 + $0x34] sm:$0xff]
      %v897 = vld [vmem:[#allocation2 + $0x3c] sm:$0xff]
      %v898 = vld [vmem:[#allocation2 + $0x4c] sm:$0xff]
      %v899 = vld [vmem:[#allocation2 + $0x54] sm:$0xff]
      %v900 = vld [vmem:[#allocation2 + $0x64] sm:$0xff]
      %v901 = vld [vmem:[#allocation2 + $0x6c] sm:$0xff]
      %v902 = vld [vmem:[#allocation2 + $0x7c] sm:$0xff]
      %v903 = vld [vmem:[#allocation2 + $0x84] sm:$0xff]
      %v904 = vld [vmem:[#allocation2 + $0x94] sm:$0xff]
      %v905 = vld [vmem:[#allocation2 + $0x9c] sm:$0xff]
      %v906 = vld [vmem:[#allocation2 + $0xac] sm:$0xff]
      %v907 = vld [vmem:[#allocation2 + $0xb4] sm:$0xff]
      %v908 = vld [vmem:[#allocation2 + $0xc4] sm:$0xff]
      %v909 = vld [vmem:[#allocation2 + $0xcc] sm:$0xff]
      %v910 = vld [vmem:[#allocation2 + $0xdc] sm:$0xff]
      %v911 = vld [vmem:[#allocation2 + $0xe4] sm:$0xff]
      %v912 = vld [vmem:[#allocation2 + $0xf4] sm:$0xff]
      %v913 = vld [vmem:[#allocation2 + $0xfc] sm:$0xff]
      %v914 = vld [vmem:[#allocation2 + $0x10c] sm:$0xff]
      %v915 = vld [vmem:[#allocation2 + $0x114] sm:$0xff]
      %v916 = vld [vmem:[#allocation2 + $0x124] sm:$0xff]
      %v917 = vld [vmem:[#allocation2 + $0x12c] sm:$0xff]
      %v918 = vld [vmem:[#allocation2 + $0x13c] sm:$0xff]
      %v919 = vld [vmem:[#allocation2 + $0x144] sm:$0xff]
      %v920 = vld [vmem:[#allocation2 + $0x154] sm:$0xff]
      %v921 = vld [vmem:[#allocation2 + $0x15c] sm:$0xff]
      %v922 = vld [vmem:[#allocation2 + $0x16c] sm:$0xff]
      %v923 = vld [vmem:[#allocation2 + $0x174] sm:$0xff]
      %v924 = vld [vmem:[#allocation2 + $0x184] sm:$0xff]
      %v925 = vld [vmem:[#allocation2 + $0x18c] sm:$0xff]
      %v926 = vld [vmem:[#allocation2 + $0x19c] sm:$0xff]
      %v927 = vld [vmem:[#allocation2 + $0x1a4] sm:$0xff]
      %v928 = vld [vmem:[#allocation2 + $0x1b4] sm:$0xff]
      %v929 = vld [vmem:[#allocation2 + $0x1bc] sm:$0xff]
      %v930 = vld [vmem:[#allocation2 + $0x1cc] sm:$0xff]
      %v931 = vld [vmem:[#allocation2 + $0x1d4] sm:$0xff]
      %s932 = scalar_lea.vmem [#allocation3], 1280
      %933 = vst [vmem:[%s932] sm:$0xff] %v892
      %934 = vst [vmem:[%s932 + $0x8] sm:$0xff] %v893
      %935 = vst [vmem:[%s932 + $0x10] sm:$0xff] %v894
      %936 = vst [vmem:[%s932 + $0x18] sm:$0xff] %v895
      %937 = vst [vmem:[%s932 + $0x20] sm:$0xff] %v896
      %938 = vst [vmem:[%s932 + $0x28] sm:$0xff] %v897
      %939 = vst [vmem:[%s932 + $0x30] sm:$0xff] %v898
      %940 = vst [vmem:[%s932 + $0x38] sm:$0xff] %v899
      %941 = vst [vmem:[%s932 + $0x40] sm:$0xff] %v900
      %942 = vst [vmem:[%s932 + $0x48] sm:$0xff] %v901
      %943 = vst [vmem:[%s932 + $0x50] sm:$0xff] %v902
      %944 = vst [vmem:[%s932 + $0x58] sm:$0xff] %v903
      %945 = vst [vmem:[%s932 + $0x60] sm:$0xff] %v904
      %946 = vst [vmem:[%s932 + $0x68] sm:$0xff] %v905
      %947 = vst [vmem:[%s932 + $0x70] sm:$0xff] %v906
      %948 = vst [vmem:[%s932 + $0x78] sm:$0xff] %v907
      %949 = vst [vmem:[%s932 + $0x80] sm:$0xff] %v908
      %950 = vst [vmem:[%s932 + $0x88] sm:$0xff] %v909
      %951 = vst [vmem:[%s932 + $0x90] sm:$0xff] %v910
      %952 = vst [vmem:[%s932 + $0x98] sm:$0xff] %v911
      %953 = vst [vmem:[%s932 + $0xa0] sm:$0xff] %v912
      %954 = vst [vmem:[%s932 + $0xa8] sm:$0xff] %v913
      %955 = vst [vmem:[%s932 + $0xb0] sm:$0xff] %v914
      %956 = vst [vmem:[%s932 + $0xb8] sm:$0xff] %v915
      %957 = vst [vmem:[%s932 + $0xc0] sm:$0xff] %v916
      %958 = vst [vmem:[%s932 + $0xc8] sm:$0xff] %v917
      %959 = vst [vmem:[%s932 + $0xd0] sm:$0xff] %v918
      %960 = vst [vmem:[%s932 + $0xd8] sm:$0xff] %v919
      %961 = vst [vmem:[%s932 + $0xe0] sm:$0xff] %v920
      %962 = vst [vmem:[%s932 + $0xe8] sm:$0xff] %v921
      %963 = vst [vmem:[%s932 + $0xf0] sm:$0xff] %v922
      %964 = vst [vmem:[%s932 + $0xf8] sm:$0xff] %v923
      %965 = vst [vmem:[%s932 + $0x100] sm:$0xff] %v924
      %966 = vst [vmem:[%s932 + $0x108] sm:$0xff] %v925
      %967 = vst [vmem:[%s932 + $0x110] sm:$0xff] %v926
      %968 = vst [vmem:[%s932 + $0x118] sm:$0xff] %v927
      %969 = vst [vmem:[%s932 + $0x120] sm:$0xff] %v928
      %970 = vst [vmem:[%s932 + $0x128] sm:$0xff] %v929
      %971 = vst [vmem:[%s932 + $0x130] sm:$0xff] %v930
      %972 = vst [vmem:[%s932 + $0x138] sm:$0xff] %v931
      %v973 = vld [vmem:[%s2] sm:$0xff]
      %v974 = vld [vmem:[%s2 + $0x8] sm:$0xff]
      %v975 = vld [vmem:[%s2 + $0x10] sm:$0xff]
      %v976 = vld [vmem:[%s2 + $0x18] sm:$0x1]
      %v977 = vld [vmem:[#allocation3] sm:$0xff]
      %v978 = vld [vmem:[#allocation3 + $0x8] sm:$0xff]
      %v979 = vld [vmem:[#allocation3 + $0x10] sm:$0xff]
      %v980 = vld [vmem:[#allocation3 + $0x18] sm:$0xff]
      %v981 = vld [vmem:[#allocation3 + $0x20] sm:$0xff]
      %v982 = vld [vmem:[#allocation3 + $0x28] sm:$0xff]
      %v983 = vld [vmem:[#allocation3 + $0x30] sm:$0xff]
      %v984 = vld [vmem:[#allocation3 + $0x38] sm:$0xff]
      %v985 = vld [vmem:[#allocation3 + $0x40] sm:$0xff]
      %v986 = vld [vmem:[#allocation3 + $0x48] sm:$0xff]
      %v987 = vld [vmem:[#allocation3 + $0x50] sm:$0xff]
      %v988 = vld [vmem:[#allocation3 + $0x58] sm:$0xff]
      %v989 = vld [vmem:[#allocation3 + $0x60] sm:$0xff]
      %v990 = vld [vmem:[#allocation3 + $0x68] sm:$0xff]
      %v991 = vld [vmem:[#allocation3 + $0x70] sm:$0xff]
      %v992 = vld [vmem:[#allocation3 + $0x78] sm:$0xff]
      %v993 = vlaneseq
      %v994 = vshrl.u32 %v993, 7
      %v995 = vsub.s32 0, %v994
      %v996 = vrot.slane %v973, %v995
      %v997 = vmul.f32 %v977, %v996
      %v998 = vmul.f32 %v978, %v996
      %v999 = vmul.f32 %v979, %v996
      %v1000 = vmul.f32 %v980, %v996
      %v1001 = vmul.f32 %v981, %v996
      %v1002 = vmul.f32 %v982, %v996
      %v1003 = vmul.f32 %v983, %v996
      %v1004 = vmul.f32 %v984, %v996
      %v1005 = vmul.f32 %v985, %v996
      %v1006 = vmul.f32 %v986, %v996
      %v1007 = vmul.f32 %v987, %v996
      %v1008 = vmul.f32 %v988, %v996
      %v1009 = vmul.f32 %v989, %v996
      %v1010 = vmul.f32 %v990, %v996
      %v1011 = vmul.f32 %v991, %v996
      %v1012 = vmul.f32 %v992, %v996
      %v1013 = vadd.f32 %v997, 0.0
      %v1014 = vadd.f32 %v998, 0.0
      %v1015 = vadd.f32 %v999, 0.0
      %v1016 = vadd.f32 %v1000, 0.0
      %v1017 = vadd.f32 %v1001, 0.0
      %v1018 = vadd.f32 %v1002, 0.0
      %v1019 = vadd.f32 %v1003, 0.0
      %v1020 = vadd.f32 %v1004, 0.0
      %v1021 = vadd.f32 %v1005, 0.0
      %v1022 = vadd.f32 %v1006, 0.0
      %v1023 = vadd.f32 %v1007, 0.0
      %v1024 = vadd.f32 %v1008, 0.0
      %v1025 = vadd.f32 %v1009, 0.0
      %v1026 = vadd.f32 %v1010, 0.0
      %v1027 = vadd.f32 %v1011, 0.0
      %v1028 = vadd.f32 %v1012, 0.0
      %v1029 = vld [vmem:[%s689] sm:$0xff]
      %v1030 = vld [vmem:[%s689 + $0x8] sm:$0xff]
      %v1031 = vld [vmem:[%s689 + $0x10] sm:$0xff]
      %v1032 = vld [vmem:[%s689 + $0x18] sm:$0xff]
      %v1033 = vld [vmem:[%s689 + $0x20] sm:$0xff]
      %v1034 = vld [vmem:[%s689 + $0x28] sm:$0xff]
      %v1035 = vld [vmem:[%s689 + $0x30] sm:$0xff]
      %v1036 = vld [vmem:[%s689 + $0x38] sm:$0xff]
      %v1037 = vld [vmem:[%s689 + $0x40] sm:$0xff]
      %v1038 = vld [vmem:[%s689 + $0x48] sm:$0xff]
      %v1039 = vld [vmem:[%s689 + $0x50] sm:$0xff]
      %v1040 = vld [vmem:[%s689 + $0x58] sm:$0xff]
      %v1041 = vld [vmem:[%s689 + $0x60] sm:$0xff]
      %v1042 = vld [vmem:[%s689 + $0x68] sm:$0xff]
      %v1043 = vld [vmem:[%s689 + $0x70] sm:$0xff]
      %v1044 = vld [vmem:[%s689 + $0x78] sm:$0xff]
      %v1045 = vlaneseq
      %v1046 = vshrl.u32 %v1045, 7
      %v1047 = vsub.s32 1, %v1046
      %v1048 = vrot.slane %v973, %v1047
      %v1049 = vmul.f32 %v1029, %v1048
      %v1050 = vmul.f32 %v1030, %v1048
      %v1051 = vmul.f32 %v1031, %v1048
      %v1052 = vmul.f32 %v1032, %v1048
      %v1053 = vmul.f32 %v1033, %v1048
      %v1054 = vmul.f32 %v1034, %v1048
      %v1055 = vmul.f32 %v1035, %v1048
      %v1056 = vmul.f32 %v1036, %v1048
      %v1057 = vmul.f32 %v1037, %v1048
      %v1058 = vmul.f32 %v1038, %v1048
      %v1059 = vmul.f32 %v1039, %v1048
      %v1060 = vmul.f32 %v1040, %v1048
      %v1061 = vmul.f32 %v1041, %v1048
      %v1062 = vmul.f32 %v1042, %v1048
      %v1063 = vmul.f32 %v1043, %v1048
      %v1064 = vmul.f32 %v1044, %v1048
      %v1065 = vadd.f32 %v1013, %v1049
      %v1066 = vadd.f32 %v1014, %v1050
      %v1067 = vadd.f32 %v1015, %v1051
      %v1068 = vadd.f32 %v1016, %v1052
      %v1069 = vadd.f32 %v1017, %v1053
      %v1070 = vadd.f32 %v1018, %v1054
      %v1071 = vadd.f32 %v1019, %v1055
      %v1072 = vadd.f32 %v1020, %v1056
      %v1073 = vadd.f32 %v1021, %v1057
      %v1074 = vadd.f32 %v1022, %v1058
      %v1075 = vadd.f32 %v1023, %v1059
      %v1076 = vadd.f32 %v1024, %v1060
      %v1077 = vadd.f32 %v1025, %v1061
      %v1078 = vadd.f32 %v1026, %v1062
      %v1079 = vadd.f32 %v1027, %v1063
      %v1080 = vadd.f32 %v1028, %v1064
      %v1081 = vld [vmem:[%s770] sm:$0xff]
      %v1082 = vld [vmem:[%s770 + $0x8] sm:$0xff]
      %v1083 = vld [vmem:[%s770 + $0x10] sm:$0xff]
      %v1084 = vld [vmem:[%s770 + $0x18] sm:$0xff]
      %v1085 = vld [vmem:[%s770 + $0x20] sm:$0xff]
      %v1086 = vld [vmem:[%s770 + $0x28] sm:$0xff]
      %v1087 = vld [vmem:[%s770 + $0x30] sm:$0xff]
      %v1088 = vld [vmem:[%s770 + $0x38] sm:$0xff]
      %v1089 = vld [vmem:[%s770 + $0x40] sm:$0xff]
      %v1090 = vld [vmem:[%s770 + $0x48] sm:$0xff]
      %v1091 = vld [vmem:[%s770 + $0x50] sm:$0xff]
      %v1092 = vld [vmem:[%s770 + $0x58] sm:$0xff]
      %v1093 = vld [vmem:[%s770 + $0x60] sm:$0xff]
      %v1094 = vld [vmem:[%s770 + $0x68] sm:$0xff]
      %v1095 = vld [vmem:[%s770 + $0x70] sm:$0xff]
      %v1096 = vld [vmem:[%s770 + $0x78] sm:$0xff]
      %v1097 = vlaneseq
      %v1098 = vshrl.u32 %v1097, 7
      %v1099 = vsub.s32 2, %v1098
      %v1100 = vrot.slane %v973, %v1099
      %v1101 = vmul.f32 %v1081, %v1100
      %v1102 = vmul.f32 %v1082, %v1100
      %v1103 = vmul.f32 %v1083, %v1100
      %v1104 = vmul.f32 %v1084, %v1100
      %v1105 = vmul.f32 %v1085, %v1100
      %v1106 = vmul.f32 %v1086, %v1100
      %v1107 = vmul.f32 %v1087, %v1100
      %v1108 = vmul.f32 %v1088, %v1100
      %v1109 = vmul.f32 %v1089, %v1100
      %v1110 = vmul.f32 %v1090, %v1100
      %v1111 = vmul.f32 %v1091, %v1100
      %v1112 = vmul.f32 %v1092, %v1100
      %v1113 = vmul.f32 %v1093, %v1100
      %v1114 = vmul.f32 %v1094, %v1100
      %v1115 = vmul.f32 %v1095, %v1100
      %v1116 = vmul.f32 %v1096, %v1100
      %v1117 = vadd.f32 %v1065, %v1101
      %v1118 = vadd.f32 %v1066, %v1102
      %v1119 = vadd.f32 %v1067, %v1103
      %v1120 = vadd.f32 %v1068, %v1104
      %v1121 = vadd.f32 %v1069, %v1105
      %v1122 = vadd.f32 %v1070, %v1106
      %v1123 = vadd.f32 %v1071, %v1107
      %v1124 = vadd.f32 %v1072, %v1108
      %v1125 = vadd.f32 %v1073, %v1109
      %v1126 = vadd.f32 %v1074, %v1110
      %v1127 = vadd.f32 %v1075, %v1111
      %v1128 = vadd.f32 %v1076, %v1112
      %v1129 = vadd.f32 %v1077, %v1113
      %v1130 = vadd.f32 %v1078, %v1114
      %v1131 = vadd.f32 %v1079, %v1115
      %v1132 = vadd.f32 %v1080, %v1116
      %v1133 = vld [vmem:[%s851] sm:$0xff]
      %v1134 = vld [vmem:[%s851 + $0x8] sm:$0xff]
      %v1135 = vld [vmem:[%s851 + $0x10] sm:$0xff]
      %v1136 = vld [vmem:[%s851 + $0x18] sm:$0xff]
      %v1137 = vld [vmem:[%s851 + $0x20] sm:$0xff]
      %v1138 = vld [vmem:[%s851 + $0x28] sm:$0xff]
      %v1139 = vld [vmem:[%s851 + $0x30] sm:$0xff]
      %v1140 = vld [vmem:[%s851 + $0x38] sm:$0xff]
      %v1141 = vld [vmem:[%s851 + $0x40] sm:$0xff]
      %v1142 = vld [vmem:[%s851 + $0x48] sm:$0xff]
      %v1143 = vld [vmem:[%s851 + $0x50] sm:$0xff]
      %v1144 = vld [vmem:[%s851 + $0x58] sm:$0xff]
      %v1145 = vld [vmem:[%s851 + $0x60] sm:$0xff]
      %v1146 = vld [vmem:[%s851 + $0x68] sm:$0xff]
      %v1147 = vld [vmem:[%s851 + $0x70] sm:$0xff]
      %v1148 = vld [vmem:[%s851 + $0x78] sm:$0xff]
      %v1149 = vlaneseq
      %v1150 = vshrl.u32 %v1149, 7
      %v1151 = vsub.s32 3, %v1150
      %v1152 = vrot.slane %v973, %v1151
      %v1153 = vmul.f32 %v1133, %v1152
      %v1154 = vmul.f32 %v1134, %v1152
      %v1155 = vmul.f32 %v1135, %v1152
      %v1156 = vmul.f32 %v1136, %v1152
      %v1157 = vmul.f32 %v1137, %v1152
      %v1158 = vmul.f32 %v1138, %v1152
      %v1159 = vmul.f32 %v1139, %v1152
      %v1160 = vmul.f32 %v1140, %v1152
      %v1161 = vmul.f32 %v1141, %v1152
      %v1162 = vmul.f32 %v1142, %v1152
      %v1163 = vmul.f32 %v1143, %v1152
      %v1164 = vmul.f32 %v1144, %v1152
      %v1165 = vmul.f32 %v1145, %v1152
      %v1166 = vmul.f32 %v1146, %v1152
      %v1167 = vmul.f32 %v1147, %v1152
      %v1168 = vmul.f32 %v1148, %v1152
      %v1169 = vadd.f32 %v1117, %v1153
      %v1170 = vadd.f32 %v1118, %v1154
      %v1171 = vadd.f32 %v1119, %v1155
      %v1172 = vadd.f32 %v1120, %v1156
      %v1173 = vadd.f32 %v1121, %v1157
      %v1174 = vadd.f32 %v1122, %v1158
      %v1175 = vadd.f32 %v1123, %v1159
      %v1176 = vadd.f32 %v1124, %v1160
      %v1177 = vadd.f32 %v1125, %v1161
      %v1178 = vadd.f32 %v1126, %v1162
      %v1179 = vadd.f32 %v1127, %v1163
      %v1180 = vadd.f32 %v1128, %v1164
      %v1181 = vadd.f32 %v1129, %v1165
      %v1182 = vadd.f32 %v1130, %v1166
      %v1183 = vadd.f32 %v1131, %v1167
      %v1184 = vadd.f32 %v1132, %v1168
      %v1185 = vld [vmem:[%s932] sm:$0xff]
      %v1186 = vld [vmem:[%s932 + $0x8] sm:$0xff]
      %v1187 = vld [vmem:[%s932 + $0x10] sm:$0xff]
      %v1188 = vld [vmem:[%s932 + $0x18] sm:$0xff]
      %v1189 = vld [vmem:[%s932 + $0x20] sm:$0xff]
      %v1190 = vld [vmem:[%s932 + $0x28] sm:$0xff]
      %v1191 = vld [vmem:[%s932 + $0x30] sm:$0xff]
      %v1192 = vld [vmem:[%s932 + $0x38] sm:$0xff]
      %v1193 = vld [vmem:[%s932 + $0x40] sm:$0xff]
      %v1194 = vld [vmem:[%s932 + $0x48] sm:$0xff]
      %v1195 = vld [vmem:[%s932 + $0x50] sm:$0xff]
      %v1196 = vld [vmem:[%s932 + $0x58] sm:$0xff]
      %v1197 = vld [vmem:[%s932 + $0x60] sm:$0xff]
      %v1198 = vld [vmem:[%s932 + $0x68] sm:$0xff]
      %v1199 = vld [vmem:[%s932 + $0x70] sm:$0xff]
      %v1200 = vld [vmem:[%s932 + $0x78] sm:$0xff]
      %v1201 = vlaneseq
      %v1202 = vshrl.u32 %v1201, 7
      %v1203 = vsub.s32 4, %v1202
      %v1204 = vrot.slane %v973, %v1203
      %v1205 = vmul.f32 %v1185, %v1204
      %v1206 = vmul.f32 %v1186, %v1204
      %v1207 = vmul.f32 %v1187, %v1204
      %v1208 = vmul.f32 %v1188, %v1204
      %v1209 = vmul.f32 %v1189, %v1204
      %v1210 = vmul.f32 %v1190, %v1204
      %v1211 = vmul.f32 %v1191, %v1204
      %v1212 = vmul.f32 %v1192, %v1204
      %v1213 = vmul.f32 %v1193, %v1204
      %v1214 = vmul.f32 %v1194, %v1204
      %v1215 = vmul.f32 %v1195, %v1204
      %v1216 = vmul.f32 %v1196, %v1204
      %v1217 = vmul.f32 %v1197, %v1204
      %v1218 = vmul.f32 %v1198, %v1204
      %v1219 = vmul.f32 %v1199, %v1204
      %v1220 = vmul.f32 %v1200, %v1204
      %v1221 = vadd.f32 %v1169, %v1205
      %v1222 = vadd.f32 %v1170, %v1206
      %v1223 = vadd.f32 %v1171, %v1207
      %v1224 = vadd.f32 %v1172, %v1208
      %v1225 = vadd.f32 %v1173, %v1209
      %v1226 = vadd.f32 %v1174, %v1210
      %v1227 = vadd.f32 %v1175, %v1211
      %v1228 = vadd.f32 %v1176, %v1212
      %v1229 = vadd.f32 %v1177, %v1213
      %v1230 = vadd.f32 %v1178, %v1214
      %v1231 = vadd.f32 %v1179, %v1215
      %v1232 = vadd.f32 %v1180, %v1216
      %v1233 = vadd.f32 %v1181, %v1217
      %v1234 = vadd.f32 %v1182, %v1218
      %v1235 = vadd.f32 %v1183, %v1219
      %v1236 = vadd.f32 %v1184, %v1220
      %s1237 = scalar_lea.vmem [#allocation3], 16
      %v1238 = vld [vmem:[%s1237] sm:$0xff]
      %v1239 = vld [vmem:[%s1237 + $0x8] sm:$0xff]
      %v1240 = vld [vmem:[%s1237 + $0x10] sm:$0xff]
      %v1241 = vld [vmem:[%s1237 + $0x18] sm:$0xff]
      %v1242 = vld [vmem:[%s1237 + $0x20] sm:$0xff]
      %v1243 = vld [vmem:[%s1237 + $0x28] sm:$0xff]
      %v1244 = vld [vmem:[%s1237 + $0x30] sm:$0xff]
      %v1245 = vld [vmem:[%s1237 + $0x38] sm:$0xff]
      %v1246 = vld [vmem:[%s1237 + $0x40] sm:$0xff]
      %v1247 = vld [vmem:[%s1237 + $0x48] sm:$0xff]
      %v1248 = vld [vmem:[%s1237 + $0x50] sm:$0xff]
      %v1249 = vld [vmem:[%s1237 + $0x58] sm:$0xff]
      %v1250 = vld [vmem:[%s1237 + $0x60] sm:$0xff]
      %v1251 = vld [vmem:[%s1237 + $0x68] sm:$0xff]
      %v1252 = vld [vmem:[%s1237 + $0x70] sm:$0xff]
      %v1253 = vld [vmem:[%s1237 + $0x78] sm:$0xff]
      %v1254 = vlaneseq
      %v1255 = vshrl.u32 %v1254, 7
      %v1256 = vsub.s32 5, %v1255
      %v1257 = vrot.slane %v973, %v1256
      %v1258 = vmul.f32 %v1238, %v1257
      %v1259 = vmul.f32 %v1239, %v1257
      %v1260 = vmul.f32 %v1240, %v1257
      %v1261 = vmul.f32 %v1241, %v1257
      %v1262 = vmul.f32 %v1242, %v1257
      %v1263 = vmul.f32 %v1243, %v1257
      %v1264 = vmul.f32 %v1244, %v1257
      %v1265 = vmul.f32 %v1245, %v1257
      %v1266 = vmul.f32 %v1246, %v1257
      %v1267 = vmul.f32 %v1247, %v1257
      %v1268 = vmul.f32 %v1248, %v1257
      %v1269 = vmul.f32 %v1249, %v1257
      %v1270 = vmul.f32 %v1250, %v1257
      %v1271 = vmul.f32 %v1251, %v1257
      %v1272 = vmul.f32 %v1252, %v1257
      %v1273 = vmul.f32 %v1253, %v1257
      %v1274 = vadd.f32 %v1221, %v1258
      %v1275 = vadd.f32 %v1222, %v1259
      %v1276 = vadd.f32 %v1223, %v1260
      %v1277 = vadd.f32 %v1224, %v1261
      %v1278 = vadd.f32 %v1225, %v1262
      %v1279 = vadd.f32 %v1226, %v1263
      %v1280 = vadd.f32 %v1227, %v1264
      %v1281 = vadd.f32 %v1228, %v1265
      %v1282 = vadd.f32 %v1229, %v1266
      %v1283 = vadd.f32 %v1230, %v1267
      %v1284 = vadd.f32 %v1231, %v1268
      %v1285 = vadd.f32 %v1232, %v1269
      %v1286 = vadd.f32 %v1233, %v1270
      %v1287 = vadd.f32 %v1234, %v1271
      %v1288 = vadd.f32 %v1235, %v1272
      %v1289 = vadd.f32 %v1236, %v1273
      %s1290 = scalar_lea.vmem [#allocation3], 336
      %v1291 = vld [vmem:[%s1290] sm:$0xff]
      %v1292 = vld [vmem:[%s1290 + $0x8] sm:$0xff]
      %v1293 = vld [vmem:[%s1290 + $0x10] sm:$0xff]
      %v1294 = vld [vmem:[%s1290 + $0x18] sm:$0xff]
      %v1295 = vld [vmem:[%s1290 + $0x20] sm:$0xff]
      %v1296 = vld [vmem:[%s1290 + $0x28] sm:$0xff]
      %v1297 = vld [vmem:[%s1290 + $0x30] sm:$0xff]
      %v1298 = vld [vmem:[%s1290 + $0x38] sm:$0xff]
      %v1299 = vld [vmem:[%s1290 + $0x40] sm:$0xff]
      %v1300 = vld [vmem:[%s1290 + $0x48] sm:$0xff]
      %v1301 = vld [vmem:[%s1290 + $0x50] sm:$0xff]
      %v1302 = vld [vmem:[%s1290 + $0x58] sm:$0xff]
      %v1303 = vld [vmem:[%s1290 + $0x60] sm:$0xff]
      %v1304 = vld [vmem:[%s1290 + $0x68] sm:$0xff]
      %v1305 = vld [vmem:[%s1290 + $0x70] sm:$0xff]
      %v1306 = vld [vmem:[%s1290 + $0x78] sm:$0xff]
      %v1307 = vlaneseq
      %v1308 = vshrl.u32 %v1307, 7
      %v1309 = vsub.s32 6, %v1308
      %v1310 = vrot.slane %v973, %v1309
      %v1311 = vmul.f32 %v1291, %v1310
      %v1312 = vmul.f32 %v1292, %v1310
      %v1313 = vmul.f32 %v1293, %v1310
      %v1314 = vmul.f32 %v1294, %v1310
      %v1315 = vmul.f32 %v1295, %v1310
      %v1316 = vmul.f32 %v1296, %v1310
      %v1317 = vmul.f32 %v1297, %v1310
      %v1318 = vmul.f32 %v1298, %v1310
      %v1319 = vmul.f32 %v1299, %v1310
      %v1320 = vmul.f32 %v1300, %v1310
      %v1321 = vmul.f32 %v1301, %v1310
      %v1322 = vmul.f32 %v1302, %v1310
      %v1323 = vmul.f32 %v1303, %v1310
      %v1324 = vmul.f32 %v1304, %v1310
      %v1325 = vmul.f32 %v1305, %v1310
      %v1326 = vmul.f32 %v1306, %v1310
      %v1327 = vadd.f32 %v1274, %v1311
      %v1328 = vadd.f32 %v1275, %v1312
      %v1329 = vadd.f32 %v1276, %v1313
      %v1330 = vadd.f32 %v1277, %v1314
      %v1331 = vadd.f32 %v1278, %v1315
      %v1332 = vadd.f32 %v1279, %v1316
      %v1333 = vadd.f32 %v1280, %v1317
      %v1334 = vadd.f32 %v1281, %v1318
      %v1335 = vadd.f32 %v1282, %v1319
      %v1336 = vadd.f32 %v1283, %v1320
      %v1337 = vadd.f32 %v1284, %v1321
      %v1338 = vadd.f32 %v1285, %v1322
      %v1339 = vadd.f32 %v1286, %v1323
      %v1340 = vadd.f32 %v1287, %v1324
      %v1341 = vadd.f32 %v1288, %v1325
      %v1342 = vadd.f32 %v1289, %v1326
      %s1343 = scalar_lea.vmem [#allocation3], 656
      %v1344 = vld [vmem:[%s1343] sm:$0xff]
      %v1345 = vld [vmem:[%s1343 + $0x8] sm:$0xff]
      %v1346 = vld [vmem:[%s1343 + $0x10] sm:$0xff]
      %v1347 = vld [vmem:[%s1343 + $0x18] sm:$0xff]
      %v1348 = vld [vmem:[%s1343 + $0x20] sm:$0xff]
      %v1349 = vld [vmem:[%s1343 + $0x28] sm:$0xff]
      %v1350 = vld [vmem:[%s1343 + $0x30] sm:$0xff]
      %v1351 = vld [vmem:[%s1343 + $0x38] sm:$0xff]
      %v1352 = vld [vmem:[%s1343 + $0x40] sm:$0xff]
      %v1353 = vld [vmem:[%s1343 + $0x48] sm:$0xff]
      %v1354 = vld [vmem:[%s1343 + $0x50] sm:$0xff]
      %v1355 = vld [vmem:[%s1343 + $0x58] sm:$0xff]
      %v1356 = vld [vmem:[%s1343 + $0x60] sm:$0xff]
      %v1357 = vld [vmem:[%s1343 + $0x68] sm:$0xff]
      %v1358 = vld [vmem:[%s1343 + $0x70] sm:$0xff]
      %v1359 = vld [vmem:[%s1343 + $0x78] sm:$0xff]
      %v1360 = vlaneseq
      %v1361 = vshrl.u32 %v1360, 7
      %v1362 = vsub.s32 7, %v1361
      %v1363 = vrot.slane %v973, %v1362
      %v1364 = vmul.f32 %v1344, %v1363
      %v1365 = vmul.f32 %v1345, %v1363
      %v1366 = vmul.f32 %v1346, %v1363
      %v1367 = vmul.f32 %v1347, %v1363
      %v1368 = vmul.f32 %v1348, %v1363
      %v1369 = vmul.f32 %v1349, %v1363
      %v1370 = vmul.f32 %v1350, %v1363
      %v1371 = vmul.f32 %v1351, %v1363
      %v1372 = vmul.f32 %v1352, %v1363
      %v1373 = vmul.f32 %v1353, %v1363
      %v1374 = vmul.f32 %v1354, %v1363
      %v1375 = vmul.f32 %v1355, %v1363
      %v1376 = vmul.f32 %v1356, %v1363
      %v1377 = vmul.f32 %v1357, %v1363
      %v1378 = vmul.f32 %v1358, %v1363
      %v1379 = vmul.f32 %v1359, %v1363
      %v1380 = vadd.f32 %v1327, %v1364
      %v1381 = vadd.f32 %v1328, %v1365
      %v1382 = vadd.f32 %v1329, %v1366
      %v1383 = vadd.f32 %v1330, %v1367
      %v1384 = vadd.f32 %v1331, %v1368
      %v1385 = vadd.f32 %v1332, %v1369
      %v1386 = vadd.f32 %v1333, %v1370
      %v1387 = vadd.f32 %v1334, %v1371
      %v1388 = vadd.f32 %v1335, %v1372
      %v1389 = vadd.f32 %v1336, %v1373
      %v1390 = vadd.f32 %v1337, %v1374
      %v1391 = vadd.f32 %v1338, %v1375
      %v1392 = vadd.f32 %v1339, %v1376
      %v1393 = vadd.f32 %v1340, %v1377
      %v1394 = vadd.f32 %v1341, %v1378
      %v1395 = vadd.f32 %v1342, %v1379
      %s1396 = scalar_lea.vmem [#allocation3], 976
      %v1397 = vld [vmem:[%s1396] sm:$0xff]
      %v1398 = vld [vmem:[%s1396 + $0x8] sm:$0xff]
      %v1399 = vld [vmem:[%s1396 + $0x10] sm:$0xff]
      %v1400 = vld [vmem:[%s1396 + $0x18] sm:$0xff]
      %v1401 = vld [vmem:[%s1396 + $0x20] sm:$0xff]
      %v1402 = vld [vmem:[%s1396 + $0x28] sm:$0xff]
      %v1403 = vld [vmem:[%s1396 + $0x30] sm:$0xff]
      %v1404 = vld [vmem:[%s1396 + $0x38] sm:$0xff]
      %v1405 = vld [vmem:[%s1396 + $0x40] sm:$0xff]
      %v1406 = vld [vmem:[%s1396 + $0x48] sm:$0xff]
      %v1407 = vld [vmem:[%s1396 + $0x50] sm:$0xff]
      %v1408 = vld [vmem:[%s1396 + $0x58] sm:$0xff]
      %v1409 = vld [vmem:[%s1396 + $0x60] sm:$0xff]
      %v1410 = vld [vmem:[%s1396 + $0x68] sm:$0xff]
      %v1411 = vld [vmem:[%s1396 + $0x70] sm:$0xff]
      %v1412 = vld [vmem:[%s1396 + $0x78] sm:$0xff]
      %v1413 = vlaneseq
      %v1414 = vshrl.u32 %v1413, 7
      %v1415 = vsub.s32 0, %v1414
      %v1416 = vrot.slane %v974, %v1415
      %v1417 = vmul.f32 %v1397, %v1416
      %v1418 = vmul.f32 %v1398, %v1416
      %v1419 = vmul.f32 %v1399, %v1416
      %v1420 = vmul.f32 %v1400, %v1416
      %v1421 = vmul.f32 %v1401, %v1416
      %v1422 = vmul.f32 %v1402, %v1416
      %v1423 = vmul.f32 %v1403, %v1416
      %v1424 = vmul.f32 %v1404, %v1416
      %v1425 = vmul.f32 %v1405, %v1416
      %v1426 = vmul.f32 %v1406, %v1416
      %v1427 = vmul.f32 %v1407, %v1416
      %v1428 = vmul.f32 %v1408, %v1416
      %v1429 = vmul.f32 %v1409, %v1416
      %v1430 = vmul.f32 %v1410, %v1416
      %v1431 = vmul.f32 %v1411, %v1416
      %v1432 = vmul.f32 %v1412, %v1416
      %v1433 = vadd.f32 %v1380, %v1417
      %v1434 = vadd.f32 %v1381, %v1418
      %v1435 = vadd.f32 %v1382, %v1419
      %v1436 = vadd.f32 %v1383, %v1420
      %v1437 = vadd.f32 %v1384, %v1421
      %v1438 = vadd.f32 %v1385, %v1422
      %v1439 = vadd.f32 %v1386, %v1423
      %v1440 = vadd.f32 %v1387, %v1424
      %v1441 = vadd.f32 %v1388, %v1425
      %v1442 = vadd.f32 %v1389, %v1426
      %v1443 = vadd.f32 %v1390, %v1427
      %v1444 = vadd.f32 %v1391, %v1428
      %v1445 = vadd.f32 %v1392, %v1429
      %v1446 = vadd.f32 %v1393, %v1430
      %v1447 = vadd.f32 %v1394, %v1431
      %v1448 = vadd.f32 %v1395, %v1432
      %s1449 = scalar_lea.vmem [#allocation3], 1296
      %v1450 = vld [vmem:[%s1449] sm:$0xff]
      %v1451 = vld [vmem:[%s1449 + $0x8] sm:$0xff]
      %v1452 = vld [vmem:[%s1449 + $0x10] sm:$0xff]
      %v1453 = vld [vmem:[%s1449 + $0x18] sm:$0xff]
      %v1454 = vld [vmem:[%s1449 + $0x20] sm:$0xff]
      %v1455 = vld [vmem:[%s1449 + $0x28] sm:$0xff]
      %v1456 = vld [vmem:[%s1449 + $0x30] sm:$0xff]
      %v1457 = vld [vmem:[%s1449 + $0x38] sm:$0xff]
      %v1458 = vld [vmem:[%s1449 + $0x40] sm:$0xff]
      %v1459 = vld [vmem:[%s1449 + $0x48] sm:$0xff]
      %v1460 = vld [vmem:[%s1449 + $0x50] sm:$0xff]
      %v1461 = vld [vmem:[%s1449 + $0x58] sm:$0xff]
      %v1462 = vld [vmem:[%s1449 + $0x60] sm:$0xff]
      %v1463 = vld [vmem:[%s1449 + $0x68] sm:$0xff]
      %v1464 = vld [vmem:[%s1449 + $0x70] sm:$0xff]
      %v1465 = vld [vmem:[%s1449 + $0x78] sm:$0xff]
      %v1466 = vlaneseq
      %v1467 = vshrl.u32 %v1466, 7
      %v1468 = vsub.s32 1, %v1467
      %v1469 = vrot.slane %v974, %v1468
      %v1470 = vmul.f32 %v1450, %v1469
      %v1471 = vmul.f32 %v1451, %v1469
      %v1472 = vmul.f32 %v1452, %v1469
      %v1473 = vmul.f32 %v1453, %v1469
      %v1474 = vmul.f32 %v1454, %v1469
      %v1475 = vmul.f32 %v1455, %v1469
      %v1476 = vmul.f32 %v1456, %v1469
      %v1477 = vmul.f32 %v1457, %v1469
      %v1478 = vmul.f32 %v1458, %v1469
      %v1479 = vmul.f32 %v1459, %v1469
      %v1480 = vmul.f32 %v1460, %v1469
      %v1481 = vmul.f32 %v1461, %v1469
      %v1482 = vmul.f32 %v1462, %v1469
      %v1483 = vmul.f32 %v1463, %v1469
      %v1484 = vmul.f32 %v1464, %v1469
      %v1485 = vmul.f32 %v1465, %v1469
      %v1486 = vadd.f32 %v1433, %v1470
      %v1487 = vadd.f32 %v1434, %v1471
      %v1488 = vadd.f32 %v1435, %v1472
      %v1489 = vadd.f32 %v1436, %v1473
      %v1490 = vadd.f32 %v1437, %v1474
      %v1491 = vadd.f32 %v1438, %v1475
      %v1492 = vadd.f32 %v1439, %v1476
      %v1493 = vadd.f32 %v1440, %v1477
      %v1494 = vadd.f32 %v1441, %v1478
      %v1495 = vadd.f32 %v1442, %v1479
      %v1496 = vadd.f32 %v1443, %v1480
      %v1497 = vadd.f32 %v1444, %v1481
      %v1498 = vadd.f32 %v1445, %v1482
      %v1499 = vadd.f32 %v1446, %v1483
      %v1500 = vadd.f32 %v1447, %v1484
      %v1501 = vadd.f32 %v1448, %v1485
      %s1502 = scalar_lea.vmem [#allocation3], 32
      %v1503 = vld [vmem:[%s1502] sm:$0xff]
      %v1504 = vld [vmem:[%s1502 + $0x8] sm:$0xff]
      %v1505 = vld [vmem:[%s1502 + $0x10] sm:$0xff]
      %v1506 = vld [vmem:[%s1502 + $0x18] sm:$0xff]
      %v1507 = vld [vmem:[%s1502 + $0x20] sm:$0xff]
      %v1508 = vld [vmem:[%s1502 + $0x28] sm:$0xff]
      %v1509 = vld [vmem:[%s1502 + $0x30] sm:$0xff]
      %v1510 = vld [vmem:[%s1502 + $0x38] sm:$0xff]
      %v1511 = vld [vmem:[%s1502 + $0x40] sm:$0xff]
      %v1512 = vld [vmem:[%s1502 + $0x48] sm:$0xff]
      %v1513 = vld [vmem:[%s1502 + $0x50] sm:$0xff]
      %v1514 = vld [vmem:[%s1502 + $0x58] sm:$0xff]
      %v1515 = vld [vmem:[%s1502 + $0x60] sm:$0xff]
      %v1516 = vld [vmem:[%s1502 + $0x68] sm:$0xff]
      %v1517 = vld [vmem:[%s1502 + $0x70] sm:$0xff]
      %v1518 = vld [vmem:[%s1502 + $0x78] sm:$0xff]
      %v1519 = vlaneseq
      %v1520 = vshrl.u32 %v1519, 7
      %v1521 = vsub.s32 2, %v1520
      %v1522 = vrot.slane %v974, %v1521
      %v1523 = vmul.f32 %v1503, %v1522
      %v1524 = vmul.f32 %v1504, %v1522
      %v1525 = vmul.f32 %v1505, %v1522
      %v1526 = vmul.f32 %v1506, %v1522
      %v1527 = vmul.f32 %v1507, %v1522
      %v1528 = vmul.f32 %v1508, %v1522
      %v1529 = vmul.f32 %v1509, %v1522
      %v1530 = vmul.f32 %v1510, %v1522
      %v1531 = vmul.f32 %v1511, %v1522
      %v1532 = vmul.f32 %v1512, %v1522
      %v1533 = vmul.f32 %v1513, %v1522
      %v1534 = vmul.f32 %v1514, %v1522
      %v1535 = vmul.f32 %v1515, %v1522
      %v1536 = vmul.f32 %v1516, %v1522
      %v1537 = vmul.f32 %v1517, %v1522
      %v1538 = vmul.f32 %v1518, %v1522
      %v1539 = vadd.f32 %v1486, %v1523
      %v1540 = vadd.f32 %v1487, %v1524
      %v1541 = vadd.f32 %v1488, %v1525
      %v1542 = vadd.f32 %v1489, %v1526
      %v1543 = vadd.f32 %v1490, %v1527
      %v1544 = vadd.f32 %v1491, %v1528
      %v1545 = vadd.f32 %v1492, %v1529
      %v1546 = vadd.f32 %v1493, %v1530
      %v1547 = vadd.f32 %v1494, %v1531
      %v1548 = vadd.f32 %v1495, %v1532
      %v1549 = vadd.f32 %v1496, %v1533
      %v1550 = vadd.f32 %v1497, %v1534
      %v1551 = vadd.f32 %v1498, %v1535
      %v1552 = vadd.f32 %v1499, %v1536
      %v1553 = vadd.f32 %v1500, %v1537
      %v1554 = vadd.f32 %v1501, %v1538
      %s1555 = scalar_lea.vmem [#allocation3], 352
      %v1556 = vld [vmem:[%s1555] sm:$0xff]
      %v1557 = vld [vmem:[%s1555 + $0x8] sm:$0xff]
      %v1558 = vld [vmem:[%s1555 + $0x10] sm:$0xff]
      %v1559 = vld [vmem:[%s1555 + $0x18] sm:$0xff]
      %v1560 = vld [vmem:[%s1555 + $0x20] sm:$0xff]
      %v1561 = vld [vmem:[%s1555 + $0x28] sm:$0xff]
      %v1562 = vld [vmem:[%s1555 + $0x30] sm:$0xff]
      %v1563 = vld [vmem:[%s1555 + $0x38] sm:$0xff]
      %v1564 = vld [vmem:[%s1555 + $0x40] sm:$0xff]
      %v1565 = vld [vmem:[%s1555 + $0x48] sm:$0xff]
      %v1566 = vld [vmem:[%s1555 + $0x50] sm:$0xff]
      %v1567 = vld [vmem:[%s1555 + $0x58] sm:$0xff]
      %v1568 = vld [vmem:[%s1555 + $0x60] sm:$0xff]
      %v1569 = vld [vmem:[%s1555 + $0x68] sm:$0xff]
      %v1570 = vld [vmem:[%s1555 + $0x70] sm:$0xff]
      %v1571 = vld [vmem:[%s1555 + $0x78] sm:$0xff]
      %v1572 = vlaneseq
      %v1573 = vshrl.u32 %v1572, 7
      %v1574 = vsub.s32 3, %v1573
      %v1575 = vrot.slane %v974, %v1574
      %v1576 = vmul.f32 %v1556, %v1575
      %v1577 = vmul.f32 %v1557, %v1575
      %v1578 = vmul.f32 %v1558, %v1575
      %v1579 = vmul.f32 %v1559, %v1575
      %v1580 = vmul.f32 %v1560, %v1575
      %v1581 = vmul.f32 %v1561, %v1575
      %v1582 = vmul.f32 %v1562, %v1575
      %v1583 = vmul.f32 %v1563, %v1575
      %v1584 = vmul.f32 %v1564, %v1575
      %v1585 = vmul.f32 %v1565, %v1575
      %v1586 = vmul.f32 %v1566, %v1575
      %v1587 = vmul.f32 %v1567, %v1575
      %v1588 = vmul.f32 %v1568, %v1575
      %v1589 = vmul.f32 %v1569, %v1575
      %v1590 = vmul.f32 %v1570, %v1575
      %v1591 = vmul.f32 %v1571, %v1575
      %v1592 = vadd.f32 %v1539, %v1576
      %v1593 = vadd.f32 %v1540, %v1577
      %v1594 = vadd.f32 %v1541, %v1578
      %v1595 = vadd.f32 %v1542, %v1579
      %v1596 = vadd.f32 %v1543, %v1580
      %v1597 = vadd.f32 %v1544, %v1581
      %v1598 = vadd.f32 %v1545, %v1582
      %v1599 = vadd.f32 %v1546, %v1583
      %v1600 = vadd.f32 %v1547, %v1584
      %v1601 = vadd.f32 %v1548, %v1585
      %v1602 = vadd.f32 %v1549, %v1586
      %v1603 = vadd.f32 %v1550, %v1587
      %v1604 = vadd.f32 %v1551, %v1588
      %v1605 = vadd.f32 %v1552, %v1589
      %v1606 = vadd.f32 %v1553, %v1590
      %v1607 = vadd.f32 %v1554, %v1591
      %s1608 = scalar_lea.vmem [#allocation3], 672
      %v1609 = vld [vmem:[%s1608] sm:$0xff]
      %v1610 = vld [vmem:[%s1608 + $0x8] sm:$0xff]
      %v1611 = vld [vmem:[%s1608 + $0x10] sm:$0xff]
      %v1612 = vld [vmem:[%s1608 + $0x18] sm:$0xff]
      %v1613 = vld [vmem:[%s1608 + $0x20] sm:$0xff]
      %v1614 = vld [vmem:[%s1608 + $0x28] sm:$0xff]
      %v1615 = vld [vmem:[%s1608 + $0x30] sm:$0xff]
      %v1616 = vld [vmem:[%s1608 + $0x38] sm:$0xff]
      %v1617 = vld [vmem:[%s1608 + $0x40] sm:$0xff]
      %v1618 = vld [vmem:[%s1608 + $0x48] sm:$0xff]
      %v1619 = vld [vmem:[%s1608 + $0x50] sm:$0xff]
      %v1620 = vld [vmem:[%s1608 + $0x58] sm:$0xff]
      %v1621 = vld [vmem:[%s1608 + $0x60] sm:$0xff]
      %v1622 = vld [vmem:[%s1608 + $0x68] sm:$0xff]
      %v1623 = vld [vmem:[%s1608 + $0x70] sm:$0xff]
      %v1624 = vld [vmem:[%s1608 + $0x78] sm:$0xff]
      %v1625 = vlaneseq
      %v1626 = vshrl.u32 %v1625, 7
      %v1627 = vsub.s32 4, %v1626
      %v1628 = vrot.slane %v974, %v1627
      %v1629 = vmul.f32 %v1609, %v1628
      %v1630 = vmul.f32 %v1610, %v1628
      %v1631 = vmul.f32 %v1611, %v1628
      %v1632 = vmul.f32 %v1612, %v1628
      %v1633 = vmul.f32 %v1613, %v1628
      %v1634 = vmul.f32 %v1614, %v1628
      %v1635 = vmul.f32 %v1615, %v1628
      %v1636 = vmul.f32 %v1616, %v1628
      %v1637 = vmul.f32 %v1617, %v1628
      %v1638 = vmul.f32 %v1618, %v1628
      %v1639 = vmul.f32 %v1619, %v1628
      %v1640 = vmul.f32 %v1620, %v1628
      %v1641 = vmul.f32 %v1621, %v1628
      %v1642 = vmul.f32 %v1622, %v1628
      %v1643 = vmul.f32 %v1623, %v1628
      %v1644 = vmul.f32 %v1624, %v1628
      %v1645 = vadd.f32 %v1592, %v1629
      %v1646 = vadd.f32 %v1593, %v1630
      %v1647 = vadd.f32 %v1594, %v1631
      %v1648 = vadd.f32 %v1595, %v1632
      %v1649 = vadd.f32 %v1596, %v1633
      %v1650 = vadd.f32 %v1597, %v1634
      %v1651 = vadd.f32 %v1598, %v1635
      %v1652 = vadd.f32 %v1599, %v1636
      %v1653 = vadd.f32 %v1600, %v1637
      %v1654 = vadd.f32 %v1601, %v1638
      %v1655 = vadd.f32 %v1602, %v1639
      %v1656 = vadd.f32 %v1603, %v1640
      %v1657 = vadd.f32 %v1604, %v1641
      %v1658 = vadd.f32 %v1605, %v1642
      %v1659 = vadd.f32 %v1606, %v1643
      %v1660 = vadd.f32 %v1607, %v1644
      %s1661 = scalar_lea.vmem [#allocation3], 992
      %v1662 = vld [vmem:[%s1661] sm:$0xff]
      %v1663 = vld [vmem:[%s1661 + $0x8] sm:$0xff]
      %v1664 = vld [vmem:[%s1661 + $0x10] sm:$0xff]
      %v1665 = vld [vmem:[%s1661 + $0x18] sm:$0xff]
      %v1666 = vld [vmem:[%s1661 + $0x20] sm:$0xff]
      %v1667 = vld [vmem:[%s1661 + $0x28] sm:$0xff]
      %v1668 = vld [vmem:[%s1661 + $0x30] sm:$0xff]
      %v1669 = vld [vmem:[%s1661 + $0x38] sm:$0xff]
      %v1670 = vld [vmem:[%s1661 + $0x40] sm:$0xff]
      %v1671 = vld [vmem:[%s1661 + $0x48] sm:$0xff]
      %v1672 = vld [vmem:[%s1661 + $0x50] sm:$0xff]
      %v1673 = vld [vmem:[%s1661 + $0x58] sm:$0xff]
      %v1674 = vld [vmem:[%s1661 + $0x60] sm:$0xff]
      %v1675 = vld [vmem:[%s1661 + $0x68] sm:$0xff]
      %v1676 = vld [vmem:[%s1661 + $0x70] sm:$0xff]
      %v1677 = vld [vmem:[%s1661 + $0x78] sm:$0xff]
      %v1678 = vlaneseq
      %v1679 = vshrl.u32 %v1678, 7
      %v1680 = vsub.s32 5, %v1679
      %v1681 = vrot.slane %v974, %v1680
      %v1682 = vmul.f32 %v1662, %v1681
      %v1683 = vmul.f32 %v1663, %v1681
      %v1684 = vmul.f32 %v1664, %v1681
      %v1685 = vmul.f32 %v1665, %v1681
      %v1686 = vmul.f32 %v1666, %v1681
      %v1687 = vmul.f32 %v1667, %v1681
      %v1688 = vmul.f32 %v1668, %v1681
      %v1689 = vmul.f32 %v1669, %v1681
      %v1690 = vmul.f32 %v1670, %v1681
      %v1691 = vmul.f32 %v1671, %v1681
      %v1692 = vmul.f32 %v1672, %v1681
      %v1693 = vmul.f32 %v1673, %v1681
      %v1694 = vmul.f32 %v1674, %v1681
      %v1695 = vmul.f32 %v1675, %v1681
      %v1696 = vmul.f32 %v1676, %v1681
      %v1697 = vmul.f32 %v1677, %v1681
      %v1698 = vadd.f32 %v1645, %v1682
      %v1699 = vadd.f32 %v1646, %v1683
      %v1700 = vadd.f32 %v1647, %v1684
      %v1701 = vadd.f32 %v1648, %v1685
      %v1702 = vadd.f32 %v1649, %v1686
      %v1703 = vadd.f32 %v1650, %v1687
      %v1704 = vadd.f32 %v1651, %v1688
      %v1705 = vadd.f32 %v1652, %v1689
      %v1706 = vadd.f32 %v1653, %v1690
      %v1707 = vadd.f32 %v1654, %v1691
      %v1708 = vadd.f32 %v1655, %v1692
      %v1709 = vadd.f32 %v1656, %v1693
      %v1710 = vadd.f32 %v1657, %v1694
      %v1711 = vadd.f32 %v1658, %v1695
      %v1712 = vadd.f32 %v1659, %v1696
      %v1713 = vadd.f32 %v1660, %v1697
      %s1714 = scalar_lea.vmem [#allocation3], 1312
      %v1715 = vld [vmem:[%s1714] sm:$0xff]
      %v1716 = vld [vmem:[%s1714 + $0x8] sm:$0xff]
      %v1717 = vld [vmem:[%s1714 + $0x10] sm:$0xff]
      %v1718 = vld [vmem:[%s1714 + $0x18] sm:$0xff]
      %v1719 = vld [vmem:[%s1714 + $0x20] sm:$0xff]
      %v1720 = vld [vmem:[%s1714 + $0x28] sm:$0xff]
      %v1721 = vld [vmem:[%s1714 + $0x30] sm:$0xff]
      %v1722 = vld [vmem:[%s1714 + $0x38] sm:$0xff]
      %v1723 = vld [vmem:[%s1714 + $0x40] sm:$0xff]
      %v1724 = vld [vmem:[%s1714 + $0x48] sm:$0xff]
      %v1725 = vld [vmem:[%s1714 + $0x50] sm:$0xff]
      %v1726 = vld [vmem:[%s1714 + $0x58] sm:$0xff]
      %v1727 = vld [vmem:[%s1714 + $0x60] sm:$0xff]
      %v1728 = vld [vmem:[%s1714 + $0x68] sm:$0xff]
      %v1729 = vld [vmem:[%s1714 + $0x70] sm:$0xff]
      %v1730 = vld [vmem:[%s1714 + $0x78] sm:$0xff]
      %v1731 = vlaneseq
      %v1732 = vshrl.u32 %v1731, 7
      %v1733 = vsub.s32 6, %v1732
      %v1734 = vrot.slane %v974, %v1733
      %v1735 = vmul.f32 %v1715, %v1734
      %v1736 = vmul.f32 %v1716, %v1734
      %v1737 = vmul.f32 %v1717, %v1734
      %v1738 = vmul.f32 %v1718, %v1734
      %v1739 = vmul.f32 %v1719, %v1734
      %v1740 = vmul.f32 %v1720, %v1734
      %v1741 = vmul.f32 %v1721, %v1734
      %v1742 = vmul.f32 %v1722, %v1734
      %v1743 = vmul.f32 %v1723, %v1734
      %v1744 = vmul.f32 %v1724, %v1734
      %v1745 = vmul.f32 %v1725, %v1734
      %v1746 = vmul.f32 %v1726, %v1734
      %v1747 = vmul.f32 %v1727, %v1734
      %v1748 = vmul.f32 %v1728, %v1734
      %v1749 = vmul.f32 %v1729, %v1734
      %v1750 = vmul.f32 %v1730, %v1734
      %v1751 = vadd.f32 %v1698, %v1735
      %v1752 = vadd.f32 %v1699, %v1736
      %v1753 = vadd.f32 %v1700, %v1737
      %v1754 = vadd.f32 %v1701, %v1738
      %v1755 = vadd.f32 %v1702, %v1739
      %v1756 = vadd.f32 %v1703, %v1740
      %v1757 = vadd.f32 %v1704, %v1741
      %v1758 = vadd.f32 %v1705, %v1742
      %v1759 = vadd.f32 %v1706, %v1743
      %v1760 = vadd.f32 %v1707, %v1744
      %v1761 = vadd.f32 %v1708, %v1745
      %v1762 = vadd.f32 %v1709, %v1746
      %v1763 = vadd.f32 %v1710, %v1747
      %v1764 = vadd.f32 %v1711, %v1748
      %v1765 = vadd.f32 %v1712, %v1749
      %v1766 = vadd.f32 %v1713, %v1750
      %s1767 = scalar_lea.vmem [#allocation3], 48
      %v1768 = vld [vmem:[%s1767] sm:$0xff]
      %v1769 = vld [vmem:[%s1767 + $0x8] sm:$0xff]
      %v1770 = vld [vmem:[%s1767 + $0x10] sm:$0xff]
      %v1771 = vld [vmem:[%s1767 + $0x18] sm:$0xff]
      %v1772 = vld [vmem:[%s1767 + $0x20] sm:$0xff]
      %v1773 = vld [vmem:[%s1767 + $0x28] sm:$0xff]
      %v1774 = vld [vmem:[%s1767 + $0x30] sm:$0xff]
      %v1775 = vld [vmem:[%s1767 + $0x38] sm:$0xff]
      %v1776 = vld [vmem:[%s1767 + $0x40] sm:$0xff]
      %v1777 = vld [vmem:[%s1767 + $0x48] sm:$0xff]
      %v1778 = vld [vmem:[%s1767 + $0x50] sm:$0xff]
      %v1779 = vld [vmem:[%s1767 + $0x58] sm:$0xff]
      %v1780 = vld [vmem:[%s1767 + $0x60] sm:$0xff]
      %v1781 = vld [vmem:[%s1767 + $0x68] sm:$0xff]
      %v1782 = vld [vmem:[%s1767 + $0x70] sm:$0xff]
      %v1783 = vld [vmem:[%s1767 + $0x78] sm:$0xff]
      %v1784 = vlaneseq
      %v1785 = vshrl.u32 %v1784, 7
      %v1786 = vsub.s32 7, %v1785
      %v1787 = vrot.slane %v974, %v1786
      %v1788 = vmul.f32 %v1768, %v1787
      %v1789 = vmul.f32 %v1769, %v1787
      %v1790 = vmul.f32 %v1770, %v1787
      %v1791 = vmul.f32 %v1771, %v1787
      %v1792 = vmul.f32 %v1772, %v1787
      %v1793 = vmul.f32 %v1773, %v1787
      %v1794 = vmul.f32 %v1774, %v1787
      %v1795 = vmul.f32 %v1775, %v1787
      %v1796 = vmul.f32 %v1776, %v1787
      %v1797 = vmul.f32 %v1777, %v1787
      %v1798 = vmul.f32 %v1778, %v1787
      %v1799 = vmul.f32 %v1779, %v1787
      %v1800 = vmul.f32 %v1780, %v1787
      %v1801 = vmul.f32 %v1781, %v1787
      %v1802 = vmul.f32 %v1782, %v1787
      %v1803 = vmul.f32 %v1783, %v1787
      %v1804 = vadd.f32 %v1751, %v1788
      %v1805 = vadd.f32 %v1752, %v1789
      %v1806 = vadd.f32 %v1753, %v1790
      %v1807 = vadd.f32 %v1754, %v1791
      %v1808 = vadd.f32 %v1755, %v1792
      %v1809 = vadd.f32 %v1756, %v1793
      %v1810 = vadd.f32 %v1757, %v1794
      %v1811 = vadd.f32 %v1758, %v1795
      %v1812 = vadd.f32 %v1759, %v1796
      %v1813 = vadd.f32 %v1760, %v1797
      %v1814 = vadd.f32 %v1761, %v1798
      %v1815 = vadd.f32 %v1762, %v1799
      %v1816 = vadd.f32 %v1763, %v1800
      %v1817 = vadd.f32 %v1764, %v1801
      %v1818 = vadd.f32 %v1765, %v1802
      %v1819 = vadd.f32 %v1766, %v1803
      %s1820 = scalar_lea.vmem [#allocation3], 368
      %v1821 = vld [vmem:[%s1820] sm:$0xff]
      %v1822 = vld [vmem:[%s1820 + $0x8] sm:$0xff]
      %v1823 = vld [vmem:[%s1820 + $0x10] sm:$0xff]
      %v1824 = vld [vmem:[%s1820 + $0x18] sm:$0xff]
      %v1825 = vld [vmem:[%s1820 + $0x20] sm:$0xff]
      %v1826 = vld [vmem:[%s1820 + $0x28] sm:$0xff]
      %v1827 = vld [vmem:[%s1820 + $0x30] sm:$0xff]
      %v1828 = vld [vmem:[%s1820 + $0x38] sm:$0xff]
      %v1829 = vld [vmem:[%s1820 + $0x40] sm:$0xff]
      %v1830 = vld [vmem:[%s1820 + $0x48] sm:$0xff]
      %v1831 = vld [vmem:[%s1820 + $0x50] sm:$0xff]
      %v1832 = vld [vmem:[%s1820 + $0x58] sm:$0xff]
      %v1833 = vld [vmem:[%s1820 + $0x60] sm:$0xff]
      %v1834 = vld [vmem:[%s1820 + $0x68] sm:$0xff]
      %v1835 = vld [vmem:[%s1820 + $0x70] sm:$0xff]
      %v1836 = vld [vmem:[%s1820 + $0x78] sm:$0xff]
      %v1837 = vlaneseq
      %v1838 = vshrl.u32 %v1837, 7
      %v1839 = vsub.s32 0, %v1838
      %v1840 = vrot.slane %v975, %v1839
      %v1841 = vmul.f32 %v1821, %v1840
      %v1842 = vmul.f32 %v1822, %v1840
      %v1843 = vmul.f32 %v1823, %v1840
      %v1844 = vmul.f32 %v1824, %v1840
      %v1845 = vmul.f32 %v1825, %v1840
      %v1846 = vmul.f32 %v1826, %v1840
      %v1847 = vmul.f32 %v1827, %v1840
      %v1848 = vmul.f32 %v1828, %v1840
      %v1849 = vmul.f32 %v1829, %v1840
      %v1850 = vmul.f32 %v1830, %v1840
      %v1851 = vmul.f32 %v1831, %v1840
      %v1852 = vmul.f32 %v1832, %v1840
      %v1853 = vmul.f32 %v1833, %v1840
      %v1854 = vmul.f32 %v1834, %v1840
      %v1855 = vmul.f32 %v1835, %v1840
      %v1856 = vmul.f32 %v1836, %v1840
      %v1857 = vadd.f32 %v1804, %v1841
      %v1858 = vadd.f32 %v1805, %v1842
      %v1859 = vadd.f32 %v1806, %v1843
      %v1860 = vadd.f32 %v1807, %v1844
      %v1861 = vadd.f32 %v1808, %v1845
      %v1862 = vadd.f32 %v1809, %v1846
      %v1863 = vadd.f32 %v1810, %v1847
      %v1864 = vadd.f32 %v1811, %v1848
      %v1865 = vadd.f32 %v1812, %v1849
      %v1866 = vadd.f32 %v1813, %v1850
      %v1867 = vadd.f32 %v1814, %v1851
      %v1868 = vadd.f32 %v1815, %v1852
      %v1869 = vadd.f32 %v1816, %v1853
      %v1870 = vadd.f32 %v1817, %v1854
      %v1871 = vadd.f32 %v1818, %v1855
      %v1872 = vadd.f32 %v1819, %v1856
      %s1873 = scalar_lea.vmem [#allocation3], 688
      %v1874 = vld [vmem:[%s1873] sm:$0xff]
      %v1875 = vld [vmem:[%s1873 + $0x8] sm:$0xff]
      %v1876 = vld [vmem:[%s1873 + $0x10] sm:$0xff]
      %v1877 = vld [vmem:[%s1873 + $0x18] sm:$0xff]
      %v1878 = vld [vmem:[%s1873 + $0x20] sm:$0xff]
      %v1879 = vld [vmem:[%s1873 + $0x28] sm:$0xff]
      %v1880 = vld [vmem:[%s1873 + $0x30] sm:$0xff]
      %v1881 = vld [vmem:[%s1873 + $0x38] sm:$0xff]
      %v1882 = vld [vmem:[%s1873 + $0x40] sm:$0xff]
      %v1883 = vld [vmem:[%s1873 + $0x48] sm:$0xff]
      %v1884 = vld [vmem:[%s1873 + $0x50] sm:$0xff]
      %v1885 = vld [vmem:[%s1873 + $0x58] sm:$0xff]
      %v1886 = vld [vmem:[%s1873 + $0x60] sm:$0xff]
      %v1887 = vld [vmem:[%s1873 + $0x68] sm:$0xff]
      %v1888 = vld [vmem:[%s1873 + $0x70] sm:$0xff]
      %v1889 = vld [vmem:[%s1873 + $0x78] sm:$0xff]
      %v1890 = vlaneseq
      %v1891 = vshrl.u32 %v1890, 7
      %v1892 = vsub.s32 1, %v1891
      %v1893 = vrot.slane %v975, %v1892
      %v1894 = vmul.f32 %v1874, %v1893
      %v1895 = vmul.f32 %v1875, %v1893
      %v1896 = vmul.f32 %v1876, %v1893
      %v1897 = vmul.f32 %v1877, %v1893
      %v1898 = vmul.f32 %v1878, %v1893
      %v1899 = vmul.f32 %v1879, %v1893
      %v1900 = vmul.f32 %v1880, %v1893
      %v1901 = vmul.f32 %v1881, %v1893
      %v1902 = vmul.f32 %v1882, %v1893
      %v1903 = vmul.f32 %v1883, %v1893
      %v1904 = vmul.f32 %v1884, %v1893
      %v1905 = vmul.f32 %v1885, %v1893
      %v1906 = vmul.f32 %v1886, %v1893
      %v1907 = vmul.f32 %v1887, %v1893
      %v1908 = vmul.f32 %v1888, %v1893
      %v1909 = vmul.f32 %v1889, %v1893
      %v1910 = vadd.f32 %v1857, %v1894
      %v1911 = vadd.f32 %v1858, %v1895
      %v1912 = vadd.f32 %v1859, %v1896
      %v1913 = vadd.f32 %v1860, %v1897
      %v1914 = vadd.f32 %v1861, %v1898
      %v1915 = vadd.f32 %v1862, %v1899
      %v1916 = vadd.f32 %v1863, %v1900
      %v1917 = vadd.f32 %v1864, %v1901
      %v1918 = vadd.f32 %v1865, %v1902
      %v1919 = vadd.f32 %v1866, %v1903
      %v1920 = vadd.f32 %v1867, %v1904
      %v1921 = vadd.f32 %v1868, %v1905
      %v1922 = vadd.f32 %v1869, %v1906
      %v1923 = vadd.f32 %v1870, %v1907
      %v1924 = vadd.f32 %v1871, %v1908
      %v1925 = vadd.f32 %v1872, %v1909
      %s1926 = scalar_lea.vmem [#allocation3], 1008
      %v1927 = vld [vmem:[%s1926] sm:$0xff]
      %v1928 = vld [vmem:[%s1926 + $0x8] sm:$0xff]
      %v1929 = vld [vmem:[%s1926 + $0x10] sm:$0xff]
      %v1930 = vld [vmem:[%s1926 + $0x18] sm:$0xff]
      %v1931 = vld [vmem:[%s1926 + $0x20] sm:$0xff]
      %v1932 = vld [vmem:[%s1926 + $0x28] sm:$0xff]
      %v1933 = vld [vmem:[%s1926 + $0x30] sm:$0xff]
      %v1934 = vld [vmem:[%s1926 + $0x38] sm:$0xff]
      %v1935 = vld [vmem:[%s1926 + $0x40] sm:$0xff]
      %v1936 = vld [vmem:[%s1926 + $0x48] sm:$0xff]
      %v1937 = vld [vmem:[%s1926 + $0x50] sm:$0xff]
      %v1938 = vld [vmem:[%s1926 + $0x58] sm:$0xff]
      %v1939 = vld [vmem:[%s1926 + $0x60] sm:$0xff]
      %v1940 = vld [vmem:[%s1926 + $0x68] sm:$0xff]
      %v1941 = vld [vmem:[%s1926 + $0x70] sm:$0xff]
      %v1942 = vld [vmem:[%s1926 + $0x78] sm:$0xff]
      %v1943 = vlaneseq
      %v1944 = vshrl.u32 %v1943, 7
      %v1945 = vsub.s32 2, %v1944
      %v1946 = vrot.slane %v975, %v1945
      %v1947 = vmul.f32 %v1927, %v1946
      %v1948 = vmul.f32 %v1928, %v1946
      %v1949 = vmul.f32 %v1929, %v1946
      %v1950 = vmul.f32 %v1930, %v1946
      %v1951 = vmul.f32 %v1931, %v1946
      %v1952 = vmul.f32 %v1932, %v1946
      %v1953 = vmul.f32 %v1933, %v1946
      %v1954 = vmul.f32 %v1934, %v1946
      %v1955 = vmul.f32 %v1935, %v1946
      %v1956 = vmul.f32 %v1936, %v1946
      %v1957 = vmul.f32 %v1937, %v1946
      %v1958 = vmul.f32 %v1938, %v1946
      %v1959 = vmul.f32 %v1939, %v1946
      %v1960 = vmul.f32 %v1940, %v1946
      %v1961 = vmul.f32 %v1941, %v1946
      %v1962 = vmul.f32 %v1942, %v1946
      %v1963 = vadd.f32 %v1910, %v1947
      %v1964 = vadd.f32 %v1911, %v1948
      %v1965 = vadd.f32 %v1912, %v1949
      %v1966 = vadd.f32 %v1913, %v1950
      %v1967 = vadd.f32 %v1914, %v1951
      %v1968 = vadd.f32 %v1915, %v1952
      %v1969 = vadd.f32 %v1916, %v1953
      %v1970 = vadd.f32 %v1917, %v1954
      %v1971 = vadd.f32 %v1918, %v1955
      %v1972 = vadd.f32 %v1919, %v1956
      %v1973 = vadd.f32 %v1920, %v1957
      %v1974 = vadd.f32 %v1921, %v1958
      %v1975 = vadd.f32 %v1922, %v1959
      %v1976 = vadd.f32 %v1923, %v1960
      %v1977 = vadd.f32 %v1924, %v1961
      %v1978 = vadd.f32 %v1925, %v1962
      %s1979 = scalar_lea.vmem [#allocation3], 1328
      %v1980 = vld [vmem:[%s1979] sm:$0xff]
      %v1981 = vld [vmem:[%s1979 + $0x8] sm:$0xff]
      %v1982 = vld [vmem:[%s1979 + $0x10] sm:$0xff]
      %v1983 = vld [vmem:[%s1979 + $0x18] sm:$0xff]
      %v1984 = vld [vmem:[%s1979 + $0x20] sm:$0xff]
      %v1985 = vld [vmem:[%s1979 + $0x28] sm:$0xff]
      %v1986 = vld [vmem:[%s1979 + $0x30] sm:$0xff]
      %v1987 = vld [vmem:[%s1979 + $0x38] sm:$0xff]
      %v1988 = vld [vmem:[%s1979 + $0x40] sm:$0xff]
      %v1989 = vld [vmem:[%s1979 + $0x48] sm:$0xff]
      %v1990 = vld [vmem:[%s1979 + $0x50] sm:$0xff]
      %v1991 = vld [vmem:[%s1979 + $0x58] sm:$0xff]
      %v1992 = vld [vmem:[%s1979 + $0x60] sm:$0xff]
      %v1993 = vld [vmem:[%s1979 + $0x68] sm:$0xff]
      %v1994 = vld [vmem:[%s1979 + $0x70] sm:$0xff]
      %v1995 = vld [vmem:[%s1979 + $0x78] sm:$0xff]
      %v1996 = vlaneseq
      %v1997 = vshrl.u32 %v1996, 7
      %v1998 = vsub.s32 3, %v1997
      %v1999 = vrot.slane %v975, %v1998
      %v2000 = vmul.f32 %v1980, %v1999
      %v2001 = vmul.f32 %v1981, %v1999
      %v2002 = vmul.f32 %v1982, %v1999
      %v2003 = vmul.f32 %v1983, %v1999
      %v2004 = vmul.f32 %v1984, %v1999
      %v2005 = vmul.f32 %v1985, %v1999
      %v2006 = vmul.f32 %v1986, %v1999
      %v2007 = vmul.f32 %v1987, %v1999
      %v2008 = vmul.f32 %v1988, %v1999
      %v2009 = vmul.f32 %v1989, %v1999
      %v2010 = vmul.f32 %v1990, %v1999
      %v2011 = vmul.f32 %v1991, %v1999
      %v2012 = vmul.f32 %v1992, %v1999
      %v2013 = vmul.f32 %v1993, %v1999
      %v2014 = vmul.f32 %v1994, %v1999
      %v2015 = vmul.f32 %v1995, %v1999
      %v2016 = vadd.f32 %v1963, %v2000
      %v2017 = vadd.f32 %v1964, %v2001
      %v2018 = vadd.f32 %v1965, %v2002
      %v2019 = vadd.f32 %v1966, %v2003
      %v2020 = vadd.f32 %v1967, %v2004
      %v2021 = vadd.f32 %v1968, %v2005
      %v2022 = vadd.f32 %v1969, %v2006
      %v2023 = vadd.f32 %v1970, %v2007
      %v2024 = vadd.f32 %v1971, %v2008
      %v2025 = vadd.f32 %v1972, %v2009
      %v2026 = vadd.f32 %v1973, %v2010
      %v2027 = vadd.f32 %v1974, %v2011
      %v2028 = vadd.f32 %v1975, %v2012
      %v2029 = vadd.f32 %v1976, %v2013
      %v2030 = vadd.f32 %v1977, %v2014
      %v2031 = vadd.f32 %v1978, %v2015
      %s2032 = scalar_lea.vmem [#allocation3], 64
      %v2033 = vld [vmem:[%s2032] sm:$0xff]
      %v2034 = vld [vmem:[%s2032 + $0x8] sm:$0xff]
      %v2035 = vld [vmem:[%s2032 + $0x10] sm:$0xff]
      %v2036 = vld [vmem:[%s2032 + $0x18] sm:$0xff]
      %v2037 = vld [vmem:[%s2032 + $0x20] sm:$0xff]
      %v2038 = vld [vmem:[%s2032 + $0x28] sm:$0xff]
      %v2039 = vld [vmem:[%s2032 + $0x30] sm:$0xff]
      %v2040 = vld [vmem:[%s2032 + $0x38] sm:$0xff]
      %v2041 = vld [vmem:[%s2032 + $0x40] sm:$0xff]
      %v2042 = vld [vmem:[%s2032 + $0x48] sm:$0xff]
      %v2043 = vld [vmem:[%s2032 + $0x50] sm:$0xff]
      %v2044 = vld [vmem:[%s2032 + $0x58] sm:$0xff]
      %v2045 = vld [vmem:[%s2032 + $0x60] sm:$0xff]
      %v2046 = vld [vmem:[%s2032 + $0x68] sm:$0xff]
      %v2047 = vld [vmem:[%s2032 + $0x70] sm:$0xff]
      %v2048 = vld [vmem:[%s2032 + $0x78] sm:$0xff]
      %v2049 = vlaneseq
      %v2050 = vshrl.u32 %v2049, 7
      %v2051 = vsub.s32 4, %v2050
      %v2052 = vrot.slane %v975, %v2051
      %v2053 = vmul.f32 %v2033, %v2052
      %v2054 = vmul.f32 %v2034, %v2052
      %v2055 = vmul.f32 %v2035, %v2052
      %v2056 = vmul.f32 %v2036, %v2052
      %v2057 = vmul.f32 %v2037, %v2052
      %v2058 = vmul.f32 %v2038, %v2052
      %v2059 = vmul.f32 %v2039, %v2052
      %v2060 = vmul.f32 %v2040, %v2052
      %v2061 = vmul.f32 %v2041, %v2052
      %v2062 = vmul.f32 %v2042, %v2052
      %v2063 = vmul.f32 %v2043, %v2052
      %v2064 = vmul.f32 %v2044, %v2052
      %v2065 = vmul.f32 %v2045, %v2052
      %v2066 = vmul.f32 %v2046, %v2052
      %v2067 = vmul.f32 %v2047, %v2052
      %v2068 = vmul.f32 %v2048, %v2052
      %v2069 = vadd.f32 %v2016, %v2053
      %v2070 = vadd.f32 %v2017, %v2054
      %v2071 = vadd.f32 %v2018, %v2055
      %v2072 = vadd.f32 %v2019, %v2056
      %v2073 = vadd.f32 %v2020, %v2057
      %v2074 = vadd.f32 %v2021, %v2058
      %v2075 = vadd.f32 %v2022, %v2059
      %v2076 = vadd.f32 %v2023, %v2060
      %v2077 = vadd.f32 %v2024, %v2061
      %v2078 = vadd.f32 %v2025, %v2062
      %v2079 = vadd.f32 %v2026, %v2063
      %v2080 = vadd.f32 %v2027, %v2064
      %v2081 = vadd.f32 %v2028, %v2065
      %v2082 = vadd.f32 %v2029, %v2066
      %v2083 = vadd.f32 %v2030, %v2067
      %v2084 = vadd.f32 %v2031, %v2068
      %s2085 = scalar_lea.vmem [#allocation3], 384
      %v2086 = vld [vmem:[%s2085] sm:$0xff]
      %v2087 = vld [vmem:[%s2085 + $0x8] sm:$0xff]
      %v2088 = vld [vmem:[%s2085 + $0x10] sm:$0xff]
      %v2089 = vld [vmem:[%s2085 + $0x18] sm:$0xff]
      %v2090 = vld [vmem:[%s2085 + $0x20] sm:$0xff]
      %v2091 = vld [vmem:[%s2085 + $0x28] sm:$0xff]
      %v2092 = vld [vmem:[%s2085 + $0x30] sm:$0xff]
      %v2093 = vld [vmem:[%s2085 + $0x38] sm:$0xff]
      %v2094 = vld [vmem:[%s2085 + $0x40] sm:$0xff]
      %v2095 = vld [vmem:[%s2085 + $0x48] sm:$0xff]
      %v2096 = vld [vmem:[%s2085 + $0x50] sm:$0xff]
      %v2097 = vld [vmem:[%s2085 + $0x58] sm:$0xff]
      %v2098 = vld [vmem:[%s2085 + $0x60] sm:$0xff]
      %v2099 = vld [vmem:[%s2085 + $0x68] sm:$0xff]
      %v2100 = vld [vmem:[%s2085 + $0x70] sm:$0xff]
      %v2101 = vld [vmem:[%s2085 + $0x78] sm:$0xff]
      %v2102 = vlaneseq
      %v2103 = vshrl.u32 %v2102, 7
      %v2104 = vsub.s32 5, %v2103
      %v2105 = vrot.slane %v975, %v2104
      %v2106 = vmul.f32 %v2086, %v2105
      %v2107 = vmul.f32 %v2087, %v2105
      %v2108 = vmul.f32 %v2088, %v2105
      %v2109 = vmul.f32 %v2089, %v2105
      %v2110 = vmul.f32 %v2090, %v2105
      %v2111 = vmul.f32 %v2091, %v2105
      %v2112 = vmul.f32 %v2092, %v2105
      %v2113 = vmul.f32 %v2093, %v2105
      %v2114 = vmul.f32 %v2094, %v2105
      %v2115 = vmul.f32 %v2095, %v2105
      %v2116 = vmul.f32 %v2096, %v2105
      %v2117 = vmul.f32 %v2097, %v2105
      %v2118 = vmul.f32 %v2098, %v2105
      %v2119 = vmul.f32 %v2099, %v2105
      %v2120 = vmul.f32 %v2100, %v2105
      %v2121 = vmul.f32 %v2101, %v2105
      %v2122 = vadd.f32 %v2069, %v2106
      %v2123 = vadd.f32 %v2070, %v2107
      %v2124 = vadd.f32 %v2071, %v2108
      %v2125 = vadd.f32 %v2072, %v2109
      %v2126 = vadd.f32 %v2073, %v2110
      %v2127 = vadd.f32 %v2074, %v2111
      %v2128 = vadd.f32 %v2075, %v2112
      %v2129 = vadd.f32 %v2076, %v2113
      %v2130 = vadd.f32 %v2077, %v2114
      %v2131 = vadd.f32 %v2078, %v2115
      %v2132 = vadd.f32 %v2079, %v2116
      %v2133 = vadd.f32 %v2080, %v2117
      %v2134 = vadd.f32 %v2081, %v2118
      %v2135 = vadd.f32 %v2082, %v2119
      %v2136 = vadd.f32 %v2083, %v2120
      %v2137 = vadd.f32 %v2084, %v2121
      %s2138 = scalar_lea.vmem [#allocation3], 704
      %v2139 = vld [vmem:[%s2138] sm:$0xff]
      %v2140 = vld [vmem:[%s2138 + $0x8] sm:$0xff]
      %v2141 = vld [vmem:[%s2138 + $0x10] sm:$0xff]
      %v2142 = vld [vmem:[%s2138 + $0x18] sm:$0xff]
      %v2143 = vld [vmem:[%s2138 + $0x20] sm:$0xff]
      %v2144 = vld [vmem:[%s2138 + $0x28] sm:$0xff]
      %v2145 = vld [vmem:[%s2138 + $0x30] sm:$0xff]
      %v2146 = vld [vmem:[%s2138 + $0x38] sm:$0xff]
      %v2147 = vld [vmem:[%s2138 + $0x40] sm:$0xff]
      %v2148 = vld [vmem:[%s2138 + $0x48] sm:$0xff]
      %v2149 = vld [vmem:[%s2138 + $0x50] sm:$0xff]
      %v2150 = vld [vmem:[%s2138 + $0x58] sm:$0xff]
      %v2151 = vld [vmem:[%s2138 + $0x60] sm:$0xff]
      %v2152 = vld [vmem:[%s2138 + $0x68] sm:$0xff]
      %v2153 = vld [vmem:[%s2138 + $0x70] sm:$0xff]
      %v2154 = vld [vmem:[%s2138 + $0x78] sm:$0xff]
      %v2155 = vlaneseq
      %v2156 = vshrl.u32 %v2155, 7
      %v2157 = vsub.s32 6, %v2156
      %v2158 = vrot.slane %v975, %v2157
      %v2159 = vmul.f32 %v2139, %v2158
      %v2160 = vmul.f32 %v2140, %v2158
      %v2161 = vmul.f32 %v2141, %v2158
      %v2162 = vmul.f32 %v2142, %v2158
      %v2163 = vmul.f32 %v2143, %v2158
      %v2164 = vmul.f32 %v2144, %v2158
      %v2165 = vmul.f32 %v2145, %v2158
      %v2166 = vmul.f32 %v2146, %v2158
      %v2167 = vmul.f32 %v2147, %v2158
      %v2168 = vmul.f32 %v2148, %v2158
      %v2169 = vmul.f32 %v2149, %v2158
      %v2170 = vmul.f32 %v2150, %v2158
      %v2171 = vmul.f32 %v2151, %v2158
      %v2172 = vmul.f32 %v2152, %v2158
      %v2173 = vmul.f32 %v2153, %v2158
      %v2174 = vmul.f32 %v2154, %v2158
      %v2175 = vadd.f32 %v2122, %v2159
      %v2176 = vadd.f32 %v2123, %v2160
      %v2177 = vadd.f32 %v2124, %v2161
      %v2178 = vadd.f32 %v2125, %v2162
      %v2179 = vadd.f32 %v2126, %v2163
      %v2180 = vadd.f32 %v2127, %v2164
      %v2181 = vadd.f32 %v2128, %v2165
      %v2182 = vadd.f32 %v2129, %v2166
      %v2183 = vadd.f32 %v2130, %v2167
      %v2184 = vadd.f32 %v2131, %v2168
      %v2185 = vadd.f32 %v2132, %v2169
      %v2186 = vadd.f32 %v2133, %v2170
      %v2187 = vadd.f32 %v2134, %v2171
      %v2188 = vadd.f32 %v2135, %v2172
      %v2189 = vadd.f32 %v2136, %v2173
      %v2190 = vadd.f32 %v2137, %v2174
      %s2191 = scalar_lea.vmem [#allocation3], 1024
      %v2192 = vld [vmem:[%s2191] sm:$0xff]
      %v2193 = vld [vmem:[%s2191 + $0x8] sm:$0xff]
      %v2194 = vld [vmem:[%s2191 + $0x10] sm:$0xff]
      %v2195 = vld [vmem:[%s2191 + $0x18] sm:$0xff]
      %v2196 = vld [vmem:[%s2191 + $0x20] sm:$0xff]
      %v2197 = vld [vmem:[%s2191 + $0x28] sm:$0xff]
      %v2198 = vld [vmem:[%s2191 + $0x30] sm:$0xff]
      %v2199 = vld [vmem:[%s2191 + $0x38] sm:$0xff]
      %v2200 = vld [vmem:[%s2191 + $0x40] sm:$0xff]
      %v2201 = vld [vmem:[%s2191 + $0x48] sm:$0xff]
      %v2202 = vld [vmem:[%s2191 + $0x50] sm:$0xff]
      %v2203 = vld [vmem:[%s2191 + $0x58] sm:$0xff]
      %v2204 = vld [vmem:[%s2191 + $0x60] sm:$0xff]
      %v2205 = vld [vmem:[%s2191 + $0x68] sm:$0xff]
      %v2206 = vld [vmem:[%s2191 + $0x70] sm:$0xff]
      %v2207 = vld [vmem:[%s2191 + $0x78] sm:$0xff]
      %v2208 = vlaneseq
      %v2209 = vshrl.u32 %v2208, 7
      %v2210 = vsub.s32 7, %v2209
      %v2211 = vrot.slane %v975, %v2210
      %v2212 = vmul.f32 %v2192, %v2211
      %v2213 = vmul.f32 %v2193, %v2211
      %v2214 = vmul.f32 %v2194, %v2211
      %v2215 = vmul.f32 %v2195, %v2211
      %v2216 = vmul.f32 %v2196, %v2211
      %v2217 = vmul.f32 %v2197, %v2211
      %v2218 = vmul.f32 %v2198, %v2211
      %v2219 = vmul.f32 %v2199, %v2211
      %v2220 = vmul.f32 %v2200, %v2211
      %v2221 = vmul.f32 %v2201, %v2211
      %v2222 = vmul.f32 %v2202, %v2211
      %v2223 = vmul.f32 %v2203, %v2211
      %v2224 = vmul.f32 %v2204, %v2211
      %v2225 = vmul.f32 %v2205, %v2211
      %v2226 = vmul.f32 %v2206, %v2211
      %v2227 = vmul.f32 %v2207, %v2211
      %v2228 = vadd.f32 %v2175, %v2212
      %v2229 = vadd.f32 %v2176, %v2213
      %v2230 = vadd.f32 %v2177, %v2214
      %v2231 = vadd.f32 %v2178, %v2215
      %v2232 = vadd.f32 %v2179, %v2216
      %v2233 = vadd.f32 %v2180, %v2217
      %v2234 = vadd.f32 %v2181, %v2218
      %v2235 = vadd.f32 %v2182, %v2219
      %v2236 = vadd.f32 %v2183, %v2220
      %v2237 = vadd.f32 %v2184, %v2221
      %v2238 = vadd.f32 %v2185, %v2222
      %v2239 = vadd.f32 %v2186, %v2223
      %v2240 = vadd.f32 %v2187, %v2224
      %v2241 = vadd.f32 %v2188, %v2225
      %v2242 = vadd.f32 %v2189, %v2226
      %v2243 = vadd.f32 %v2190, %v2227
      %s2244 = scalar_lea.vmem [#allocation3], 1344
      %v2245 = vld [vmem:[%s2244] sm:$0xff]
      %v2246 = vld [vmem:[%s2244 + $0x8] sm:$0xff]
      %v2247 = vld [vmem:[%s2244 + $0x10] sm:$0xff]
      %v2248 = vld [vmem:[%s2244 + $0x18] sm:$0xff]
      %v2249 = vld [vmem:[%s2244 + $0x20] sm:$0xff]
      %v2250 = vld [vmem:[%s2244 + $0x28] sm:$0xff]
      %v2251 = vld [vmem:[%s2244 + $0x30] sm:$0xff]
      %v2252 = vld [vmem:[%s2244 + $0x38] sm:$0xff]
      %v2253 = vld [vmem:[%s2244 + $0x40] sm:$0xff]
      %v2254 = vld [vmem:[%s2244 + $0x48] sm:$0xff]
      %v2255 = vld [vmem:[%s2244 + $0x50] sm:$0xff]
      %v2256 = vld [vmem:[%s2244 + $0x58] sm:$0xff]
      %v2257 = vld [vmem:[%s2244 + $0x60] sm:$0xff]
      %v2258 = vld [vmem:[%s2244 + $0x68] sm:$0xff]
      %v2259 = vld [vmem:[%s2244 + $0x70] sm:$0xff]
      %v2260 = vld [vmem:[%s2244 + $0x78] sm:$0xff]
      %v2261 = vlaneseq
      %v2262 = vshrl.u32 %v2261, 7
      %v2263 = vsub.s32 0, %v2262
      %v2264 = vrot.slane %v976, %v2263
      %v2265 = vmul.f32 %v2245, %v2264
      %v2266 = vmul.f32 %v2246, %v2264
      %v2267 = vmul.f32 %v2247, %v2264
      %v2268 = vmul.f32 %v2248, %v2264
      %v2269 = vmul.f32 %v2249, %v2264
      %v2270 = vmul.f32 %v2250, %v2264
      %v2271 = vmul.f32 %v2251, %v2264
      %v2272 = vmul.f32 %v2252, %v2264
      %v2273 = vmul.f32 %v2253, %v2264
      %v2274 = vmul.f32 %v2254, %v2264
      %v2275 = vmul.f32 %v2255, %v2264
      %v2276 = vmul.f32 %v2256, %v2264
      %v2277 = vmul.f32 %v2257, %v2264
      %v2278 = vmul.f32 %v2258, %v2264
      %v2279 = vmul.f32 %v2259, %v2264
      %v2280 = vmul.f32 %v2260, %v2264
      %v2281 = vadd.f32 %v2228, %v2265
      %v2282 = vadd.f32 %v2229, %v2266
      %v2283 = vadd.f32 %v2230, %v2267
      %v2284 = vadd.f32 %v2231, %v2268
      %v2285 = vadd.f32 %v2232, %v2269
      %v2286 = vadd.f32 %v2233, %v2270
      %v2287 = vadd.f32 %v2234, %v2271
      %v2288 = vadd.f32 %v2235, %v2272
      %v2289 = vadd.f32 %v2236, %v2273
      %v2290 = vadd.f32 %v2237, %v2274
      %v2291 = vadd.f32 %v2238, %v2275
      %v2292 = vadd.f32 %v2239, %v2276
      %v2293 = vadd.f32 %v2240, %v2277
      %v2294 = vadd.f32 %v2241, %v2278
      %v2295 = vadd.f32 %v2242, %v2279
      %v2296 = vadd.f32 %v2243, %v2280
      %2297 = vst [vmem:[%s204] sm:$0xff] %v2281
      %2298 = vst [vmem:[%s204 + $0x8] sm:$0xff] %v2282
      %2299 = vst [vmem:[%s204 + $0x10] sm:$0xff] %v2283
      %2300 = vst [vmem:[%s204 + $0x18] sm:$0xff] %v2284
      %2301 = vst [vmem:[%s204 + $0x20] sm:$0xff] %v2285
      %2302 = vst [vmem:[%s204 + $0x28] sm:$0xff] %v2286
      %2303 = vst [vmem:[%s204 + $0x30] sm:$0xff] %v2287
      %2304 = vst [vmem:[%s204 + $0x38] sm:$0xff] %v2288
      %2305 = vst [vmem:[%s204 + $0x40] sm:$0xff] %v2289
      %2306 = vst [vmem:[%s204 + $0x48] sm:$0xff] %v2290
      %2307 = vst [vmem:[%s204 + $0x50] sm:$0xff] %v2291
      %2308 = vst [vmem:[%s204 + $0x58] sm:$0xff] %v2292
      %2309 = vst [vmem:[%s204 + $0x60] sm:$0xff] %v2293
      %2310 = vst [vmem:[%s204 + $0x68] sm:$0xff] %v2294
      %2311 = vst [vmem:[%s204 + $0x70] sm:$0xff] %v2295
      %2312 = vst [vmem:[%s204 + $0x78] sm:$0xff] %v2296
      %v2313 = vadd.f32 %v2281, %v2282
      %v2314 = vadd.f32 %v2313, %v2283
      %v2315 = vadd.f32 %v2314, %v2284
      %v2316 = vadd.f32 %v2315, %v2285
      %v2317 = vadd.f32 %v2316, %v2286
      %v2318 = vadd.f32 %v2317, %v2287
      %v2319 = vadd.f32 %v2318, %v2288
      %v2320 = vadd.f32 %v2319, %v2289
      %v2321 = vadd.f32 %v2320, %v2290
      %v2322 = vadd.f32 %v2321, %v2291
      %v2323 = vadd.f32 %v2322, %v2292
      %v2324 = vadd.f32 %v2323, %v2293
      %v2325 = vadd.f32 %v2324, %v2294
      %v2326 = vadd.f32 %v2325, %v2295
      %v2327 = vadd.f32 %v2326, %v2296
      %v2328 = vrot.slane %v2327, 4
      %v2329 = vadd.f32 %v2327, %v2328
      %v2330 = vrot.slane %v2329, 2
      %v2331 = vadd.f32 %v2329, %v2330
      %v2332 = vrot.slane %v2331, 1
      %v2333 = vadd.f32 %v2331, %v2332
      %v2334 = vadd.f32 %v2333, 0.0
      %v2335 = vmul.f32 %v2281, %v2281
      %v2336 = vmul.f32 %v2282, %v2282
      %v2337 = vmul.f32 %v2283, %v2283
      %v2338 = vmul.f32 %v2284, %v2284
      %v2339 = vmul.f32 %v2285, %v2285
      %v2340 = vmul.f32 %v2286, %v2286
      %v2341 = vmul.f32 %v2287, %v2287
      %v2342 = vmul.f32 %v2288, %v2288
      %v2343 = vmul.f32 %v2289, %v2289
      %v2344 = vmul.f32 %v2290, %v2290
      %v2345 = vmul.f32 %v2291, %v2291
      %v2346 = vmul.f32 %v2292, %v2292
      %v2347 = vmul.f32 %v2293, %v2293
      %v2348 = vmul.f32 %v2294, %v2294
      %v2349 = vmul.f32 %v2295, %v2295
      %v2350 = vmul.f32 %v2296, %v2296
      %v2351 = vadd.f32 %v2335, %v2336
      %v2352 = vadd.f32 %v2351, %v2337
      %v2353 = vadd.f32 %v2352, %v2338
      %v2354 = vadd.f32 %v2353, %v2339
      %v2355 = vadd.f32 %v2354, %v2340
      %v2356 = vadd.f32 %v2355, %v2341
      %v2357 = vadd.f32 %v2356, %v2342
      %v2358 = vadd.f32 %v2357, %v2343
      %v2359 = vadd.f32 %v2358, %v2344
      %v2360 = vadd.f32 %v2359, %v2345
      %v2361 = vadd.f32 %v2360, %v2346
      %v2362 = vadd.f32 %v2361, %v2347
      %v2363 = vadd.f32 %v2362, %v2348
      %v2364 = vadd.f32 %v2363, %v2349
      %v2365 = vadd.f32 %v2364, %v2350
      %v2366 = vrot.slane %v2365, 4
      %v2367 = vadd.f32 %v2365, %v2366
      %v2368 = vrot.slane %v2367, 2
      %v2369 = vadd.f32 %v2367, %v2368
      %v2370 = vrot.slane %v2369, 1
      %v2371 = vadd.f32 %v2369, %v2370
      %v2372 = vadd.f32 %v2371, 0.0
      %s2373 = scalar_lea.vmem [#allocation3], 128
      %v2374 = vld [vmem:[%s2373] sm:$0xff]
      %v2375 = vld [vmem:[%s2373 + $0x8] sm:$0xff]
      %v2376 = vld [vmem:[%s2373 + $0x10] sm:$0xff]
      %v2377 = vld [vmem:[%s2373 + $0x18] sm:$0xff]
      %v2378 = vld [vmem:[%s2373 + $0x20] sm:$0xff]
      %v2379 = vld [vmem:[%s2373 + $0x28] sm:$0xff]
      %v2380 = vld [vmem:[%s2373 + $0x30] sm:$0xff]
      %v2381 = vld [vmem:[%s2373 + $0x38] sm:$0xff]
      %v2382 = vld [vmem:[%s2373 + $0x40] sm:$0xff]
      %v2383 = vld [vmem:[%s2373 + $0x48] sm:$0xff]
      %v2384 = vld [vmem:[%s2373 + $0x50] sm:$0xff]
      %v2385 = vld [vmem:[%s2373 + $0x58] sm:$0xff]
      %v2386 = vld [vmem:[%s2373 + $0x60] sm:$0xff]
      %v2387 = vld [vmem:[%s2373 + $0x68] sm:$0xff]
      %v2388 = vld [vmem:[%s2373 + $0x70] sm:$0xff]
      %v2389 = vld [vmem:[%s2373 + $0x78] sm:$0xff]
      %v2390 = vmul.f32 %v2374, %v996
      %v2391 = vmul.f32 %v2375, %v996
      %v2392 = vmul.f32 %v2376, %v996
      %v2393 = vmul.f32 %v2377, %v996
      %v2394 = vmul.f32 %v2378, %v996
      %v2395 = vmul.f32 %v2379, %v996
      %v2396 = vmul.f32 %v2380, %v996
      %v2397 = vmul.f32 %v2381, %v996
      %v2398 = vmul.f32 %v2382, %v996
      %v2399 = vmul.f32 %v2383, %v996
      %v2400 = vmul.f32 %v2384, %v996
      %v2401 = vmul.f32 %v2385, %v996
      %v2402 = vmul.f32 %v2386, %v996
      %v2403 = vmul.f32 %v2387, %v996
      %v2404 = vmul.f32 %v2388, %v996
      %v2405 = vmul.f32 %v2389, %v996
      %v2406 = vadd.f32 %v2390, 0.0
      %v2407 = vadd.f32 %v2391, 0.0
      %v2408 = vadd.f32 %v2392, 0.0
      %v2409 = vadd.f32 %v2393, 0.0
      %v2410 = vadd.f32 %v2394, 0.0
      %v2411 = vadd.f32 %v2395, 0.0
      %v2412 = vadd.f32 %v2396, 0.0
      %v2413 = vadd.f32 %v2397, 0.0
      %v2414 = vadd.f32 %v2398, 0.0
      %v2415 = vadd.f32 %v2399, 0.0
      %v2416 = vadd.f32 %v2400, 0.0
      %v2417 = vadd.f32 %v2401, 0.0
      %v2418 = vadd.f32 %v2402, 0.0
      %v2419 = vadd.f32 %v2403, 0.0
      %v2420 = vadd.f32 %v2404, 0.0
      %v2421 = vadd.f32 %v2405, 0.0
      %s2422 = scalar_lea.vmem [#allocation3], 448
      %v2423 = vld [vmem:[%s2422] sm:$0xff]
      %v2424 = vld [vmem:[%s2422 + $0x8] sm:$0xff]
      %v2425 = vld [vmem:[%s2422 + $0x10] sm:$0xff]
      %v2426 = vld [vmem:[%s2422 + $0x18] sm:$0xff]
      %v2427 = vld [vmem:[%s2422 + $0x20] sm:$0xff]
      %v2428 = vld [vmem:[%s2422 + $0x28] sm:$0xff]
      %v2429 = vld [vmem:[%s2422 + $0x30] sm:$0xff]
      %v2430 = vld [vmem:[%s2422 + $0x38] sm:$0xff]
      %v2431 = vld [vmem:[%s2422 + $0x40] sm:$0xff]
      %v2432 = vld [vmem:[%s2422 + $0x48] sm:$0xff]
      %v2433 = vld [vmem:[%s2422 + $0x50] sm:$0xff]
      %v2434 = vld [vmem:[%s2422 + $0x58] sm:$0xff]
      %v2435 = vld [vmem:[%s2422 + $0x60] sm:$0xff]
      %v2436 = vld [vmem:[%s2422 + $0x68] sm:$0xff]
      %v2437 = vld [vmem:[%s2422 + $0x70] sm:$0xff]
      %v2438 = vld [vmem:[%s2422 + $0x78] sm:$0xff]
      %v2439 = vmul.f32 %v2423, %v1048
      %v2440 = vmul.f32 %v2424, %v1048
      %v2441 = vmul.f32 %v2425, %v1048
      %v2442 = vmul.f32 %v2426, %v1048
      %v2443 = vmul.f32 %v2427, %v1048
      %v2444 = vmul.f32 %v2428, %v1048
      %v2445 = vmul.f32 %v2429, %v1048
      %v2446 = vmul.f32 %v2430, %v1048
      %v2447 = vmul.f32 %v2431, %v1048
      %v2448 = vmul.f32 %v2432, %v1048
      %v2449 = vmul.f32 %v2433, %v1048
      %v2450 = vmul.f32 %v2434, %v1048
      %v2451 = vmul.f32 %v2435, %v1048
      %v2452 = vmul.f32 %v2436, %v1048
      %v2453 = vmul.f32 %v2437, %v1048
      %v2454 = vmul.f32 %v2438, %v1048
      %v2455 = vadd.f32 %v2406, %v2439
      %v2456 = vadd.f32 %v2407, %v2440
      %v2457 = vadd.f32 %v2408, %v2441
      %v2458 = vadd.f32 %v2409, %v2442
      %v2459 = vadd.f32 %v2410, %v2443
      %v2460 = vadd.f32 %v2411, %v2444
      %v2461 = vadd.f32 %v2412, %v2445
      %v2462 = vadd.f32 %v2413, %v2446
      %v2463 = vadd.f32 %v2414, %v2447
      %v2464 = vadd.f32 %v2415, %v2448
      %v2465 = vadd.f32 %v2416, %v2449
      %v2466 = vadd.f32 %v2417, %v2450
      %v2467 = vadd.f32 %v2418, %v2451
      %v2468 = vadd.f32 %v2419, %v2452
      %v2469 = vadd.f32 %v2420, %v2453
      %v2470 = vadd.f32 %v2421, %v2454
      %s2471 = scalar_lea.vmem [#allocation3], 768
      %v2472 = vld [vmem:[%s2471] sm:$0xff]
      %v2473 = vld [vmem:[%s2471 + $0x8] sm:$0xff]
      %v2474 = vld [vmem:[%s2471 + $0x10] sm:$0xff]
      %v2475 = vld [vmem:[%s2471 + $0x18] sm:$0xff]
      %v2476 = vld [vmem:[%s2471 + $0x20] sm:$0xff]
      %v2477 = vld [vmem:[%s2471 + $0x28] sm:$0xff]
      %v2478 = vld [vmem:[%s2471 + $0x30] sm:$0xff]
      %v2479 = vld [vmem:[%s2471 + $0x38] sm:$0xff]
      %v2480 = vld [vmem:[%s2471 + $0x40] sm:$0xff]
      %v2481 = vld [vmem:[%s2471 + $0x48] sm:$0xff]
      %v2482 = vld [vmem:[%s2471 + $0x50] sm:$0xff]
      %v2483 = vld [vmem:[%s2471 + $0x58] sm:$0xff]
      %v2484 = vld [vmem:[%s2471 + $0x60] sm:$0xff]
      %v2485 = vld [vmem:[%s2471 + $0x68] sm:$0xff]
      %v2486 = vld [vmem:[%s2471 + $0x70] sm:$0xff]
      %v2487 = vld [vmem:[%s2471 + $0x78] sm:$0xff]
      %v2488 = vmul.f32 %v2472, %v1100
      %v2489 = vmul.f32 %v2473, %v1100
      %v2490 = vmul.f32 %v2474, %v1100
      %v2491 = vmul.f32 %v2475, %v1100
      %v2492 = vmul.f32 %v2476, %v1100
      %v2493 = vmul.f32 %v2477, %v1100
      %v2494 = vmul.f32 %v2478, %v1100
      %v2495 = vmul.f32 %v2479, %v1100
      %v2496 = vmul.f32 %v2480, %v1100
      %v2497 = vmul.f32 %v2481, %v1100
      %v2498 = vmul.f32 %v2482, %v1100
      %v2499 = vmul.f32 %v2483, %v1100
      %v2500 = vmul.f32 %v2484, %v1100
      %v2501 = vmul.f32 %v2485, %v1100
      %v2502 = vmul.f32 %v2486, %v1100
      %v2503 = vmul.f32 %v2487, %v1100
      %v2504 = vadd.f32 %v2455, %v2488
      %v2505 = vadd.f32 %v2456, %v2489
      %v2506 = vadd.f32 %v2457, %v2490
      %v2507 = vadd.f32 %v2458, %v2491
      %v2508 = vadd.f32 %v2459, %v2492
      %v2509 = vadd.f32 %v2460, %v2493
      %v2510 = vadd.f32 %v2461, %v2494
      %v2511 = vadd.f32 %v2462, %v2495
      %v2512 = vadd.f32 %v2463, %v2496
      %v2513 = vadd.f32 %v2464, %v2497
      %v2514 = vadd.f32 %v2465, %v2498
      %v2515 = vadd.f32 %v2466, %v2499
      %v2516 = vadd.f32 %v2467, %v2500
      %v2517 = vadd.f32 %v2468, %v2501
      %v2518 = vadd.f32 %v2469, %v2502
      %v2519 = vadd.f32 %v2470, %v2503
      %s2520 = scalar_lea.vmem [#allocation3], 1088
      %v2521 = vld [vmem:[%s2520] sm:$0xff]
      %v2522 = vld [vmem:[%s2520 + $0x8] sm:$0xff]
      %v2523 = vld [vmem:[%s2520 + $0x10] sm:$0xff]
      %v2524 = vld [vmem:[%s2520 + $0x18] sm:$0xff]
      %v2525 = vld [vmem:[%s2520 + $0x20] sm:$0xff]
      %v2526 = vld [vmem:[%s2520 + $0x28] sm:$0xff]
      %v2527 = vld [vmem:[%s2520 + $0x30] sm:$0xff]
      %v2528 = vld [vmem:[%s2520 + $0x38] sm:$0xff]
      %v2529 = vld [vmem:[%s2520 + $0x40] sm:$0xff]
      %v2530 = vld [vmem:[%s2520 + $0x48] sm:$0xff]
      %v2531 = vld [vmem:[%s2520 + $0x50] sm:$0xff]
      %v2532 = vld [vmem:[%s2520 + $0x58] sm:$0xff]
      %v2533 = vld [vmem:[%s2520 + $0x60] sm:$0xff]
      %v2534 = vld [vmem:[%s2520 + $0x68] sm:$0xff]
      %v2535 = vld [vmem:[%s2520 + $0x70] sm:$0xff]
      %v2536 = vld [vmem:[%s2520 + $0x78] sm:$0xff]
      %v2537 = vmul.f32 %v2521, %v1152
      %v2538 = vmul.f32 %v2522, %v1152
      %v2539 = vmul.f32 %v2523, %v1152
      %v2540 = vmul.f32 %v2524, %v1152
      %v2541 = vmul.f32 %v2525, %v1152
      %v2542 = vmul.f32 %v2526, %v1152
      %v2543 = vmul.f32 %v2527, %v1152
      %v2544 = vmul.f32 %v2528, %v1152
      %v2545 = vmul.f32 %v2529, %v1152
      %v2546 = vmul.f32 %v2530, %v1152
      %v2547 = vmul.f32 %v2531, %v1152
      %v2548 = vmul.f32 %v2532, %v1152
      %v2549 = vmul.f32 %v2533, %v1152
      %v2550 = vmul.f32 %v2534, %v1152
      %v2551 = vmul.f32 %v2535, %v1152
      %v2552 = vmul.f32 %v2536, %v1152
      %v2553 = vadd.f32 %v2504, %v2537
      %v2554 = vadd.f32 %v2505, %v2538
      %v2555 = vadd.f32 %v2506, %v2539
      %v2556 = vadd.f32 %v2507, %v2540
      %v2557 = vadd.f32 %v2508, %v2541
      %v2558 = vadd.f32 %v2509, %v2542
      %v2559 = vadd.f32 %v2510, %v2543
      %v2560 = vadd.f32 %v2511, %v2544
      %v2561 = vadd.f32 %v2512, %v2545
      %v2562 = vadd.f32 %v2513, %v2546
      %v2563 = vadd.f32 %v2514, %v2547
      %v2564 = vadd.f32 %v2515, %v2548
      %v2565 = vadd.f32 %v2516, %v2549
      %v2566 = vadd.f32 %v2517, %v2550
      %v2567 = vadd.f32 %v2518, %v2551
      %v2568 = vadd.f32 %v2519, %v2552
      %s2569 = scalar_lea.vmem [#allocation3], 1408
      %v2570 = vld [vmem:[%s2569] sm:$0xff]
      %v2571 = vld [vmem:[%s2569 + $0x8] sm:$0xff]
      %v2572 = vld [vmem:[%s2569 + $0x10] sm:$0xff]
      %v2573 = vld [vmem:[%s2569 + $0x18] sm:$0xff]
      %v2574 = vld [vmem:[%s2569 + $0x20] sm:$0xff]
      %v2575 = vld [vmem:[%s2569 + $0x28] sm:$0xff]
      %v2576 = vld [vmem:[%s2569 + $0x30] sm:$0xff]
      %v2577 = vld [vmem:[%s2569 + $0x38] sm:$0xff]
      %v2578 = vld [vmem:[%s2569 + $0x40] sm:$0xff]
      %v2579 = vld [vmem:[%s2569 + $0x48] sm:$0xff]
      %v2580 = vld [vmem:[%s2569 + $0x50] sm:$0xff]
      %v2581 = vld [vmem:[%s2569 + $0x58] sm:$0xff]
      %v2582 = vld [vmem:[%s2569 + $0x60] sm:$0xff]
      %v2583 = vld [vmem:[%s2569 + $0x68] sm:$0xff]
      %v2584 = vld [vmem:[%s2569 + $0x70] sm:$0xff]
      %v2585 = vld [vmem:[%s2569 + $0x78] sm:$0xff]
      %v2586 = vmul.f32 %v2570, %v1204
      %v2587 = vmul.f32 %v2571, %v1204
      %v2588 = vmul.f32 %v2572, %v1204
      %v2589 = vmul.f32 %v2573, %v1204
      %v2590 = vmul.f32 %v2574, %v1204
      %v2591 = vmul.f32 %v2575, %v1204
      %v2592 = vmul.f32 %v2576, %v1204
      %v2593 = vmul.f32 %v2577, %v1204
      %v2594 = vmul.f32 %v2578, %v1204
      %v2595 = vmul.f32 %v2579, %v1204
      %v2596 = vmul.f32 %v2580, %v1204
      %v2597 = vmul.f32 %v2581, %v1204
      %v2598 = vmul.f32 %v2582, %v1204
      %v2599 = vmul.f32 %v2583, %v1204
      %v2600 = vmul.f32 %v2584, %v1204
      %v2601 = vmul.f32 %v2585, %v1204
      %v2602 = vadd.f32 %v2553, %v2586
      %v2603 = vadd.f32 %v2554, %v2587
      %v2604 = vadd.f32 %v2555, %v2588
      %v2605 = vadd.f32 %v2556, %v2589
      %v2606 = vadd.f32 %v2557, %v2590
      %v2607 = vadd.f32 %v2558, %v2591
      %v2608 = vadd.f32 %v2559, %v2592
      %v2609 = vadd.f32 %v2560, %v2593
      %v2610 = vadd.f32 %v2561, %v2594
      %v2611 = vadd.f32 %v2562, %v2595
      %v2612 = vadd.f32 %v2563, %v2596
      %v2613 = vadd.f32 %v2564, %v2597
      %v2614 = vadd.f32 %v2565, %v2598
      %v2615 = vadd.f32 %v2566, %v2599
      %v2616 = vadd.f32 %v2567, %v2600
      %v2617 = vadd.f32 %v2568, %v2601
      %s2618 = scalar_lea.vmem [#allocation3], 144
      %v2619 = vld [vmem:[%s2618] sm:$0xff]
      %v2620 = vld [vmem:[%s2618 + $0x8] sm:$0xff]
      %v2621 = vld [vmem:[%s2618 + $0x10] sm:$0xff]
      %v2622 = vld [vmem:[%s2618 + $0x18] sm:$0xff]
      %v2623 = vld [vmem:[%s2618 + $0x20] sm:$0xff]
      %v2624 = vld [vmem:[%s2618 + $0x28] sm:$0xff]
      %v2625 = vld [vmem:[%s2618 + $0x30] sm:$0xff]
      %v2626 = vld [vmem:[%s2618 + $0x38] sm:$0xff]
      %v2627 = vld [vmem:[%s2618 + $0x40] sm:$0xff]
      %v2628 = vld [vmem:[%s2618 + $0x48] sm:$0xff]
      %v2629 = vld [vmem:[%s2618 + $0x50] sm:$0xff]
      %v2630 = vld [vmem:[%s2618 + $0x58] sm:$0xff]
      %v2631 = vld [vmem:[%s2618 + $0x60] sm:$0xff]
      %v2632 = vld [vmem:[%s2618 + $0x68] sm:$0xff]
      %v2633 = vld [vmem:[%s2618 + $0x70] sm:$0xff]
      %v2634 = vld [vmem:[%s2618 + $0x78] sm:$0xff]
      %v2635 = vmul.f32 %v2619, %v1257
      %v2636 = vmul.f32 %v2620, %v1257
      %v2637 = vmul.f32 %v2621, %v1257
      %v2638 = vmul.f32 %v2622, %v1257
      %v2639 = vmul.f32 %v2623, %v1257
      %v2640 = vmul.f32 %v2624, %v1257
      %v2641 = vmul.f32 %v2625, %v1257
      %v2642 = vmul.f32 %v2626, %v1257
      %v2643 = vmul.f32 %v2627, %v1257
      %v2644 = vmul.f32 %v2628, %v1257
      %v2645 = vmul.f32 %v2629, %v1257
      %v2646 = vmul.f32 %v2630, %v1257
      %v2647 = vmul.f32 %v2631, %v1257
      %v2648 = vmul.f32 %v2632, %v1257
      %v2649 = vmul.f32 %v2633, %v1257
      %v2650 = vmul.f32 %v2634, %v1257
      %v2651 = vadd.f32 %v2602, %v2635
      %v2652 = vadd.f32 %v2603, %v2636
      %v2653 = vadd.f32 %v2604, %v2637
      %v2654 = vadd.f32 %v2605, %v2638
      %v2655 = vadd.f32 %v2606, %v2639
      %v2656 = vadd.f32 %v2607, %v2640
      %v2657 = vadd.f32 %v2608, %v2641
      %v2658 = vadd.f32 %v2609, %v2642
      %v2659 = vadd.f32 %v2610, %v2643
      %v2660 = vadd.f32 %v2611, %v2644
      %v2661 = vadd.f32 %v2612, %v2645
      %v2662 = vadd.f32 %v2613, %v2646
      %v2663 = vadd.f32 %v2614, %v2647
      %v2664 = vadd.f32 %v2615, %v2648
      %v2665 = vadd.f32 %v2616, %v2649
      %v2666 = vadd.f32 %v2617, %v2650
      %s2667 = scalar_lea.vmem [#allocation3], 464
      %v2668 = vld [vmem:[%s2667] sm:$0xff]
      %v2669 = vld [vmem:[%s2667 + $0x8] sm:$0xff]
      %v2670 = vld [vmem:[%s2667 + $0x10] sm:$0xff]
      %v2671 = vld [vmem:[%s2667 + $0x18] sm:$0xff]
      %v2672 = vld [vmem:[%s2667 + $0x20] sm:$0xff]
      %v2673 = vld [vmem:[%s2667 + $0x28] sm:$0xff]
      %v2674 = vld [vmem:[%s2667 + $0x30] sm:$0xff]
      %v2675 = vld [vmem:[%s2667 + $0x38] sm:$0xff]
      %v2676 = vld [vmem:[%s2667 + $0x40] sm:$0xff]
      %v2677 = vld [vmem:[%s2667 + $0x48] sm:$0xff]
      %v2678 = vld [vmem:[%s2667 + $0x50] sm:$0xff]
      %v2679 = vld [vmem:[%s2667 + $0x58] sm:$0xff]
      %v2680 = vld [vmem:[%s2667 + $0x60] sm:$0xff]
      %v2681 = vld [vmem:[%s2667 + $0x68] sm:$0xff]
      %v2682 = vld [vmem:[%s2667 + $0x70] sm:$0xff]
      %v2683 = vld [vmem:[%s2667 + $0x78] sm:$0xff]
      %v2684 = vmul.f32 %v2668, %v1310
      %v2685 = vmul.f32 %v2669, %v1310
      %v2686 = vmul.f32 %v2670, %v1310
      %v2687 = vmul.f32 %v2671, %v1310
      %v2688 = vmul.f32 %v2672, %v1310
      %v2689 = vmul.f32 %v2673, %v1310
      %v2690 = vmul.f32 %v2674, %v1310
      %v2691 = vmul.f32 %v2675, %v1310
      %v2692 = vmul.f32 %v2676, %v1310
      %v2693 = vmul.f32 %v2677, %v1310
      %v2694 = vmul.f32 %v2678, %v1310
      %v2695 = vmul.f32 %v2679, %v1310
      %v2696 = vmul.f32 %v2680, %v1310
      %v2697 = vmul.f32 %v2681, %v1310
      %v2698 = vmul.f32 %v2682, %v1310
      %v2699 = vmul.f32 %v2683, %v1310
      %v2700 = vadd.f32 %v2651, %v2684
      %v2701 = vadd.f32 %v2652, %v2685
      %v2702 = vadd.f32 %v2653, %v2686
      %v2703 = vadd.f32 %v2654, %v2687
      %v2704 = vadd.f32 %v2655, %v2688
      %v2705 = vadd.f32 %v2656, %v2689
      %v2706 = vadd.f32 %v2657, %v2690
      %v2707 = vadd.f32 %v2658, %v2691
      %v2708 = vadd.f32 %v2659, %v2692
      %v2709 = vadd.f32 %v2660, %v2693
      %v2710 = vadd.f32 %v2661, %v2694
      %v2711 = vadd.f32 %v2662, %v2695
      %v2712 = vadd.f32 %v2663, %v2696
      %v2713 = vadd.f32 %v2664, %v2697
      %v2714 = vadd.f32 %v2665, %v2698
      %v2715 = vadd.f32 %v2666, %v2699
      %s2716 = scalar_lea.vmem [#allocation3], 784
      %v2717 = vld [vmem:[%s2716] sm:$0xff]
      %v2718 = vld [vmem:[%s2716 + $0x8] sm:$0xff]
      %v2719 = vld [vmem:[%s2716 + $0x10] sm:$0xff]
      %v2720 = vld [vmem:[%s2716 + $0x18] sm:$0xff]
      %v2721 = vld [vmem:[%s2716 + $0x20] sm:$0xff]
      %v2722 = vld [vmem:[%s2716 + $0x28] sm:$0xff]
      %v2723 = vld [vmem:[%s2716 + $0x30] sm:$0xff]
      %v2724 = vld [vmem:[%s2716 + $0x38] sm:$0xff]
      %v2725 = vld [vmem:[%s2716 + $0x40] sm:$0xff]
      %v2726 = vld [vmem:[%s2716 + $0x48] sm:$0xff]
      %v2727 = vld [vmem:[%s2716 + $0x50] sm:$0xff]
      %v2728 = vld [vmem:[%s2716 + $0x58] sm:$0xff]
      %v2729 = vld [vmem:[%s2716 + $0x60] sm:$0xff]
      %v2730 = vld [vmem:[%s2716 + $0x68] sm:$0xff]
      %v2731 = vld [vmem:[%s2716 + $0x70] sm:$0xff]
      %v2732 = vld [vmem:[%s2716 + $0x78] sm:$0xff]
      %v2733 = vmul.f32 %v2717, %v1363
      %v2734 = vmul.f32 %v2718, %v1363
      %v2735 = vmul.f32 %v2719, %v1363
      %v2736 = vmul.f32 %v2720, %v1363
      %v2737 = vmul.f32 %v2721, %v1363
      %v2738 = vmul.f32 %v2722, %v1363
      %v2739 = vmul.f32 %v2723, %v1363
      %v2740 = vmul.f32 %v2724, %v1363
      %v2741 = vmul.f32 %v2725, %v1363
      %v2742 = vmul.f32 %v2726, %v1363
      %v2743 = vmul.f32 %v2727, %v1363
      %v2744 = vmul.f32 %v2728, %v1363
      %v2745 = vmul.f32 %v2729, %v1363
      %v2746 = vmul.f32 %v2730, %v1363
      %v2747 = vmul.f32 %v2731, %v1363
      %v2748 = vmul.f32 %v2732, %v1363
      %v2749 = vadd.f32 %v2700, %v2733
      %v2750 = vadd.f32 %v2701, %v2734
      %v2751 = vadd.f32 %v2702, %v2735
      %v2752 = vadd.f32 %v2703, %v2736
      %v2753 = vadd.f32 %v2704, %v2737
      %v2754 = vadd.f32 %v2705, %v2738
      %v2755 = vadd.f32 %v2706, %v2739
      %v2756 = vadd.f32 %v2707, %v2740
      %v2757 = vadd.f32 %v2708, %v2741
      %v2758 = vadd.f32 %v2709, %v2742
      %v2759 = vadd.f32 %v2710, %v2743
      %v2760 = vadd.f32 %v2711, %v2744
      %v2761 = vadd.f32 %v2712, %v2745
      %v2762 = vadd.f32 %v2713, %v2746
      %v2763 = vadd.f32 %v2714, %v2747
      %v2764 = vadd.f32 %v2715, %v2748
      %s2765 = scalar_lea.vmem [#allocation3], 1104
      %v2766 = vld [vmem:[%s2765] sm:$0xff]
      %v2767 = vld [vmem:[%s2765 + $0x8] sm:$0xff]
      %v2768 = vld [vmem:[%s2765 + $0x10] sm:$0xff]
      %v2769 = vld [vmem:[%s2765 + $0x18] sm:$0xff]
      %v2770 = vld [vmem:[%s2765 + $0x20] sm:$0xff]
      %v2771 = vld [vmem:[%s2765 + $0x28] sm:$0xff]
      %v2772 = vld [vmem:[%s2765 + $0x30] sm:$0xff]
      %v2773 = vld [vmem:[%s2765 + $0x38] sm:$0xff]
      %v2774 = vld [vmem:[%s2765 + $0x40] sm:$0xff]
      %v2775 = vld [vmem:[%s2765 + $0x48] sm:$0xff]
      %v2776 = vld [vmem:[%s2765 + $0x50] sm:$0xff]
      %v2777 = vld [vmem:[%s2765 + $0x58] sm:$0xff]
      %v2778 = vld [vmem:[%s2765 + $0x60] sm:$0xff]
      %v2779 = vld [vmem:[%s2765 + $0x68] sm:$0xff]
      %v2780 = vld [vmem:[%s2765 + $0x70] sm:$0xff]
      %v2781 = vld [vmem:[%s2765 + $0x78] sm:$0xff]
      %v2782 = vmul.f32 %v2766, %v1416
      %v2783 = vmul.f32 %v2767, %v1416
      %v2784 = vmul.f32 %v2768, %v1416
      %v2785 = vmul.f32 %v2769, %v1416
      %v2786 = vmul.f32 %v2770, %v1416
      %v2787 = vmul.f32 %v2771, %v1416
      %v2788 = vmul.f32 %v2772, %v1416
      %v2789 = vmul.f32 %v2773, %v1416
      %v2790 = vmul.f32 %v2774, %v1416
      %v2791 = vmul.f32 %v2775, %v1416
      %v2792 = vmul.f32 %v2776, %v1416
      %v2793 = vmul.f32 %v2777, %v1416
      %v2794 = vmul.f32 %v2778, %v1416
      %v2795 = vmul.f32 %v2779, %v1416
      %v2796 = vmul.f32 %v2780, %v1416
      %v2797 = vmul.f32 %v2781, %v1416
      %v2798 = vadd.f32 %v2749, %v2782
      %v2799 = vadd.f32 %v2750, %v2783
      %v2800 = vadd.f32 %v2751, %v2784
      %v2801 = vadd.f32 %v2752, %v2785
      %v2802 = vadd.f32 %v2753, %v2786
      %v2803 = vadd.f32 %v2754, %v2787
      %v2804 = vadd.f32 %v2755, %v2788
      %v2805 = vadd.f32 %v2756, %v2789
      %v2806 = vadd.f32 %v2757, %v2790
      %v2807 = vadd.f32 %v2758, %v2791
      %v2808 = vadd.f32 %v2759, %v2792
      %v2809 = vadd.f32 %v2760, %v2793
      %v2810 = vadd.f32 %v2761, %v2794
      %v2811 = vadd.f32 %v2762, %v2795
      %v2812 = vadd.f32 %v2763, %v2796
      %v2813 = vadd.f32 %v2764, %v2797
      %s2814 = scalar_lea.vmem [#allocation3], 1424
      %v2815 = vld [vmem:[%s2814] sm:$0xff]
      %v2816 = vld [vmem:[%s2814 + $0x8] sm:$0xff]
      %v2817 = vld [vmem:[%s2814 + $0x10] sm:$0xff]
      %v2818 = vld [vmem:[%s2814 + $0x18] sm:$0xff]
      %v2819 = vld [vmem:[%s2814 + $0x20] sm:$0xff]
      %v2820 = vld [vmem:[%s2814 + $0x28] sm:$0xff]
      %v2821 = vld [vmem:[%s2814 + $0x30] sm:$0xff]
      %v2822 = vld [vmem:[%s2814 + $0x38] sm:$0xff]
      %v2823 = vld [vmem:[%s2814 + $0x40] sm:$0xff]
      %v2824 = vld [vmem:[%s2814 + $0x48] sm:$0xff]
      %v2825 = vld [vmem:[%s2814 + $0x50] sm:$0xff]
      %v2826 = vld [vmem:[%s2814 + $0x58] sm:$0xff]
      %v2827 = vld [vmem:[%s2814 + $0x60] sm:$0xff]
      %v2828 = vld [vmem:[%s2814 + $0x68] sm:$0xff]
      %v2829 = vld [vmem:[%s2814 + $0x70] sm:$0xff]
      %v2830 = vld [vmem:[%s2814 + $0x78] sm:$0xff]
      %v2831 = vmul.f32 %v2815, %v1469
      %v2832 = vmul.f32 %v2816, %v1469
      %v2833 = vmul.f32 %v2817, %v1469
      %v2834 = vmul.f32 %v2818, %v1469
      %v2835 = vmul.f32 %v2819, %v1469
      %v2836 = vmul.f32 %v2820, %v1469
      %v2837 = vmul.f32 %v2821, %v1469
      %v2838 = vmul.f32 %v2822, %v1469
      %v2839 = vmul.f32 %v2823, %v1469
      %v2840 = vmul.f32 %v2824, %v1469
      %v2841 = vmul.f32 %v2825, %v1469
      %v2842 = vmul.f32 %v2826, %v1469
      %v2843 = vmul.f32 %v2827, %v1469
      %v2844 = vmul.f32 %v2828, %v1469
      %v2845 = vmul.f32 %v2829, %v1469
      %v2846 = vmul.f32 %v2830, %v1469
      %v2847 = vadd.f32 %v2798, %v2831
      %v2848 = vadd.f32 %v2799, %v2832
      %v2849 = vadd.f32 %v2800, %v2833
      %v2850 = vadd.f32 %v2801, %v2834
      %v2851 = vadd.f32 %v2802, %v2835
      %v2852 = vadd.f32 %v2803, %v2836
      %v2853 = vadd.f32 %v2804, %v2837
      %v2854 = vadd.f32 %v2805, %v2838
      %v2855 = vadd.f32 %v2806, %v2839
      %v2856 = vadd.f32 %v2807, %v2840
      %v2857 = vadd.f32 %v2808, %v2841
      %v2858 = vadd.f32 %v2809, %v2842
      %v2859 = vadd.f32 %v2810, %v2843
      %v2860 = vadd.f32 %v2811, %v2844
      %v2861 = vadd.f32 %v2812, %v2845
      %v2862 = vadd.f32 %v2813, %v2846
      %s2863 = scalar_lea.vmem [#allocation3], 160
      %v2864 = vld [vmem:[%s2863] sm:$0xff]
      %v2865 = vld [vmem:[%s2863 + $0x8] sm:$0xff]
      %v2866 = vld [vmem:[%s2863 + $0x10] sm:$0xff]
      %v2867 = vld [vmem:[%s2863 + $0x18] sm:$0xff]
      %v2868 = vld [vmem:[%s2863 + $0x20] sm:$0xff]
      %v2869 = vld [vmem:[%s2863 + $0x28] sm:$0xff]
      %v2870 = vld [vmem:[%s2863 + $0x30] sm:$0xff]
      %v2871 = vld [vmem:[%s2863 + $0x38] sm:$0xff]
      %v2872 = vld [vmem:[%s2863 + $0x40] sm:$0xff]
      %v2873 = vld [vmem:[%s2863 + $0x48] sm:$0xff]
      %v2874 = vld [vmem:[%s2863 + $0x50] sm:$0xff]
      %v2875 = vld [vmem:[%s2863 + $0x58] sm:$0xff]
      %v2876 = vld [vmem:[%s2863 + $0x60] sm:$0xff]
      %v2877 = vld [vmem:[%s2863 + $0x68] sm:$0xff]
      %v2878 = vld [vmem:[%s2863 + $0x70] sm:$0xff]
      %v2879 = vld [vmem:[%s2863 + $0x78] sm:$0xff]
      %v2880 = vmul.f32 %v2864, %v1522
      %v2881 = vmul.f32 %v2865, %v1522
      %v2882 = vmul.f32 %v2866, %v1522
      %v2883 = vmul.f32 %v2867, %v1522
      %v2884 = vmul.f32 %v2868, %v1522
      %v2885 = vmul.f32 %v2869, %v1522
      %v2886 = vmul.f32 %v2870, %v1522
      %v2887 = vmul.f32 %v2871, %v1522
      %v2888 = vmul.f32 %v2872, %v1522
      %v2889 = vmul.f32 %v2873, %v1522
      %v2890 = vmul.f32 %v2874, %v1522
      %v2891 = vmul.f32 %v2875, %v1522
      %v2892 = vmul.f32 %v2876, %v1522
      %v2893 = vmul.f32 %v2877, %v1522
      %v2894 = vmul.f32 %v2878, %v1522
      %v2895 = vmul.f32 %v2879, %v1522
      %v2896 = vadd.f32 %v2847, %v2880
      %v2897 = vadd.f32 %v2848, %v2881
      %v2898 = vadd.f32 %v2849, %v2882
      %v2899 = vadd.f32 %v2850, %v2883
      %v2900 = vadd.f32 %v2851, %v2884
      %v2901 = vadd.f32 %v2852, %v2885
      %v2902 = vadd.f32 %v2853, %v2886
      %v2903 = vadd.f32 %v2854, %v2887
      %v2904 = vadd.f32 %v2855, %v2888
      %v2905 = vadd.f32 %v2856, %v2889
      %v2906 = vadd.f32 %v2857, %v2890
      %v2907 = vadd.f32 %v2858, %v2891
      %v2908 = vadd.f32 %v2859, %v2892
      %v2909 = vadd.f32 %v2860, %v2893
      %v2910 = vadd.f32 %v2861, %v2894
      %v2911 = vadd.f32 %v2862, %v2895
      %s2912 = scalar_lea.vmem [#allocation3], 480
      %v2913 = vld [vmem:[%s2912] sm:$0xff]
      %v2914 = vld [vmem:[%s2912 + $0x8] sm:$0xff]
      %v2915 = vld [vmem:[%s2912 + $0x10] sm:$0xff]
      %v2916 = vld [vmem:[%s2912 + $0x18] sm:$0xff]
      %v2917 = vld [vmem:[%s2912 + $0x20] sm:$0xff]
      %v2918 = vld [vmem:[%s2912 + $0x28] sm:$0xff]
      %v2919 = vld [vmem:[%s2912 + $0x30] sm:$0xff]
      %v2920 = vld [vmem:[%s2912 + $0x38] sm:$0xff]
      %v2921 = vld [vmem:[%s2912 + $0x40] sm:$0xff]
      %v2922 = vld [vmem:[%s2912 + $0x48] sm:$0xff]
      %v2923 = vld [vmem:[%s2912 + $0x50] sm:$0xff]
      %v2924 = vld [vmem:[%s2912 + $0x58] sm:$0xff]
      %v2925 = vld [vmem:[%s2912 + $0x60] sm:$0xff]
      %v2926 = vld [vmem:[%s2912 + $0x68] sm:$0xff]
      %v2927 = vld [vmem:[%s2912 + $0x70] sm:$0xff]
      %v2928 = vld [vmem:[%s2912 + $0x78] sm:$0xff]
      %v2929 = vmul.f32 %v2913, %v1575
      %v2930 = vmul.f32 %v2914, %v1575
      %v2931 = vmul.f32 %v2915, %v1575
      %v2932 = vmul.f32 %v2916, %v1575
      %v2933 = vmul.f32 %v2917, %v1575
      %v2934 = vmul.f32 %v2918, %v1575
      %v2935 = vmul.f32 %v2919, %v1575
      %v2936 = vmul.f32 %v2920, %v1575
      %v2937 = vmul.f32 %v2921, %v1575
      %v2938 = vmul.f32 %v2922, %v1575
      %v2939 = vmul.f32 %v2923, %v1575
      %v2940 = vmul.f32 %v2924, %v1575
      %v2941 = vmul.f32 %v2925, %v1575
      %v2942 = vmul.f32 %v2926, %v1575
      %v2943 = vmul.f32 %v2927, %v1575
      %v2944 = vmul.f32 %v2928, %v1575
      %v2945 = vadd.f32 %v2896, %v2929
      %v2946 = vadd.f32 %v2897, %v2930
      %v2947 = vadd.f32 %v2898, %v2931
      %v2948 = vadd.f32 %v2899, %v2932
      %v2949 = vadd.f32 %v2900, %v2933
      %v2950 = vadd.f32 %v2901, %v2934
      %v2951 = vadd.f32 %v2902, %v2935
      %v2952 = vadd.f32 %v2903, %v2936
      %v2953 = vadd.f32 %v2904, %v2937
      %v2954 = vadd.f32 %v2905, %v2938
      %v2955 = vadd.f32 %v2906, %v2939
      %v2956 = vadd.f32 %v2907, %v2940
      %v2957 = vadd.f32 %v2908, %v2941
      %v2958 = vadd.f32 %v2909, %v2942
      %v2959 = vadd.f32 %v2910, %v2943
      %v2960 = vadd.f32 %v2911, %v2944
      %s2961 = scalar_lea.vmem [#allocation3], 800
      %v2962 = vld [vmem:[%s2961] sm:$0xff]
      %v2963 = vld [vmem:[%s2961 + $0x8] sm:$0xff]
      %v2964 = vld [vmem:[%s2961 + $0x10] sm:$0xff]
      %v2965 = vld [vmem:[%s2961 + $0x18] sm:$0xff]
      %v2966 = vld [vmem:[%s2961 + $0x20] sm:$0xff]
      %v2967 = vld [vmem:[%s2961 + $0x28] sm:$0xff]
      %v2968 = vld [vmem:[%s2961 + $0x30] sm:$0xff]
      %v2969 = vld [vmem:[%s2961 + $0x38] sm:$0xff]
      %v2970 = vld [vmem:[%s2961 + $0x40] sm:$0xff]
      %v2971 = vld [vmem:[%s2961 + $0x48] sm:$0xff]
      %v2972 = vld [vmem:[%s2961 + $0x50] sm:$0xff]
      %v2973 = vld [vmem:[%s2961 + $0x58] sm:$0xff]
      %v2974 = vld [vmem:[%s2961 + $0x60] sm:$0xff]
      %v2975 = vld [vmem:[%s2961 + $0x68] sm:$0xff]
      %v2976 = vld [vmem:[%s2961 + $0x70] sm:$0xff]
      %v2977 = vld [vmem:[%s2961 + $0x78] sm:$0xff]
      %v2978 = vmul.f32 %v2962, %v1628
      %v2979 = vmul.f32 %v2963, %v1628
      %v2980 = vmul.f32 %v2964, %v1628
      %v2981 = vmul.f32 %v2965, %v1628
      %v2982 = vmul.f32 %v2966, %v1628
      %v2983 = vmul.f32 %v2967, %v1628
      %v2984 = vmul.f32 %v2968, %v1628
      %v2985 = vmul.f32 %v2969, %v1628
      %v2986 = vmul.f32 %v2970, %v1628
      %v2987 = vmul.f32 %v2971, %v1628
      %v2988 = vmul.f32 %v2972, %v1628
      %v2989 = vmul.f32 %v2973, %v1628
      %v2990 = vmul.f32 %v2974, %v1628
      %v2991 = vmul.f32 %v2975, %v1628
      %v2992 = vmul.f32 %v2976, %v1628
      %v2993 = vmul.f32 %v2977, %v1628
      %v2994 = vadd.f32 %v2945, %v2978
      %v2995 = vadd.f32 %v2946, %v2979
      %v2996 = vadd.f32 %v2947, %v2980
      %v2997 = vadd.f32 %v2948, %v2981
      %v2998 = vadd.f32 %v2949, %v2982
      %v2999 = vadd.f32 %v2950, %v2983
      %v3000 = vadd.f32 %v2951, %v2984
      %v3001 = vadd.f32 %v2952, %v2985
      %v3002 = vadd.f32 %v2953, %v2986
      %v3003 = vadd.f32 %v2954, %v2987
      %v3004 = vadd.f32 %v2955, %v2988
      %v3005 = vadd.f32 %v2956, %v2989
      %v3006 = vadd.f32 %v2957, %v2990
      %v3007 = vadd.f32 %v2958, %v2991
      %v3008 = vadd.f32 %v2959, %v2992
      %v3009 = vadd.f32 %v2960, %v2993
      %s3010 = scalar_lea.vmem [#allocation3], 1120
      %v3011 = vld [vmem:[%s3010] sm:$0xff]
      %v3012 = vld [vmem:[%s3010 + $0x8] sm:$0xff]
      %v3013 = vld [vmem:[%s3010 + $0x10] sm:$0xff]
      %v3014 = vld [vmem:[%s3010 + $0x18] sm:$0xff]
      %v3015 = vld [vmem:[%s3010 + $0x20] sm:$0xff]
      %v3016 = vld [vmem:[%s3010 + $0x28] sm:$0xff]
      %v3017 = vld [vmem:[%s3010 + $0x30] sm:$0xff]
      %v3018 = vld [vmem:[%s3010 + $0x38] sm:$0xff]
      %v3019 = vld [vmem:[%s3010 + $0x40] sm:$0xff]
      %v3020 = vld [vmem:[%s3010 + $0x48] sm:$0xff]
      %v3021 = vld [vmem:[%s3010 + $0x50] sm:$0xff]
      %v3022 = vld [vmem:[%s3010 + $0x58] sm:$0xff]
      %v3023 = vld [vmem:[%s3010 + $0x60] sm:$0xff]
      %v3024 = vld [vmem:[%s3010 + $0x68] sm:$0xff]
      %v3025 = vld [vmem:[%s3010 + $0x70] sm:$0xff]
      %v3026 = vld [vmem:[%s3010 + $0x78] sm:$0xff]
      %v3027 = vmul.f32 %v3011, %v1681
      %v3028 = vmul.f32 %v3012, %v1681
      %v3029 = vmul.f32 %v3013, %v1681
      %v3030 = vmul.f32 %v3014, %v1681
      %v3031 = vmul.f32 %v3015, %v1681
      %v3032 = vmul.f32 %v3016, %v1681
      %v3033 = vmul.f32 %v3017, %v1681
      %v3034 = vmul.f32 %v3018, %v1681
      %v3035 = vmul.f32 %v3019, %v1681
      %v3036 = vmul.f32 %v3020, %v1681
      %v3037 = vmul.f32 %v3021, %v1681
      %v3038 = vmul.f32 %v3022, %v1681
      %v3039 = vmul.f32 %v3023, %v1681
      %v3040 = vmul.f32 %v3024, %v1681
      %v3041 = vmul.f32 %v3025, %v1681
      %v3042 = vmul.f32 %v3026, %v1681
      %v3043 = vadd.f32 %v2994, %v3027
      %v3044 = vadd.f32 %v2995, %v3028
      %v3045 = vadd.f32 %v2996, %v3029
      %v3046 = vadd.f32 %v2997, %v3030
      %v3047 = vadd.f32 %v2998, %v3031
      %v3048 = vadd.f32 %v2999, %v3032
      %v3049 = vadd.f32 %v3000, %v3033
      %v3050 = vadd.f32 %v3001, %v3034
      %v3051 = vadd.f32 %v3002, %v3035
      %v3052 = vadd.f32 %v3003, %v3036
      %v3053 = vadd.f32 %v3004, %v3037
      %v3054 = vadd.f32 %v3005, %v3038
      %v3055 = vadd.f32 %v3006, %v3039
      %v3056 = vadd.f32 %v3007, %v3040
      %v3057 = vadd.f32 %v3008, %v3041
      %v3058 = vadd.f32 %v3009, %v3042
      %s3059 = scalar_lea.vmem [#allocation3], 1440
      %v3060 = vld [vmem:[%s3059] sm:$0xff]
      %v3061 = vld [vmem:[%s3059 + $0x8] sm:$0xff]
      %v3062 = vld [vmem:[%s3059 + $0x10] sm:$0xff]
      %v3063 = vld [vmem:[%s3059 + $0x18] sm:$0xff]
      %v3064 = vld [vmem:[%s3059 + $0x20] sm:$0xff]
      %v3065 = vld [vmem:[%s3059 + $0x28] sm:$0xff]
      %v3066 = vld [vmem:[%s3059 + $0x30] sm:$0xff]
      %v3067 = vld [vmem:[%s3059 + $0x38] sm:$0xff]
      %v3068 = vld [vmem:[%s3059 + $0x40] sm:$0xff]
      %v3069 = vld [vmem:[%s3059 + $0x48] sm:$0xff]
      %v3070 = vld [vmem:[%s3059 + $0x50] sm:$0xff]
      %v3071 = vld [vmem:[%s3059 + $0x58] sm:$0xff]
      %v3072 = vld [vmem:[%s3059 + $0x60] sm:$0xff]
      %v3073 = vld [vmem:[%s3059 + $0x68] sm:$0xff]
      %v3074 = vld [vmem:[%s3059 + $0x70] sm:$0xff]
      %v3075 = vld [vmem:[%s3059 + $0x78] sm:$0xff]
      %v3076 = vmul.f32 %v3060, %v1734
      %v3077 = vmul.f32 %v3061, %v1734
      %v3078 = vmul.f32 %v3062, %v1734
      %v3079 = vmul.f32 %v3063, %v1734
      %v3080 = vmul.f32 %v3064, %v1734
      %v3081 = vmul.f32 %v3065, %v1734
      %v3082 = vmul.f32 %v3066, %v1734
      %v3083 = vmul.f32 %v3067, %v1734
      %v3084 = vmul.f32 %v3068, %v1734
      %v3085 = vmul.f32 %v3069, %v1734
      %v3086 = vmul.f32 %v3070, %v1734
      %v3087 = vmul.f32 %v3071, %v1734
      %v3088 = vmul.f32 %v3072, %v1734
      %v3089 = vmul.f32 %v3073, %v1734
      %v3090 = vmul.f32 %v3074, %v1734
      %v3091 = vmul.f32 %v3075, %v1734
      %v3092 = vadd.f32 %v3043, %v3076
      %v3093 = vadd.f32 %v3044, %v3077
      %v3094 = vadd.f32 %v3045, %v3078
      %v3095 = vadd.f32 %v3046, %v3079
      %v3096 = vadd.f32 %v3047, %v3080
      %v3097 = vadd.f32 %v3048, %v3081
      %v3098 = vadd.f32 %v3049, %v3082
      %v3099 = vadd.f32 %v3050, %v3083
      %v3100 = vadd.f32 %v3051, %v3084
      %v3101 = vadd.f32 %v3052, %v3085
      %v3102 = vadd.f32 %v3053, %v3086
      %v3103 = vadd.f32 %v3054, %v3087
      %v3104 = vadd.f32 %v3055, %v3088
      %v3105 = vadd.f32 %v3056, %v3089
      %v3106 = vadd.f32 %v3057, %v3090
      %v3107 = vadd.f32 %v3058, %v3091
      %s3108 = scalar_lea.vmem [#allocation3], 176
      %v3109 = vld [vmem:[%s3108] sm:$0xff]
      %v3110 = vld [vmem:[%s3108 + $0x8] sm:$0xff]
      %v3111 = vld [vmem:[%s3108 + $0x10] sm:$0xff]
      %v3112 = vld [vmem:[%s3108 + $0x18] sm:$0xff]
      %v3113 = vld [vmem:[%s3108 + $0x20] sm:$0xff]
      %v3114 = vld [vmem:[%s3108 + $0x28] sm:$0xff]
      %v3115 = vld [vmem:[%s3108 + $0x30] sm:$0xff]
      %v3116 = vld [vmem:[%s3108 + $0x38] sm:$0xff]
      %v3117 = vld [vmem:[%s3108 + $0x40] sm:$0xff]
      %v3118 = vld [vmem:[%s3108 + $0x48] sm:$0xff]
      %v3119 = vld [vmem:[%s3108 + $0x50] sm:$0xff]
      %v3120 = vld [vmem:[%s3108 + $0x58] sm:$0xff]
      %v3121 = vld [vmem:[%s3108 + $0x60] sm:$0xff]
      %v3122 = vld [vmem:[%s3108 + $0x68] sm:$0xff]
      %v3123 = vld [vmem:[%s3108 + $0x70] sm:$0xff]
      %v3124 = vld [vmem:[%s3108 + $0x78] sm:$0xff]
      %v3125 = vmul.f32 %v3109, %v1787
      %v3126 = vmul.f32 %v3110, %v1787
      %v3127 = vmul.f32 %v3111, %v1787
      %v3128 = vmul.f32 %v3112, %v1787
      %v3129 = vmul.f32 %v3113, %v1787
      %v3130 = vmul.f32 %v3114, %v1787
      %v3131 = vmul.f32 %v3115, %v1787
      %v3132 = vmul.f32 %v3116, %v1787
      %v3133 = vmul.f32 %v3117, %v1787
      %v3134 = vmul.f32 %v3118, %v1787
      %v3135 = vmul.f32 %v3119, %v1787
      %v3136 = vmul.f32 %v3120, %v1787
      %v3137 = vmul.f32 %v3121, %v1787
      %v3138 = vmul.f32 %v3122, %v1787
      %v3139 = vmul.f32 %v3123, %v1787
      %v3140 = vmul.f32 %v3124, %v1787
      %v3141 = vadd.f32 %v3092, %v3125
      %v3142 = vadd.f32 %v3093, %v3126
      %v3143 = vadd.f32 %v3094, %v3127
      %v3144 = vadd.f32 %v3095, %v3128
      %v3145 = vadd.f32 %v3096, %v3129
      %v3146 = vadd.f32 %v3097, %v3130
      %v3147 = vadd.f32 %v3098, %v3131
      %v3148 = vadd.f32 %v3099, %v3132
      %v3149 = vadd.f32 %v3100, %v3133
      %v3150 = vadd.f32 %v3101, %v3134
      %v3151 = vadd.f32 %v3102, %v3135
      %v3152 = vadd.f32 %v3103, %v3136
      %v3153 = vadd.f32 %v3104, %v3137
      %v3154 = vadd.f32 %v3105, %v3138
      %v3155 = vadd.f32 %v3106, %v3139
      %v3156 = vadd.f32 %v3107, %v3140
      %s3157 = scalar_lea.vmem [#allocation3], 496
      %v3158 = vld [vmem:[%s3157] sm:$0xff]
      %v3159 = vld [vmem:[%s3157 + $0x8] sm:$0xff]
      %v3160 = vld [vmem:[%s3157 + $0x10] sm:$0xff]
      %v3161 = vld [vmem:[%s3157 + $0x18] sm:$0xff]
      %v3162 = vld [vmem:[%s3157 + $0x20] sm:$0xff]
      %v3163 = vld [vmem:[%s3157 + $0x28] sm:$0xff]
      %v3164 = vld [vmem:[%s3157 + $0x30] sm:$0xff]
      %v3165 = vld [vmem:[%s3157 + $0x38] sm:$0xff]
      %v3166 = vld [vmem:[%s3157 + $0x40] sm:$0xff]
      %v3167 = vld [vmem:[%s3157 + $0x48] sm:$0xff]
      %v3168 = vld [vmem:[%s3157 + $0x50] sm:$0xff]
      %v3169 = vld [vmem:[%s3157 + $0x58] sm:$0xff]
      %v3170 = vld [vmem:[%s3157 + $0x60] sm:$0xff]
      %v3171 = vld [vmem:[%s3157 + $0x68] sm:$0xff]
      %v3172 = vld [vmem:[%s3157 + $0x70] sm:$0xff]
      %v3173 = vld [vmem:[%s3157 + $0x78] sm:$0xff]
      %v3174 = vmul.f32 %v3158, %v1840
      %v3175 = vmul.f32 %v3159, %v1840
      %v3176 = vmul.f32 %v3160, %v1840
      %v3177 = vmul.f32 %v3161, %v1840
      %v3178 = vmul.f32 %v3162, %v1840
      %v3179 = vmul.f32 %v3163, %v1840
      %v3180 = vmul.f32 %v3164, %v1840
      %v3181 = vmul.f32 %v3165, %v1840
      %v3182 = vmul.f32 %v3166, %v1840
      %v3183 = vmul.f32 %v3167, %v1840
      %v3184 = vmul.f32 %v3168, %v1840
      %v3185 = vmul.f32 %v3169, %v1840
      %v3186 = vmul.f32 %v3170, %v1840
      %v3187 = vmul.f32 %v3171, %v1840
      %v3188 = vmul.f32 %v3172, %v1840
      %v3189 = vmul.f32 %v3173, %v1840
      %v3190 = vadd.f32 %v3141, %v3174
      %v3191 = vadd.f32 %v3142, %v3175
      %v3192 = vadd.f32 %v3143, %v3176
      %v3193 = vadd.f32 %v3144, %v3177
      %v3194 = vadd.f32 %v3145, %v3178
      %v3195 = vadd.f32 %v3146, %v3179
      %v3196 = vadd.f32 %v3147, %v3180
      %v3197 = vadd.f32 %v3148, %v3181
      %v3198 = vadd.f32 %v3149, %v3182
      %v3199 = vadd.f32 %v3150, %v3183
      %v3200 = vadd.f32 %v3151, %v3184
      %v3201 = vadd.f32 %v3152, %v3185
      %v3202 = vadd.f32 %v3153, %v3186
      %v3203 = vadd.f32 %v3154, %v3187
      %v3204 = vadd.f32 %v3155, %v3188
      %v3205 = vadd.f32 %v3156, %v3189
      %s3206 = scalar_lea.vmem [#allocation3], 816
      %v3207 = vld [vmem:[%s3206] sm:$0xff]
      %v3208 = vld [vmem:[%s3206 + $0x8] sm:$0xff]
      %v3209 = vld [vmem:[%s3206 + $0x10] sm:$0xff]
      %v3210 = vld [vmem:[%s3206 + $0x18] sm:$0xff]
      %v3211 = vld [vmem:[%s3206 + $0x20] sm:$0xff]
      %v3212 = vld [vmem:[%s3206 + $0x28] sm:$0xff]
      %v3213 = vld [vmem:[%s3206 + $0x30] sm:$0xff]
      %v3214 = vld [vmem:[%s3206 + $0x38] sm:$0xff]
      %v3215 = vld [vmem:[%s3206 + $0x40] sm:$0xff]
      %v3216 = vld [vmem:[%s3206 + $0x48] sm:$0xff]
      %v3217 = vld [vmem:[%s3206 + $0x50] sm:$0xff]
      %v3218 = vld [vmem:[%s3206 + $0x58] sm:$0xff]
      %v3219 = vld [vmem:[%s3206 + $0x60] sm:$0xff]
      %v3220 = vld [vmem:[%s3206 + $0x68] sm:$0xff]
      %v3221 = vld [vmem:[%s3206 + $0x70] sm:$0xff]
      %v3222 = vld [vmem:[%s3206 + $0x78] sm:$0xff]
      %v3223 = vmul.f32 %v3207, %v1893
      %v3224 = vmul.f32 %v3208, %v1893
      %v3225 = vmul.f32 %v3209, %v1893
      %v3226 = vmul.f32 %v3210, %v1893
      %v3227 = vmul.f32 %v3211, %v1893
      %v3228 = vmul.f32 %v3212, %v1893
      %v3229 = vmul.f32 %v3213, %v1893
      %v3230 = vmul.f32 %v3214, %v1893
      %v3231 = vmul.f32 %v3215, %v1893
      %v3232 = vmul.f32 %v3216, %v1893
      %v3233 = vmul.f32 %v3217, %v1893
      %v3234 = vmul.f32 %v3218, %v1893
      %v3235 = vmul.f32 %v3219, %v1893
      %v3236 = vmul.f32 %v3220, %v1893
      %v3237 = vmul.f32 %v3221, %v1893
      %v3238 = vmul.f32 %v3222, %v1893
      %v3239 = vadd.f32 %v3190, %v3223
      %v3240 = vadd.f32 %v3191, %v3224
      %v3241 = vadd.f32 %v3192, %v3225
      %v3242 = vadd.f32 %v3193, %v3226
      %v3243 = vadd.f32 %v3194, %v3227
      %v3244 = vadd.f32 %v3195, %v3228
      %v3245 = vadd.f32 %v3196, %v3229
      %v3246 = vadd.f32 %v3197, %v3230
      %v3247 = vadd.f32 %v3198, %v3231
      %v3248 = vadd.f32 %v3199, %v3232
      %v3249 = vadd.f32 %v3200, %v3233
      %v3250 = vadd.f32 %v3201, %v3234
      %v3251 = vadd.f32 %v3202, %v3235
      %v3252 = vadd.f32 %v3203, %v3236
      %v3253 = vadd.f32 %v3204, %v3237
      %v3254 = vadd.f32 %v3205, %v3238
      %s3255 = scalar_lea.vmem [#allocation3], 1136
      %v3256 = vld [vmem:[%s3255] sm:$0xff]
      %v3257 = vld [vmem:[%s3255 + $0x8] sm:$0xff]
      %v3258 = vld [vmem:[%s3255 + $0x10] sm:$0xff]
      %v3259 = vld [vmem:[%s3255 + $0x18] sm:$0xff]
      %v3260 = vld [vmem:[%s3255 + $0x20] sm:$0xff]
      %v3261 = vld [vmem:[%s3255 + $0x28] sm:$0xff]
      %v3262 = vld [vmem:[%s3255 + $0x30] sm:$0xff]
      %v3263 = vld [vmem:[%s3255 + $0x38] sm:$0xff]
      %v3264 = vld [vmem:[%s3255 + $0x40] sm:$0xff]
      %v3265 = vld [vmem:[%s3255 + $0x48] sm:$0xff]
      %v3266 = vld [vmem:[%s3255 + $0x50] sm:$0xff]
      %v3267 = vld [vmem:[%s3255 + $0x58] sm:$0xff]
      %v3268 = vld [vmem:[%s3255 + $0x60] sm:$0xff]
      %v3269 = vld [vmem:[%s3255 + $0x68] sm:$0xff]
      %v3270 = vld [vmem:[%s3255 + $0x70] sm:$0xff]
      %v3271 = vld [vmem:[%s3255 + $0x78] sm:$0xff]
      %v3272 = vmul.f32 %v3256, %v1946
      %v3273 = vmul.f32 %v3257, %v1946
      %v3274 = vmul.f32 %v3258, %v1946
      %v3275 = vmul.f32 %v3259, %v1946
      %v3276 = vmul.f32 %v3260, %v1946
      %v3277 = vmul.f32 %v3261, %v1946
      %v3278 = vmul.f32 %v3262, %v1946
      %v3279 = vmul.f32 %v3263, %v1946
      %v3280 = vmul.f32 %v3264, %v1946
      %v3281 = vmul.f32 %v3265, %v1946
      %v3282 = vmul.f32 %v3266, %v1946
      %v3283 = vmul.f32 %v3267, %v1946
      %v3284 = vmul.f32 %v3268, %v1946
      %v3285 = vmul.f32 %v3269, %v1946
      %v3286 = vmul.f32 %v3270, %v1946
      %v3287 = vmul.f32 %v3271, %v1946
      %v3288 = vadd.f32 %v3239, %v3272
      %v3289 = vadd.f32 %v3240, %v3273
      %v3290 = vadd.f32 %v3241, %v3274
      %v3291 = vadd.f32 %v3242, %v3275
      %v3292 = vadd.f32 %v3243, %v3276
      %v3293 = vadd.f32 %v3244, %v3277
      %v3294 = vadd.f32 %v3245, %v3278
      %v3295 = vadd.f32 %v3246, %v3279
      %v3296 = vadd.f32 %v3247, %v3280
      %v3297 = vadd.f32 %v3248, %v3281
      %v3298 = vadd.f32 %v3249, %v3282
      %v3299 = vadd.f32 %v3250, %v3283
      %v3300 = vadd.f32 %v3251, %v3284
      %v3301 = vadd.f32 %v3252, %v3285
      %v3302 = vadd.f32 %v3253, %v3286
      %v3303 = vadd.f32 %v3254, %v3287
      %s3304 = scalar_lea.vmem [#allocation3], 1456
      %v3305 = vld [vmem:[%s3304] sm:$0xff]
      %v3306 = vld [vmem:[%s3304 + $0x8] sm:$0xff]
      %v3307 = vld [vmem:[%s3304 + $0x10] sm:$0xff]
      %v3308 = vld [vmem:[%s3304 + $0x18] sm:$0xff]
      %v3309 = vld [vmem:[%s3304 + $0x20] sm:$0xff]
      %v3310 = vld [vmem:[%s3304 + $0x28] sm:$0xff]
      %v3311 = vld [vmem:[%s3304 + $0x30] sm:$0xff]
      %v3312 = vld [vmem:[%s3304 + $0x38] sm:$0xff]
      %v3313 = vld [vmem:[%s3304 + $0x40] sm:$0xff]
      %v3314 = vld [vmem:[%s3304 + $0x48] sm:$0xff]
      %v3315 = vld [vmem:[%s3304 + $0x50] sm:$0xff]
      %v3316 = vld [vmem:[%s3304 + $0x58] sm:$0xff]
      %v3317 = vld [vmem:[%s3304 + $0x60] sm:$0xff]
      %v3318 = vld [vmem:[%s3304 + $0x68] sm:$0xff]
      %v3319 = vld [vmem:[%s3304 + $0x70] sm:$0xff]
      %v3320 = vld [vmem:[%s3304 + $0x78] sm:$0xff]
      %v3321 = vmul.f32 %v3305, %v1999
      %v3322 = vmul.f32 %v3306, %v1999
      %v3323 = vmul.f32 %v3307, %v1999
      %v3324 = vmul.f32 %v3308, %v1999
      %v3325 = vmul.f32 %v3309, %v1999
      %v3326 = vmul.f32 %v3310, %v1999
      %v3327 = vmul.f32 %v3311, %v1999
      %v3328 = vmul.f32 %v3312, %v1999
      %v3329 = vmul.f32 %v3313, %v1999
      %v3330 = vmul.f32 %v3314, %v1999
      %v3331 = vmul.f32 %v3315, %v1999
      %v3332 = vmul.f32 %v3316, %v1999
      %v3333 = vmul.f32 %v3317, %v1999
      %v3334 = vmul.f32 %v3318, %v1999
      %v3335 = vmul.f32 %v3319, %v1999
      %v3336 = vmul.f32 %v3320, %v1999
      %v3337 = vadd.f32 %v3288, %v3321
      %v3338 = vadd.f32 %v3289, %v3322
      %v3339 = vadd.f32 %v3290, %v3323
      %v3340 = vadd.f32 %v3291, %v3324
      %v3341 = vadd.f32 %v3292, %v3325
      %v3342 = vadd.f32 %v3293, %v3326
      %v3343 = vadd.f32 %v3294, %v3327
      %v3344 = vadd.f32 %v3295, %v3328
      %v3345 = vadd.f32 %v3296, %v3329
      %v3346 = vadd.f32 %v3297, %v3330
      %v3347 = vadd.f32 %v3298, %v3331
      %v3348 = vadd.f32 %v3299, %v3332
      %v3349 = vadd.f32 %v3300, %v3333
      %v3350 = vadd.f32 %v3301, %v3334
      %v3351 = vadd.f32 %v3302, %v3335
      %v3352 = vadd.f32 %v3303, %v3336
      %s3353 = scalar_lea.vmem [#allocation3], 192
      %v3354 = vld [vmem:[%s3353] sm:$0xff]
      %v3355 = vld [vmem:[%s3353 + $0x8] sm:$0xff]
      %v3356 = vld [vmem:[%s3353 + $0x10] sm:$0xff]
      %v3357 = vld [vmem:[%s3353 + $0x18] sm:$0xff]
      %v3358 = vld [vmem:[%s3353 + $0x20] sm:$0xff]
      %v3359 = vld [vmem:[%s3353 + $0x28] sm:$0xff]
      %v3360 = vld [vmem:[%s3353 + $0x30] sm:$0xff]
      %v3361 = vld [vmem:[%s3353 + $0x38] sm:$0xff]
      %v3362 = vld [vmem:[%s3353 + $0x40] sm:$0xff]
      %v3363 = vld [vmem:[%s3353 + $0x48] sm:$0xff]
      %v3364 = vld [vmem:[%s3353 + $0x50] sm:$0xff]
      %v3365 = vld [vmem:[%s3353 + $0x58] sm:$0xff]
      %v3366 = vld [vmem:[%s3353 + $0x60] sm:$0xff]
      %v3367 = vld [vmem:[%s3353 + $0x68] sm:$0xff]
      %v3368 = vld [vmem:[%s3353 + $0x70] sm:$0xff]
      %v3369 = vld [vmem:[%s3353 + $0x78] sm:$0xff]
      %v3370 = vmul.f32 %v3354, %v2052
      %v3371 = vmul.f32 %v3355, %v2052
      %v3372 = vmul.f32 %v3356, %v2052
      %v3373 = vmul.f32 %v3357, %v2052
      %v3374 = vmul.f32 %v3358, %v2052
      %v3375 = vmul.f32 %v3359, %v2052
      %v3376 = vmul.f32 %v3360, %v2052
      %v3377 = vmul.f32 %v3361, %v2052
      %v3378 = vmul.f32 %v3362, %v2052
      %v3379 = vmul.f32 %v3363, %v2052
      %v3380 = vmul.f32 %v3364, %v2052
      %v3381 = vmul.f32 %v3365, %v2052
      %v3382 = vmul.f32 %v3366, %v2052
      %v3383 = vmul.f32 %v3367, %v2052
      %v3384 = vmul.f32 %v3368, %v2052
      %v3385 = vmul.f32 %v3369, %v2052
      %v3386 = vadd.f32 %v3337, %v3370
      %v3387 = vadd.f32 %v3338, %v3371
      %v3388 = vadd.f32 %v3339, %v3372
      %v3389 = vadd.f32 %v3340, %v3373
      %v3390 = vadd.f32 %v3341, %v3374
      %v3391 = vadd.f32 %v3342, %v3375
      %v3392 = vadd.f32 %v3343, %v3376
      %v3393 = vadd.f32 %v3344, %v3377
      %v3394 = vadd.f32 %v3345, %v3378
      %v3395 = vadd.f32 %v3346, %v3379
      %v3396 = vadd.f32 %v3347, %v3380
      %v3397 = vadd.f32 %v3348, %v3381
      %v3398 = vadd.f32 %v3349, %v3382
      %v3399 = vadd.f32 %v3350, %v3383
      %v3400 = vadd.f32 %v3351, %v3384
      %v3401 = vadd.f32 %v3352, %v3385
      %s3402 = scalar_lea.vmem [#allocation3], 512
      %v3403 = vld [vmem:[%s3402] sm:$0xff]
      %v3404 = vld [vmem:[%s3402 + $0x8] sm:$0xff]
      %v3405 = vld [vmem:[%s3402 + $0x10] sm:$0xff]
      %v3406 = vld [vmem:[%s3402 + $0x18] sm:$0xff]
      %v3407 = vld [vmem:[%s3402 + $0x20] sm:$0xff]
      %v3408 = vld [vmem:[%s3402 + $0x28] sm:$0xff]
      %v3409 = vld [vmem:[%s3402 + $0x30] sm:$0xff]
      %v3410 = vld [vmem:[%s3402 + $0x38] sm:$0xff]
      %v3411 = vld [vmem:[%s3402 + $0x40] sm:$0xff]
      %v3412 = vld [vmem:[%s3402 + $0x48] sm:$0xff]
      %v3413 = vld [vmem:[%s3402 + $0x50] sm:$0xff]
      %v3414 = vld [vmem:[%s3402 + $0x58] sm:$0xff]
      %v3415 = vld [vmem:[%s3402 + $0x60] sm:$0xff]
      %v3416 = vld [vmem:[%s3402 + $0x68] sm:$0xff]
      %v3417 = vld [vmem:[%s3402 + $0x70] sm:$0xff]
      %v3418 = vld [vmem:[%s3402 + $0x78] sm:$0xff]
      %v3419 = vmul.f32 %v3403, %v2105
      %v3420 = vmul.f32 %v3404, %v2105
      %v3421 = vmul.f32 %v3405, %v2105
      %v3422 = vmul.f32 %v3406, %v2105
      %v3423 = vmul.f32 %v3407, %v2105
      %v3424 = vmul.f32 %v3408, %v2105
      %v3425 = vmul.f32 %v3409, %v2105
      %v3426 = vmul.f32 %v3410, %v2105
      %v3427 = vmul.f32 %v3411, %v2105
      %v3428 = vmul.f32 %v3412, %v2105
      %v3429 = vmul.f32 %v3413, %v2105
      %v3430 = vmul.f32 %v3414, %v2105
      %v3431 = vmul.f32 %v3415, %v2105
      %v3432 = vmul.f32 %v3416, %v2105
      %v3433 = vmul.f32 %v3417, %v2105
      %v3434 = vmul.f32 %v3418, %v2105
      %v3435 = vadd.f32 %v3386, %v3419
      %v3436 = vadd.f32 %v3387, %v3420
      %v3437 = vadd.f32 %v3388, %v3421
      %v3438 = vadd.f32 %v3389, %v3422
      %v3439 = vadd.f32 %v3390, %v3423
      %v3440 = vadd.f32 %v3391, %v3424
      %v3441 = vadd.f32 %v3392, %v3425
      %v3442 = vadd.f32 %v3393, %v3426
      %v3443 = vadd.f32 %v3394, %v3427
      %v3444 = vadd.f32 %v3395, %v3428
      %v3445 = vadd.f32 %v3396, %v3429
      %v3446 = vadd.f32 %v3397, %v3430
      %v3447 = vadd.f32 %v3398, %v3431
      %v3448 = vadd.f32 %v3399, %v3432
      %v3449 = vadd.f32 %v3400, %v3433
      %v3450 = vadd.f32 %v3401, %v3434
      %s3451 = scalar_lea.vmem [#allocation3], 832
      %v3452 = vld [vmem:[%s3451] sm:$0xff]
      %v3453 = vld [vmem:[%s3451 + $0x8] sm:$0xff]
      %v3454 = vld [vmem:[%s3451 + $0x10] sm:$0xff]
      %v3455 = vld [vmem:[%s3451 + $0x18] sm:$0xff]
      %v3456 = vld [vmem:[%s3451 + $0x20] sm:$0xff]
      %v3457 = vld [vmem:[%s3451 + $0x28] sm:$0xff]
      %v3458 = vld [vmem:[%s3451 + $0x30] sm:$0xff]
      %v3459 = vld [vmem:[%s3451 + $0x38] sm:$0xff]
      %v3460 = vld [vmem:[%s3451 + $0x40] sm:$0xff]
      %v3461 = vld [vmem:[%s3451 + $0x48] sm:$0xff]
      %v3462 = vld [vmem:[%s3451 + $0x50] sm:$0xff]
      %v3463 = vld [vmem:[%s3451 + $0x58] sm:$0xff]
      %v3464 = vld [vmem:[%s3451 + $0x60] sm:$0xff]
      %v3465 = vld [vmem:[%s3451 + $0x68] sm:$0xff]
      %v3466 = vld [vmem:[%s3451 + $0x70] sm:$0xff]
      %v3467 = vld [vmem:[%s3451 + $0x78] sm:$0xff]
      %v3468 = vmul.f32 %v3452, %v2158
      %v3469 = vmul.f32 %v3453, %v2158
      %v3470 = vmul.f32 %v3454, %v2158
      %v3471 = vmul.f32 %v3455, %v2158
      %v3472 = vmul.f32 %v3456, %v2158
      %v3473 = vmul.f32 %v3457, %v2158
      %v3474 = vmul.f32 %v3458, %v2158
      %v3475 = vmul.f32 %v3459, %v2158
      %v3476 = vmul.f32 %v3460, %v2158
      %v3477 = vmul.f32 %v3461, %v2158
      %v3478 = vmul.f32 %v3462, %v2158
      %v3479 = vmul.f32 %v3463, %v2158
      %v3480 = vmul.f32 %v3464, %v2158
      %v3481 = vmul.f32 %v3465, %v2158
      %v3482 = vmul.f32 %v3466, %v2158
      %v3483 = vmul.f32 %v3467, %v2158
      %v3484 = vadd.f32 %v3435, %v3468
      %v3485 = vadd.f32 %v3436, %v3469
      %v3486 = vadd.f32 %v3437, %v3470
      %v3487 = vadd.f32 %v3438, %v3471
      %v3488 = vadd.f32 %v3439, %v3472
      %v3489 = vadd.f32 %v3440, %v3473
      %v3490 = vadd.f32 %v3441, %v3474
      %v3491 = vadd.f32 %v3442, %v3475
      %v3492 = vadd.f32 %v3443, %v3476
      %v3493 = vadd.f32 %v3444, %v3477
      %v3494 = vadd.f32 %v3445, %v3478
      %v3495 = vadd.f32 %v3446, %v3479
      %v3496 = vadd.f32 %v3447, %v3480
      %v3497 = vadd.f32 %v3448, %v3481
      %v3498 = vadd.f32 %v3449, %v3482
      %v3499 = vadd.f32 %v3450, %v3483
      %s3500 = scalar_lea.vmem [#allocation3], 1152
      %v3501 = vld [vmem:[%s3500] sm:$0xff]
      %v3502 = vld [vmem:[%s3500 + $0x8] sm:$0xff]
      %v3503 = vld [vmem:[%s3500 + $0x10] sm:$0xff]
      %v3504 = vld [vmem:[%s3500 + $0x18] sm:$0xff]
      %v3505 = vld [vmem:[%s3500 + $0x20] sm:$0xff]
      %v3506 = vld [vmem:[%s3500 + $0x28] sm:$0xff]
      %v3507 = vld [vmem:[%s3500 + $0x30] sm:$0xff]
      %v3508 = vld [vmem:[%s3500 + $0x38] sm:$0xff]
      %v3509 = vld [vmem:[%s3500 + $0x40] sm:$0xff]
      %v3510 = vld [vmem:[%s3500 + $0x48] sm:$0xff]
      %v3511 = vld [vmem:[%s3500 + $0x50] sm:$0xff]
      %v3512 = vld [vmem:[%s3500 + $0x58] sm:$0xff]
      %v3513 = vld [vmem:[%s3500 + $0x60] sm:$0xff]
      %v3514 = vld [vmem:[%s3500 + $0x68] sm:$0xff]
      %v3515 = vld [vmem:[%s3500 + $0x70] sm:$0xff]
      %v3516 = vld [vmem:[%s3500 + $0x78] sm:$0xff]
      %v3517 = vmul.f32 %v3501, %v2211
      %v3518 = vmul.f32 %v3502, %v2211
      %v3519 = vmul.f32 %v3503, %v2211
      %v3520 = vmul.f32 %v3504, %v2211
      %v3521 = vmul.f32 %v3505, %v2211
      %v3522 = vmul.f32 %v3506, %v2211
      %v3523 = vmul.f32 %v3507, %v2211
      %v3524 = vmul.f32 %v3508, %v2211
      %v3525 = vmul.f32 %v3509, %v2211
      %v3526 = vmul.f32 %v3510, %v2211
      %v3527 = vmul.f32 %v3511, %v2211
      %v3528 = vmul.f32 %v3512, %v2211
      %v3529 = vmul.f32 %v3513, %v2211
      %v3530 = vmul.f32 %v3514, %v2211
      %v3531 = vmul.f32 %v3515, %v2211
      %v3532 = vmul.f32 %v3516, %v2211
      %v3533 = vadd.f32 %v3484, %v3517
      %v3534 = vadd.f32 %v3485, %v3518
      %v3535 = vadd.f32 %v3486, %v3519
      %v3536 = vadd.f32 %v3487, %v3520
      %v3537 = vadd.f32 %v3488, %v3521
      %v3538 = vadd.f32 %v3489, %v3522
      %v3539 = vadd.f32 %v3490, %v3523
      %v3540 = vadd.f32 %v3491, %v3524
      %v3541 = vadd.f32 %v3492, %v3525
      %v3542 = vadd.f32 %v3493, %v3526
      %v3543 = vadd.f32 %v3494, %v3527
      %v3544 = vadd.f32 %v3495, %v3528
      %v3545 = vadd.f32 %v3496, %v3529
      %v3546 = vadd.f32 %v3497, %v3530
      %v3547 = vadd.f32 %v3498, %v3531
      %v3548 = vadd.f32 %v3499, %v3532
      %s3549 = scalar_lea.vmem [#allocation3], 1472
      %v3550 = vld [vmem:[%s3549] sm:$0xff]
      %v3551 = vld [vmem:[%s3549 + $0x8] sm:$0xff]
      %v3552 = vld [vmem:[%s3549 + $0x10] sm:$0xff]
      %v3553 = vld [vmem:[%s3549 + $0x18] sm:$0xff]
      %v3554 = vld [vmem:[%s3549 + $0x20] sm:$0xff]
      %v3555 = vld [vmem:[%s3549 + $0x28] sm:$0xff]
      %v3556 = vld [vmem:[%s3549 + $0x30] sm:$0xff]
      %v3557 = vld [vmem:[%s3549 + $0x38] sm:$0xff]
      %v3558 = vld [vmem:[%s3549 + $0x40] sm:$0xff]
      %v3559 = vld [vmem:[%s3549 + $0x48] sm:$0xff]
      %v3560 = vld [vmem:[%s3549 + $0x50] sm:$0xff]
      %v3561 = vld [vmem:[%s3549 + $0x58] sm:$0xff]
      %v3562 = vld [vmem:[%s3549 + $0x60] sm:$0xff]
      %v3563 = vld [vmem:[%s3549 + $0x68] sm:$0xff]
      %v3564 = vld [vmem:[%s3549 + $0x70] sm:$0xff]
      %v3565 = vld [vmem:[%s3549 + $0x78] sm:$0xff]
      %v3566 = vmul.f32 %v3550, %v2264
      %v3567 = vmul.f32 %v3551, %v2264
      %v3568 = vmul.f32 %v3552, %v2264
      %v3569 = vmul.f32 %v3553, %v2264
      %v3570 = vmul.f32 %v3554, %v2264
      %v3571 = vmul.f32 %v3555, %v2264
      %v3572 = vmul.f32 %v3556, %v2264
      %v3573 = vmul.f32 %v3557, %v2264
      %v3574 = vmul.f32 %v3558, %v2264
      %v3575 = vmul.f32 %v3559, %v2264
      %v3576 = vmul.f32 %v3560, %v2264
      %v3577 = vmul.f32 %v3561, %v2264
      %v3578 = vmul.f32 %v3562, %v2264
      %v3579 = vmul.f32 %v3563, %v2264
      %v3580 = vmul.f32 %v3564, %v2264
      %v3581 = vmul.f32 %v3565, %v2264
      %v3582 = vadd.f32 %v3533, %v3566
      %v3583 = vadd.f32 %v3534, %v3567
      %v3584 = vadd.f32 %v3535, %v3568
      %v3585 = vadd.f32 %v3536, %v3569
      %v3586 = vadd.f32 %v3537, %v3570
      %v3587 = vadd.f32 %v3538, %v3571
      %v3588 = vadd.f32 %v3539, %v3572
      %v3589 = vadd.f32 %v3540, %v3573
      %v3590 = vadd.f32 %v3541, %v3574
      %v3591 = vadd.f32 %v3542, %v3575
      %v3592 = vadd.f32 %v3543, %v3576
      %v3593 = vadd.f32 %v3544, %v3577
      %v3594 = vadd.f32 %v3545, %v3578
      %v3595 = vadd.f32 %v3546, %v3579
      %v3596 = vadd.f32 %v3547, %v3580
      %v3597 = vadd.f32 %v3548, %v3581
      %3598 = vst [vmem:[%s204 + $0x80] sm:$0xff] %v3582
      %3599 = vst [vmem:[%s204 + $0x88] sm:$0xff] %v3583
      %3600 = vst [vmem:[%s204 + $0x90] sm:$0xff] %v3584
      %3601 = vst [vmem:[%s204 + $0x98] sm:$0xff] %v3585
      %3602 = vst [vmem:[%s204 + $0xa0] sm:$0xff] %v3586
      %3603 = vst [vmem:[%s204 + $0xa8] sm:$0xff] %v3587
      %3604 = vst [vmem:[%s204 + $0xb0] sm:$0xff] %v3588
      %3605 = vst [vmem:[%s204 + $0xb8] sm:$0xff] %v3589
      %3606 = vst [vmem:[%s204 + $0xc0] sm:$0xff] %v3590
      %3607 = vst [vmem:[%s204 + $0xc8] sm:$0xff] %v3591
      %3608 = vst [vmem:[%s204 + $0xd0] sm:$0xff] %v3592
      %3609 = vst [vmem:[%s204 + $0xd8] sm:$0xff] %v3593
      %3610 = vst [vmem:[%s204 + $0xe0] sm:$0xff] %v3594
      %3611 = vst [vmem:[%s204 + $0xe8] sm:$0xff] %v3595
      %3612 = vst [vmem:[%s204 + $0xf0] sm:$0xff] %v3596
      %3613 = vst [vmem:[%s204 + $0xf8] sm:$0xff] %v3597
      %v3614 = vadd.f32 %v3582, %v3583
      %v3615 = vadd.f32 %v3614, %v3584
      %v3616 = vadd.f32 %v3615, %v3585
      %v3617 = vadd.f32 %v3616, %v3586
      %v3618 = vadd.f32 %v3617, %v3587
      %v3619 = vadd.f32 %v3618, %v3588
      %v3620 = vadd.f32 %v3619, %v3589
      %v3621 = vadd.f32 %v3620, %v3590
      %v3622 = vadd.f32 %v3621, %v3591
      %v3623 = vadd.f32 %v3622, %v3592
      %v3624 = vadd.f32 %v3623, %v3593
      %v3625 = vadd.f32 %v3624, %v3594
      %v3626 = vadd.f32 %v3625, %v3595
      %v3627 = vadd.f32 %v3626, %v3596
      %v3628 = vadd.f32 %v3627, %v3597
      %v3629 = vrot.slane %v3628, 4
      %v3630 = vadd.f32 %v3628, %v3629
      %v3631 = vrot.slane %v3630, 2
      %v3632 = vadd.f32 %v3630, %v3631
      %v3633 = vrot.slane %v3632, 1
      %v3634 = vadd.f32 %v3632, %v3633
      %v3635 = vadd.f32 %v2334, %v3634
      %v3636 = vmul.f32 %v3582, %v3582
      %v3637 = vmul.f32 %v3583, %v3583
      %v3638 = vmul.f32 %v3584, %v3584
      %v3639 = vmul.f32 %v3585, %v3585
      %v3640 = vmul.f32 %v3586, %v3586
      %v3641 = vmul.f32 %v3587, %v3587
      %v3642 = vmul.f32 %v3588, %v3588
      %v3643 = vmul.f32 %v3589, %v3589
      %v3644 = vmul.f32 %v3590, %v3590
      %v3645 = vmul.f32 %v3591, %v3591
      %v3646 = vmul.f32 %v3592, %v3592
      %v3647 = vmul.f32 %v3593, %v3593
      %v3648 = vmul.f32 %v3594, %v3594
      %v3649 = vmul.f32 %v3595, %v3595
      %v3650 = vmul.f32 %v3596, %v3596
      %v3651 = vmul.f32 %v3597, %v3597
      %v3652 = vadd.f32 %v3636, %v3637
      %v3653 = vadd.f32 %v3652, %v3638
      %v3654 = vadd.f32 %v3653, %v3639
      %v3655 = vadd.f32 %v3654, %v3640
      %v3656 = vadd.f32 %v3655, %v3641
      %v3657 = vadd.f32 %v3656, %v3642
      %v3658 = vadd.f32 %v3657, %v3643
      %v3659 = vadd.f32 %v3658, %v3644
      %v3660 = vadd.f32 %v3659, %v3645
      %v3661 = vadd.f32 %v3660, %v3646
      %v3662 = vadd.f32 %v3661, %v3647
      %v3663 = vadd.f32 %v3662, %v3648
      %v3664 = vadd.f32 %v3663, %v3649
      %v3665 = vadd.f32 %v3664, %v3650
      %v3666 = vadd.f32 %v3665, %v3651
      %v3667 = vrot.slane %v3666, 4
      %v3668 = vadd.f32 %v3666, %v3667
      %v3669 = vrot.slane %v3668, 2
      %v3670 = vadd.f32 %v3668, %v3669
      %v3671 = vrot.slane %v3670, 1
      %v3672 = vadd.f32 %v3670, %v3671
      %v3673 = vadd.f32 %v2372, %v3672
      %3674 = vst [vmem:[%s209] sm:$0x1] %v3635
      %3675 = vst [vmem:[%s209 + $0x1] sm:$0x1] %v3673
      %s3676 = smul.u32 32, %s16
      %p3677 = scmp.lt.s32.totalorder %s3676, 63
      %s3678 = scalar_select %p3677, %s3676, 63
      %s3679 = smul.addr %s3678, 8
      %s3680 = scalar_lea.vmem %s3, %s3679
      %p3681 = scmp.lt.s32.totalorder %s16, 1
      %s3682 = scalar_select %p3681, %s16, 1
      %s3683 = smul.addr %s3682, 2
      %s3684 = scalar_lea.vmem %s4, %s3683
      // Predicated region
      $region33: #{inception_v3_module_2_forward.7} parent=31 // pred_check
        %p3685 = pneg %p102
      $region34: #{inception_v3_module_2_forward.7} parent=31 // pred_check_branch
        %3687 = sbr.rel (%p3685) target = $region36
      $region35: #{inception_v3_module_2_forward.7} parent=31 // pred_region
        %s3688 = smul.u32 32, %s16
      $region36: #{inception_v3_module_2_forward.7} parent=31 // pred_fallthru
        _
      // Predicated region
      $region37: #{inception_v3_module_2_forward.7} parent=31 // pred_check
        %p3689 = pneg %p128
      $region38: #{inception_v3_module_2_forward.7} parent=31 // pred_check_branch
        %3691 = sbr.rel (%p3689) target = $region40
      $region39: #{inception_v3_module_2_forward.7} parent=31 // pred_region
        _
      $region40: #{inception_v3_module_2_forward.7} parent=31 // pred_fallthru
        _
    $region32: #{inception_v3_module_2_forward.7} parent=5 // pred_fallthru
      _
    %p3692 = scmp.le.s32.totalorder 2, %s11
    // Predicated region
    $region41: #{inception_v3_module_2_forward.7} parent=5 // pred_check
      %p3693 = pneg %p3692
    $region42: #{inception_v3_module_2_forward.7} parent=5 // pred_check_branch
      %3695 = sbr.rel (%p3693) target = $region44
    $region43: #{inception_v3_module_2_forward.7} parent=5 // pred_region
      %s3696 = ssub.s32 %s11, 2
      // Predicated region
      $region45: #{inception_v3_module_2_forward.7} parent=43 // pred_check
        %p3697 = pneg %p108
      $region46: #{inception_v3_module_2_forward.7} parent=43 // pred_check_branch
        %3699 = sbr.rel (%p3697) target = $region48
      $region47: #{inception_v3_module_2_forward.7} parent=43 // pred_region
        %s3700 = smul.u32 32, %s17
        %p3701 = scmp.lt.s32.totalorder %s3700, 63
        %s3702 = scalar_select %p3701, %s3700, 63
        %s3703 = smul.addr %s3702, 8
        %s3704 = scalar_lea.vmem %s3, %s3703
      $region48: #{inception_v3_module_2_forward.7} parent=43 // pred_fallthru
        _
      // Predicated region
      $region49: #{inception_v3_module_2_forward.7} parent=43 // pred_check
        %p3705 = pneg %p134
      $region50: #{inception_v3_module_2_forward.7} parent=43 // pred_check_branch
        %3707 = sbr.rel (%p3705) target = $region52
      $region51: #{inception_v3_module_2_forward.7} parent=43 // pred_region
        %p3708 = scmp.lt.s32.totalorder %s17, 1
        %s3709 = scalar_select %p3708, %s17, 1
        %s3710 = smul.addr %s3709, 2
        %s3711 = scalar_lea.vmem %s4, %s3710
      $region52: #{inception_v3_module_2_forward.7} parent=43 // pred_fallthru
        _
    $region44: #{inception_v3_module_2_forward.7} parent=5 // pred_fallthru
      _
  $region6: #{inception_v3_module_2_forward.7} parent=0 // loop_footer
    %s15 = sadd.s32 1, %s11
  $region7: #{inception_v3_module_2_forward.7} parent=0 // loop_footer_branch
    %10 = sbr.rel target = $region3
  $region8: #{inception_v3_module_2_forward.7} parent=0 // loop_exit
    _

</llo_original>
